<compile_context>
chip_gen: v7x
topology: tpu7x:2x2x1
jax: 0.10.0
libtpu: 0.0.40
codegen_flags: <defaults>
</compile_context>

<pallas_src>
import functools
import math

import jax
import jax.numpy as jnp
from jax.experimental import pallas as pl
from jax.experimental.pallas import tpu as pltpu


def _round_up(x, m):
    return ((x + m - 1) // m) * m


def _nbytes(shape, dtype):
    n = 1
    for d in shape:
        n *= int(d)
    return n * jnp.dtype(dtype).itemsize


# -----------------------------------------------------------------------------
# Fused ConvLSTM kernel body (runs once per (batch element, step) grid point).
# -----------------------------------------------------------------------------
def _convlstm_kernel(H, W, K, p, w_off, cin_list, ch_list, chp_list, mm_dtype,
                     *refs):
    L = len(ch_list)
    # refs: slot_map (SMEM, unused in body), x0p, (w_i, b_i)*L, h_seq, c_out, (hp_i, c_i)*L
    x0p_ref = refs[1]                                   # (1, Hp, Wpad, Cin)   mm_dtype
    w_refs = [refs[2 + 2 * i] for i in range(L)]        # (K*K*(Ci+Ch), 4*Chp) mm_dtype
    b_refs = [refs[3 + 2 * i] for i in range(L)]        # (1, 4*Chp)           f32
    n_in = 2 + 2 * L
    h_seq_ref = refs[n_in]                              # (1, 1, HW, ChpL)     f32
    c_out_ref = refs[n_in + 1]                          # (1, HW, ChpL)        f32
    scratch = refs[n_in + 2:]
    hp_refs = [scratch[2 * i] for i in range(L)]        # padded hidden state, mm_dtype
    c_refs = [scratch[2 * i + 1] for i in range(L)]     # cell state (HW, Chp), f32

    s = pl.program_id(1)
    HW = H * W

    @pl.when(s == 0)
    def _init():
        for i in range(L):
            hp_refs[i][...] = jnp.zeros(hp_refs[i].shape, hp_refs[i].dtype)
            c_refs[i][...] = jnp.zeros(c_refs[i].shape, jnp.float32)

    for i in range(L):
        Ci, Ch, Chp = cin_list[i], ch_list[i], chp_list[i]
        # Layer input: constant padded x block for layer 0, otherwise the previous
        # layer's padded hidden scratch (already updated THIS step).  Own hidden
        # state hp_refs[i] still holds the PREVIOUS step's value here.
        x_pad = x0p_ref[...] if i == 0 else hp_refs[i - 1][...]
        h_pad = hp_refs[i][...]

        # --- im2col: one (HW, K*K*(Ci+Ch)) LHS -> single deep-contraction MXU dot ---
        cols = []
        for kx in range(K):                     # W shift hoisted: K unaligned slices per buffer
            a0 = w_off - p + kx
            x_kx = x_pad[:, :, a0:a0 + W, :]    # (1, Hp, W, Ci)
            h_kx = h_pad[:, :, a0:a0 + W, :]    # (1, Hp, W, Ch)
            for ky in range(K):                 # H shift: free major-dim slice
                cols.append(x_kx[:, ky:ky + H].reshape(HW, Ci))
                cols.append(h_kx[:, ky:ky + H].reshape(HW, Ch))
        lhs = jnp.concatenate(cols, axis=-1)    # (HW, K*K*(Ci+Ch)), mm_dtype

        acc = jnp.dot(lhs, w_refs[i][...],
                      preferred_element_type=jnp.float32) + b_refs[i][...]

        c_prev = c_refs[i][...]
        # Peephole weights Wci/Wcf/Wco are zero Parameters in the module -> skipped.
        if Chp < 128:
            # Full-width transcendentals: 2 full-vreg EUP passes over (HW, 4*Chp)
            # instead of 4 quarter-filled (HW, Chp) slices.
            sg = jax.nn.sigmoid(acc)
            th = jnp.tanh(acc)
            ig = sg[:, 0 * Chp:1 * Chp]
            fg = sg[:, 1 * Chp:2 * Chp]
            gct = th[:, 2 * Chp:3 * Chp]
            og = sg[:, 3 * Chp:4 * Chp]
        else:
            ig = jax.nn.sigmoid(acc[:, 0 * Chp:1 * Chp])
            fg = jax.nn.sigmoid(acc[:, 1 * Chp:2 * Chp])
            gct = jnp.tanh(acc[:, 2 * Chp:3 * Chp])
            og = jax.nn.sigmoid(acc[:, 3 * Chp:4 * Chp])

        cc = fg * c_prev + ig * gct             # (HW, Chp); padded lanes stay 0 (zero bias
        hh = og * jnp.tanh(cc)                  #  columns + zero-init c => 0 by induction)
        c_refs[i][...] = cc

        # New hidden state -> padded scratch (interior only; halo stays zero).
        # H offset is a major dim, w_off is sublane-aligned -> clean tiled stores.
        hp_refs[i][:, p:p + H, w_off:w_off + W, :] = (
            hh[:, :Ch].reshape(1, H, W, Ch).astype(mm_dtype))

        if i + 1 == L:
            h_seq_ref[...] = hh.reshape(1, 1, HW, Chp)
            c_out_ref[...] = cc.reshape(1, HW, Chp)


# -----------------------------------------------------------------------------
# Wrapper: one pallas_call for the full ConvLSTM forward.
# -----------------------------------------------------------------------------
def convlstm_forward_pallas(x_nchw, packed_params, hidden_channels, kernel_size,
                            step, effective_step, mm_dtype=jnp.bfloat16):
    x = jnp.transpose(x_nchw, (0, 2, 3, 1)).astype(jnp.float32)   # NCHW -> NHWC
    B, H, W, Cin = x.shape
    L = len(hidden_channels)
    K = kernel_size
    p = (K - 1) // 2
    w_off = max(8, _round_up(p, 8))             # sublane-aligned W halo offset
    Hp = H + 2 * p
    Wpad = _round_up(w_off + W + p, 8)
    HW = H * W
    cin_list = tuple(([Cin] + list(hidden_channels))[:L])
    ch_list = tuple(hidden_channels)
    chp_list = tuple(_round_up(c, 32) for c in ch_list)   # 4*Chp multiple of 128
    ChL, ChpL = ch_list[-1], chp_list[-1]

    # Steps whose last-layer hidden state must reach HBM: effective steps + last step.
    eff = sorted({t for t in effective_step if 0 <= t < step})
    need = sorted(set(eff) | {step - 1})
    n_slots = len(need)
    slot_of = {t: k for k, t in enumerate(need)}
    # Non-needed steps all write a reused dummy slot (index n_slots).
    slot_map = jnp.asarray([slot_of.get(t, n_slots) for t in range(step)],
                           dtype=jnp.int32)

    x0p = jnp.pad(x, ((0, 0), (p, p), (w_off, Wpad - w_off - W), (0, 0)))
    x0p = x0p.astype(mm_dtype)

    inputs = [x0p]
    in_specs = [pl.BlockSpec((1, Hp, Wpad, Cin), lambda b, s, sm: (b, 0, 0, 0))]
    for i in range(L):
        w = packed_params[i]["w"].astype(mm_dtype)          # (K*K*(Ci+Ch), 4*Chp)
        bias = packed_params[i]["b"].astype(jnp.float32)     # (1, 4*Chp)
        inputs += [w, bias]
        in_specs += [pl.BlockSpec(w.shape, lambda b, s, sm: (0, 0)),
                     pl.BlockSpec(bias.shape, lambda b, s, sm: (0, 0))]

    out_shape = (
        jax.ShapeDtypeStruct((n_slots + 1, B, HW, ChpL), jnp.float32),  # needed h steps (+dummy)
        jax.ShapeDtypeStruct((B, HW, ChpL), jnp.float32),               # final cell state
    )
    out_specs = (
        pl.BlockSpec((1, 1, HW, ChpL), lambda b, s, sm: (sm[s], b, 0, 0)),
        pl.BlockSpec((1, HW, ChpL), lambda b, s, sm: (b, 0, 0)),
    )

    scratch_shapes = []
    for i in range(L):
        scratch_shapes.append(pltpu.VMEM((1, Hp, Wpad, ch_list[i]), mm_dtype))
        scratch_shapes.append(pltpu.VMEM((HW, chp_list[i]), jnp.float32))

    # Explicit VMEM budget (weights + state scratch + im2col/acc temporaries + blocks),
    # kept <= 64 MiB so the same budget also fits a v7x TensorCore.
    est = 2 * _nbytes((1, Hp, Wpad, Cin), mm_dtype)
    est += 2 * _nbytes((1, 1, HW, ChpL), jnp.float32)
    est += 2 * _nbytes((1, HW, ChpL), jnp.float32)
    for i in range(L):
        Ct = cin_list[i] + ch_list[i]
        est += _nbytes((K * K * Ct, 4 * chp_list[i]), mm_dtype)
        est += _nbytes((1, 4 * chp_list[i]), jnp.float32)
        est += _nbytes((1, Hp, Wpad, ch_list[i]), mm_dtype)
        est += _nbytes((HW, chp_list[i]), jnp.float32)
        est += _nbytes((HW, K * K * Ct), mm_dtype)               # im2col LHS temp
        est += 3 * _nbytes((HW, 4 * chp_list[i]), jnp.float32)   # acc/sigmoid/tanh temps
    vmem_limit = int(min(64 * 2 ** 20, max(24 * 2 ** 20, 2 * est)))

    kernel = functools.partial(_convlstm_kernel, H, W, K, p, w_off,
                               cin_list, ch_list, chp_list, mm_dtype)

    h_seq, c_last2d = pl.pallas_call(
        kernel,
        out_shape=out_shape,
        grid_spec=pltpu.PrefetchScalarGridSpec(
            num_scalar_prefetch=1,
            grid=(B, step),                       # step MUST be the last (fastest) axis
            in_specs=in_specs,
            out_specs=out_specs,
            scratch_shapes=scratch_shapes),
        compiler_params=pltpu.CompilerParams(
            dimension_semantics=("parallel", "arbitrary"),
            vmem_limit_bytes=vmem_limit),
    )(slot_map, *inputs)

    def to_nchw(a2d, ch):
        a = a2d[..., :ch].reshape(a2d.shape[0], H, W, ch)
        return jnp.transpose(a, (0, 3, 1, 2))

    outputs = [to_nchw(h_seq[slot_of[t]], ChL) for t in eff]
    x_last = to_nchw(h_seq[slot_of[step - 1]], ChL)
    c_last = to_nchw(c_last2d, ChL)
    return outputs, (x_last, c_last)


# -----------------------------------------------------------------------------
# Deterministic parameter init: per-gate Conv2d-style weights + im2col-packed form.
# -----------------------------------------------------------------------------
def init_params(key, input_channels, hidden_channels, kernel_size):
    K = kernel_size
    in_ch = [input_channels] + list(hidden_channels)
    packed, raw = [], []
    for i, ch in enumerate(hidden_channels):
        cin = in_ch[i]
        chp = _round_up(ch, 32)
        keys = jax.random.split(jax.random.fold_in(key, i), 12)
        sx = 1.0 / math.sqrt(K * K * cin)
        sh = 1.0 / math.sqrt(K * K * ch)
        # per-gate HWIO weights, gate order [i, f, c, o]
        wx_g = [jax.random.uniform(keys[j], (K, K, cin, ch), jnp.float32, -sx, sx)
                for j in range(4)]
        bx_g = [jax.random.uniform(keys[4 + j], (ch,), jnp.float32, -sx, sx)
                for j in range(4)]
        wh_g = [jax.random.uniform(keys[8 + j], (K, K, ch, ch), jnp.float32, -sh, sh)
                for j in range(4)]
        # im2col packing: rows ordered (kx, ky, [x channels | h channels]),
        # gate g occupies columns [g*chp : g*chp + ch] (padded columns stay zero).
        w = jnp.zeros((K * K * (cin + ch), 4 * chp), jnp.float32)
        b = jnp.zeros((1, 4 * chp), jnp.float32)
        for g in range(4):
            wkk_x = jnp.transpose(wx_g[g], (1, 0, 2, 3)).reshape(K * K, cin, ch)
            wkk_h = jnp.transpose(wh_g[g], (1, 0, 2, 3)).reshape(K * K, ch, ch)
            tap = jnp.concatenate([wkk_x, wkk_h], axis=1)       # (K*K, cin+ch, ch)
            w = w.at[:, g * chp:g * chp + ch].set(tap.reshape(K * K * (cin + ch), ch))
            b = b.at[0, g * chp:g * chp + ch].set(bx_g[g])
        packed.append({"w": w, "b": b})
        raw.append({"wx_g": wx_g, "bx_g": bx_g, "wh_g": wh_g})
    return packed, raw


# -----------------------------------------------------------------------------
# Pure-JAX reference (correctness only).
# -----------------------------------------------------------------------------
def _conv_same_nhwc(x, w):
    return jax.lax.conv_general_dilated(
        x, w, window_strides=(1, 1), padding="SAME",
        dimension_numbers=("NHWC", "HWIO", "NHWC"))


def convlstm_cell_ref(x, h, c, raw_layer):
    wx_g, bx_g, wh_g = raw_layer["wx_g"], raw_layer["bx_g"], raw_layer["wh_g"]
    gi = _conv_same_nhwc(x, wx_g[0]) + bx_g[0] + _conv_same_nhwc(h, wh_g[0])
    gf = _conv_same_nhwc(x, wx_g[1]) + bx_g[1] + _conv_same_nhwc(h, wh_g[1])
    gc = _conv_same_nhwc(x, wx_g[2]) + bx_g[2] + _conv_same_nhwc(h, wh_g[2])
    go = _conv_same_nhwc(x, wx_g[3]) + bx_g[3] + _conv_same_nhwc(h, wh_g[3])
    ci = jax.nn.sigmoid(gi)            # peephole weights are zeros in the module
    cf = jax.nn.sigmoid(gf)
    cc = cf * c + ci * jnp.tanh(gc)
    co = jax.nn.sigmoid(go)
    return co * jnp.tanh(cc), cc


def convlstm_forward_ref(x_nchw, raw_params, hidden_channels, kernel_size,
                         step, effective_step):
    x_in = jnp.transpose(x_nchw, (0, 2, 3, 1)).astype(jnp.float32)
    L = len(hidden_channels)
    B, H, W, _ = x_in.shape
    state = [None] * L
    outputs = []
    x = x_in
    cc = None
    for s in range(step):
        x = x_in
        for i in range(L):
            if s == 0:
                state[i] = (jnp.zeros((B, H, W, hidden_channels[i]), jnp.float32),
                            jnp.zeros((B, H, W, hidden_channels[i]), jnp.float32))
            h, c = state[i]
            x, cc = convlstm_cell_ref(x, h, c, raw_params[i])
            state[i] = (x, cc)
        if s in effective_step:
            outputs.append(jnp.transpose(x, (0, 3, 1, 2)))
    return outputs, (jnp.transpose(x, (0, 3, 1, 2)),
                     jnp.transpose(cc, (0, 3, 1, 2)))


if __name__ == "__main__":
    key = jax.random.PRNGKey(0)
    B, Cin, H, W = 2, 4, 16, 16
    hidden_channels = [8, 8]
    kernel_size = 3
    step = 2
    effective_step = [1]

    k_in, k_par = jax.random.split(key)
    x = jax.random.normal(k_in, (B, Cin, H, W), jnp.float32)   # NCHW like PyTorch
    packed, raw = init_params(k_par, Cin, hidden_channels, kernel_size)

    # Pure-JAX reference
    routs, (rx, rc) = convlstm_forward_ref(
        x, raw, hidden_channels, kernel_size, step, effective_step)
    n_eff = len([t for t in range(step) if t in effective_step])

    # Default path: bf16 MXU inputs / bf16 state, f32 accumulation + f32 epilogue.
    outs, (x_last, c_last) = convlstm_forward_pallas(
        x, packed, hidden_channels, kernel_size, step, effective_step)
    jax.block_until_ready(x_last)
    jax.block_until_ready(c_last)
    assert len(outs) == len(routs) == n_eff
    for o, r in zip(outs, routs):
        assert jnp.allclose(o, r, atol=1e-1, rtol=1e-1), float(jnp.max(jnp.abs(o - r)))
    assert jnp.allclose(x_last, rx, atol=1e-1, rtol=1e-1)
    assert jnp.allclose(c_last, rc, atol=1e-1, rtol=1e-1)

    # Exact f32 path for strict numerical validation against the reference.
    outs32, (x32, c32) = convlstm_forward_pallas(
        x, packed, hidden_channels, kernel_size, step, effective_step,
        mm_dtype=jnp.float32)
    jax.block_until_ready(x32)
    for o, r in zip(outs32, routs):
        assert jnp.allclose(o, r, atol=1e-4, rtol=1e-4), float(jnp.max(jnp.abs(o - r)))
    assert jnp.allclose(x32, rx, atol=1e-4, rtol=1e-4)
    assert jnp.allclose(c32, rc, atol=1e-4, rtol=1e-4)

    print("KERNEL_OK")
</pallas_src>

<mosaic_0001>
module attributes {stable_mosaic.version = 11 : i64} {
  func.func @_convlstm_kernel(%arg0: i32, %arg1: i32, %arg2: memref<2xi32, #tpu.memory_space<smem>>, %arg3: memref<1x18x32x4xbf16, #tpu.memory_space<vmem>>, %arg4: memref<108x128xbf16, #tpu.memory_space<vmem>>, %arg5: memref<1x128xf32, #tpu.memory_space<vmem>>, %arg6: memref<144x128xbf16, #tpu.memory_space<vmem>>, %arg7: memref<1x128xf32, #tpu.memory_space<vmem>>, %arg8: memref<1x1x256x32xf32, #tpu.memory_space<vmem>>, %arg9: memref<1x256x32xf32, #tpu.memory_space<vmem>>, %arg10: memref<1x18x32x8xbf16, #tpu.memory_space<vmem>>, %arg11: memref<256x32xf32, #tpu.memory_space<vmem>>, %arg12: memref<1x18x32x8xbf16, #tpu.memory_space<vmem>>, %arg13: memref<256x32xf32, #tpu.memory_space<vmem>>) attributes {dimension_semantics = [#tpu.dimension_semantics<parallel>, #tpu.dimension_semantics<arbitrary>], iteration_bounds = array<i64: 2, 2>, scalar_prefetch = 1 : i64, scratch_operands = 4 : i64, tpu.core_type = #tpu.core_type<tc>, window_params = [{transform_indices = @transform_0, window_bounds = array<i64: 1, 18, 32, 4>}, {pipeline_mode = #tpu.pipeline_mode<synchronous>, transform_indices = @transform_1, window_bounds = array<i64: 108, 128>}, {pipeline_mode = #tpu.pipeline_mode<synchronous>, transform_indices = @transform_2, window_bounds = array<i64: 1, 128>}, {pipeline_mode = #tpu.pipeline_mode<synchronous>, transform_indices = @transform_3, window_bounds = array<i64: 144, 128>}, {pipeline_mode = #tpu.pipeline_mode<synchronous>, transform_indices = @transform_4, window_bounds = array<i64: 1, 128>}, {transform_indices = @transform_5, window_bounds = array<i64: 1, 1, 256, 32>}, {transform_indices = @transform_6, window_bounds = array<i64: 1, 256, 32>}]} {
    %c0_i32 = arith.constant 0 : i32
    %0 = arith.cmpi eq, %arg1, %c0_i32 : i32
    %1 = arith.extui %0 : i1 to i32
    %c0_i32_0 = arith.constant 0 : i32
    %2 = arith.cmpi ne, %1, %c0_i32_0 : i32
    scf.if %2 {
      %cst_48 = arith.constant 0.000000e+00 : bf16
      %153 = vector.broadcast %cst_48 : bf16 to vector<1x18x32x8xbf16>
      %c0_49 = arith.constant 0 : index
      %c0_50 = arith.constant 0 : index
      %c0_51 = arith.constant 0 : index
      %c0_52 = arith.constant 0 : index
      %154 = vector.load %arg10[%c0_49, %c0_50, %c0_51, %c0_52] : memref<1x18x32x8xbf16, #tpu.memory_space<vmem>>, vector<1x18x32x8xbf16>
      tpu.vector_store %arg10[%c0_49, %c0_50, %c0_51, %c0_52], %153 {strides = array<i32>} : memref<1x18x32x8xbf16, #tpu.memory_space<vmem>>, vector<1x18x32x8xbf16>,
      %cst_53 = arith.constant 0.000000e+00 : f32
      %155 = vector.broadcast %cst_53 : f32 to vector<256x32xf32>
      %c0_54 = arith.constant 0 : index
      %c0_55 = arith.constant 0 : index
      %156 = vector.load %arg11[%c0_54, %c0_55] : memref<256x32xf32, #tpu.memory_space<vmem>>, vector<256x32xf32>
      tpu.vector_store %arg11[%c0_54, %c0_55], %155 {strides = array<i32>} : memref<256x32xf32, #tpu.memory_space<vmem>>, vector<256x32xf32>,
      %cst_56 = arith.constant 0.000000e+00 : bf16
      %157 = vector.broadcast %cst_56 : bf16 to vector<1x18x32x8xbf16>
      %c0_57 = arith.constant 0 : index
      %c0_58 = arith.constant 0 : index
      %c0_59 = arith.constant 0 : index
      %c0_60 = arith.constant 0 : index
      %158 = vector.load %arg12[%c0_57, %c0_58, %c0_59, %c0_60] : memref<1x18x32x8xbf16, #tpu.memory_space<vmem>>, vector<1x18x32x8xbf16>
      tpu.vector_store %arg12[%c0_57, %c0_58, %c0_59, %c0_60], %157 {strides = array<i32>} : memref<1x18x32x8xbf16, #tpu.memory_space<vmem>>, vector<1x18x32x8xbf16>,
      %cst_61 = arith.constant 0.000000e+00 : f32
      %159 = vector.broadcast %cst_61 : f32 to vector<256x32xf32>
      %c0_62 = arith.constant 0 : index
      %c0_63 = arith.constant 0 : index
      %160 = vector.load %arg13[%c0_62, %c0_63] : memref<256x32xf32, #tpu.memory_space<vmem>>, vector<256x32xf32>
      tpu.vector_store %arg13[%c0_62, %c0_63], %159 {strides = array<i32>} : memref<256x32xf32, #tpu.memory_space<vmem>>, vector<256x32xf32>,
    } else {
    }
    %c0 = arith.constant 0 : index
    %c0_1 = arith.constant 0 : index
    %c0_2 = arith.constant 0 : index
    %c0_3 = arith.constant 0 : index
    %3 = vector.load %arg3[%c0, %c0_1, %c0_2, %c0_3] : memref<1x18x32x4xbf16, #tpu.memory_space<vmem>>, vector<1x18x32x4xbf16>
    %c0_4 = arith.constant 0 : index
    %c0_5 = arith.constant 0 : index
    %c0_6 = arith.constant 0 : index
    %c0_7 = arith.constant 0 : index
    %4 = vector.load %arg10[%c0_4, %c0_5, %c0_6, %c0_7] : memref<1x18x32x8xbf16, #tpu.memory_space<vmem>>, vector<1x18x32x8xbf16>
    %5 = vector.extract_strided_slice %3 {offsets = [0, 0, 7, 0], sizes = [1, 18, 16, 4], strides = [1, 1, 1, 1]} : vector<1x18x32x4xbf16> to vector<1x18x16x4xbf16>
    %6 = vector.extract_strided_slice %4 {offsets = [0, 0, 7, 0], sizes = [1, 18, 16, 8], strides = [1, 1, 1, 1]} : vector<1x18x32x8xbf16> to vector<1x18x16x8xbf16>
    %7 = vector.extract_strided_slice %5 {offsets = [0, 0, 0, 0], sizes = [1, 16, 16, 4], strides = [1, 1, 1, 1]} : vector<1x18x16x4xbf16> to vector<1x16x16x4xbf16>
    %8 = vector.shape_cast %7 : vector<1x16x16x4xbf16> to vector<256x4xbf16>
    %9 = vector.extract_strided_slice %6 {offsets = [0, 0, 0, 0], sizes = [1, 16, 16, 8], strides = [1, 1, 1, 1]} : vector<1x18x16x8xbf16> to vector<1x16x16x8xbf16>
    %10 = vector.shape_cast %9 : vector<1x16x16x8xbf16> to vector<256x8xbf16>
    %11 = vector.extract_strided_slice %5 {offsets = [0, 1, 0, 0], sizes = [1, 16, 16, 4], strides = [1, 1, 1, 1]} : vector<1x18x16x4xbf16> to vector<1x16x16x4xbf16>
    %12 = vector.shape_cast %11 : vector<1x16x16x4xbf16> to vector<256x4xbf16>
    %13 = vector.extract_strided_slice %6 {offsets = [0, 1, 0, 0], sizes = [1, 16, 16, 8], strides = [1, 1, 1, 1]} : vector<1x18x16x8xbf16> to vector<1x16x16x8xbf16>
    %14 = vector.shape_cast %13 : vector<1x16x16x8xbf16> to vector<256x8xbf16>
    %15 = vector.extract_strided_slice %5 {offsets = [0, 2, 0, 0], sizes = [1, 16, 16, 4], strides = [1, 1, 1, 1]} : vector<1x18x16x4xbf16> to vector<1x16x16x4xbf16>
    %16 = vector.shape_cast %15 : vector<1x16x16x4xbf16> to vector<256x4xbf16>
    %17 = vector.extract_strided_slice %6 {offsets = [0, 2, 0, 0], sizes = [1, 16, 16, 8], strides = [1, 1, 1, 1]} : vector<1x18x16x8xbf16> to vector<1x16x16x8xbf16>
    %18 = vector.shape_cast %17 : vector<1x16x16x8xbf16> to vector<256x8xbf16>
    %19 = vector.extract_strided_slice %3 {offsets = [0, 0, 8, 0], sizes = [1, 18, 16, 4], strides = [1, 1, 1, 1]} : vector<1x18x32x4xbf16> to vector<1x18x16x4xbf16>
    %20 = vector.extract_strided_slice %4 {offsets = [0, 0, 8, 0], sizes = [1, 18, 16, 8], strides = [1, 1, 1, 1]} : vector<1x18x32x8xbf16> to vector<1x18x16x8xbf16>
    %21 = vector.extract_strided_slice %19 {offsets = [0, 0, 0, 0], sizes = [1, 16, 16, 4], strides = [1, 1, 1, 1]} : vector<1x18x16x4xbf16> to vector<1x16x16x4xbf16>
    %22 = vector.shape_cast %21 : vector<1x16x16x4xbf16> to vector<256x4xbf16>
    %23 = vector.extract_strided_slice %20 {offsets = [0, 0, 0, 0], sizes = [1, 16, 16, 8], strides = [1, 1, 1, 1]} : vector<1x18x16x8xbf16> to vector<1x16x16x8xbf16>
    %24 = vector.shape_cast %23 : vector<1x16x16x8xbf16> to vector<256x8xbf16>
    %25 = vector.extract_strided_slice %19 {offsets = [0, 1, 0, 0], sizes = [1, 16, 16, 4], strides = [1, 1, 1, 1]} : vector<1x18x16x4xbf16> to vector<1x16x16x4xbf16>
    %26 = vector.shape_cast %25 : vector<1x16x16x4xbf16> to vector<256x4xbf16>
    %27 = vector.extract_strided_slice %20 {offsets = [0, 1, 0, 0], sizes = [1, 16, 16, 8], strides = [1, 1, 1, 1]} : vector<1x18x16x8xbf16> to vector<1x16x16x8xbf16>
    %28 = vector.shape_cast %27 : vector<1x16x16x8xbf16> to vector<256x8xbf16>
    %29 = vector.extract_strided_slice %19 {offsets = [0, 2, 0, 0], sizes = [1, 16, 16, 4], strides = [1, 1, 1, 1]} : vector<1x18x16x4xbf16> to vector<1x16x16x4xbf16>
    %30 = vector.shape_cast %29 : vector<1x16x16x4xbf16> to vector<256x4xbf16>
    %31 = vector.extract_strided_slice %20 {offsets = [0, 2, 0, 0], sizes = [1, 16, 16, 8], strides = [1, 1, 1, 1]} : vector<1x18x16x8xbf16> to vector<1x16x16x8xbf16>
    %32 = vector.shape_cast %31 : vector<1x16x16x8xbf16> to vector<256x8xbf16>
    %33 = vector.extract_strided_slice %3 {offsets = [0, 0, 9, 0], sizes = [1, 18, 16, 4], strides = [1, 1, 1, 1]} : vector<1x18x32x4xbf16> to vector<1x18x16x4xbf16>
    %34 = vector.extract_strided_slice %4 {offsets = [0, 0, 9, 0], sizes = [1, 18, 16, 8], strides = [1, 1, 1, 1]} : vector<1x18x32x8xbf16> to vector<1x18x16x8xbf16>
    %35 = vector.extract_strided_slice %33 {offsets = [0, 0, 0, 0], sizes = [1, 16, 16, 4], strides = [1, 1, 1, 1]} : vector<1x18x16x4xbf16> to vector<1x16x16x4xbf16>
    %36 = vector.shape_cast %35 : vector<1x16x16x4xbf16> to vector<256x4xbf16>
    %37 = vector.extract_strided_slice %34 {offsets = [0, 0, 0, 0], sizes = [1, 16, 16, 8], strides = [1, 1, 1, 1]} : vector<1x18x16x8xbf16> to vector<1x16x16x8xbf16>
    %38 = vector.shape_cast %37 : vector<1x16x16x8xbf16> to vector<256x8xbf16>
    %39 = vector.extract_strided_slice %33 {offsets = [0, 1, 0, 0], sizes = [1, 16, 16, 4], strides = [1, 1, 1, 1]} : vector<1x18x16x4xbf16> to vector<1x16x16x4xbf16>
    %40 = vector.shape_cast %39 : vector<1x16x16x4xbf16> to vector<256x4xbf16>
    %41 = vector.extract_strided_slice %34 {offsets = [0, 1, 0, 0], sizes = [1, 16, 16, 8], strides = [1, 1, 1, 1]} : vector<1x18x16x8xbf16> to vector<1x16x16x8xbf16>
    %42 = vector.shape_cast %41 : vector<1x16x16x8xbf16> to vector<256x8xbf16>
    %43 = vector.extract_strided_slice %33 {offsets = [0, 2, 0, 0], sizes = [1, 16, 16, 4], strides = [1, 1, 1, 1]} : vector<1x18x16x4xbf16> to vector<1x16x16x4xbf16>
    %44 = vector.shape_cast %43 : vector<1x16x16x4xbf16> to vector<256x4xbf16>
    %45 = vector.extract_strided_slice %34 {offsets = [0, 2, 0, 0], sizes = [1, 16, 16, 8], strides = [1, 1, 1, 1]} : vector<1x18x16x8xbf16> to vector<1x16x16x8xbf16>
    %46 = vector.shape_cast %45 : vector<1x16x16x8xbf16> to vector<256x8xbf16>
    %47 = tpu.concatenate %8, %10, %12, %14, %16, %18, %22, %24, %26, %28, %30, %32, %36, %38, %40, %42 in 1 : vector<256x4xbf16>, vector<256x8xbf16>, vector<256x4xbf16>, vector<256x8xbf16>, vector<256x4xbf16>, vector<256x8xbf16>, vector<256x4xbf16>, vector<256x8xbf16>, vector<256x4xbf16>, vector<256x8xbf16>, vector<256x4xbf16>, vector<256x8xbf16>, vector<256x4xbf16>, vector<256x8xbf16>, vector<256x4xbf16>, vector<256x8xbf16> -> vector<256x96xbf16>
    %48 = tpu.concatenate %44, %46 in 1 : vector<256x4xbf16>, vector<256x8xbf16> -> vector<256x12xbf16>
    %49 = tpu.concatenate %47, %48 in 1 : vector<256x96xbf16>, vector<256x12xbf16> -> vector<256x108xbf16>
    %c0_8 = arith.constant 0 : index
    %c0_9 = arith.constant 0 : index
    %50 = vector.load %arg4[%c0_8, %c0_9] : memref<108x128xbf16, #tpu.memory_space<vmem>>, vector<108x128xbf16>
    %cst = arith.constant dense<0.000000e+00> : vector<256x128xf32>
    %51 = tpu.matmul %49, %50, %cst {dimension_numbers = #tpu.dot_dimension_numbers<[1], [0], [0], [1], [0, 0, 1, 1], [], []>} : vector<256x108xbf16>, vector<108x128xbf16>, vector<256x128xf32> -> vector<256x128xf32>
    %c0_10 = arith.constant 0 : index
    %c0_11 = arith.constant 0 : index
    %52 = vector.load %arg5[%c0_10, %c0_11] : memref<1x128xf32, #tpu.memory_space<vmem>>, vector<1x128xf32>
    %53 = vector.broadcast %52 : vector<1x128xf32> to vector<256x128xf32>
    %54 = arith.addf %51, %53 : vector<256x128xf32>
    %c0_12 = arith.constant 0 : index
    %c0_13 = arith.constant 0 : index
    %55 = vector.load %arg11[%c0_12, %c0_13] : memref<256x32xf32, #tpu.memory_space<vmem>>, vector<256x32xf32>
    %56 = arith.negf %54 : vector<256x128xf32>
    %57 = math.exp %56 : vector<256x128xf32>
    %cst_14 = arith.constant 1.000000e+00 : f32
    %58 = vector.broadcast %cst_14 : f32 to vector<256x128xf32>
    %59 = arith.addf %58, %57 : vector<256x128xf32>
    %60 = arith.divf %58, %59 : vector<256x128xf32>
    %61 = math.tanh %54 : vector<256x128xf32>
    %62 = vector.extract_strided_slice %60 {offsets = [0, 0], sizes = [256, 32], strides = [1, 1]} : vector<256x128xf32> to vector<256x32xf32>
    %63 = vector.extract_strided_slice %60 {offsets = [0, 32], sizes = [256, 32], strides = [1, 1]} : vector<256x128xf32> to vector<256x32xf32>
    %64 = vector.extract_strided_slice %61 {offsets = [0, 64], sizes = [256, 32], strides = [1, 1]} : vector<256x128xf32> to vector<256x32xf32>
    %65 = vector.extract_strided_slice %60 {offsets = [0, 96], sizes = [256, 32], strides = [1, 1]} : vector<256x128xf32> to vector<256x32xf32>
    %66 = arith.mulf %63, %55 : vector<256x32xf32>
    %67 = arith.mulf %62, %64 : vector<256x32xf32>
    %68 = arith.addf %66, %67 : vector<256x32xf32>
    %69 = math.tanh %68 : vector<256x32xf32>
    %70 = arith.mulf %65, %69 : vector<256x32xf32>
    %c0_15 = arith.constant 0 : index
    %c0_16 = arith.constant 0 : index
    %71 = vector.load %arg11[%c0_15, %c0_16] : memref<256x32xf32, #tpu.memory_space<vmem>>, vector<256x32xf32>
    tpu.vector_store %arg11[%c0_15, %c0_16], %68 {strides = array<i32>} : memref<256x32xf32, #tpu.memory_space<vmem>>, vector<256x32xf32>,
    %72 = vector.extract_strided_slice %70 {offsets = [0, 0], sizes = [256, 8], strides = [1, 1]} : vector<256x32xf32> to vector<256x8xf32>
    %73 = vector.shape_cast %72 : vector<256x8xf32> to vector<1x16x16x8xf32>
    %74 = arith.truncf %73 : vector<1x16x16x8xf32> to vector<1x16x16x8xbf16>
    %c0_17 = arith.constant 0 : index
    %c1 = arith.constant 1 : index
    %c8 = arith.constant 8 : index
    %c0_18 = arith.constant 0 : index
    %75 = vector.load %arg10[%c0_17, %c1, %c8, %c0_18] : memref<1x18x32x8xbf16, #tpu.memory_space<vmem>>, vector<1x16x16x8xbf16>
    tpu.vector_store %arg10[%c0_17, %c1, %c8, %c0_18], %74 {strides = array<i32>} : memref<1x18x32x8xbf16, #tpu.memory_space<vmem>>, vector<1x16x16x8xbf16>,
    %c0_19 = arith.constant 0 : index
    %c0_20 = arith.constant 0 : index
    %c0_21 = arith.constant 0 : index
    %c0_22 = arith.constant 0 : index
    %76 = vector.load %arg10[%c0_19, %c0_20, %c0_21, %c0_22] : memref<1x18x32x8xbf16, #tpu.memory_space<vmem>>, vector<1x18x32x8xbf16>
    %c0_23 = arith.constant 0 : index
    %c0_24 = arith.constant 0 : index
    %c0_25 = arith.constant 0 : index
    %c0_26 = arith.constant 0 : index
    %77 = vector.load %arg12[%c0_23, %c0_24, %c0_25, %c0_26] : memref<1x18x32x8xbf16, #tpu.memory_space<vmem>>, vector<1x18x32x8xbf16>
    %78 = vector.extract_strided_slice %76 {offsets = [0, 0, 7, 0], sizes = [1, 18, 16, 8], strides = [1, 1, 1, 1]} : vector<1x18x32x8xbf16> to vector<1x18x16x8xbf16>
    %79 = vector.extract_strided_slice %77 {offsets = [0, 0, 7, 0], sizes = [1, 18, 16, 8], strides = [1, 1, 1, 1]} : vector<1x18x32x8xbf16> to vector<1x18x16x8xbf16>
    %80 = vector.extract_strided_slice %78 {offsets = [0, 0, 0, 0], sizes = [1, 16, 16, 8], strides = [1, 1, 1, 1]} : vector<1x18x16x8xbf16> to vector<1x16x16x8xbf16>
    %81 = vector.shape_cast %80 : vector<1x16x16x8xbf16> to vector<256x8xbf16>
    %82 = vector.extract_strided_slice %79 {offsets = [0, 0, 0, 0], sizes = [1, 16, 16, 8], strides = [1, 1, 1, 1]} : vector<1x18x16x8xbf16> to vector<1x16x16x8xbf16>
    %83 = vector.shape_cast %82 : vector<1x16x16x8xbf16> to vector<256x8xbf16>
    %84 = vector.extract_strided_slice %78 {offsets = [0, 1, 0, 0], sizes = [1, 16, 16, 8], strides = [1, 1, 1, 1]} : vector<1x18x16x8xbf16> to vector<1x16x16x8xbf16>
    %85 = vector.shape_cast %84 : vector<1x16x16x8xbf16> to vector<256x8xbf16>
    %86 = vector.extract_strided_slice %79 {offsets = [0, 1, 0, 0], sizes = [1, 16, 16, 8], strides = [1, 1, 1, 1]} : vector<1x18x16x8xbf16> to vector<1x16x16x8xbf16>
    %87 = vector.shape_cast %86 : vector<1x16x16x8xbf16> to vector<256x8xbf16>
    %88 = vector.extract_strided_slice %78 {offsets = [0, 2, 0, 0], sizes = [1, 16, 16, 8], strides = [1, 1, 1, 1]} : vector<1x18x16x8xbf16> to vector<1x16x16x8xbf16>
    %89 = vector.shape_cast %88 : vector<1x16x16x8xbf16> to vector<256x8xbf16>
    %90 = vector.extract_strided_slice %79 {offsets = [0, 2, 0, 0], sizes = [1, 16, 16, 8], strides = [1, 1, 1, 1]} : vector<1x18x16x8xbf16> to vector<1x16x16x8xbf16>
    %91 = vector.shape_cast %90 : vector<1x16x16x8xbf16> to vector<256x8xbf16>
    %92 = vector.extract_strided_slice %76 {offsets = [0, 0, 8, 0], sizes = [1, 18, 16, 8], strides = [1, 1, 1, 1]} : vector<1x18x32x8xbf16> to vector<1x18x16x8xbf16>
    %93 = vector.extract_strided_slice %77 {offsets = [0, 0, 8, 0], sizes = [1, 18, 16, 8], strides = [1, 1, 1, 1]} : vector<1x18x32x8xbf16> to vector<1x18x16x8xbf16>
    %94 = vector.extract_strided_slice %92 {offsets = [0, 0, 0, 0], sizes = [1, 16, 16, 8], strides = [1, 1, 1, 1]} : vector<1x18x16x8xbf16> to vector<1x16x16x8xbf16>
    %95 = vector.shape_cast %94 : vector<1x16x16x8xbf16> to vector<256x8xbf16>
    %96 = vector.extract_strided_slice %93 {offsets = [0, 0, 0, 0], sizes = [1, 16, 16, 8], strides = [1, 1, 1, 1]} : vector<1x18x16x8xbf16> to vector<1x16x16x8xbf16>
    %97 = vector.shape_cast %96 : vector<1x16x16x8xbf16> to vector<256x8xbf16>
    %98 = vector.extract_strided_slice %92 {offsets = [0, 1, 0, 0], sizes = [1, 16, 16, 8], strides = [1, 1, 1, 1]} : vector<1x18x16x8xbf16> to vector<1x16x16x8xbf16>
    %99 = vector.shape_cast %98 : vector<1x16x16x8xbf16> to vector<256x8xbf16>
    %100 = vector.extract_strided_slice %93 {offsets = [0, 1, 0, 0], sizes = [1, 16, 16, 8], strides = [1, 1, 1, 1]} : vector<1x18x16x8xbf16> to vector<1x16x16x8xbf16>
    %101 = vector.shape_cast %100 : vector<1x16x16x8xbf16> to vector<256x8xbf16>
    %102 = vector.extract_strided_slice %92 {offsets = [0, 2, 0, 0], sizes = [1, 16, 16, 8], strides = [1, 1, 1, 1]} : vector<1x18x16x8xbf16> to vector<1x16x16x8xbf16>
    %103 = vector.shape_cast %102 : vector<1x16x16x8xbf16> to vector<256x8xbf16>
    %104 = vector.extract_strided_slice %93 {offsets = [0, 2, 0, 0], sizes = [1, 16, 16, 8], strides = [1, 1, 1, 1]} : vector<1x18x16x8xbf16> to vector<1x16x16x8xbf16>
    %105 = vector.shape_cast %104 : vector<1x16x16x8xbf16> to vector<256x8xbf16>
    %106 = vector.extract_strided_slice %76 {offsets = [0, 0, 9, 0], sizes = [1, 18, 16, 8], strides = [1, 1, 1, 1]} : vector<1x18x32x8xbf16> to vector<1x18x16x8xbf16>
    %107 = vector.extract_strided_slice %77 {offsets = [0, 0, 9, 0], sizes = [1, 18, 16, 8], strides = [1, 1, 1, 1]} : vector<1x18x32x8xbf16> to vector<1x18x16x8xbf16>
    %108 = vector.extract_strided_slice %106 {offsets = [0, 0, 0, 0], sizes = [1, 16, 16, 8], strides = [1, 1, 1, 1]} : vector<1x18x16x8xbf16> to vector<1x16x16x8xbf16>
    %109 = vector.shape_cast %108 : vector<1x16x16x8xbf16> to vector<256x8xbf16>
    %110 = vector.extract_strided_slice %107 {offsets = [0, 0, 0, 0], sizes = [1, 16, 16, 8], strides = [1, 1, 1, 1]} : vector<1x18x16x8xbf16> to vector<1x16x16x8xbf16>
    %111 = vector.shape_cast %110 : vector<1x16x16x8xbf16> to vector<256x8xbf16>
    %112 = vector.extract_strided_slice %106 {offsets = [0, 1, 0, 0], sizes = [1, 16, 16, 8], strides = [1, 1, 1, 1]} : vector<1x18x16x8xbf16> to vector<1x16x16x8xbf16>
    %113 = vector.shape_cast %112 : vector<1x16x16x8xbf16> to vector<256x8xbf16>
    %114 = vector.extract_strided_slice %107 {offsets = [0, 1, 0, 0], sizes = [1, 16, 16, 8], strides = [1, 1, 1, 1]} : vector<1x18x16x8xbf16> to vector<1x16x16x8xbf16>
    %115 = vector.shape_cast %114 : vector<1x16x16x8xbf16> to vector<256x8xbf16>
    %116 = vector.extract_strided_slice %106 {offsets = [0, 2, 0, 0], sizes = [1, 16, 16, 8], strides = [1, 1, 1, 1]} : vector<1x18x16x8xbf16> to vector<1x16x16x8xbf16>
    %117 = vector.shape_cast %116 : vector<1x16x16x8xbf16> to vector<256x8xbf16>
    %118 = vector.extract_strided_slice %107 {offsets = [0, 2, 0, 0], sizes = [1, 16, 16, 8], strides = [1, 1, 1, 1]} : vector<1x18x16x8xbf16> to vector<1x16x16x8xbf16>
    %119 = vector.shape_cast %118 : vector<1x16x16x8xbf16> to vector<256x8xbf16>
    %120 = tpu.concatenate %81, %83, %85, %87, %89, %91, %95, %97, %99, %101, %103, %105, %109, %111, %113, %115 in 1 : vector<256x8xbf16>, vector<256x8xbf16>, vector<256x8xbf16>, vector<256x8xbf16>, vector<256x8xbf16>, vector<256x8xbf16>, vector<256x8xbf16>, vector<256x8xbf16>, vector<256x8xbf16>, vector<256x8xbf16>, vector<256x8xbf16>, vector<256x8xbf16>, vector<256x8xbf16>, vector<256x8xbf16>, vector<256x8xbf16>, vector<256x8xbf16> -> vector<256x128xbf16>
    %121 = tpu.concatenate %117, %119 in 1 : vector<256x8xbf16>, vector<256x8xbf16> -> vector<256x16xbf16>
    %122 = tpu.concatenate %120, %121 in 1 : vector<256x128xbf16>, vector<256x16xbf16> -> vector<256x144xbf16>
    %c0_27 = arith.constant 0 : index
    %c0_28 = arith.constant 0 : index
    %123 = vector.load %arg6[%c0_27, %c0_28] : memref<144x128xbf16, #tpu.memory_space<vmem>>, vector<144x128xbf16>
    %cst_29 = arith.constant dense<0.000000e+00> : vector<256x128xf32>
    %124 = tpu.matmul %122, %123, %cst_29 {dimension_numbers = #tpu.dot_dimension_numbers<[1], [0], [0], [1], [0, 0, 1, 1], [], []>} : vector<256x144xbf16>, vector<144x128xbf16>, vector<256x128xf32> -> vector<256x128xf32>
    %c0_30 = arith.constant 0 : index
    %c0_31 = arith.constant 0 : index
    %125 = vector.load %arg7[%c0_30, %c0_31] : memref<1x128xf32, #tpu.memory_space<vmem>>, vector<1x128xf32>
    %126 = vector.broadcast %125 : vector<1x128xf32> to vector<256x128xf32>
    %127 = arith.addf %124, %126 : vector<256x128xf32>
    %c0_32 = arith.constant 0 : index
    %c0_33 = arith.constant 0 : index
    %128 = vector.load %arg13[%c0_32, %c0_33] : memref<256x32xf32, #tpu.memory_space<vmem>>, vector<256x32xf32>
    %129 = arith.negf %127 : vector<256x128xf32>
    %130 = math.exp %129 : vector<256x128xf32>
    %cst_34 = arith.constant 1.000000e+00 : f32
    %131 = vector.broadcast %cst_34 : f32 to vector<256x128xf32>
    %132 = arith.addf %131, %130 : vector<256x128xf32>
    %133 = arith.divf %131, %132 : vector<256x128xf32>
    %134 = math.tanh %127 : vector<256x128xf32>
    %135 = vector.extract_strided_slice %133 {offsets = [0, 0], sizes = [256, 32], strides = [1, 1]} : vector<256x128xf32> to vector<256x32xf32>
    %136 = vector.extract_strided_slice %133 {offsets = [0, 32], sizes = [256, 32], strides = [1, 1]} : vector<256x128xf32> to vector<256x32xf32>
    %137 = vector.extract_strided_slice %134 {offsets = [0, 64], sizes = [256, 32], strides = [1, 1]} : vector<256x128xf32> to vector<256x32xf32>
    %138 = vector.extract_strided_slice %133 {offsets = [0, 96], sizes = [256, 32], strides = [1, 1]} : vector<256x128xf32> to vector<256x32xf32>
    %139 = arith.mulf %136, %128 : vector<256x32xf32>
    %140 = arith.mulf %135, %137 : vector<256x32xf32>
    %141 = arith.addf %139, %140 : vector<256x32xf32>
    %142 = math.tanh %141 : vector<256x32xf32>
    %143 = arith.mulf %138, %142 : vector<256x32xf32>
    %c0_35 = arith.constant 0 : index
    %c0_36 = arith.constant 0 : index
    %144 = vector.load %arg13[%c0_35, %c0_36] : memref<256x32xf32, #tpu.memory_space<vmem>>, vector<256x32xf32>
    tpu.vector_store %arg13[%c0_35, %c0_36], %141 {strides = array<i32>} : memref<256x32xf32, #tpu.memory_space<vmem>>, vector<256x32xf32>,
    %145 = vector.extract_strided_slice %143 {offsets = [0, 0], sizes = [256, 8], strides = [1, 1]} : vector<256x32xf32> to vector<256x8xf32>
    %146 = vector.shape_cast %145 : vector<256x8xf32> to vector<1x16x16x8xf32>
    %147 = arith.truncf %146 : vector<1x16x16x8xf32> to vector<1x16x16x8xbf16>
    %c0_37 = arith.constant 0 : index
    %c1_38 = arith.constant 1 : index
    %c8_39 = arith.constant 8 : index
    %c0_40 = arith.constant 0 : index
    %148 = vector.load %arg12[%c0_37, %c1_38, %c8_39, %c0_40] : memref<1x18x32x8xbf16, #tpu.memory_space<vmem>>, vector<1x16x16x8xbf16>
    tpu.vector_store %arg12[%c0_37, %c1_38, %c8_39, %c0_40], %147 {strides = array<i32>} : memref<1x18x32x8xbf16, #tpu.memory_space<vmem>>, vector<1x16x16x8xbf16>,
    %149 = vector.shape_cast %143 : vector<256x32xf32> to vector<1x1x256x32xf32>
    %c0_41 = arith.constant 0 : index
    %c0_42 = arith.constant 0 : index
    %c0_43 = arith.constant 0 : index
    %c0_44 = arith.constant 0 : index
    %150 = vector.load %arg8[%c0_41, %c0_42, %c0_43, %c0_44] : memref<1x1x256x32xf32, #tpu.memory_space<vmem>>, vector<1x1x256x32xf32>
    tpu.vector_store %arg8[%c0_41, %c0_42, %c0_43, %c0_44], %149 {strides = array<i32>} : memref<1x1x256x32xf32, #tpu.memory_space<vmem>>, vector<1x1x256x32xf32>,
    %151 = vector.shape_cast %141 : vector<256x32xf32> to vector<1x256x32xf32>
    %c0_45 = arith.constant 0 : index
    %c0_46 = arith.constant 0 : index
    %c0_47 = arith.constant 0 : index
    %152 = vector.load %arg9[%c0_45, %c0_46, %c0_47] : memref<1x256x32xf32, #tpu.memory_space<vmem>>, vector<1x256x32xf32>
    tpu.vector_store %arg9[%c0_45, %c0_46, %c0_47], %151 {strides = array<i32>} : memref<1x256x32xf32, #tpu.memory_space<vmem>>, vector<1x256x32xf32>,
    return
  }
  func.func @transform_0(%arg0: i32, %arg1: i32, %arg2: memref<2xi32, #tpu.memory_space<smem>>) -> (i32, i32, i32, i32) {
    %c0_i32 = arith.constant 0 : i32
    %c0_i32_0 = arith.constant 0 : i32
    %c0_i32_1 = arith.constant 0 : i32
    %c0_i32_2 = arith.constant 0 : i32
    return %arg0, %c0_i32, %c0_i32_0, %c0_i32_1 : i32, i32, i32, i32
  }
  func.func @transform_1(%arg0: i32, %arg1: i32, %arg2: memref<2xi32, #tpu.memory_space<smem>>) -> (i32, i32) {
    %c0_i32 = arith.constant 0 : i32
    %c0_i32_0 = arith.constant 0 : i32
    %c0_i32_1 = arith.constant 0 : i32
    return %c0_i32, %c0_i32_0 : i32, i32
  }
  func.func @transform_2(%arg0: i32, %arg1: i32, %arg2: memref<2xi32, #tpu.memory_space<smem>>) -> (i32, i32) {
    %c0_i32 = arith.constant 0 : i32
    %c0_i32_0 = arith.constant 0 : i32
    %c0_i32_1 = arith.constant 0 : i32
    return %c0_i32, %c0_i32_0 : i32, i32
  }
  func.func @transform_3(%arg0: i32, %arg1: i32, %arg2: memref<2xi32, #tpu.memory_space<smem>>) -> (i32, i32) {
    %c0_i32 = arith.constant 0 : i32
    %c0_i32_0 = arith.constant 0 : i32
    %c0_i32_1 = arith.constant 0 : i32
    return %c0_i32, %c0_i32_0 : i32, i32
  }
  func.func @transform_4(%arg0: i32, %arg1: i32, %arg2: memref<2xi32, #tpu.memory_space<smem>>) -> (i32, i32) {
    %c0_i32 = arith.constant 0 : i32
    %c0_i32_0 = arith.constant 0 : i32
    %c0_i32_1 = arith.constant 0 : i32
    return %c0_i32, %c0_i32_0 : i32, i32
  }
  func.func @transform_5(%arg0: i32, %arg1: i32, %arg2: memref<2xi32, #tpu.memory_space<smem>>) -> (i32, i32, i32, i32) {
    %0 = arith.index_cast %arg1 : i32 to index
    %1 = memref.load %arg2[%0] : memref<2xi32, #tpu.memory_space<smem>>
    %c0_i32 = arith.constant 0 : i32
    %c0_i32_0 = arith.constant 0 : i32
    %c0_i32_1 = arith.constant 0 : i32
    return %1, %arg0, %c0_i32, %c0_i32_0 : i32, i32, i32, i32
  }
  func.func @transform_6(%arg0: i32, %arg1: i32, %arg2: memref<2xi32, #tpu.memory_space<smem>>) -> (i32, i32, i32) {
    %c0_i32 = arith.constant 0 : i32
    %c0_i32_0 = arith.constant 0 : i32
    %c0_i32_1 = arith.constant 0 : i32
    return %arg0, %c0_i32, %c0_i32_0 : i32, i32, i32
  }
}

</mosaic_0001>

<llo_original>
// kernel: tpu_custom_call.1
$region0: #{tpu_custom_call.1}
  #allocation0 [shape = 'u32[]', space=smem, size = 0x4, offset = 0x4, fixed_abs, tag = 'smem constant byte address 0x4 - core index']
  #allocation1 [shape = 'u32[144,128]{1,0:T(1,128)}', space=vmem, size = 0x12000, scoped, tag = 'internal scratch']
  #allocation2 [shape = 'bf16[1,18,32,8]{3,2,1,0:T(16,128)(2,1)}', space=vmem, size = 0x24000, scoped, tag = 'scratch operand']
  #allocation3 [shape = 'f32[256,32]{1,0:T(8,128)}', space=vmem, size = 0x20000, scoped, tag = 'scratch operand']
  #allocation4 [shape = 'bf16[1,18,32,8]{3,2,1,0:T(16,128)(2,1)}', space=vmem, size = 0x24000, scoped, tag = 'scratch operand']
  #allocation5 [shape = 'f32[256,32]{1,0:T(8,128)}', space=vmem, size = 0x20000, scoped, tag = 'scratch operand']
  #allocation6 [shape = 's32[1]{0}', space=sflag, size = 0x4, scoped, tag = 'scoped memory for tpu_custom_call.1']
  #allocation7 [shape = 'u8[512]{0}', space=smem, size = 0x200, scoped, tag = 'prefetched SMEM operand 0']
  %s0 = inlined_call_operand.vmem [shape: s32[2], index: 0, kind: input, shape index: {}]
  %s1 = inlined_call_operand.vmem [shape: bf16[2,18,32,4], index: 1, kind: input, shape index: {}]
  %s2 = inlined_call_operand.vmem [shape: bf16[108,128], index: 2, kind: input, shape index: {}]
  %s3 = inlined_call_operand.vmem [shape: f32[1,128], index: 3, kind: input, shape index: {}]
  %s4 = inlined_call_operand.vmem [shape: bf16[144,128], index: 4, kind: input, shape index: {}]
  %s5 = inlined_call_operand.vmem [shape: f32[1,128], index: 5, kind: input, shape index: {}]
  %s6 = inlined_call_operand.vmem [shape: f32[2,2,256,32], index: 6, kind: output, shape index: {0}]
  %s7 = inlined_call_operand.vmem [shape: f32[2,256,32], index: 7, kind: output, shape index: {1}]
  %8 = xla_tuple %s6, %s7
  %s9 = sld [smem:[#allocation0]]
  $region65: #{tpu_custom_call.1} parent=0
    _
  %s11 = ssub.s32 1, %s9
  %s12 = scalar_select 0, %s11, %s9
  %s13 = sshll.u32 %s0, 4
  %s14 = int_to_ptr.vmem [resolvable:$true] %s13
  %16 = dma.vmem_to_smem %s14, 16, [#allocation7], [#allocation6]
  %17 = dma.done [#allocation6], 16
  %18 = sfence
  loop: start=0, step=1, limit=6
  $region2: #{tpu_custom_call.1} parent=0 // loop_pre_header
    _
  $region3: #{tpu_custom_call.1} parent=0 // loop_header
    %s20 = sphi 0, %s24
    %p21 = scmp.ge.s32.totalorder %s20, 6
    %s27 = sphi 0, %s39
    %s28 = sphi 0, %s35
    %s29 = sphi 0, %s27
    %s30 = sphi 0, %s28
    %s31 = sphi 0, %s29
    %s32 = sphi 0, %s30
    %s42 = sphi 0, %s44
    %s45 = sphi 0, %s42
    %s46 = sphi 0, %s45
    %s62 = sphi 0, %s46
    %s66 = sphi 0, %s66
    %s68 = sphi 0, %s66
    %s69 = sphi 0, %s68
    %s83 = sphi 0, %s69
    %s87 = sphi 0, %s87
    %s89 = sphi 0, %s87
    %s90 = sphi 0, %s89
    %s104 = sphi 0, %s90
    %s108 = sphi 0, %s108
    %s110 = sphi 0, %s108
    %s111 = sphi 0, %s110
    %s125 = sphi 0, %s111
    %s129 = sphi 0, %s129
    %s131 = sphi 0, %s129
    %s132 = sphi 0, %s131
    %s146 = sphi 0, %s132
    %s156 = sphi 0, %s158
    %s159 = sphi 0, %s156
    %s160 = sphi 0, %s159
    %s176 = sphi 0, %s160
    %s182 = sphi 0, %s184
    %s185 = sphi 0, %s182
    %s186 = sphi 0, %s185
    %s202 = sphi 0, %s186
  $region4: #{tpu_custom_call.1} parent=0 // loop_header_branch
    %23 = sbr.rel (%p21) target = $region8
  $region5: #{tpu_custom_call.1} parent=0 // loop_body
    %s25 = ssub.s32 %s20, 1
    %s26 = ssub.s32 %s20, 2
    %s33 = sadd.s32 1, %s28
    %p34 = scmp.ge.s32.totalorder %s33, 2
    %s35 = scalar_select %p34, 0, %s33
    %s36 = sadd.s32 1, %s27
    %s37 = scalar_select %p34, %s36, %s27
    %p38 = scmp.ge.s32.totalorder %s37, 2
    %s39 = scalar_select %p38, 0, %s37
    %s40 = ssub.s32 %s27, %s39
    %p41 = scmp.eq.s32.totalorder %s40, 0
    %s43 = sadd.s32 %s42, 1
    %s44 = scalar_select %p41, %s42, %s43
    %p47 = pneg %p41
    %p48 = scmp.eq.s32.totalorder %s20, 3
    %p49 = por %p47, %p48
    %p50 = scmp.ne.s32.totalorder %s42, %s45
    %p51 = scmp.eq.s32.totalorder %s20, 0
    %p52 = por %p50, %p51
    %p53 = scmp.ne.s32.totalorder %s42, %s45
    %p54 = scmp.eq.s32.totalorder %s25, 3
    %p55 = por %p53, %p54
    %p56 = scmp.ne.s32.totalorder %s45, %s46
    %p57 = scmp.eq.s32.totalorder %s25, 0
    %p58 = por %p56, %p57
    %p59 = scmp.ne.s32.totalorder %s45, %s46
    %p60 = scmp.eq.s32.totalorder %s26, 3
    %p61 = por %p59, %p60
    %p63 = scmp.ne.s32.totalorder %s46, %s62
    %p64 = scmp.eq.s32.totalorder %s26, 0
    %p65 = por %p63, %p64
    %s67 = sadd.s32 %s66, 1
    %p70 = scmp.eq.s32.totalorder %s20, 3
    %p71 = scmp.ne.s32.totalorder %s66, %s68
    %p72 = scmp.eq.s32.totalorder %s20, 0
    %p73 = por %p71, %p72
    %p74 = scmp.ne.s32.totalorder %s66, %s68
    %p75 = scmp.eq.s32.totalorder %s25, 3
    %p76 = por %p74, %p75
    %p77 = scmp.ne.s32.totalorder %s68, %s69
    %p78 = scmp.eq.s32.totalorder %s25, 0
    %p79 = por %p77, %p78
    %p80 = scmp.ne.s32.totalorder %s68, %s69
    %p81 = scmp.eq.s32.totalorder %s26, 3
    %p82 = por %p80, %p81
    %p84 = scmp.ne.s32.totalorder %s69, %s83
    %p85 = scmp.eq.s32.totalorder %s26, 0
    %p86 = por %p84, %p85
    %s88 = sadd.s32 %s87, 1
    %p91 = scmp.eq.s32.totalorder %s20, 3
    %p92 = scmp.ne.s32.totalorder %s87, %s89
    %p93 = scmp.eq.s32.totalorder %s20, 0
    %p94 = por %p92, %p93
    %p95 = scmp.ne.s32.totalorder %s87, %s89
    %p96 = scmp.eq.s32.totalorder %s25, 3
    %p97 = por %p95, %p96
    %p98 = scmp.ne.s32.totalorder %s89, %s90
    %p99 = scmp.eq.s32.totalorder %s25, 0
    %p100 = por %p98, %p99
    %p101 = scmp.ne.s32.totalorder %s89, %s90
    %p102 = scmp.eq.s32.totalorder %s26, 3
    %p103 = por %p101, %p102
    %p105 = scmp.ne.s32.totalorder %s90, %s104
    %p106 = scmp.eq.s32.totalorder %s26, 0
    %p107 = por %p105, %p106
    %s109 = sadd.s32 %s108, 1
    %p112 = scmp.eq.s32.totalorder %s20, 3
    %p113 = scmp.ne.s32.totalorder %s108, %s110
    %p114 = scmp.eq.s32.totalorder %s20, 0
    %p115 = por %p113, %p114
    %p116 = scmp.ne.s32.totalorder %s108, %s110
    %p117 = scmp.eq.s32.totalorder %s25, 3
    %p118 = por %p116, %p117
    %p119 = scmp.ne.s32.totalorder %s110, %s111
    %p120 = scmp.eq.s32.totalorder %s25, 0
    %p121 = por %p119, %p120
    %p122 = scmp.ne.s32.totalorder %s110, %s111
    %p123 = scmp.eq.s32.totalorder %s26, 3
    %p124 = por %p122, %p123
    %p126 = scmp.ne.s32.totalorder %s111, %s125
    %p127 = scmp.eq.s32.totalorder %s26, 0
    %p128 = por %p126, %p127
    %s130 = sadd.s32 %s129, 1
    %p133 = scmp.eq.s32.totalorder %s20, 3
    %p134 = scmp.ne.s32.totalorder %s129, %s131
    %p135 = scmp.eq.s32.totalorder %s20, 0
    %p136 = por %p134, %p135
    %p137 = scmp.ne.s32.totalorder %s129, %s131
    %p138 = scmp.eq.s32.totalorder %s25, 3
    %p139 = por %p137, %p138
    %p140 = scmp.ne.s32.totalorder %s131, %s132
    %p141 = scmp.eq.s32.totalorder %s25, 0
    %p142 = por %p140, %p141
    %p143 = scmp.ne.s32.totalorder %s131, %s132
    %p144 = scmp.eq.s32.totalorder %s26, 3
    %p145 = por %p143, %p144
    %p147 = scmp.ne.s32.totalorder %s132, %s146
    %p148 = scmp.eq.s32.totalorder %s26, 0
    %p149 = por %p147, %p148
    %s150 = sld [smem:[#allocation7 + %s28]]
    %s151 = sld [smem:[#allocation7 + %s35]]
    %s152 = ssub.s32 %s150, %s151
    %s153 = ssub.s32 %s27, %s39
    %s154 = sor.u32 %s152, %s153
    %p155 = scmp.eq.s32.totalorder %s154, 0
    %s157 = sadd.s32 %s156, 1
    %s158 = scalar_select %p155, %s156, %s157
    %p161 = pneg %p155
    %p162 = scmp.eq.s32.totalorder %s20, 3
    %p163 = por %p161, %p162
    %p164 = scmp.ne.s32.totalorder %s156, %s159
    %p165 = scmp.eq.s32.totalorder %s20, 0
    %p166 = por %p164, %p165
    %p167 = scmp.ne.s32.totalorder %s156, %s159
    %p168 = scmp.eq.s32.totalorder %s25, 3
    %p169 = por %p167, %p168
    %p170 = scmp.ne.s32.totalorder %s159, %s160
    %p171 = scmp.eq.s32.totalorder %s25, 0
    %p172 = por %p170, %p171
    %p173 = scmp.ne.s32.totalorder %s159, %s160
    %p174 = scmp.eq.s32.totalorder %s26, 3
    %p175 = por %p173, %p174
    %p177 = scmp.ne.s32.totalorder %s160, %s176
    %p178 = scmp.eq.s32.totalorder %s26, 0
    %p179 = por %p177, %p178
    %s180 = ssub.s32 %s27, %s39
    %p181 = scmp.eq.s32.totalorder %s180, 0
    %s183 = sadd.s32 %s182, 1
    %s184 = scalar_select %p181, %s182, %s183
    %p187 = pneg %p181
    %p188 = scmp.eq.s32.totalorder %s20, 3
    %p189 = por %p187, %p188
    %p190 = scmp.ne.s32.totalorder %s182, %s185
    %p191 = scmp.eq.s32.totalorder %s20, 0
    %p192 = por %p190, %p191
    %p193 = scmp.ne.s32.totalorder %s182, %s185
    %p194 = scmp.eq.s32.totalorder %s25, 3
    %p195 = por %p193, %p194
    %p196 = scmp.ne.s32.totalorder %s185, %s186
    %p197 = scmp.eq.s32.totalorder %s25, 0
    %p198 = por %p196, %p197
    %p199 = scmp.ne.s32.totalorder %s185, %s186
    %p200 = scmp.eq.s32.totalorder %s26, 3
    %p201 = por %p199, %p200
    %p203 = scmp.ne.s32.totalorder %s186, %s202
    %p204 = scmp.eq.s32.totalorder %s26, 0
    %p205 = por %p203, %p204
    %p206 = scmp.le.s32.totalorder 1, %s20
    %p207 = scmp.lt.s32.totalorder %s20, 5
    %p208 = pnand %p206, %p207
    %p209 = pneg %p208
    // Predicated region
    $region9: #{tpu_custom_call.1} parent=5 // pred_check
      _
    $region10: #{tpu_custom_call.1} parent=5 // pred_check_branch
      %211 = sbr.rel (%p208) target = $region12
    $region11: #{tpu_custom_call.1} parent=5 // pred_region
      %s212 = ssub.s32 %s20, 1
      // Predicated region
      $region13: #{tpu_custom_call.1} parent=11 // pred_check
        %p213 = pneg %p79
      $region14: #{tpu_custom_call.1} parent=11 // pred_check_branch
        %215 = sbr.rel (%p213) target = $region16
      $region15: #{tpu_custom_call.1} parent=11 // pred_region
        _
      $region16: #{tpu_custom_call.1} parent=11 // pred_fallthru
        _
      // Predicated region
      $region17: #{tpu_custom_call.1} parent=11 // pred_check
        %p216 = pneg %p100
      $region18: #{tpu_custom_call.1} parent=11 // pred_check_branch
        %218 = sbr.rel (%p216) target = $region20
      $region19: #{tpu_custom_call.1} parent=11 // pred_region
        _
      $region20: #{tpu_custom_call.1} parent=11 // pred_fallthru
        _
      // Predicated region
      $region21: #{tpu_custom_call.1} parent=11 // pred_check
        %p219 = pneg %p121
      $region22: #{tpu_custom_call.1} parent=11 // pred_check_branch
        %221 = sbr.rel (%p219) target = $region24
      $region23: #{tpu_custom_call.1} parent=11 // pred_region
        _
      $region24: #{tpu_custom_call.1} parent=11 // pred_fallthru
        _
      // Predicated region
      $region25: #{tpu_custom_call.1} parent=11 // pred_check
        %p222 = pneg %p142
      $region26: #{tpu_custom_call.1} parent=11 // pred_check_branch
        %224 = sbr.rel (%p222) target = $region28
      $region27: #{tpu_custom_call.1} parent=11 // pred_region
        _
      $region28: #{tpu_custom_call.1} parent=11 // pred_fallthru
        _
    $region12: #{tpu_custom_call.1} parent=5 // pred_fallthru
      _
    %p225 = scmp.lt.s32.totalorder %s20, 4
    // Predicated region
    $region29: #{tpu_custom_call.1} parent=5 // pred_check
      %p226 = pneg %p225
    $region30: #{tpu_custom_call.1} parent=5 // pred_check_branch
      %228 = sbr.rel (%p226) target = $region32
    $region31: #{tpu_custom_call.1} parent=5 // pred_region
      // Predicated region
      $region33: #{tpu_custom_call.1} parent=31 // pred_check
        %p229 = pneg %p52
      $region34: #{tpu_custom_call.1} parent=31 // pred_check_branch
        %231 = sbr.rel (%p229) target = $region36
      $region35: #{tpu_custom_call.1} parent=31 // pred_region
        %p232 = scmp.lt.s32.totalorder %s27, 1
        %s233 = scalar_select %p232, %s27, 1
        %s234 = smul.addr %s233, 72
        %s235 = smul.addr %s234, 4
        %s236 = scalar_lea.vmem %s1, %s235
      $region36: #{tpu_custom_call.1} parent=31 // pred_fallthru
        _
    $region32: #{tpu_custom_call.1} parent=5 // pred_fallthru
      _
    %p237 = scmp.le.s32.totalorder 1, %s20
    %p238 = scmp.lt.s32.totalorder %s20, 5
    %p239 = pnand %p237, %p238
    %p240 = pneg %p239
    // Predicated region
    $region37: #{tpu_custom_call.1} parent=5 // pred_check
      _
    $region38: #{tpu_custom_call.1} parent=5 // pred_check_branch
      %242 = sbr.rel (%p239) target = $region40
    $region39: #{tpu_custom_call.1} parent=5 // pred_region
      %s243 = ssub.s32 %s20, 1
      %p244 = scmp.lt.s32.totalorder %s29, 1
      %s245 = scalar_select %p244, %s29, 1
      %s246 = smul.addr %s245, 72
      %s247 = smul.addr %s246, 4
      %s248 = scalar_lea.vmem %s1, %s247
      %p249 = pneg %p58
      %p250 = pneg %p55
      %p251 = pneg %p79
      %p252 = pneg %p76
      %p253 = pneg %p100
      %p254 = pneg %p97
      %p255 = pneg %p121
      %p256 = pneg %p118
      %p257 = pneg %p142
      %p258 = pneg %p139
      %p259 = pneg %p172
      %p260 = pneg %p169
      %s261 = sld [smem:[#allocation7 + %s30]]
      %p262 = scmp.lt.s32.totalorder %s261, 1
      %s263 = scalar_select %p262, %s261, 1
      %p264 = scmp.lt.s32.totalorder %s29, 1
      %s265 = scalar_select %p264, %s29, 1
      %s266 = smul.addr %s265, 32
      %s267 = smul.addr %s263, 64
      %s268 = sadd.s32 %s266, %s267
      %s269 = smul.addr %s268, 8
      %s270 = scalar_lea.vmem %s6, %s269
      %p271 = pneg %p198
      %p272 = pneg %p195
      %p273 = scmp.lt.s32.totalorder %s29, 1
      %s274 = scalar_select %p273, %s29, 1
      %s275 = smul.addr %s274, 32
      %s276 = smul.addr %s275, 8
      %s277 = scalar_lea.vmem %s7, %s276
      %p278 = scmp.lt.s32.totalorder %s29, 1
      %s279 = scalar_select %p278, %s29, 1
      %s280 = smul.addr %s279, 72
      %s281 = smul.addr %s280, 4
      %s282 = scalar_lea.vmem %s1, %s281
      %s283 = sld [smem:[#allocation7 + %s30]]
      %p284 = scmp.lt.s32.totalorder %s283, 1
      %s285 = scalar_select %p284, %s283, 1
      %p286 = scmp.lt.s32.totalorder %s29, 1
      %s287 = scalar_select %p286, %s29, 1
      %s288 = smul.addr %s287, 32
      %s289 = smul.addr %s285, 64
      %s290 = sadd.s32 %s288, %s289
      %s291 = smul.addr %s290, 8
      %s292 = scalar_lea.vmem %s6, %s291
      %s293 = sld [smem:[#allocation7 + %s30]]
      %p294 = scmp.lt.s32.totalorder %s29, 1
      %s295 = scalar_select %p294, %s29, 1
      %s296 = smul.addr %s295, 32
      %s297 = smul.addr %s296, 8
      %s298 = scalar_lea.vmem %s7, %s297
      %p300 = scmp.eq.s32.totalorder %s30, 0
      // Predicated region
      $region41: #{tpu_custom_call.1} parent=39 // pred_check
        %p301 = pneg %p300
      $region42: #{tpu_custom_call.1} parent=39 // pred_check_branch
        %303 = sbr.rel (%p301) target = $region44
      $region43: #{tpu_custom_call.1} parent=39 // pred_region
        %vm304 = vcmask 64512
        %305 = vst.msk [vmem:[#allocation2] sm:$0xff] %vm304, 0
        %306 = vst.msk [vmem:[#allocation2 + $0x8] sm:$0xff] %vm304, 0
        %307 = vst.msk [vmem:[#allocation2 + $0x10] sm:$0xff] %vm304, 0
        %308 = vst.msk [vmem:[#allocation2 + $0x18] sm:$0xff] %vm304, 0
        %309 = vst.msk [vmem:[#allocation2 + $0x20] sm:$0xff] %vm304, 0
        %310 = vst.msk [vmem:[#allocation2 + $0x28] sm:$0xff] %vm304, 0
        %311 = vst.msk [vmem:[#allocation2 + $0x30] sm:$0xff] %vm304, 0
        %312 = vst.msk [vmem:[#allocation2 + $0x38] sm:$0xff] %vm304, 0
        %313 = vst.msk [vmem:[#allocation2 + $0x40] sm:$0xff] %vm304, 0
        %314 = vst.msk [vmem:[#allocation2 + $0x48] sm:$0xff] %vm304, 0
        %315 = vst.msk [vmem:[#allocation2 + $0x50] sm:$0xff] %vm304, 0
        %316 = vst.msk [vmem:[#allocation2 + $0x58] sm:$0xff] %vm304, 0
        %317 = vst.msk [vmem:[#allocation2 + $0x60] sm:$0xff] %vm304, 0
        %318 = vst.msk [vmem:[#allocation2 + $0x68] sm:$0xff] %vm304, 0
        %319 = vst.msk [vmem:[#allocation2 + $0x70] sm:$0xff] %vm304, 0
        %320 = vst.msk [vmem:[#allocation2 + $0x78] sm:$0xff] %vm304, 0
        %321 = vst.msk [vmem:[#allocation2 + $0x80] sm:$0xff] %vm304, 0
        %322 = vst.msk [vmem:[#allocation2 + $0x88] sm:$0xff] %vm304, 0
        %323 = vst.msk [vmem:[#allocation2 + $0x90] sm:$0xff] %vm304, 0
        %324 = vst.msk [vmem:[#allocation2 + $0x98] sm:$0xff] %vm304, 0
        %325 = vst.msk [vmem:[#allocation2 + $0xa0] sm:$0xff] %vm304, 0
        %326 = vst.msk [vmem:[#allocation2 + $0xa8] sm:$0xff] %vm304, 0
        %327 = vst.msk [vmem:[#allocation2 + $0xb0] sm:$0xff] %vm304, 0
        %328 = vst.msk [vmem:[#allocation2 + $0xb8] sm:$0xff] %vm304, 0
        %329 = vst.msk [vmem:[#allocation2 + $0xc0] sm:$0xff] %vm304, 0
        %330 = vst.msk [vmem:[#allocation2 + $0xc8] sm:$0xff] %vm304, 0
        %331 = vst.msk [vmem:[#allocation2 + $0xd0] sm:$0xff] %vm304, 0
        %332 = vst.msk [vmem:[#allocation2 + $0xd8] sm:$0xff] %vm304, 0
        %333 = vst.msk [vmem:[#allocation2 + $0xe0] sm:$0xff] %vm304, 0
        %334 = vst.msk [vmem:[#allocation2 + $0xe8] sm:$0xff] %vm304, 0
        %335 = vst.msk [vmem:[#allocation2 + $0xf0] sm:$0xff] %vm304, 0
        %336 = vst.msk [vmem:[#allocation2 + $0xf8] sm:$0xff] %vm304, 0
        %337 = vst.msk [vmem:[#allocation2 + $0x100] sm:$0xff] %vm304, 0
        %338 = vst.msk [vmem:[#allocation2 + $0x108] sm:$0xff] %vm304, 0
        %339 = vst.msk [vmem:[#allocation2 + $0x110] sm:$0xff] %vm304, 0
        %340 = vst.msk [vmem:[#allocation2 + $0x118] sm:$0xff] %vm304, 0
        %vm341 = vcmask 261120
        %342 = vst.msk [vmem:[#allocation3] sm:$0xff] %vm341, 0.0
        %343 = vst.msk [vmem:[#allocation3 + $0x8] sm:$0xff] %vm341, 0.0
        %344 = vst.msk [vmem:[#allocation3 + $0x10] sm:$0xff] %vm341, 0.0
        %345 = vst.msk [vmem:[#allocation3 + $0x18] sm:$0xff] %vm341, 0.0
        %346 = vst.msk [vmem:[#allocation3 + $0x20] sm:$0xff] %vm341, 0.0
        %347 = vst.msk [vmem:[#allocation3 + $0x28] sm:$0xff] %vm341, 0.0
        %348 = vst.msk [vmem:[#allocation3 + $0x30] sm:$0xff] %vm341, 0.0
        %349 = vst.msk [vmem:[#allocation3 + $0x38] sm:$0xff] %vm341, 0.0
        %350 = vst.msk [vmem:[#allocation3 + $0x40] sm:$0xff] %vm341, 0.0
        %351 = vst.msk [vmem:[#allocation3 + $0x48] sm:$0xff] %vm341, 0.0
        %352 = vst.msk [vmem:[#allocation3 + $0x50] sm:$0xff] %vm341, 0.0
        %353 = vst.msk [vmem:[#allocation3 + $0x58] sm:$0xff] %vm341, 0.0
        %354 = vst.msk [vmem:[#allocation3 + $0x60] sm:$0xff] %vm341, 0.0
        %355 = vst.msk [vmem:[#allocation3 + $0x68] sm:$0xff] %vm341, 0.0
        %356 = vst.msk [vmem:[#allocation3 + $0x70] sm:$0xff] %vm341, 0.0
        %357 = vst.msk [vmem:[#allocation3 + $0x78] sm:$0xff] %vm341, 0.0
        %358 = vst.msk [vmem:[#allocation3 + $0x80] sm:$0xff] %vm341, 0.0
        %359 = vst.msk [vmem:[#allocation3 + $0x88] sm:$0xff] %vm341, 0.0
        %360 = vst.msk [vmem:[#allocation3 + $0x90] sm:$0xff] %vm341, 0.0
        %361 = vst.msk [vmem:[#allocation3 + $0x98] sm:$0xff] %vm341, 0.0
        %362 = vst.msk [vmem:[#allocation3 + $0xa0] sm:$0xff] %vm341, 0.0
        %363 = vst.msk [vmem:[#allocation3 + $0xa8] sm:$0xff] %vm341, 0.0
        %364 = vst.msk [vmem:[#allocation3 + $0xb0] sm:$0xff] %vm341, 0.0
        %365 = vst.msk [vmem:[#allocation3 + $0xb8] sm:$0xff] %vm341, 0.0
        %366 = vst.msk [vmem:[#allocation3 + $0xc0] sm:$0xff] %vm341, 0.0
        %367 = vst.msk [vmem:[#allocation3 + $0xc8] sm:$0xff] %vm341, 0.0
        %368 = vst.msk [vmem:[#allocation3 + $0xd0] sm:$0xff] %vm341, 0.0
        %369 = vst.msk [vmem:[#allocation3 + $0xd8] sm:$0xff] %vm341, 0.0
        %370 = vst.msk [vmem:[#allocation3 + $0xe0] sm:$0xff] %vm341, 0.0
        %371 = vst.msk [vmem:[#allocation3 + $0xe8] sm:$0xff] %vm341, 0.0
        %372 = vst.msk [vmem:[#allocation3 + $0xf0] sm:$0xff] %vm341, 0.0
        %373 = vst.msk [vmem:[#allocation3 + $0xf8] sm:$0xff] %vm341, 0.0
        %374 = vst.msk [vmem:[#allocation4] sm:$0xff] %vm304, 0
        %375 = vst.msk [vmem:[#allocation4 + $0x8] sm:$0xff] %vm304, 0
        %376 = vst.msk [vmem:[#allocation4 + $0x10] sm:$0xff] %vm304, 0
        %377 = vst.msk [vmem:[#allocation4 + $0x18] sm:$0xff] %vm304, 0
        %378 = vst.msk [vmem:[#allocation4 + $0x20] sm:$0xff] %vm304, 0
        %379 = vst.msk [vmem:[#allocation4 + $0x28] sm:$0xff] %vm304, 0
        %380 = vst.msk [vmem:[#allocation4 + $0x30] sm:$0xff] %vm304, 0
        %381 = vst.msk [vmem:[#allocation4 + $0x38] sm:$0xff] %vm304, 0
        %382 = vst.msk [vmem:[#allocation4 + $0x40] sm:$0xff] %vm304, 0
        %383 = vst.msk [vmem:[#allocation4 + $0x48] sm:$0xff] %vm304, 0
        %384 = vst.msk [vmem:[#allocation4 + $0x50] sm:$0xff] %vm304, 0
        %385 = vst.msk [vmem:[#allocation4 + $0x58] sm:$0xff] %vm304, 0
        %386 = vst.msk [vmem:[#allocation4 + $0x60] sm:$0xff] %vm304, 0
        %387 = vst.msk [vmem:[#allocation4 + $0x68] sm:$0xff] %vm304, 0
        %388 = vst.msk [vmem:[#allocation4 + $0x70] sm:$0xff] %vm304, 0
        %389 = vst.msk [vmem:[#allocation4 + $0x78] sm:$0xff] %vm304, 0
        %390 = vst.msk [vmem:[#allocation4 + $0x80] sm:$0xff] %vm304, 0
        %391 = vst.msk [vmem:[#allocation4 + $0x88] sm:$0xff] %vm304, 0
        %392 = vst.msk [vmem:[#allocation4 + $0x90] sm:$0xff] %vm304, 0
        %393 = vst.msk [vmem:[#allocation4 + $0x98] sm:$0xff] %vm304, 0
        %394 = vst.msk [vmem:[#allocation4 + $0xa0] sm:$0xff] %vm304, 0
        %395 = vst.msk [vmem:[#allocation4 + $0xa8] sm:$0xff] %vm304, 0
        %396 = vst.msk [vmem:[#allocation4 + $0xb0] sm:$0xff] %vm304, 0
        %397 = vst.msk [vmem:[#allocation4 + $0xb8] sm:$0xff] %vm304, 0
        %398 = vst.msk [vmem:[#allocation4 + $0xc0] sm:$0xff] %vm304, 0
        %399 = vst.msk [vmem:[#allocation4 + $0xc8] sm:$0xff] %vm304, 0
        %400 = vst.msk [vmem:[#allocation4 + $0xd0] sm:$0xff] %vm304, 0
        %401 = vst.msk [vmem:[#allocation4 + $0xd8] sm:$0xff] %vm304, 0
        %402 = vst.msk [vmem:[#allocation4 + $0xe0] sm:$0xff] %vm304, 0
        %403 = vst.msk [vmem:[#allocation4 + $0xe8] sm:$0xff] %vm304, 0
        %404 = vst.msk [vmem:[#allocation4 + $0xf0] sm:$0xff] %vm304, 0
        %405 = vst.msk [vmem:[#allocation4 + $0xf8] sm:$0xff] %vm304, 0
        %406 = vst.msk [vmem:[#allocation4 + $0x100] sm:$0xff] %vm304, 0
        %407 = vst.msk [vmem:[#allocation4 + $0x108] sm:$0xff] %vm304, 0
        %408 = vst.msk [vmem:[#allocation4 + $0x110] sm:$0xff] %vm304, 0
        %409 = vst.msk [vmem:[#allocation4 + $0x118] sm:$0xff] %vm304, 0
        %410 = vst.msk [vmem:[#allocation5] sm:$0xff] %vm341, 0.0
        %411 = vst.msk [vmem:[#allocation5 + $0x8] sm:$0xff] %vm341, 0.0
        %412 = vst.msk [vmem:[#allocation5 + $0x10] sm:$0xff] %vm341, 0.0
        %413 = vst.msk [vmem:[#allocation5 + $0x18] sm:$0xff] %vm341, 0.0
        %414 = vst.msk [vmem:[#allocation5 + $0x20] sm:$0xff] %vm341, 0.0
        %415 = vst.msk [vmem:[#allocation5 + $0x28] sm:$0xff] %vm341, 0.0
        %416 = vst.msk [vmem:[#allocation5 + $0x30] sm:$0xff] %vm341, 0.0
        %417 = vst.msk [vmem:[#allocation5 + $0x38] sm:$0xff] %vm341, 0.0
        %418 = vst.msk [vmem:[#allocation5 + $0x40] sm:$0xff] %vm341, 0.0
        %419 = vst.msk [vmem:[#allocation5 + $0x48] sm:$0xff] %vm341, 0.0
        %420 = vst.msk [vmem:[#allocation5 + $0x50] sm:$0xff] %vm341, 0.0
        %421 = vst.msk [vmem:[#allocation5 + $0x58] sm:$0xff] %vm341, 0.0
        %422 = vst.msk [vmem:[#allocation5 + $0x60] sm:$0xff] %vm341, 0.0
        %423 = vst.msk [vmem:[#allocation5 + $0x68] sm:$0xff] %vm341, 0.0
        %424 = vst.msk [vmem:[#allocation5 + $0x70] sm:$0xff] %vm341, 0.0
        %425 = vst.msk [vmem:[#allocation5 + $0x78] sm:$0xff] %vm341, 0.0
        %426 = vst.msk [vmem:[#allocation5 + $0x80] sm:$0xff] %vm341, 0.0
        %427 = vst.msk [vmem:[#allocation5 + $0x88] sm:$0xff] %vm341, 0.0
        %428 = vst.msk [vmem:[#allocation5 + $0x90] sm:$0xff] %vm341, 0.0
        %429 = vst.msk [vmem:[#allocation5 + $0x98] sm:$0xff] %vm341, 0.0
        %430 = vst.msk [vmem:[#allocation5 + $0xa0] sm:$0xff] %vm341, 0.0
        %431 = vst.msk [vmem:[#allocation5 + $0xa8] sm:$0xff] %vm341, 0.0
        %432 = vst.msk [vmem:[#allocation5 + $0xb0] sm:$0xff] %vm341, 0.0
        %433 = vst.msk [vmem:[#allocation5 + $0xb8] sm:$0xff] %vm341, 0.0
        %434 = vst.msk [vmem:[#allocation5 + $0xc0] sm:$0xff] %vm341, 0.0
        %435 = vst.msk [vmem:[#allocation5 + $0xc8] sm:$0xff] %vm341, 0.0
        %436 = vst.msk [vmem:[#allocation5 + $0xd0] sm:$0xff] %vm341, 0.0
        %437 = vst.msk [vmem:[#allocation5 + $0xd8] sm:$0xff] %vm341, 0.0
        %438 = vst.msk [vmem:[#allocation5 + $0xe0] sm:$0xff] %vm341, 0.0
        %439 = vst.msk [vmem:[#allocation5 + $0xe8] sm:$0xff] %vm341, 0.0
        %440 = vst.msk [vmem:[#allocation5 + $0xf0] sm:$0xff] %vm341, 0.0
        %441 = vst.msk [vmem:[#allocation5 + $0xf8] sm:$0xff] %vm341, 0.0
      $region44: #{tpu_custom_call.1} parent=39 // pred_fallthru
        _
      %v442 = vld [vmem:[%s282] sm:$0xf]
      %v443 = vld [vmem:[%s282 + $0x4] sm:$0xf]
      %v444 = vld [vmem:[%s282 + $0x8] sm:$0xf]
      %v445 = vld [vmem:[%s282 + $0xc] sm:$0xf]
      %v446 = vld [vmem:[%s282 + $0x10] sm:$0xf]
      %v447 = vld [vmem:[%s282 + $0x14] sm:$0xf]
      %v448 = vld [vmem:[%s282 + $0x18] sm:$0xf]
      %v449 = vld [vmem:[%s282 + $0x1c] sm:$0xf]
      %v450 = vld [vmem:[%s282 + $0x20] sm:$0xf]
      %v451 = vld [vmem:[%s282 + $0x24] sm:$0xf]
      %v452 = vld [vmem:[%s282 + $0x28] sm:$0xf]
      %v453 = vld [vmem:[%s282 + $0x2c] sm:$0xf]
      %v454 = vld [vmem:[%s282 + $0x30] sm:$0xf]
      %v455 = vld [vmem:[%s282 + $0x34] sm:$0xf]
      %v456 = vld [vmem:[%s282 + $0x38] sm:$0xf]
      %v457 = vld [vmem:[%s282 + $0x3c] sm:$0xf]
      %v458 = vld [vmem:[%s282 + $0x40] sm:$0xf]
      %v459 = vld [vmem:[%s282 + $0x44] sm:$0xf]
      %v460 = vld [vmem:[%s282 + $0x48] sm:$0xf]
      %v461 = vld [vmem:[%s282 + $0x4c] sm:$0xf]
      %v462 = vld [vmem:[%s282 + $0x50] sm:$0xf]
      %v463 = vld [vmem:[%s282 + $0x54] sm:$0xf]
      %v464 = vld [vmem:[%s282 + $0x58] sm:$0xf]
      %v465 = vld [vmem:[%s282 + $0x5c] sm:$0xf]
      %v466 = vld [vmem:[%s282 + $0x60] sm:$0xf]
      %v467 = vld [vmem:[%s282 + $0x64] sm:$0xf]
      %v468 = vld [vmem:[%s282 + $0x68] sm:$0xf]
      %v469 = vld [vmem:[%s282 + $0x6c] sm:$0xf]
      %v470 = vld [vmem:[%s282 + $0x70] sm:$0xf]
      %v471 = vld [vmem:[%s282 + $0x74] sm:$0xf]
      %v472 = vld [vmem:[%s282 + $0x78] sm:$0xf]
      %v473 = vld [vmem:[%s282 + $0x7c] sm:$0xf]
      %v474 = vld [vmem:[%s282 + $0x80] sm:$0xf]
      %v475 = vld [vmem:[%s282 + $0x84] sm:$0xf]
      %v476 = vld [vmem:[%s282 + $0x88] sm:$0xf]
      %v477 = vld [vmem:[%s282 + $0x8c] sm:$0xf]
      %v478 = vld [vmem:[%s282 + $0x90] sm:$0xf]
      %v479 = vld [vmem:[%s282 + $0x94] sm:$0xf]
      %v480 = vld [vmem:[%s282 + $0x98] sm:$0xf]
      %v481 = vld [vmem:[%s282 + $0x9c] sm:$0xf]
      %v482 = vld [vmem:[%s282 + $0xa0] sm:$0xf]
      %v483 = vld [vmem:[%s282 + $0xa4] sm:$0xf]
      %v484 = vld [vmem:[%s282 + $0xa8] sm:$0xf]
      %v485 = vld [vmem:[%s282 + $0xac] sm:$0xf]
      %v486 = vld [vmem:[%s282 + $0xb0] sm:$0xf]
      %v487 = vld [vmem:[%s282 + $0xb4] sm:$0xf]
      %v488 = vld [vmem:[%s282 + $0xb8] sm:$0xf]
      %v489 = vld [vmem:[%s282 + $0xbc] sm:$0xf]
      %v490 = vld [vmem:[%s282 + $0xc0] sm:$0xf]
      %v491 = vld [vmem:[%s282 + $0xc4] sm:$0xf]
      %v492 = vld [vmem:[%s282 + $0xc8] sm:$0xf]
      %v493 = vld [vmem:[%s282 + $0xcc] sm:$0xf]
      %v494 = vld [vmem:[%s282 + $0xd0] sm:$0xf]
      %v495 = vld [vmem:[%s282 + $0xd4] sm:$0xf]
      %v496 = vld [vmem:[%s282 + $0xd8] sm:$0xf]
      %v497 = vld [vmem:[%s282 + $0xdc] sm:$0xf]
      %v498 = vld [vmem:[%s282 + $0xe0] sm:$0xf]
      %v499 = vld [vmem:[%s282 + $0xe4] sm:$0xf]
      %v500 = vld [vmem:[%s282 + $0xe8] sm:$0xf]
      %v501 = vld [vmem:[%s282 + $0xec] sm:$0xf]
      %v502 = vld [vmem:[%s282 + $0xf0] sm:$0xf]
      %v503 = vld [vmem:[%s282 + $0xf4] sm:$0xf]
      %v504 = vld [vmem:[%s282 + $0xf8] sm:$0xf]
      %v505 = vld [vmem:[%s282 + $0xfc] sm:$0xf]
      %v506 = vld [vmem:[%s282 + $0x100] sm:$0xf]
      %v507 = vld [vmem:[%s282 + $0x104] sm:$0xf]
      %v508 = vld [vmem:[%s282 + $0x108] sm:$0xf]
      %v509 = vld [vmem:[%s282 + $0x10c] sm:$0xf]
      %v510 = vld [vmem:[%s282 + $0x110] sm:$0xf]
      %v511 = vld [vmem:[%s282 + $0x114] sm:$0xf]
      %v512 = vld [vmem:[%s282 + $0x118] sm:$0xf]
      %v513 = vld [vmem:[%s282 + $0x11c] sm:$0xf]
      %v514 = vld [vmem:[#allocation2] sm:$0xff]
      %v515 = vld [vmem:[#allocation2 + $0x8] sm:$0xff]
      %v516 = vld [vmem:[#allocation2 + $0x10] sm:$0xff]
      %v517 = vld [vmem:[#allocation2 + $0x18] sm:$0xff]
      %v518 = vld [vmem:[#allocation2 + $0x20] sm:$0xff]
      %v519 = vld [vmem:[#allocation2 + $0x28] sm:$0xff]
      %v520 = vld [vmem:[#allocation2 + $0x30] sm:$0xff]
      %v521 = vld [vmem:[#allocation2 + $0x38] sm:$0xff]
      %v522 = vld [vmem:[#allocation2 + $0x40] sm:$0xff]
      %v523 = vld [vmem:[#allocation2 + $0x48] sm:$0xff]
      %v524 = vld [vmem:[#allocation2 + $0x50] sm:$0xff]
      %v525 = vld [vmem:[#allocation2 + $0x58] sm:$0xff]
      %v526 = vld [vmem:[#allocation2 + $0x60] sm:$0xff]
      %v527 = vld [vmem:[#allocation2 + $0x68] sm:$0xff]
      %v528 = vld [vmem:[#allocation2 + $0x70] sm:$0xff]
      %v529 = vld [vmem:[#allocation2 + $0x78] sm:$0xff]
      %v530 = vld [vmem:[#allocation2 + $0x80] sm:$0xff]
      %v531 = vld [vmem:[#allocation2 + $0x88] sm:$0xff]
      %v532 = vld [vmem:[#allocation2 + $0x90] sm:$0xff]
      %v533 = vld [vmem:[#allocation2 + $0x98] sm:$0xff]
      %v534 = vld [vmem:[#allocation2 + $0xa0] sm:$0xff]
      %v535 = vld [vmem:[#allocation2 + $0xa8] sm:$0xff]
      %v536 = vld [vmem:[#allocation2 + $0xb0] sm:$0xff]
      %v537 = vld [vmem:[#allocation2 + $0xb8] sm:$0xff]
      %v538 = vld [vmem:[#allocation2 + $0xc0] sm:$0xff]
      %v539 = vld [vmem:[#allocation2 + $0xc8] sm:$0xff]
      %v540 = vld [vmem:[#allocation2 + $0xd0] sm:$0xff]
      %v541 = vld [vmem:[#allocation2 + $0xd8] sm:$0xff]
      %v542 = vld [vmem:[#allocation2 + $0xe0] sm:$0xff]
      %v543 = vld [vmem:[#allocation2 + $0xe8] sm:$0xff]
      %v544 = vld [vmem:[#allocation2 + $0xf0] sm:$0xff]
      %v545 = vld [vmem:[#allocation2 + $0xf8] sm:$0xff]
      %v546 = vld [vmem:[#allocation2 + $0x100] sm:$0xff]
      %v547 = vld [vmem:[#allocation2 + $0x108] sm:$0xff]
      %v548 = vld [vmem:[#allocation2 + $0x110] sm:$0xff]
      %v549 = vld [vmem:[#allocation2 + $0x118] sm:$0xff]
      %vm550 = vsmask.f32 256
      %vm551 = vsmask.f32 4368
      %vm552 = vmor %vm550, %vm551
      %v554 = vshrl.u32 %v442, 16
      %v556 = vrot.slane %v554, 7
      %v557 = vrot.slane %v556, 4
      %v559 = vshrl.u32 %v443, 16
      %v561 = vrot.slane %v559, 7
      %v562 = vshll.u32 %v443, 16
      %v564 = vor.u32 %v561, %v562
      %v565 = vsel %vm552, %v557, %v564
      %v566 = vrot.slane %v561, 4
      %v568 = vshrl.u32 %v444, 16
      %v570 = vrot.slane %v568, 7
      %v571 = vshll.u32 %v444, 16
      %v573 = vor.u32 %v570, %v571
      %v574 = vsel %vm552, %v566, %v573
      %v576 = vshrl.u32 %v446, 16
      %v578 = vrot.slane %v576, 7
      %v579 = vrot.slane %v578, 4
      %v581 = vshrl.u32 %v447, 16
      %v583 = vrot.slane %v581, 7
      %v584 = vshll.u32 %v447, 16
      %v586 = vor.u32 %v583, %v584
      %v587 = vsel %vm552, %v579, %v586
      %v588 = vrot.slane %v583, 4
      %v590 = vshrl.u32 %v448, 16
      %v592 = vrot.slane %v590, 7
      %v593 = vshll.u32 %v448, 16
      %v595 = vor.u32 %v592, %v593
      %v596 = vsel %vm552, %v588, %v595
      %v598 = vshrl.u32 %v450, 16
      %v600 = vrot.slane %v598, 7
      %v601 = vrot.slane %v600, 4
      %v603 = vshrl.u32 %v451, 16
      %v605 = vrot.slane %v603, 7
      %v606 = vshll.u32 %v451, 16
      %v608 = vor.u32 %v605, %v606
      %v609 = vsel %vm552, %v601, %v608
      %v610 = vrot.slane %v605, 4
      %v612 = vshrl.u32 %v452, 16
      %v614 = vrot.slane %v612, 7
      %v615 = vshll.u32 %v452, 16
      %v617 = vor.u32 %v614, %v615
      %v618 = vsel %vm552, %v610, %v617
      %v620 = vshrl.u32 %v454, 16
      %v622 = vrot.slane %v620, 7
      %v623 = vrot.slane %v622, 4
      %v625 = vshrl.u32 %v455, 16
      %v627 = vrot.slane %v625, 7
      %v628 = vshll.u32 %v455, 16
      %v630 = vor.u32 %v627, %v628
      %v631 = vsel %vm552, %v623, %v630
      %v632 = vrot.slane %v627, 4
      %v634 = vshrl.u32 %v456, 16
      %v636 = vrot.slane %v634, 7
      %v637 = vshll.u32 %v456, 16
      %v639 = vor.u32 %v636, %v637
      %v640 = vsel %vm552, %v632, %v639
      %v642 = vshrl.u32 %v458, 16
      %v644 = vrot.slane %v642, 7
      %v645 = vrot.slane %v644, 4
      %v647 = vshrl.u32 %v459, 16
      %v649 = vrot.slane %v647, 7
      %v650 = vshll.u32 %v459, 16
      %v652 = vor.u32 %v649, %v650
      %v653 = vsel %vm552, %v645, %v652
      %v654 = vrot.slane %v649, 4
      %v656 = vshrl.u32 %v460, 16
      %v658 = vrot.slane %v656, 7
      %v659 = vshll.u32 %v460, 16
      %v661 = vor.u32 %v658, %v659
      %v662 = vsel %vm552, %v654, %v661
      %v664 = vshrl.u32 %v462, 16
      %v666 = vrot.slane %v664, 7
      %v667 = vrot.slane %v666, 4
      %v669 = vshrl.u32 %v463, 16
      %v671 = vrot.slane %v669, 7
      %v672 = vshll.u32 %v463, 16
      %v674 = vor.u32 %v671, %v672
      %v675 = vsel %vm552, %v667, %v674
      %v676 = vrot.slane %v671, 4
      %v678 = vshrl.u32 %v464, 16
      %v680 = vrot.slane %v678, 7
      %v681 = vshll.u32 %v464, 16
      %v683 = vor.u32 %v680, %v681
      %v684 = vsel %vm552, %v676, %v683
      %v686 = vshrl.u32 %v466, 16
      %v688 = vrot.slane %v686, 7
      %v689 = vrot.slane %v688, 4
      %v691 = vshrl.u32 %v467, 16
      %v693 = vrot.slane %v691, 7
      %v694 = vshll.u32 %v467, 16
      %v696 = vor.u32 %v693, %v694
      %v697 = vsel %vm552, %v689, %v696
      %v698 = vrot.slane %v693, 4
      %v700 = vshrl.u32 %v468, 16
      %v702 = vrot.slane %v700, 7
      %v703 = vshll.u32 %v468, 16
      %v705 = vor.u32 %v702, %v703
      %v706 = vsel %vm552, %v698, %v705
      %v708 = vshrl.u32 %v470, 16
      %v710 = vrot.slane %v708, 7
      %v711 = vrot.slane %v710, 4
      %v713 = vshrl.u32 %v471, 16
      %v715 = vrot.slane %v713, 7
      %v716 = vshll.u32 %v471, 16
      %v718 = vor.u32 %v715, %v716
      %v719 = vsel %vm552, %v711, %v718
      %v720 = vrot.slane %v715, 4
      %v722 = vshrl.u32 %v472, 16
      %v724 = vrot.slane %v722, 7
      %v725 = vshll.u32 %v472, 16
      %v727 = vor.u32 %v724, %v725
      %v728 = vsel %vm552, %v720, %v727
      %v730 = vshrl.u32 %v474, 16
      %v732 = vrot.slane %v730, 7
      %v733 = vrot.slane %v732, 4
      %v735 = vshrl.u32 %v475, 16
      %v737 = vrot.slane %v735, 7
      %v738 = vshll.u32 %v475, 16
      %v740 = vor.u32 %v737, %v738
      %v741 = vsel %vm552, %v733, %v740
      %v742 = vrot.slane %v737, 4
      %v744 = vshrl.u32 %v476, 16
      %v746 = vrot.slane %v744, 7
      %v747 = vshll.u32 %v476, 16
      %v749 = vor.u32 %v746, %v747
      %v750 = vsel %vm552, %v742, %v749
      %v752 = vshrl.u32 %v478, 16
      %v754 = vrot.slane %v752, 7
      %v755 = vrot.slane %v754, 4
      %v757 = vshrl.u32 %v479, 16
      %v759 = vrot.slane %v757, 7
      %v760 = vshll.u32 %v479, 16
      %v762 = vor.u32 %v759, %v760
      %v763 = vsel %vm552, %v755, %v762
      %v764 = vrot.slane %v759, 4
      %v766 = vshrl.u32 %v480, 16
      %v768 = vrot.slane %v766, 7
      %v769 = vshll.u32 %v480, 16
      %v771 = vor.u32 %v768, %v769
      %v772 = vsel %vm552, %v764, %v771
      %v774 = vshrl.u32 %v482, 16
      %v776 = vrot.slane %v774, 7
      %v777 = vrot.slane %v776, 4
      %v779 = vshrl.u32 %v483, 16
      %v781 = vrot.slane %v779, 7
      %v782 = vshll.u32 %v483, 16
      %v784 = vor.u32 %v781, %v782
      %v785 = vsel %vm552, %v777, %v784
      %v786 = vrot.slane %v781, 4
      %v788 = vshrl.u32 %v484, 16
      %v790 = vrot.slane %v788, 7
      %v791 = vshll.u32 %v484, 16
      %v793 = vor.u32 %v790, %v791
      %v794 = vsel %vm552, %v786, %v793
      %v796 = vshrl.u32 %v486, 16
      %v798 = vrot.slane %v796, 7
      %v799 = vrot.slane %v798, 4
      %v801 = vshrl.u32 %v487, 16
      %v803 = vrot.slane %v801, 7
      %v804 = vshll.u32 %v487, 16
      %v806 = vor.u32 %v803, %v804
      %v807 = vsel %vm552, %v799, %v806
      %v808 = vrot.slane %v803, 4
      %v810 = vshrl.u32 %v488, 16
      %v812 = vrot.slane %v810, 7
      %v813 = vshll.u32 %v488, 16
      %v815 = vor.u32 %v812, %v813
      %v816 = vsel %vm552, %v808, %v815
      %v818 = vshrl.u32 %v490, 16
      %v820 = vrot.slane %v818, 7
      %v821 = vrot.slane %v820, 4
      %v823 = vshrl.u32 %v491, 16
      %v825 = vrot.slane %v823, 7
      %v826 = vshll.u32 %v491, 16
      %v828 = vor.u32 %v825, %v826
      %v829 = vsel %vm552, %v821, %v828
      %v830 = vrot.slane %v825, 4
      %v832 = vshrl.u32 %v492, 16
      %v834 = vrot.slane %v832, 7
      %v835 = vshll.u32 %v492, 16
      %v837 = vor.u32 %v834, %v835
      %v838 = vsel %vm552, %v830, %v837
      %v840 = vshrl.u32 %v494, 16
      %v842 = vrot.slane %v840, 7
      %v843 = vrot.slane %v842, 4
      %v845 = vshrl.u32 %v495, 16
      %v847 = vrot.slane %v845, 7
      %v848 = vshll.u32 %v495, 16
      %v850 = vor.u32 %v847, %v848
      %v851 = vsel %vm552, %v843, %v850
      %v852 = vrot.slane %v847, 4
      %v854 = vshrl.u32 %v496, 16
      %v856 = vrot.slane %v854, 7
      %v857 = vshll.u32 %v496, 16
      %v859 = vor.u32 %v856, %v857
      %v860 = vsel %vm552, %v852, %v859
      %v862 = vshrl.u32 %v498, 16
      %v864 = vrot.slane %v862, 7
      %v865 = vrot.slane %v864, 4
      %v867 = vshrl.u32 %v499, 16
      %v869 = vrot.slane %v867, 7
      %v870 = vshll.u32 %v499, 16
      %v872 = vor.u32 %v869, %v870
      %v873 = vsel %vm552, %v865, %v872
      %v874 = vrot.slane %v869, 4
      %v876 = vshrl.u32 %v500, 16
      %v878 = vrot.slane %v876, 7
      %v879 = vshll.u32 %v500, 16
      %v881 = vor.u32 %v878, %v879
      %v882 = vsel %vm552, %v874, %v881
      %v884 = vshrl.u32 %v502, 16
      %v886 = vrot.slane %v884, 7
      %v887 = vrot.slane %v886, 4
      %v889 = vshrl.u32 %v503, 16
      %v891 = vrot.slane %v889, 7
      %v892 = vshll.u32 %v503, 16
      %v894 = vor.u32 %v891, %v892
      %v895 = vsel %vm552, %v887, %v894
      %v896 = vrot.slane %v891, 4
      %v898 = vshrl.u32 %v504, 16
      %v900 = vrot.slane %v898, 7
      %v901 = vshll.u32 %v504, 16
      %v903 = vor.u32 %v900, %v901
      %v904 = vsel %vm552, %v896, %v903
      %vm905 = vsmask.f32 4352
      %v907 = vshrl.u32 %v514, 16
      %v909 = vrot.slane %v907, 3
      %v910 = vshll.u32 %v514, 16
      %v912 = vrot.slane %v910, 4
      %v913 = vor.u32 %v909, %v912
      %v915 = vshrl.u32 %v515, 16
      %v917 = vrot.slane %v915, 3
      %v918 = vshll.u32 %v515, 16
      %v920 = vrot.slane %v918, 4
      %v921 = vor.u32 %v917, %v920
      %v922 = vsel %vm905, %v913, %v921
      %v924 = vshrl.u32 %v516, 16
      %v926 = vrot.slane %v924, 3
      %v927 = vshll.u32 %v516, 16
      %v929 = vrot.slane %v927, 4
      %v930 = vor.u32 %v926, %v929
      %v932 = vshrl.u32 %v517, 16
      %v934 = vrot.slane %v932, 3
      %v935 = vshll.u32 %v517, 16
      %v937 = vrot.slane %v935, 4
      %v938 = vor.u32 %v934, %v937
      %v939 = vsel %vm905, %v930, %v938
      %v941 = vshrl.u32 %v518, 16
      %v943 = vrot.slane %v941, 3
      %v944 = vshll.u32 %v518, 16
      %v946 = vrot.slane %v944, 4
      %v947 = vor.u32 %v943, %v946
      %v949 = vshrl.u32 %v519, 16
      %v951 = vrot.slane %v949, 3
      %v952 = vshll.u32 %v519, 16
      %v954 = vrot.slane %v952, 4
      %v955 = vor.u32 %v951, %v954
      %v956 = vsel %vm905, %v947, %v955
      %v958 = vshrl.u32 %v520, 16
      %v960 = vrot.slane %v958, 3
      %v961 = vshll.u32 %v520, 16
      %v963 = vrot.slane %v961, 4
      %v964 = vor.u32 %v960, %v963
      %v966 = vshrl.u32 %v521, 16
      %v968 = vrot.slane %v966, 3
      %v969 = vshll.u32 %v521, 16
      %v971 = vrot.slane %v969, 4
      %v972 = vor.u32 %v968, %v971
      %v973 = vsel %vm905, %v964, %v972
      %v975 = vshrl.u32 %v522, 16
      %v977 = vrot.slane %v975, 3
      %v978 = vshll.u32 %v522, 16
      %v980 = vrot.slane %v978, 4
      %v981 = vor.u32 %v977, %v980
      %v983 = vshrl.u32 %v523, 16
      %v985 = vrot.slane %v983, 3
      %v986 = vshll.u32 %v523, 16
      %v988 = vrot.slane %v986, 4
      %v989 = vor.u32 %v985, %v988
      %v990 = vsel %vm905, %v981, %v989
      %v992 = vshrl.u32 %v524, 16
      %v994 = vrot.slane %v992, 3
      %v995 = vshll.u32 %v524, 16
      %v997 = vrot.slane %v995, 4
      %v998 = vor.u32 %v994, %v997
      %v1000 = vshrl.u32 %v525, 16
      %v1002 = vrot.slane %v1000, 3
      %v1003 = vshll.u32 %v525, 16
      %v1005 = vrot.slane %v1003, 4
      %v1006 = vor.u32 %v1002, %v1005
      %v1007 = vsel %vm905, %v998, %v1006
      %v1009 = vshrl.u32 %v526, 16
      %v1011 = vrot.slane %v1009, 3
      %v1012 = vshll.u32 %v526, 16
      %v1014 = vrot.slane %v1012, 4
      %v1015 = vor.u32 %v1011, %v1014
      %v1017 = vshrl.u32 %v527, 16
      %v1019 = vrot.slane %v1017, 3
      %v1020 = vshll.u32 %v527, 16
      %v1022 = vrot.slane %v1020, 4
      %v1023 = vor.u32 %v1019, %v1022
      %v1024 = vsel %vm905, %v1015, %v1023
      %v1026 = vshrl.u32 %v528, 16
      %v1028 = vrot.slane %v1026, 3
      %v1029 = vshll.u32 %v528, 16
      %v1031 = vrot.slane %v1029, 4
      %v1032 = vor.u32 %v1028, %v1031
      %v1034 = vshrl.u32 %v529, 16
      %v1036 = vrot.slane %v1034, 3
      %v1037 = vshll.u32 %v529, 16
      %v1039 = vrot.slane %v1037, 4
      %v1040 = vor.u32 %v1036, %v1039
      %v1041 = vsel %vm905, %v1032, %v1040
      %v1043 = vshrl.u32 %v530, 16
      %v1045 = vrot.slane %v1043, 3
      %v1046 = vshll.u32 %v530, 16
      %v1048 = vrot.slane %v1046, 4
      %v1049 = vor.u32 %v1045, %v1048
      %v1051 = vshrl.u32 %v531, 16
      %v1053 = vrot.slane %v1051, 3
      %v1054 = vshll.u32 %v531, 16
      %v1056 = vrot.slane %v1054, 4
      %v1057 = vor.u32 %v1053, %v1056
      %v1058 = vsel %vm905, %v1049, %v1057
      %v1060 = vshrl.u32 %v532, 16
      %v1062 = vrot.slane %v1060, 3
      %v1063 = vshll.u32 %v532, 16
      %v1065 = vrot.slane %v1063, 4
      %v1066 = vor.u32 %v1062, %v1065
      %v1068 = vshrl.u32 %v533, 16
      %v1070 = vrot.slane %v1068, 3
      %v1071 = vshll.u32 %v533, 16
      %v1073 = vrot.slane %v1071, 4
      %v1074 = vor.u32 %v1070, %v1073
      %v1075 = vsel %vm905, %v1066, %v1074
      %v1077 = vshrl.u32 %v534, 16
      %v1079 = vrot.slane %v1077, 3
      %v1080 = vshll.u32 %v534, 16
      %v1082 = vrot.slane %v1080, 4
      %v1083 = vor.u32 %v1079, %v1082
      %v1085 = vshrl.u32 %v535, 16
      %v1087 = vrot.slane %v1085, 3
      %v1088 = vshll.u32 %v535, 16
      %v1090 = vrot.slane %v1088, 4
      %v1091 = vor.u32 %v1087, %v1090
      %v1092 = vsel %vm905, %v1083, %v1091
      %v1094 = vshrl.u32 %v536, 16
      %v1096 = vrot.slane %v1094, 3
      %v1097 = vshll.u32 %v536, 16
      %v1099 = vrot.slane %v1097, 4
      %v1100 = vor.u32 %v1096, %v1099
      %v1102 = vshrl.u32 %v537, 16
      %v1104 = vrot.slane %v1102, 3
      %v1105 = vshll.u32 %v537, 16
      %v1107 = vrot.slane %v1105, 4
      %v1108 = vor.u32 %v1104, %v1107
      %v1109 = vsel %vm905, %v1100, %v1108
      %v1111 = vshrl.u32 %v538, 16
      %v1113 = vrot.slane %v1111, 3
      %v1114 = vshll.u32 %v538, 16
      %v1116 = vrot.slane %v1114, 4
      %v1117 = vor.u32 %v1113, %v1116
      %v1119 = vshrl.u32 %v539, 16
      %v1121 = vrot.slane %v1119, 3
      %v1122 = vshll.u32 %v539, 16
      %v1124 = vrot.slane %v1122, 4
      %v1125 = vor.u32 %v1121, %v1124
      %v1126 = vsel %vm905, %v1117, %v1125
      %v1128 = vshrl.u32 %v540, 16
      %v1130 = vrot.slane %v1128, 3
      %v1131 = vshll.u32 %v540, 16
      %v1133 = vrot.slane %v1131, 4
      %v1134 = vor.u32 %v1130, %v1133
      %v1136 = vshrl.u32 %v541, 16
      %v1138 = vrot.slane %v1136, 3
      %v1139 = vshll.u32 %v541, 16
      %v1141 = vrot.slane %v1139, 4
      %v1142 = vor.u32 %v1138, %v1141
      %v1143 = vsel %vm905, %v1134, %v1142
      %v1145 = vshrl.u32 %v542, 16
      %v1147 = vrot.slane %v1145, 3
      %v1148 = vshll.u32 %v542, 16
      %v1150 = vrot.slane %v1148, 4
      %v1151 = vor.u32 %v1147, %v1150
      %v1153 = vshrl.u32 %v543, 16
      %v1155 = vrot.slane %v1153, 3
      %v1156 = vshll.u32 %v543, 16
      %v1158 = vrot.slane %v1156, 4
      %v1159 = vor.u32 %v1155, %v1158
      %v1160 = vsel %vm905, %v1151, %v1159
      %v1162 = vshrl.u32 %v544, 16
      %v1164 = vrot.slane %v1162, 3
      %v1165 = vshll.u32 %v544, 16
      %v1167 = vrot.slane %v1165, 4
      %v1168 = vor.u32 %v1164, %v1167
      %v1170 = vshrl.u32 %v545, 16
      %v1172 = vrot.slane %v1170, 3
      %v1173 = vshll.u32 %v545, 16
      %v1175 = vrot.slane %v1173, 4
      %v1176 = vor.u32 %v1172, %v1175
      %v1177 = vsel %vm905, %v1168, %v1176
      %v1179 = vshrl.u32 %v506, 16
      %v1181 = vrot.slane %v1179, 7
      %v1182 = vrot.slane %v1181, 4
      %v1184 = vshrl.u32 %v507, 16
      %v1186 = vrot.slane %v1184, 7
      %v1187 = vshll.u32 %v507, 16
      %v1189 = vor.u32 %v1186, %v1187
      %v1190 = vsel %vm552, %v1182, %v1189
      %v1191 = vrot.slane %v1186, 4
      %v1193 = vshrl.u32 %v508, 16
      %v1195 = vrot.slane %v1193, 7
      %v1196 = vshll.u32 %v508, 16
      %v1198 = vor.u32 %v1195, %v1196
      %v1199 = vsel %vm552, %v1191, %v1198
      %v1201 = vshrl.u32 %v546, 16
      %v1203 = vrot.slane %v1201, 3
      %v1204 = vshll.u32 %v546, 16
      %v1206 = vrot.slane %v1204, 4
      %v1207 = vor.u32 %v1203, %v1206
      %v1209 = vshrl.u32 %v547, 16
      %v1211 = vrot.slane %v1209, 3
      %v1212 = vshll.u32 %v547, 16
      %v1214 = vrot.slane %v1212, 4
      %v1215 = vor.u32 %v1211, %v1214
      %v1216 = vsel %vm905, %v1207, %v1215
      %v1218 = vshrl.u32 %v510, 16
      %v1220 = vrot.slane %v1218, 7
      %v1221 = vrot.slane %v1220, 4
      %v1223 = vshrl.u32 %v511, 16
      %v1225 = vrot.slane %v1223, 7
      %v1226 = vshll.u32 %v511, 16
      %v1228 = vor.u32 %v1225, %v1226
      %v1229 = vsel %vm552, %v1221, %v1228
      %v1230 = vrot.slane %v1225, 4
      %v1232 = vshrl.u32 %v512, 16
      %v1234 = vrot.slane %v1232, 7
      %v1235 = vshll.u32 %v512, 16
      %v1237 = vor.u32 %v1234, %v1235
      %v1238 = vsel %vm552, %v1230, %v1237
      %v1240 = vshrl.u32 %v548, 16
      %v1242 = vrot.slane %v1240, 3
      %v1243 = vshll.u32 %v548, 16
      %v1245 = vrot.slane %v1243, 4
      %v1246 = vor.u32 %v1242, %v1245
      %v1248 = vshrl.u32 %v549, 16
      %v1250 = vrot.slane %v1248, 3
      %v1251 = vshll.u32 %v549, 16
      %v1253 = vrot.slane %v1251, 4
      %v1254 = vor.u32 %v1250, %v1253
      %v1255 = vsel %vm905, %v1246, %v1254
      %vm1288 = vcmask 1043456
      %v1289 = vrot.slane %v514, 4
      %v1290 = vrot.slane %v515, 4
      %v1291 = vsel %vm1288, %v1289, %v1290
      %v1292 = vrot.slane %v516, 4
      %v1293 = vrot.slane %v517, 4
      %v1294 = vsel %vm1288, %v1292, %v1293
      %v1295 = vrot.slane %v518, 4
      %v1296 = vrot.slane %v519, 4
      %v1297 = vsel %vm1288, %v1295, %v1296
      %v1298 = vrot.slane %v520, 4
      %v1299 = vrot.slane %v521, 4
      %v1300 = vsel %vm1288, %v1298, %v1299
      %v1301 = vrot.slane %v522, 4
      %v1302 = vrot.slane %v523, 4
      %v1303 = vsel %vm1288, %v1301, %v1302
      %v1304 = vrot.slane %v524, 4
      %v1305 = vrot.slane %v525, 4
      %v1306 = vsel %vm1288, %v1304, %v1305
      %v1307 = vrot.slane %v526, 4
      %v1308 = vrot.slane %v527, 4
      %v1309 = vsel %vm1288, %v1307, %v1308
      %v1310 = vrot.slane %v528, 4
      %v1311 = vrot.slane %v529, 4
      %v1312 = vsel %vm1288, %v1310, %v1311
      %v1313 = vrot.slane %v530, 4
      %v1314 = vrot.slane %v531, 4
      %v1315 = vsel %vm1288, %v1313, %v1314
      %v1316 = vrot.slane %v532, 4
      %v1317 = vrot.slane %v533, 4
      %v1318 = vsel %vm1288, %v1316, %v1317
      %v1319 = vrot.slane %v534, 4
      %v1320 = vrot.slane %v535, 4
      %v1321 = vsel %vm1288, %v1319, %v1320
      %v1322 = vrot.slane %v536, 4
      %v1323 = vrot.slane %v537, 4
      %v1324 = vsel %vm1288, %v1322, %v1323
      %v1325 = vrot.slane %v538, 4
      %v1326 = vrot.slane %v539, 4
      %v1327 = vsel %vm1288, %v1325, %v1326
      %v1328 = vrot.slane %v540, 4
      %v1329 = vrot.slane %v541, 4
      %v1330 = vsel %vm1288, %v1328, %v1329
      %v1331 = vrot.slane %v542, 4
      %v1332 = vrot.slane %v543, 4
      %v1333 = vsel %vm1288, %v1331, %v1332
      %v1334 = vrot.slane %v544, 4
      %v1335 = vrot.slane %v545, 4
      %v1336 = vsel %vm1288, %v1334, %v1335
      %v1339 = vrot.slane %v546, 4
      %v1340 = vrot.slane %v547, 4
      %v1341 = vsel %vm1288, %v1339, %v1340
      %v1344 = vrot.slane %v548, 4
      %v1345 = vrot.slane %v549, 4
      %v1346 = vsel %vm1288, %v1344, %v1345
      %vm1347 = vsmask.f32 3328
      %vm1348 = vsmask.f32 7440
      %vm1349 = vmor %vm1347, %vm1348
      %v1350 = vrot.slane %v559, 4
      %v1351 = vrot.slane %v562, 5
      %v1352 = vor.u32 %v1350, %v1351
      %v1353 = vrot.slane %v1352, 4
      %v1354 = vrot.slane %v571, 5
      %v1355 = vsel %vm1349, %v1353, %v1354
      %v1356 = vrot.slane %v568, 4
      %v1357 = vor.u32 %v1356, %v1354
      %v1358 = vrot.slane %v1357, 4
      %v1360 = vshll.u32 %v445, 16
      %v1362 = vrot.slane %v1360, 5
      %v1363 = vsel %vm1349, %v1358, %v1362
      %v1364 = vrot.slane %v581, 4
      %v1365 = vrot.slane %v584, 5
      %v1366 = vor.u32 %v1364, %v1365
      %v1367 = vrot.slane %v1366, 4
      %v1368 = vrot.slane %v593, 5
      %v1369 = vsel %vm1349, %v1367, %v1368
      %v1370 = vrot.slane %v590, 4
      %v1371 = vor.u32 %v1370, %v1368
      %v1372 = vrot.slane %v1371, 4
      %v1374 = vshll.u32 %v449, 16
      %v1376 = vrot.slane %v1374, 5
      %v1377 = vsel %vm1349, %v1372, %v1376
      %v1378 = vrot.slane %v603, 4
      %v1379 = vrot.slane %v606, 5
      %v1380 = vor.u32 %v1378, %v1379
      %v1381 = vrot.slane %v1380, 4
      %v1382 = vrot.slane %v615, 5
      %v1383 = vsel %vm1349, %v1381, %v1382
      %v1384 = vrot.slane %v612, 4
      %v1385 = vor.u32 %v1384, %v1382
      %v1386 = vrot.slane %v1385, 4
      %v1388 = vshll.u32 %v453, 16
      %v1390 = vrot.slane %v1388, 5
      %v1391 = vsel %vm1349, %v1386, %v1390
      %v1392 = vrot.slane %v625, 4
      %v1393 = vrot.slane %v628, 5
      %v1394 = vor.u32 %v1392, %v1393
      %v1395 = vrot.slane %v1394, 4
      %v1396 = vrot.slane %v637, 5
      %v1397 = vsel %vm1349, %v1395, %v1396
      %v1398 = vrot.slane %v634, 4
      %v1399 = vor.u32 %v1398, %v1396
      %v1400 = vrot.slane %v1399, 4
      %v1402 = vshll.u32 %v457, 16
      %v1404 = vrot.slane %v1402, 5
      %v1405 = vsel %vm1349, %v1400, %v1404
      %v1406 = vrot.slane %v647, 4
      %v1407 = vrot.slane %v650, 5
      %v1408 = vor.u32 %v1406, %v1407
      %v1409 = vrot.slane %v1408, 4
      %v1410 = vrot.slane %v659, 5
      %v1411 = vsel %vm1349, %v1409, %v1410
      %v1412 = vrot.slane %v656, 4
      %v1413 = vor.u32 %v1412, %v1410
      %v1414 = vrot.slane %v1413, 4
      %v1416 = vshll.u32 %v461, 16
      %v1418 = vrot.slane %v1416, 5
      %v1419 = vsel %vm1349, %v1414, %v1418
      %v1420 = vrot.slane %v669, 4
      %v1421 = vrot.slane %v672, 5
      %v1422 = vor.u32 %v1420, %v1421
      %v1423 = vrot.slane %v1422, 4
      %v1424 = vrot.slane %v681, 5
      %v1425 = vsel %vm1349, %v1423, %v1424
      %v1426 = vrot.slane %v678, 4
      %v1427 = vor.u32 %v1426, %v1424
      %v1428 = vrot.slane %v1427, 4
      %v1430 = vshll.u32 %v465, 16
      %v1432 = vrot.slane %v1430, 5
      %v1433 = vsel %vm1349, %v1428, %v1432
      %v1434 = vrot.slane %v691, 4
      %v1435 = vrot.slane %v694, 5
      %v1436 = vor.u32 %v1434, %v1435
      %v1437 = vrot.slane %v1436, 4
      %v1438 = vrot.slane %v703, 5
      %v1439 = vsel %vm1349, %v1437, %v1438
      %v1440 = vrot.slane %v700, 4
      %v1441 = vor.u32 %v1440, %v1438
      %v1442 = vrot.slane %v1441, 4
      %v1444 = vshll.u32 %v469, 16
      %v1446 = vrot.slane %v1444, 5
      %v1447 = vsel %vm1349, %v1442, %v1446
      %v1448 = vrot.slane %v713, 4
      %v1449 = vrot.slane %v716, 5
      %v1450 = vor.u32 %v1448, %v1449
      %v1451 = vrot.slane %v1450, 4
      %v1452 = vrot.slane %v725, 5
      %v1453 = vsel %vm1349, %v1451, %v1452
      %v1454 = vrot.slane %v722, 4
      %v1455 = vor.u32 %v1454, %v1452
      %v1456 = vrot.slane %v1455, 4
      %v1458 = vshll.u32 %v473, 16
      %v1460 = vrot.slane %v1458, 5
      %v1461 = vsel %vm1349, %v1456, %v1460
      %v1462 = vrot.slane %v735, 4
      %v1463 = vrot.slane %v738, 5
      %v1464 = vor.u32 %v1462, %v1463
      %v1465 = vrot.slane %v1464, 4
      %v1466 = vrot.slane %v747, 5
      %v1467 = vsel %vm1349, %v1465, %v1466
      %v1468 = vrot.slane %v744, 4
      %v1469 = vor.u32 %v1468, %v1466
      %v1470 = vrot.slane %v1469, 4
      %v1472 = vshll.u32 %v477, 16
      %v1474 = vrot.slane %v1472, 5
      %v1475 = vsel %vm1349, %v1470, %v1474
      %v1476 = vrot.slane %v757, 4
      %v1477 = vrot.slane %v760, 5
      %v1478 = vor.u32 %v1476, %v1477
      %v1479 = vrot.slane %v1478, 4
      %v1480 = vrot.slane %v769, 5
      %v1481 = vsel %vm1349, %v1479, %v1480
      %v1482 = vrot.slane %v766, 4
      %v1483 = vor.u32 %v1482, %v1480
      %v1484 = vrot.slane %v1483, 4
      %v1486 = vshll.u32 %v481, 16
      %v1488 = vrot.slane %v1486, 5
      %v1489 = vsel %vm1349, %v1484, %v1488
      %v1490 = vrot.slane %v779, 4
      %v1491 = vrot.slane %v782, 5
      %v1492 = vor.u32 %v1490, %v1491
      %v1493 = vrot.slane %v1492, 4
      %v1494 = vrot.slane %v791, 5
      %v1495 = vsel %vm1349, %v1493, %v1494
      %v1496 = vrot.slane %v788, 4
      %v1497 = vor.u32 %v1496, %v1494
      %v1498 = vrot.slane %v1497, 4
      %v1500 = vshll.u32 %v485, 16
      %v1502 = vrot.slane %v1500, 5
      %v1503 = vsel %vm1349, %v1498, %v1502
      %v1504 = vrot.slane %v801, 4
      %v1505 = vrot.slane %v804, 5
      %v1506 = vor.u32 %v1504, %v1505
      %v1507 = vrot.slane %v1506, 4
      %v1508 = vrot.slane %v813, 5
      %v1509 = vsel %vm1349, %v1507, %v1508
      %v1510 = vrot.slane %v810, 4
      %v1511 = vor.u32 %v1510, %v1508
      %v1512 = vrot.slane %v1511, 4
      %v1514 = vshll.u32 %v489, 16
      %v1516 = vrot.slane %v1514, 5
      %v1517 = vsel %vm1349, %v1512, %v1516
      %v1518 = vrot.slane %v823, 4
      %v1519 = vrot.slane %v826, 5
      %v1520 = vor.u32 %v1518, %v1519
      %v1521 = vrot.slane %v1520, 4
      %v1522 = vrot.slane %v835, 5
      %v1523 = vsel %vm1349, %v1521, %v1522
      %v1524 = vrot.slane %v832, 4
      %v1525 = vor.u32 %v1524, %v1522
      %v1526 = vrot.slane %v1525, 4
      %v1528 = vshll.u32 %v493, 16
      %v1530 = vrot.slane %v1528, 5
      %v1531 = vsel %vm1349, %v1526, %v1530
      %v1532 = vrot.slane %v845, 4
      %v1533 = vrot.slane %v848, 5
      %v1534 = vor.u32 %v1532, %v1533
      %v1535 = vrot.slane %v1534, 4
      %v1536 = vrot.slane %v857, 5
      %v1537 = vsel %vm1349, %v1535, %v1536
      %v1538 = vrot.slane %v854, 4
      %v1539 = vor.u32 %v1538, %v1536
      %v1540 = vrot.slane %v1539, 4
      %v1542 = vshll.u32 %v497, 16
      %v1544 = vrot.slane %v1542, 5
      %v1545 = vsel %vm1349, %v1540, %v1544
      %v1546 = vrot.slane %v867, 4
      %v1547 = vrot.slane %v870, 5
      %v1548 = vor.u32 %v1546, %v1547
      %v1549 = vrot.slane %v1548, 4
      %v1550 = vrot.slane %v879, 5
      %v1551 = vsel %vm1349, %v1549, %v1550
      %v1552 = vrot.slane %v876, 4
      %v1553 = vor.u32 %v1552, %v1550
      %v1554 = vrot.slane %v1553, 4
      %v1556 = vshll.u32 %v501, 16
      %v1558 = vrot.slane %v1556, 5
      %v1559 = vsel %vm1349, %v1554, %v1558
      %v1560 = vrot.slane %v889, 4
      %v1561 = vrot.slane %v892, 5
      %v1562 = vor.u32 %v1560, %v1561
      %v1563 = vrot.slane %v1562, 4
      %v1564 = vrot.slane %v901, 5
      %v1565 = vsel %vm1349, %v1563, %v1564
      %v1566 = vrot.slane %v898, 4
      %v1567 = vor.u32 %v1566, %v1564
      %v1568 = vrot.slane %v1567, 4
      %v1570 = vshll.u32 %v505, 16
      %v1572 = vrot.slane %v1570, 5
      %v1573 = vsel %vm1349, %v1568, %v1572
      %v1574 = vrot.slane %v907, 4
      %v1575 = vrot.slane %v910, 5
      %v1576 = vor.u32 %v1574, %v1575
      %v1577 = vrot.slane %v915, 4
      %v1578 = vrot.slane %v918, 5
      %v1579 = vor.u32 %v1577, %v1578
      %v1580 = vsel %vm1347, %v1576, %v1579
      %v1581 = vrot.slane %v924, 4
      %v1582 = vrot.slane %v927, 5
      %v1583 = vor.u32 %v1581, %v1582
      %v1584 = vrot.slane %v932, 4
      %v1585 = vrot.slane %v935, 5
      %v1586 = vor.u32 %v1584, %v1585
      %v1587 = vsel %vm1347, %v1583, %v1586
      %v1588 = vrot.slane %v941, 4
      %v1589 = vrot.slane %v944, 5
      %v1590 = vor.u32 %v1588, %v1589
      %v1591 = vrot.slane %v949, 4
      %v1592 = vrot.slane %v952, 5
      %v1593 = vor.u32 %v1591, %v1592
      %v1594 = vsel %vm1347, %v1590, %v1593
      %v1595 = vrot.slane %v958, 4
      %v1596 = vrot.slane %v961, 5
      %v1597 = vor.u32 %v1595, %v1596
      %v1598 = vrot.slane %v966, 4
      %v1599 = vrot.slane %v969, 5
      %v1600 = vor.u32 %v1598, %v1599
      %v1601 = vsel %vm1347, %v1597, %v1600
      %v1602 = vrot.slane %v975, 4
      %v1603 = vrot.slane %v978, 5
      %v1604 = vor.u32 %v1602, %v1603
      %v1605 = vrot.slane %v983, 4
      %v1606 = vrot.slane %v986, 5
      %v1607 = vor.u32 %v1605, %v1606
      %v1608 = vsel %vm1347, %v1604, %v1607
      %v1609 = vrot.slane %v992, 4
      %v1610 = vrot.slane %v995, 5
      %v1611 = vor.u32 %v1609, %v1610
      %v1612 = vrot.slane %v1000, 4
      %v1613 = vrot.slane %v1003, 5
      %v1614 = vor.u32 %v1612, %v1613
      %v1615 = vsel %vm1347, %v1611, %v1614
      %v1616 = vrot.slane %v1009, 4
      %v1617 = vrot.slane %v1012, 5
      %v1618 = vor.u32 %v1616, %v1617
      %v1619 = vrot.slane %v1017, 4
      %v1620 = vrot.slane %v1020, 5
      %v1621 = vor.u32 %v1619, %v1620
      %v1622 = vsel %vm1347, %v1618, %v1621
      %v1623 = vrot.slane %v1026, 4
      %v1624 = vrot.slane %v1029, 5
      %v1625 = vor.u32 %v1623, %v1624
      %v1626 = vrot.slane %v1034, 4
      %v1627 = vrot.slane %v1037, 5
      %v1628 = vor.u32 %v1626, %v1627
      %v1629 = vsel %vm1347, %v1625, %v1628
      %v1630 = vrot.slane %v1043, 4
      %v1631 = vrot.slane %v1046, 5
      %v1632 = vor.u32 %v1630, %v1631
      %v1633 = vrot.slane %v1051, 4
      %v1634 = vrot.slane %v1054, 5
      %v1635 = vor.u32 %v1633, %v1634
      %v1636 = vsel %vm1347, %v1632, %v1635
      %v1637 = vrot.slane %v1060, 4
      %v1638 = vrot.slane %v1063, 5
      %v1639 = vor.u32 %v1637, %v1638
      %v1640 = vrot.slane %v1068, 4
      %v1641 = vrot.slane %v1071, 5
      %v1642 = vor.u32 %v1640, %v1641
      %v1643 = vsel %vm1347, %v1639, %v1642
      %v1644 = vrot.slane %v1077, 4
      %v1645 = vrot.slane %v1080, 5
      %v1646 = vor.u32 %v1644, %v1645
      %v1647 = vrot.slane %v1085, 4
      %v1648 = vrot.slane %v1088, 5
      %v1649 = vor.u32 %v1647, %v1648
      %v1650 = vsel %vm1347, %v1646, %v1649
      %v1651 = vrot.slane %v1094, 4
      %v1652 = vrot.slane %v1097, 5
      %v1653 = vor.u32 %v1651, %v1652
      %v1654 = vrot.slane %v1102, 4
      %v1655 = vrot.slane %v1105, 5
      %v1656 = vor.u32 %v1654, %v1655
      %v1657 = vsel %vm1347, %v1653, %v1656
      %v1658 = vrot.slane %v1111, 4
      %v1659 = vrot.slane %v1114, 5
      %v1660 = vor.u32 %v1658, %v1659
      %v1661 = vrot.slane %v1119, 4
      %v1662 = vrot.slane %v1122, 5
      %v1663 = vor.u32 %v1661, %v1662
      %v1664 = vsel %vm1347, %v1660, %v1663
      %v1665 = vrot.slane %v1128, 4
      %v1666 = vrot.slane %v1131, 5
      %v1667 = vor.u32 %v1665, %v1666
      %v1668 = vrot.slane %v1136, 4
      %v1669 = vrot.slane %v1139, 5
      %v1670 = vor.u32 %v1668, %v1669
      %v1671 = vsel %vm1347, %v1667, %v1670
      %v1672 = vrot.slane %v1145, 4
      %v1673 = vrot.slane %v1148, 5
      %v1674 = vor.u32 %v1672, %v1673
      %v1675 = vrot.slane %v1153, 4
      %v1676 = vrot.slane %v1156, 5
      %v1677 = vor.u32 %v1675, %v1676
      %v1678 = vsel %vm1347, %v1674, %v1677
      %v1679 = vrot.slane %v1162, 4
      %v1680 = vrot.slane %v1165, 5
      %v1681 = vor.u32 %v1679, %v1680
      %v1682 = vrot.slane %v1170, 4
      %v1683 = vrot.slane %v1173, 5
      %v1684 = vor.u32 %v1682, %v1683
      %v1685 = vsel %vm1347, %v1681, %v1684
      %v1686 = vrot.slane %v1184, 4
      %v1687 = vrot.slane %v1187, 5
      %v1688 = vor.u32 %v1686, %v1687
      %v1689 = vrot.slane %v1688, 4
      %v1690 = vrot.slane %v1196, 5
      %v1691 = vsel %vm1349, %v1689, %v1690
      %v1692 = vrot.slane %v1193, 4
      %v1693 = vor.u32 %v1692, %v1690
      %v1694 = vrot.slane %v1693, 4
      %v1696 = vshll.u32 %v509, 16
      %v1698 = vrot.slane %v1696, 5
      %v1699 = vsel %vm1349, %v1694, %v1698
      %v1700 = vrot.slane %v1201, 4
      %v1701 = vrot.slane %v1204, 5
      %v1702 = vor.u32 %v1700, %v1701
      %v1703 = vrot.slane %v1209, 4
      %v1704 = vrot.slane %v1212, 5
      %v1705 = vor.u32 %v1703, %v1704
      %v1706 = vsel %vm1347, %v1702, %v1705
      %v1707 = vrot.slane %v1223, 4
      %v1708 = vrot.slane %v1226, 5
      %v1709 = vor.u32 %v1707, %v1708
      %v1710 = vrot.slane %v1709, 4
      %v1711 = vrot.slane %v1235, 5
      %v1712 = vsel %vm1349, %v1710, %v1711
      %v1713 = vrot.slane %v1232, 4
      %v1714 = vor.u32 %v1713, %v1711
      %v1715 = vrot.slane %v1714, 4
      %v1717 = vshll.u32 %v513, 16
      %v1719 = vrot.slane %v1717, 5
      %v1720 = vsel %vm1349, %v1715, %v1719
      %v1721 = vrot.slane %v1240, 4
      %v1722 = vrot.slane %v1243, 5
      %v1723 = vor.u32 %v1721, %v1722
      %v1724 = vrot.slane %v1248, 4
      %v1725 = vrot.slane %v1251, 5
      %v1726 = vor.u32 %v1724, %v1725
      %v1727 = vsel %vm1347, %v1723, %v1726
      %v1728 = vunpack.c.l.b16 %v565
      %v1729 = vunpack.c.l.b16 %v574
      %v1730 = vunpack.c.l.b16 %v587
      %v1731 = vunpack.c.l.b16 %v596
      %v1732 = vunpack.c.l.b16 %v609
      %v1733 = vunpack.c.l.b16 %v618
      %v1734 = vunpack.c.l.b16 %v631
      %v1735 = vunpack.c.l.b16 %v640
      %v1736 = vunpack.c.l.b16 %v653
      %v1737 = vunpack.c.l.b16 %v662
      %v1738 = vunpack.c.l.b16 %v675
      %v1739 = vunpack.c.l.b16 %v684
      %v1740 = vunpack.c.l.b16 %v697
      %v1741 = vunpack.c.l.b16 %v706
      %v1742 = vunpack.c.l.b16 %v719
      %v1743 = vunpack.c.l.b16 %v728
      %v1744 = vunpack.c.l.b16 %v741
      %v1745 = vunpack.c.l.b16 %v750
      %v1746 = vunpack.c.l.b16 %v763
      %v1747 = vunpack.c.l.b16 %v772
      %v1748 = vunpack.c.l.b16 %v785
      %v1749 = vunpack.c.l.b16 %v794
      %v1750 = vunpack.c.l.b16 %v807
      %v1751 = vunpack.c.l.b16 %v816
      %v1752 = vunpack.c.l.b16 %v829
      %v1753 = vunpack.c.l.b16 %v838
      %v1754 = vunpack.c.l.b16 %v851
      %v1755 = vunpack.c.l.b16 %v860
      %v1756 = vunpack.c.l.b16 %v873
      %v1757 = vunpack.c.l.b16 %v882
      %v1758 = vunpack.c.l.b16 %v895
      %v1759 = vunpack.c.l.b16 %v904
      %v1760 = vpack.c.b16 %v1729, %v1728
      %v1761 = vpack.c.b16 %v1731, %v1730
      %v1762 = vpack.c.b16 %v1733, %v1732
      %v1763 = vpack.c.b16 %v1735, %v1734
      %v1764 = vpack.c.b16 %v1737, %v1736
      %v1765 = vpack.c.b16 %v1739, %v1738
      %v1766 = vpack.c.b16 %v1741, %v1740
      %v1767 = vpack.c.b16 %v1743, %v1742
      %v1768 = vpack.c.b16 %v1745, %v1744
      %v1769 = vpack.c.b16 %v1747, %v1746
      %v1770 = vpack.c.b16 %v1749, %v1748
      %v1771 = vpack.c.b16 %v1751, %v1750
      %v1772 = vpack.c.b16 %v1753, %v1752
      %v1773 = vpack.c.b16 %v1755, %v1754
      %v1774 = vpack.c.b16 %v1757, %v1756
      %v1775 = vpack.c.b16 %v1759, %v1758
      %1776 = vrot.lane.b32.xlu0 %v922, 4
      %v1777 = vpop.permute.xlu0 %1776
      %1778 = vrot.lane.b32.xlu0 %v939, 4
      %v1779 = vpop.permute.xlu0 %1778
      %1780 = vrot.lane.b32.xlu0 %v956, 4
      %v1781 = vpop.permute.xlu0 %1780
      %1782 = vrot.lane.b32.xlu0 %v973, 4
      %v1783 = vpop.permute.xlu0 %1782
      %1784 = vrot.lane.b32.xlu0 %v990, 4
      %v1785 = vpop.permute.xlu0 %1784
      %1786 = vrot.lane.b32.xlu0 %v1007, 4
      %v1787 = vpop.permute.xlu0 %1786
      %1788 = vrot.lane.b32.xlu0 %v1024, 4
      %v1789 = vpop.permute.xlu0 %1788
      %1790 = vrot.lane.b32.xlu0 %v1041, 4
      %v1791 = vpop.permute.xlu0 %1790
      %1792 = vrot.lane.b32.xlu0 %v1058, 4
      %v1793 = vpop.permute.xlu0 %1792
      %1794 = vrot.lane.b32.xlu0 %v1075, 4
      %v1795 = vpop.permute.xlu0 %1794
      %1796 = vrot.lane.b32.xlu0 %v1092, 4
      %v1797 = vpop.permute.xlu0 %1796
      %1798 = vrot.lane.b32.xlu0 %v1109, 4
      %v1799 = vpop.permute.xlu0 %1798
      %1800 = vrot.lane.b32.xlu0 %v1126, 4
      %v1801 = vpop.permute.xlu0 %1800
      %1802 = vrot.lane.b32.xlu0 %v1143, 4
      %v1803 = vpop.permute.xlu0 %1802
      %1804 = vrot.lane.b32.xlu0 %v1160, 4
      %v1805 = vpop.permute.xlu0 %1804
      %1806 = vrot.lane.b32.xlu0 %v1177, 4
      %v1807 = vpop.permute.xlu0 %1806
      %v1808 = vunpack.c.l.b16 %v1190
      %v1809 = vunpack.c.l.b16 %v1199
      %v1810 = vpack.c.b16 %v1809, %v1808
      %1811 = vrot.lane.b32.xlu0 %v1761, 12
      %v1812 = vpop.permute.xlu0 %1811
      %1813 = vrot.lane.b32.xlu0 %v1762, 12
      %v1814 = vpop.permute.xlu0 %1813
      %1815 = vrot.lane.b32.xlu0 %v1763, 12
      %v1816 = vpop.permute.xlu0 %1815
      %1817 = vrot.lane.b32.xlu0 %v1764, 12
      %v1818 = vpop.permute.xlu0 %1817
      %1819 = vrot.lane.b32.xlu0 %v1765, 12
      %v1820 = vpop.permute.xlu0 %1819
      %1821 = vrot.lane.b32.xlu0 %v1766, 12
      %v1822 = vpop.permute.xlu0 %1821
      %1823 = vrot.lane.b32.xlu0 %v1767, 12
      %v1824 = vpop.permute.xlu0 %1823
      %1825 = vrot.lane.b32.xlu0 %v1768, 12
      %v1826 = vpop.permute.xlu0 %1825
      %1827 = vrot.lane.b32.xlu0 %v1769, 12
      %v1828 = vpop.permute.xlu0 %1827
      %1829 = vrot.lane.b32.xlu0 %v1770, 12
      %v1830 = vpop.permute.xlu0 %1829
      %1831 = vrot.lane.b32.xlu0 %v1771, 12
      %v1832 = vpop.permute.xlu0 %1831
      %1833 = vrot.lane.b32.xlu0 %v1772, 12
      %v1834 = vpop.permute.xlu0 %1833
      %1835 = vrot.lane.b32.xlu0 %v1773, 12
      %v1836 = vpop.permute.xlu0 %1835
      %1837 = vrot.lane.b32.xlu0 %v1774, 12
      %v1838 = vpop.permute.xlu0 %1837
      %1839 = vrot.lane.b32.xlu0 %v1775, 12
      %v1840 = vpop.permute.xlu0 %1839
      %1841 = vrot.lane.b32.xlu0 %v1810, 12
      %v1842 = vpop.permute.xlu0 %1841
      %1843 = vrot.lane.b32.xlu0 %v939, 16
      %v1844 = vpop.permute.xlu0 %1843
      %1845 = vrot.lane.b32.xlu0 %v956, 16
      %v1846 = vpop.permute.xlu0 %1845
      %1847 = vrot.lane.b32.xlu0 %v973, 16
      %v1848 = vpop.permute.xlu0 %1847
      %1849 = vrot.lane.b32.xlu0 %v990, 16
      %v1850 = vpop.permute.xlu0 %1849
      %1851 = vrot.lane.b32.xlu0 %v1007, 16
      %v1852 = vpop.permute.xlu0 %1851
      %1853 = vrot.lane.b32.xlu0 %v1024, 16
      %v1854 = vpop.permute.xlu0 %1853
      %1855 = vrot.lane.b32.xlu0 %v1041, 16
      %v1856 = vpop.permute.xlu0 %1855
      %1857 = vrot.lane.b32.xlu0 %v1058, 16
      %v1858 = vpop.permute.xlu0 %1857
      %1859 = vrot.lane.b32.xlu0 %v1075, 16
      %v1860 = vpop.permute.xlu0 %1859
      %1861 = vrot.lane.b32.xlu0 %v1092, 16
      %v1862 = vpop.permute.xlu0 %1861
      %1863 = vrot.lane.b32.xlu0 %v1109, 16
      %v1864 = vpop.permute.xlu0 %1863
      %1865 = vrot.lane.b32.xlu0 %v1126, 16
      %v1866 = vpop.permute.xlu0 %1865
      %1867 = vrot.lane.b32.xlu0 %v1143, 16
      %v1868 = vpop.permute.xlu0 %1867
      %1869 = vrot.lane.b32.xlu0 %v1160, 16
      %v1870 = vpop.permute.xlu0 %1869
      %1871 = vrot.lane.b32.xlu0 %v1177, 16
      %v1872 = vpop.permute.xlu0 %1871
      %1873 = vrot.lane.b32.xlu0 %v1216, 16
      %v1874 = vpop.permute.xlu0 %1873
      %v1875 = vunpack.c.l.b16 %v1229
      %v1876 = vunpack.c.l.b16 %v1238
      %v1877 = vpack.c.b16 %v1876, %v1875
      %1878 = vrot.lane.b32.xlu0 %v1762, 24
      %v1879 = vpop.permute.xlu0 %1878
      %1880 = vrot.lane.b32.xlu0 %v1763, 24
      %v1881 = vpop.permute.xlu0 %1880
      %1882 = vrot.lane.b32.xlu0 %v1764, 24
      %v1883 = vpop.permute.xlu0 %1882
      %1884 = vrot.lane.b32.xlu0 %v1765, 24
      %v1885 = vpop.permute.xlu0 %1884
      %1886 = vrot.lane.b32.xlu0 %v1766, 24
      %v1887 = vpop.permute.xlu0 %1886
      %1888 = vrot.lane.b32.xlu0 %v1767, 24
      %v1889 = vpop.permute.xlu0 %1888
      %1890 = vrot.lane.b32.xlu0 %v1768, 24
      %v1891 = vpop.permute.xlu0 %1890
      %1892 = vrot.lane.b32.xlu0 %v1769, 24
      %v1893 = vpop.permute.xlu0 %1892
      %1894 = vrot.lane.b32.xlu0 %v1770, 24
      %v1895 = vpop.permute.xlu0 %1894
      %1896 = vrot.lane.b32.xlu0 %v1771, 24
      %v1897 = vpop.permute.xlu0 %1896
      %1898 = vrot.lane.b32.xlu0 %v1772, 24
      %v1899 = vpop.permute.xlu0 %1898
      %1900 = vrot.lane.b32.xlu0 %v1773, 24
      %v1901 = vpop.permute.xlu0 %1900
      %1902 = vrot.lane.b32.xlu0 %v1774, 24
      %v1903 = vpop.permute.xlu0 %1902
      %1904 = vrot.lane.b32.xlu0 %v1775, 24
      %v1905 = vpop.permute.xlu0 %1904
      %1906 = vrot.lane.b32.xlu0 %v1810, 24
      %v1907 = vpop.permute.xlu0 %1906
      %1908 = vrot.lane.b32.xlu0 %v1877, 24
      %v1909 = vpop.permute.xlu0 %1908
      %1910 = vrot.lane.b32.xlu0 %v956, 28
      %v1911 = vpop.permute.xlu0 %1910
      %1912 = vrot.lane.b32.xlu0 %v973, 28
      %v1913 = vpop.permute.xlu0 %1912
      %1914 = vrot.lane.b32.xlu0 %v990, 28
      %v1915 = vpop.permute.xlu0 %1914
      %1916 = vrot.lane.b32.xlu0 %v1007, 28
      %v1917 = vpop.permute.xlu0 %1916
      %1918 = vrot.lane.b32.xlu0 %v1024, 28
      %v1919 = vpop.permute.xlu0 %1918
      %1920 = vrot.lane.b32.xlu0 %v1041, 28
      %v1921 = vpop.permute.xlu0 %1920
      %1922 = vrot.lane.b32.xlu0 %v1058, 28
      %v1923 = vpop.permute.xlu0 %1922
      %1924 = vrot.lane.b32.xlu0 %v1075, 28
      %v1925 = vpop.permute.xlu0 %1924
      %1926 = vrot.lane.b32.xlu0 %v1092, 28
      %v1927 = vpop.permute.xlu0 %1926
      %1928 = vrot.lane.b32.xlu0 %v1109, 28
      %v1929 = vpop.permute.xlu0 %1928
      %1930 = vrot.lane.b32.xlu0 %v1126, 28
      %v1931 = vpop.permute.xlu0 %1930
      %1932 = vrot.lane.b32.xlu0 %v1143, 28
      %v1933 = vpop.permute.xlu0 %1932
      %1934 = vrot.lane.b32.xlu0 %v1160, 28
      %v1935 = vpop.permute.xlu0 %1934
      %1936 = vrot.lane.b32.xlu0 %v1177, 28
      %v1937 = vpop.permute.xlu0 %1936
      %1938 = vrot.lane.b32.xlu0 %v1216, 28
      %v1939 = vpop.permute.xlu0 %1938
      %1940 = vrot.lane.b32.xlu0 %v1255, 28
      %v1941 = vpop.permute.xlu0 %1940
      %v1974 = vunpack.c.l.b16 %v443
      %v1975 = vunpack.c.l.b16 %v444
      %v1976 = vunpack.c.l.b16 %v447
      %v1977 = vunpack.c.l.b16 %v448
      %v1978 = vunpack.c.l.b16 %v451
      %v1979 = vunpack.c.l.b16 %v452
      %v1980 = vunpack.c.l.b16 %v455
      %v1981 = vunpack.c.l.b16 %v456
      %v1982 = vunpack.c.l.b16 %v459
      %v1983 = vunpack.c.l.b16 %v460
      %v1984 = vunpack.c.l.b16 %v463
      %v1985 = vunpack.c.l.b16 %v464
      %v1986 = vunpack.c.l.b16 %v467
      %v1987 = vunpack.c.l.b16 %v468
      %v1988 = vunpack.c.l.b16 %v471
      %v1989 = vunpack.c.l.b16 %v472
      %v1990 = vunpack.c.l.b16 %v475
      %v1991 = vunpack.c.l.b16 %v476
      %v1992 = vunpack.c.l.b16 %v479
      %v1993 = vunpack.c.l.b16 %v480
      %v1994 = vunpack.c.l.b16 %v483
      %v1995 = vunpack.c.l.b16 %v484
      %v1996 = vunpack.c.l.b16 %v487
      %v1997 = vunpack.c.l.b16 %v488
      %v1998 = vunpack.c.l.b16 %v491
      %v1999 = vunpack.c.l.b16 %v492
      %v2000 = vunpack.c.l.b16 %v495
      %v2001 = vunpack.c.l.b16 %v496
      %v2002 = vunpack.c.l.b16 %v499
      %v2003 = vunpack.c.l.b16 %v500
      %v2004 = vunpack.c.l.b16 %v503
      %v2005 = vunpack.c.l.b16 %v504
      %v2006 = vpack.c.b16 %v1975, %v1974
      %v2007 = vpack.c.b16 %v1977, %v1976
      %v2008 = vpack.c.b16 %v1979, %v1978
      %v2009 = vpack.c.b16 %v1981, %v1980
      %v2010 = vpack.c.b16 %v1983, %v1982
      %v2011 = vpack.c.b16 %v1985, %v1984
      %v2012 = vpack.c.b16 %v1987, %v1986
      %v2013 = vpack.c.b16 %v1989, %v1988
      %v2014 = vpack.c.b16 %v1991, %v1990
      %v2015 = vpack.c.b16 %v1993, %v1992
      %v2016 = vpack.c.b16 %v1995, %v1994
      %v2017 = vpack.c.b16 %v1997, %v1996
      %v2018 = vpack.c.b16 %v1999, %v1998
      %v2019 = vpack.c.b16 %v2001, %v2000
      %v2020 = vpack.c.b16 %v2003, %v2002
      %v2021 = vpack.c.b16 %v2005, %v2004
      %2022 = vrot.lane.b32.xlu0 %v2006, 36
      %v2023 = vpop.permute.xlu0 %2022
      %2024 = vrot.lane.b32.xlu0 %v2007, 36
      %v2025 = vpop.permute.xlu0 %2024
      %2026 = vrot.lane.b32.xlu0 %v2008, 36
      %v2027 = vpop.permute.xlu0 %2026
      %2028 = vrot.lane.b32.xlu0 %v2009, 36
      %v2029 = vpop.permute.xlu0 %2028
      %2030 = vrot.lane.b32.xlu0 %v2010, 36
      %v2031 = vpop.permute.xlu0 %2030
      %2032 = vrot.lane.b32.xlu0 %v2011, 36
      %v2033 = vpop.permute.xlu0 %2032
      %2034 = vrot.lane.b32.xlu0 %v2012, 36
      %v2035 = vpop.permute.xlu0 %2034
      %2036 = vrot.lane.b32.xlu0 %v2013, 36
      %v2037 = vpop.permute.xlu0 %2036
      %2038 = vrot.lane.b32.xlu0 %v2014, 36
      %v2039 = vpop.permute.xlu0 %2038
      %2040 = vrot.lane.b32.xlu0 %v2015, 36
      %v2041 = vpop.permute.xlu0 %2040
      %2042 = vrot.lane.b32.xlu0 %v2016, 36
      %v2043 = vpop.permute.xlu0 %2042
      %2044 = vrot.lane.b32.xlu0 %v2017, 36
      %v2045 = vpop.permute.xlu0 %2044
      %2046 = vrot.lane.b32.xlu0 %v2018, 36
      %v2047 = vpop.permute.xlu0 %2046
      %2048 = vrot.lane.b32.xlu0 %v2019, 36
      %v2049 = vpop.permute.xlu0 %2048
      %2050 = vrot.lane.b32.xlu0 %v2020, 36
      %v2051 = vpop.permute.xlu0 %2050
      %2052 = vrot.lane.b32.xlu0 %v2021, 36
      %v2053 = vpop.permute.xlu0 %2052
      %2054 = vrot.lane.b32.xlu0 %v1291, 40
      %v2055 = vpop.permute.xlu0 %2054
      %2056 = vrot.lane.b32.xlu0 %v1294, 40
      %v2057 = vpop.permute.xlu0 %2056
      %2058 = vrot.lane.b32.xlu0 %v1297, 40
      %v2059 = vpop.permute.xlu0 %2058
      %2060 = vrot.lane.b32.xlu0 %v1300, 40
      %v2061 = vpop.permute.xlu0 %2060
      %2062 = vrot.lane.b32.xlu0 %v1303, 40
      %v2063 = vpop.permute.xlu0 %2062
      %2064 = vrot.lane.b32.xlu0 %v1306, 40
      %v2065 = vpop.permute.xlu0 %2064
      %2066 = vrot.lane.b32.xlu0 %v1309, 40
      %v2067 = vpop.permute.xlu0 %2066
      %2068 = vrot.lane.b32.xlu0 %v1312, 40
      %v2069 = vpop.permute.xlu0 %2068
      %2070 = vrot.lane.b32.xlu0 %v1315, 40
      %v2071 = vpop.permute.xlu0 %2070
      %2072 = vrot.lane.b32.xlu0 %v1318, 40
      %v2073 = vpop.permute.xlu0 %2072
      %2074 = vrot.lane.b32.xlu0 %v1321, 40
      %v2075 = vpop.permute.xlu0 %2074
      %2076 = vrot.lane.b32.xlu0 %v1324, 40
      %v2077 = vpop.permute.xlu0 %2076
      %2078 = vrot.lane.b32.xlu0 %v1327, 40
      %v2079 = vpop.permute.xlu0 %2078
      %2080 = vrot.lane.b32.xlu0 %v1330, 40
      %v2081 = vpop.permute.xlu0 %2080
      %2082 = vrot.lane.b32.xlu0 %v1333, 40
      %v2083 = vpop.permute.xlu0 %2082
      %2084 = vrot.lane.b32.xlu0 %v1336, 40
      %v2085 = vpop.permute.xlu0 %2084
      %v2088 = vunpack.c.l.b16 %v507
      %v2089 = vunpack.c.l.b16 %v508
      %v2090 = vpack.c.b16 %v2089, %v2088
      %2091 = vrot.lane.b32.xlu0 %v2007, 48
      %v2092 = vpop.permute.xlu0 %2091
      %2093 = vrot.lane.b32.xlu0 %v2008, 48
      %v2094 = vpop.permute.xlu0 %2093
      %2095 = vrot.lane.b32.xlu0 %v2009, 48
      %v2096 = vpop.permute.xlu0 %2095
      %2097 = vrot.lane.b32.xlu0 %v2010, 48
      %v2098 = vpop.permute.xlu0 %2097
      %2099 = vrot.lane.b32.xlu0 %v2011, 48
      %v2100 = vpop.permute.xlu0 %2099
      %2101 = vrot.lane.b32.xlu0 %v2012, 48
      %v2102 = vpop.permute.xlu0 %2101
      %2103 = vrot.lane.b32.xlu0 %v2013, 48
      %v2104 = vpop.permute.xlu0 %2103
      %2105 = vrot.lane.b32.xlu0 %v2014, 48
      %v2106 = vpop.permute.xlu0 %2105
      %2107 = vrot.lane.b32.xlu0 %v2015, 48
      %v2108 = vpop.permute.xlu0 %2107
      %2109 = vrot.lane.b32.xlu0 %v2016, 48
      %v2110 = vpop.permute.xlu0 %2109
      %2111 = vrot.lane.b32.xlu0 %v2017, 48
      %v2112 = vpop.permute.xlu0 %2111
      %2113 = vrot.lane.b32.xlu0 %v2018, 48
      %v2114 = vpop.permute.xlu0 %2113
      %2115 = vrot.lane.b32.xlu0 %v2019, 48
      %v2116 = vpop.permute.xlu0 %2115
      %2117 = vrot.lane.b32.xlu0 %v2020, 48
      %v2118 = vpop.permute.xlu0 %2117
      %2119 = vrot.lane.b32.xlu0 %v2021, 48
      %v2120 = vpop.permute.xlu0 %2119
      %2121 = vrot.lane.b32.xlu0 %v2090, 48
      %v2122 = vpop.permute.xlu0 %2121
      %2123 = vrot.lane.b32.xlu0 %v1294, 52
      %v2124 = vpop.permute.xlu0 %2123
      %2125 = vrot.lane.b32.xlu0 %v1297, 52
      %v2126 = vpop.permute.xlu0 %2125
      %2127 = vrot.lane.b32.xlu0 %v1300, 52
      %v2128 = vpop.permute.xlu0 %2127
      %2129 = vrot.lane.b32.xlu0 %v1303, 52
      %v2130 = vpop.permute.xlu0 %2129
      %2131 = vrot.lane.b32.xlu0 %v1306, 52
      %v2132 = vpop.permute.xlu0 %2131
      %2133 = vrot.lane.b32.xlu0 %v1309, 52
      %v2134 = vpop.permute.xlu0 %2133
      %2135 = vrot.lane.b32.xlu0 %v1312, 52
      %v2136 = vpop.permute.xlu0 %2135
      %2137 = vrot.lane.b32.xlu0 %v1315, 52
      %v2138 = vpop.permute.xlu0 %2137
      %2139 = vrot.lane.b32.xlu0 %v1318, 52
      %v2140 = vpop.permute.xlu0 %2139
      %2141 = vrot.lane.b32.xlu0 %v1321, 52
      %v2142 = vpop.permute.xlu0 %2141
      %2143 = vrot.lane.b32.xlu0 %v1324, 52
      %v2144 = vpop.permute.xlu0 %2143
      %2145 = vrot.lane.b32.xlu0 %v1327, 52
      %v2146 = vpop.permute.xlu0 %2145
      %2147 = vrot.lane.b32.xlu0 %v1330, 52
      %v2148 = vpop.permute.xlu0 %2147
      %2149 = vrot.lane.b32.xlu0 %v1333, 52
      %v2150 = vpop.permute.xlu0 %2149
      %2151 = vrot.lane.b32.xlu0 %v1336, 52
      %v2152 = vpop.permute.xlu0 %2151
      %2153 = vrot.lane.b32.xlu0 %v1341, 52
      %v2154 = vpop.permute.xlu0 %2153
      %v2157 = vunpack.c.l.b16 %v511
      %v2158 = vunpack.c.l.b16 %v512
      %v2159 = vpack.c.b16 %v2158, %v2157
      %2160 = vrot.lane.b32.xlu0 %v2008, 60
      %v2161 = vpop.permute.xlu0 %2160
      %2162 = vrot.lane.b32.xlu0 %v2009, 60
      %v2163 = vpop.permute.xlu0 %2162
      %2164 = vrot.lane.b32.xlu0 %v2010, 60
      %v2165 = vpop.permute.xlu0 %2164
      %2166 = vrot.lane.b32.xlu0 %v2011, 60
      %v2167 = vpop.permute.xlu0 %2166
      %2168 = vrot.lane.b32.xlu0 %v2012, 60
      %v2169 = vpop.permute.xlu0 %2168
      %2170 = vrot.lane.b32.xlu0 %v2013, 60
      %v2171 = vpop.permute.xlu0 %2170
      %2172 = vrot.lane.b32.xlu0 %v2014, 60
      %v2173 = vpop.permute.xlu0 %2172
      %2174 = vrot.lane.b32.xlu0 %v2015, 60
      %v2175 = vpop.permute.xlu0 %2174
      %2176 = vrot.lane.b32.xlu0 %v2016, 60
      %v2177 = vpop.permute.xlu0 %2176
      %2178 = vrot.lane.b32.xlu0 %v2017, 60
      %v2179 = vpop.permute.xlu0 %2178
      %2180 = vrot.lane.b32.xlu0 %v2018, 60
      %v2181 = vpop.permute.xlu0 %2180
      %2182 = vrot.lane.b32.xlu0 %v2019, 60
      %v2183 = vpop.permute.xlu0 %2182
      %2184 = vrot.lane.b32.xlu0 %v2020, 60
      %v2185 = vpop.permute.xlu0 %2184
      %2186 = vrot.lane.b32.xlu0 %v2021, 60
      %v2187 = vpop.permute.xlu0 %2186
      %2188 = vrot.lane.b32.xlu0 %v2090, 60
      %v2189 = vpop.permute.xlu0 %2188
      %2190 = vrot.lane.b32.xlu0 %v2159, 60
      %v2191 = vpop.permute.xlu0 %2190
      %2192 = vrot.lane.b32.xlu0 %v1297, 64
      %v2193 = vpop.permute.xlu0 %2192
      %2194 = vrot.lane.b32.xlu0 %v1300, 64
      %v2195 = vpop.permute.xlu0 %2194
      %2196 = vrot.lane.b32.xlu0 %v1303, 64
      %v2197 = vpop.permute.xlu0 %2196
      %2198 = vrot.lane.b32.xlu0 %v1306, 64
      %v2199 = vpop.permute.xlu0 %2198
      %2200 = vrot.lane.b32.xlu0 %v1309, 64
      %v2201 = vpop.permute.xlu0 %2200
      %2202 = vrot.lane.b32.xlu0 %v1312, 64
      %v2203 = vpop.permute.xlu0 %2202
      %2204 = vrot.lane.b32.xlu0 %v1315, 64
      %v2205 = vpop.permute.xlu0 %2204
      %2206 = vrot.lane.b32.xlu0 %v1318, 64
      %v2207 = vpop.permute.xlu0 %2206
      %2208 = vrot.lane.b32.xlu0 %v1321, 64
      %v2209 = vpop.permute.xlu0 %2208
      %2210 = vrot.lane.b32.xlu0 %v1324, 64
      %v2211 = vpop.permute.xlu0 %2210
      %2212 = vrot.lane.b32.xlu0 %v1327, 64
      %v2213 = vpop.permute.xlu0 %2212
      %2214 = vrot.lane.b32.xlu0 %v1330, 64
      %v2215 = vpop.permute.xlu0 %2214
      %2216 = vrot.lane.b32.xlu0 %v1333, 64
      %v2217 = vpop.permute.xlu0 %2216
      %2218 = vrot.lane.b32.xlu0 %v1336, 64
      %v2219 = vpop.permute.xlu0 %2218
      %2220 = vrot.lane.b32.xlu0 %v1341, 64
      %v2221 = vpop.permute.xlu0 %2220
      %2222 = vrot.lane.b32.xlu0 %v1346, 64
      %v2223 = vpop.permute.xlu0 %2222
      %v2224 = vunpack.c.l.b16 %v1355
      %v2225 = vunpack.c.l.b16 %v1363
      %v2226 = vunpack.c.l.b16 %v1369
      %v2227 = vunpack.c.l.b16 %v1377
      %v2228 = vunpack.c.l.b16 %v1383
      %v2229 = vunpack.c.l.b16 %v1391
      %v2230 = vunpack.c.l.b16 %v1397
      %v2231 = vunpack.c.l.b16 %v1405
      %v2232 = vunpack.c.l.b16 %v1411
      %v2233 = vunpack.c.l.b16 %v1419
      %v2234 = vunpack.c.l.b16 %v1425
      %v2235 = vunpack.c.l.b16 %v1433
      %v2236 = vunpack.c.l.b16 %v1439
      %v2237 = vunpack.c.l.b16 %v1447
      %v2238 = vunpack.c.l.b16 %v1453
      %v2239 = vunpack.c.l.b16 %v1461
      %v2240 = vunpack.c.l.b16 %v1467
      %v2241 = vunpack.c.l.b16 %v1475
      %v2242 = vunpack.c.l.b16 %v1481
      %v2243 = vunpack.c.l.b16 %v1489
      %v2244 = vunpack.c.l.b16 %v1495
      %v2245 = vunpack.c.l.b16 %v1503
      %v2246 = vunpack.c.l.b16 %v1509
      %v2247 = vunpack.c.l.b16 %v1517
      %v2248 = vunpack.c.l.b16 %v1523
      %v2249 = vunpack.c.l.b16 %v1531
      %v2250 = vunpack.c.l.b16 %v1537
      %v2251 = vunpack.c.l.b16 %v1545
      %v2252 = vunpack.c.l.b16 %v1551
      %v2253 = vunpack.c.l.b16 %v1559
      %v2254 = vunpack.c.l.b16 %v1565
      %v2255 = vunpack.c.l.b16 %v1573
      %v2256 = vpack.c.b16 %v2225, %v2224
      %v2257 = vpack.c.b16 %v2227, %v2226
      %v2258 = vpack.c.b16 %v2229, %v2228
      %v2259 = vpack.c.b16 %v2231, %v2230
      %v2260 = vpack.c.b16 %v2233, %v2232
      %v2261 = vpack.c.b16 %v2235, %v2234
      %v2262 = vpack.c.b16 %v2237, %v2236
      %v2263 = vpack.c.b16 %v2239, %v2238
      %v2264 = vpack.c.b16 %v2241, %v2240
      %v2265 = vpack.c.b16 %v2243, %v2242
      %v2266 = vpack.c.b16 %v2245, %v2244
      %v2267 = vpack.c.b16 %v2247, %v2246
      %v2268 = vpack.c.b16 %v2249, %v2248
      %v2269 = vpack.c.b16 %v2251, %v2250
      %v2270 = vpack.c.b16 %v2253, %v2252
      %v2271 = vpack.c.b16 %v2255, %v2254
      %2272 = vrot.lane.b32.xlu0 %v2256, 72
      %v2273 = vpop.permute.xlu0 %2272
      %2274 = vrot.lane.b32.xlu0 %v2257, 72
      %v2275 = vpop.permute.xlu0 %2274
      %2276 = vrot.lane.b32.xlu0 %v2258, 72
      %v2277 = vpop.permute.xlu0 %2276
      %2278 = vrot.lane.b32.xlu0 %v2259, 72
      %v2279 = vpop.permute.xlu0 %2278
      %2280 = vrot.lane.b32.xlu0 %v2260, 72
      %v2281 = vpop.permute.xlu0 %2280
      %2282 = vrot.lane.b32.xlu0 %v2261, 72
      %v2283 = vpop.permute.xlu0 %2282
      %2284 = vrot.lane.b32.xlu0 %v2262, 72
      %v2285 = vpop.permute.xlu0 %2284
      %2286 = vrot.lane.b32.xlu0 %v2263, 72
      %v2287 = vpop.permute.xlu0 %2286
      %2288 = vrot.lane.b32.xlu0 %v2264, 72
      %v2289 = vpop.permute.xlu0 %2288
      %2290 = vrot.lane.b32.xlu0 %v2265, 72
      %v2291 = vpop.permute.xlu0 %2290
      %2292 = vrot.lane.b32.xlu0 %v2266, 72
      %v2293 = vpop.permute.xlu0 %2292
      %2294 = vrot.lane.b32.xlu0 %v2267, 72
      %v2295 = vpop.permute.xlu0 %2294
      %2296 = vrot.lane.b32.xlu0 %v2268, 72
      %v2297 = vpop.permute.xlu0 %2296
      %2298 = vrot.lane.b32.xlu0 %v2269, 72
      %v2299 = vpop.permute.xlu0 %2298
      %2300 = vrot.lane.b32.xlu0 %v2270, 72
      %v2301 = vpop.permute.xlu0 %2300
      %2302 = vrot.lane.b32.xlu0 %v2271, 72
      %v2303 = vpop.permute.xlu0 %2302
      %2304 = vrot.lane.b32.xlu0 %v1580, 76
      %v2305 = vpop.permute.xlu0 %2304
      %2306 = vrot.lane.b32.xlu0 %v1587, 76
      %v2307 = vpop.permute.xlu0 %2306
      %2308 = vrot.lane.b32.xlu0 %v1594, 76
      %v2309 = vpop.permute.xlu0 %2308
      %2310 = vrot.lane.b32.xlu0 %v1601, 76
      %v2311 = vpop.permute.xlu0 %2310
      %2312 = vrot.lane.b32.xlu0 %v1608, 76
      %v2313 = vpop.permute.xlu0 %2312
      %2314 = vrot.lane.b32.xlu0 %v1615, 76
      %v2315 = vpop.permute.xlu0 %2314
      %2316 = vrot.lane.b32.xlu0 %v1622, 76
      %v2317 = vpop.permute.xlu0 %2316
      %2318 = vrot.lane.b32.xlu0 %v1629, 76
      %v2319 = vpop.permute.xlu0 %2318
      %2320 = vrot.lane.b32.xlu0 %v1636, 76
      %v2321 = vpop.permute.xlu0 %2320
      %2322 = vrot.lane.b32.xlu0 %v1643, 76
      %v2323 = vpop.permute.xlu0 %2322
      %2324 = vrot.lane.b32.xlu0 %v1650, 76
      %v2325 = vpop.permute.xlu0 %2324
      %2326 = vrot.lane.b32.xlu0 %v1657, 76
      %v2327 = vpop.permute.xlu0 %2326
      %2328 = vrot.lane.b32.xlu0 %v1664, 76
      %v2329 = vpop.permute.xlu0 %2328
      %2330 = vrot.lane.b32.xlu0 %v1671, 76
      %v2331 = vpop.permute.xlu0 %2330
      %2332 = vrot.lane.b32.xlu0 %v1678, 76
      %v2333 = vpop.permute.xlu0 %2332
      %2334 = vrot.lane.b32.xlu0 %v1685, 76
      %v2335 = vpop.permute.xlu0 %2334
      %v2336 = vunpack.c.l.b16 %v1691
      %v2337 = vunpack.c.l.b16 %v1699
      %v2338 = vpack.c.b16 %v2337, %v2336
      %2339 = vrot.lane.b32.xlu0 %v2257, 84
      %v2340 = vpop.permute.xlu0 %2339
      %2341 = vrot.lane.b32.xlu0 %v2258, 84
      %v2342 = vpop.permute.xlu0 %2341
      %2343 = vrot.lane.b32.xlu0 %v2259, 84
      %v2344 = vpop.permute.xlu0 %2343
      %2345 = vrot.lane.b32.xlu0 %v2260, 84
      %v2346 = vpop.permute.xlu0 %2345
      %2347 = vrot.lane.b32.xlu0 %v2261, 84
      %v2348 = vpop.permute.xlu0 %2347
      %2349 = vrot.lane.b32.xlu0 %v2262, 84
      %v2350 = vpop.permute.xlu0 %2349
      %2351 = vrot.lane.b32.xlu0 %v2263, 84
      %v2352 = vpop.permute.xlu0 %2351
      %2353 = vrot.lane.b32.xlu0 %v2264, 84
      %v2354 = vpop.permute.xlu0 %2353
      %2355 = vrot.lane.b32.xlu0 %v2265, 84
      %v2356 = vpop.permute.xlu0 %2355
      %2357 = vrot.lane.b32.xlu0 %v2266, 84
      %v2358 = vpop.permute.xlu0 %2357
      %2359 = vrot.lane.b32.xlu0 %v2267, 84
      %v2360 = vpop.permute.xlu0 %2359
      %2361 = vrot.lane.b32.xlu0 %v2268, 84
      %v2362 = vpop.permute.xlu0 %2361
      %2363 = vrot.lane.b32.xlu0 %v2269, 84
      %v2364 = vpop.permute.xlu0 %2363
      %2365 = vrot.lane.b32.xlu0 %v2270, 84
      %v2366 = vpop.permute.xlu0 %2365
      %2367 = vrot.lane.b32.xlu0 %v2271, 84
      %v2368 = vpop.permute.xlu0 %2367
      %2369 = vrot.lane.b32.xlu0 %v2338, 84
      %v2370 = vpop.permute.xlu0 %2369
      %2371 = vrot.lane.b32.xlu0 %v1587, 88
      %v2372 = vpop.permute.xlu0 %2371
      %2373 = vrot.lane.b32.xlu0 %v1594, 88
      %v2374 = vpop.permute.xlu0 %2373
      %2375 = vrot.lane.b32.xlu0 %v1601, 88
      %v2376 = vpop.permute.xlu0 %2375
      %2377 = vrot.lane.b32.xlu0 %v1608, 88
      %v2378 = vpop.permute.xlu0 %2377
      %2379 = vrot.lane.b32.xlu0 %v1615, 88
      %v2380 = vpop.permute.xlu0 %2379
      %2381 = vrot.lane.b32.xlu0 %v1622, 88
      %v2382 = vpop.permute.xlu0 %2381
      %2383 = vrot.lane.b32.xlu0 %v1629, 88
      %v2384 = vpop.permute.xlu0 %2383
      %2385 = vrot.lane.b32.xlu0 %v1636, 88
      %v2386 = vpop.permute.xlu0 %2385
      %2387 = vrot.lane.b32.xlu0 %v1643, 88
      %v2388 = vpop.permute.xlu0 %2387
      %2389 = vrot.lane.b32.xlu0 %v1650, 88
      %v2390 = vpop.permute.xlu0 %2389
      %2391 = vrot.lane.b32.xlu0 %v1657, 88
      %v2392 = vpop.permute.xlu0 %2391
      %2393 = vrot.lane.b32.xlu0 %v1664, 88
      %v2394 = vpop.permute.xlu0 %2393
      %2395 = vrot.lane.b32.xlu0 %v1671, 88
      %v2396 = vpop.permute.xlu0 %2395
      %2397 = vrot.lane.b32.xlu0 %v1678, 88
      %v2398 = vpop.permute.xlu0 %2397
      %2399 = vrot.lane.b32.xlu0 %v1685, 88
      %v2400 = vpop.permute.xlu0 %2399
      %2401 = vrot.lane.b32.xlu0 %v1706, 88
      %v2402 = vpop.permute.xlu0 %2401
      %vm2403 = vcmask 31744
      %v2406 = vsel %vm2403, %v1760, %v1777
      %v2409 = vsel %vm2403, %v1761, %v1779
      %v2412 = vsel %vm2403, %v1762, %v1781
      %v2415 = vsel %vm2403, %v1763, %v1783
      %v2418 = vsel %vm2403, %v1764, %v1785
      %v2421 = vsel %vm2403, %v1765, %v1787
      %v2424 = vsel %vm2403, %v1766, %v1789
      %v2427 = vsel %vm2403, %v1767, %v1791
      %v2430 = vsel %vm2403, %v1768, %v1793
      %v2433 = vsel %vm2403, %v1769, %v1795
      %v2436 = vsel %vm2403, %v1770, %v1797
      %v2439 = vsel %vm2403, %v1771, %v1799
      %v2442 = vsel %vm2403, %v1772, %v1801
      %v2445 = vsel %vm2403, %v1773, %v1803
      %v2448 = vsel %vm2403, %v1774, %v1805
      %v2451 = vsel %vm2403, %v1775, %v1807
      %vm2452 = vcmask 97280
      %v2454 = vsel %vm2452, %v2406, %v1812
      %v2456 = vsel %vm2452, %v2409, %v1814
      %v2458 = vsel %vm2452, %v2412, %v1816
      %v2460 = vsel %vm2452, %v2415, %v1818
      %v2462 = vsel %vm2452, %v2418, %v1820
      %v2464 = vsel %vm2452, %v2421, %v1822
      %v2466 = vsel %vm2452, %v2424, %v1824
      %v2468 = vsel %vm2452, %v2427, %v1826
      %v2470 = vsel %vm2452, %v2430, %v1828
      %v2472 = vsel %vm2452, %v2433, %v1830
      %v2474 = vsel %vm2452, %v2436, %v1832
      %v2476 = vsel %vm2452, %v2439, %v1834
      %v2478 = vsel %vm2452, %v2442, %v1836
      %v2480 = vsel %vm2452, %v2445, %v1838
      %v2482 = vsel %vm2452, %v2448, %v1840
      %v2484 = vsel %vm2452, %v2451, %v1842
      %vm2485 = vcmask 130048
      %v2487 = vsel %vm2485, %v2454, %v1844
      %v2489 = vsel %vm2485, %v2456, %v1846
      %v2491 = vsel %vm2485, %v2458, %v1848
      %v2493 = vsel %vm2485, %v2460, %v1850
      %v2495 = vsel %vm2485, %v2462, %v1852
      %v2497 = vsel %vm2485, %v2464, %v1854
      %v2499 = vsel %vm2485, %v2466, %v1856
      %v2501 = vsel %vm2485, %v2468, %v1858
      %v2503 = vsel %vm2485, %v2470, %v1860
      %v2505 = vsel %vm2485, %v2472, %v1862
      %v2507 = vsel %vm2485, %v2474, %v1864
      %v2509 = vsel %vm2485, %v2476, %v1866
      %v2511 = vsel %vm2485, %v2478, %v1868
      %v2513 = vsel %vm2485, %v2480, %v1870
      %v2515 = vsel %vm2485, %v2482, %v1872
      %v2517 = vsel %vm2485, %v2484, %v1874
      %vm2518 = vcmask 195584
      %v2520 = vsel %vm2518, %v2487, %v1879
      %v2522 = vsel %vm2518, %v2489, %v1881
      %v2524 = vsel %vm2518, %v2491, %v1883
      %v2526 = vsel %vm2518, %v2493, %v1885
      %v2528 = vsel %vm2518, %v2495, %v1887
      %v2530 = vsel %vm2518, %v2497, %v1889
      %v2532 = vsel %vm2518, %v2499, %v1891
      %v2534 = vsel %vm2518, %v2501, %v1893
      %v2536 = vsel %vm2518, %v2503, %v1895
      %v2538 = vsel %vm2518, %v2505, %v1897
      %v2540 = vsel %vm2518, %v2507, %v1899
      %v2542 = vsel %vm2518, %v2509, %v1901
      %v2544 = vsel %vm2518, %v2511, %v1903
      %v2546 = vsel %vm2518, %v2513, %v1905
      %v2548 = vsel %vm2518, %v2515, %v1907
      %v2550 = vsel %vm2518, %v2517, %v1909
      %vm2551 = vcmask 228352
      %v2553 = vsel %vm2551, %v2520, %v1911
      %v2555 = vsel %vm2551, %v2522, %v1913
      %v2557 = vsel %vm2551, %v2524, %v1915
      %v2559 = vsel %vm2551, %v2526, %v1917
      %v2561 = vsel %vm2551, %v2528, %v1919
      %v2563 = vsel %vm2551, %v2530, %v1921
      %v2565 = vsel %vm2551, %v2532, %v1923
      %v2567 = vsel %vm2551, %v2534, %v1925
      %v2569 = vsel %vm2551, %v2536, %v1927
      %v2571 = vsel %vm2551, %v2538, %v1929
      %v2573 = vsel %vm2551, %v2540, %v1931
      %v2575 = vsel %vm2551, %v2542, %v1933
      %v2577 = vsel %vm2551, %v2544, %v1935
      %v2579 = vsel %vm2551, %v2546, %v1937
      %v2581 = vsel %vm2551, %v2548, %v1939
      %v2583 = vsel %vm2551, %v2550, %v1941
      %vm2584 = vcmask 293888
      %v2586 = vsel %vm2584, %v2553, %v2023
      %v2588 = vsel %vm2584, %v2555, %v2025
      %v2590 = vsel %vm2584, %v2557, %v2027
      %v2592 = vsel %vm2584, %v2559, %v2029
      %v2594 = vsel %vm2584, %v2561, %v2031
      %v2596 = vsel %vm2584, %v2563, %v2033
      %v2598 = vsel %vm2584, %v2565, %v2035
      %v2600 = vsel %vm2584, %v2567, %v2037
      %v2602 = vsel %vm2584, %v2569, %v2039
      %v2604 = vsel %vm2584, %v2571, %v2041
      %v2606 = vsel %vm2584, %v2573, %v2043
      %v2608 = vsel %vm2584, %v2575, %v2045
      %v2610 = vsel %vm2584, %v2577, %v2047
      %v2612 = vsel %vm2584, %v2579, %v2049
      %v2614 = vsel %vm2584, %v2581, %v2051
      %v2616 = vsel %vm2584, %v2583, %v2053
      %vm2617 = vcmask 326656
      %v2619 = vsel %vm2617, %v2586, %v2055
      %v2621 = vsel %vm2617, %v2588, %v2057
      %v2623 = vsel %vm2617, %v2590, %v2059
      %v2625 = vsel %vm2617, %v2592, %v2061
      %v2627 = vsel %vm2617, %v2594, %v2063
      %v2629 = vsel %vm2617, %v2596, %v2065
      %v2631 = vsel %vm2617, %v2598, %v2067
      %v2633 = vsel %vm2617, %v2600, %v2069
      %v2635 = vsel %vm2617, %v2602, %v2071
      %v2637 = vsel %vm2617, %v2604, %v2073
      %v2639 = vsel %vm2617, %v2606, %v2075
      %v2641 = vsel %vm2617, %v2608, %v2077
      %v2643 = vsel %vm2617, %v2610, %v2079
      %v2645 = vsel %vm2617, %v2612, %v2081
      %v2647 = vsel %vm2617, %v2614, %v2083
      %v2649 = vsel %vm2617, %v2616, %v2085
      %vm2650 = vcmask 392192
      %v2652 = vsel %vm2650, %v2619, %v2092
      %v2654 = vsel %vm2650, %v2621, %v2094
      %v2656 = vsel %vm2650, %v2623, %v2096
      %v2658 = vsel %vm2650, %v2625, %v2098
      %v2660 = vsel %vm2650, %v2627, %v2100
      %v2662 = vsel %vm2650, %v2629, %v2102
      %v2664 = vsel %vm2650, %v2631, %v2104
      %v2666 = vsel %vm2650, %v2633, %v2106
      %v2668 = vsel %vm2650, %v2635, %v2108
      %v2670 = vsel %vm2650, %v2637, %v2110
      %v2672 = vsel %vm2650, %v2639, %v2112
      %v2674 = vsel %vm2650, %v2641, %v2114
      %v2676 = vsel %vm2650, %v2643, %v2116
      %v2678 = vsel %vm2650, %v2645, %v2118
      %v2680 = vsel %vm2650, %v2647, %v2120
      %v2682 = vsel %vm2650, %v2649, %v2122
      %vm2683 = vcmask 424960
      %v2685 = vsel %vm2683, %v2652, %v2124
      %v2687 = vsel %vm2683, %v2654, %v2126
      %v2689 = vsel %vm2683, %v2656, %v2128
      %v2691 = vsel %vm2683, %v2658, %v2130
      %v2693 = vsel %vm2683, %v2660, %v2132
      %v2695 = vsel %vm2683, %v2662, %v2134
      %v2697 = vsel %vm2683, %v2664, %v2136
      %v2699 = vsel %vm2683, %v2666, %v2138
      %v2701 = vsel %vm2683, %v2668, %v2140
      %v2703 = vsel %vm2683, %v2670, %v2142
      %v2705 = vsel %vm2683, %v2672, %v2144
      %v2707 = vsel %vm2683, %v2674, %v2146
      %v2709 = vsel %vm2683, %v2676, %v2148
      %v2711 = vsel %vm2683, %v2678, %v2150
      %v2713 = vsel %vm2683, %v2680, %v2152
      %v2715 = vsel %vm2683, %v2682, %v2154
      %vm2716 = vcmask 490496
      %v2718 = vsel %vm2716, %v2685, %v2161
      %v2720 = vsel %vm2716, %v2687, %v2163
      %v2722 = vsel %vm2716, %v2689, %v2165
      %v2724 = vsel %vm2716, %v2691, %v2167
      %v2726 = vsel %vm2716, %v2693, %v2169
      %v2728 = vsel %vm2716, %v2695, %v2171
      %v2730 = vsel %vm2716, %v2697, %v2173
      %v2732 = vsel %vm2716, %v2699, %v2175
      %v2734 = vsel %vm2716, %v2701, %v2177
      %v2736 = vsel %vm2716, %v2703, %v2179
      %v2738 = vsel %vm2716, %v2705, %v2181
      %v2740 = vsel %vm2716, %v2707, %v2183
      %v2742 = vsel %vm2716, %v2709, %v2185
      %v2744 = vsel %vm2716, %v2711, %v2187
      %v2746 = vsel %vm2716, %v2713, %v2189
      %v2748 = vsel %vm2716, %v2715, %v2191
      %vm2749 = vcmask 523264
      %v2751 = vsel %vm2749, %v2718, %v2193
      %v2753 = vsel %vm2749, %v2720, %v2195
      %v2755 = vsel %vm2749, %v2722, %v2197
      %v2757 = vsel %vm2749, %v2724, %v2199
      %v2759 = vsel %vm2749, %v2726, %v2201
      %v2761 = vsel %vm2749, %v2728, %v2203
      %v2763 = vsel %vm2749, %v2730, %v2205
      %v2765 = vsel %vm2749, %v2732, %v2207
      %v2767 = vsel %vm2749, %v2734, %v2209
      %v2769 = vsel %vm2749, %v2736, %v2211
      %v2771 = vsel %vm2749, %v2738, %v2213
      %v2773 = vsel %vm2749, %v2740, %v2215
      %v2775 = vsel %vm2749, %v2742, %v2217
      %v2777 = vsel %vm2749, %v2744, %v2219
      %v2779 = vsel %vm2749, %v2746, %v2221
      %v2781 = vsel %vm2749, %v2748, %v2223
      %vm2782 = vcmask 588800
      %v2784 = vsel %vm2782, %v2751, %v2273
      %v2786 = vsel %vm2782, %v2753, %v2275
      %v2788 = vsel %vm2782, %v2755, %v2277
      %v2790 = vsel %vm2782, %v2757, %v2279
      %v2792 = vsel %vm2782, %v2759, %v2281
      %v2794 = vsel %vm2782, %v2761, %v2283
      %v2796 = vsel %vm2782, %v2763, %v2285
      %v2798 = vsel %vm2782, %v2765, %v2287
      %v2800 = vsel %vm2782, %v2767, %v2289
      %v2802 = vsel %vm2782, %v2769, %v2291
      %v2804 = vsel %vm2782, %v2771, %v2293
      %v2806 = vsel %vm2782, %v2773, %v2295
      %v2808 = vsel %vm2782, %v2775, %v2297
      %v2810 = vsel %vm2782, %v2777, %v2299
      %v2812 = vsel %vm2782, %v2779, %v2301
      %v2814 = vsel %vm2782, %v2781, %v2303
      %vm2815 = vcmask 621568
      %v2817 = vsel %vm2815, %v2784, %v2305
      %v2819 = vsel %vm2815, %v2786, %v2307
      %v2821 = vsel %vm2815, %v2788, %v2309
      %v2823 = vsel %vm2815, %v2790, %v2311
      %v2825 = vsel %vm2815, %v2792, %v2313
      %v2827 = vsel %vm2815, %v2794, %v2315
      %v2829 = vsel %vm2815, %v2796, %v2317
      %v2831 = vsel %vm2815, %v2798, %v2319
      %v2833 = vsel %vm2815, %v2800, %v2321
      %v2835 = vsel %vm2815, %v2802, %v2323
      %v2837 = vsel %vm2815, %v2804, %v2325
      %v2839 = vsel %vm2815, %v2806, %v2327
      %v2841 = vsel %vm2815, %v2808, %v2329
      %v2843 = vsel %vm2815, %v2810, %v2331
      %v2845 = vsel %vm2815, %v2812, %v2333
      %v2847 = vsel %vm2815, %v2814, %v2335
      %vm2848 = vcmask 687104
      %v2850 = vsel %vm2848, %v2817, %v2340
      %v2852 = vsel %vm2848, %v2819, %v2342
      %v2854 = vsel %vm2848, %v2821, %v2344
      %v2856 = vsel %vm2848, %v2823, %v2346
      %v2858 = vsel %vm2848, %v2825, %v2348
      %v2860 = vsel %vm2848, %v2827, %v2350
      %v2862 = vsel %vm2848, %v2829, %v2352
      %v2864 = vsel %vm2848, %v2831, %v2354
      %v2866 = vsel %vm2848, %v2833, %v2356
      %v2868 = vsel %vm2848, %v2835, %v2358
      %v2870 = vsel %vm2848, %v2837, %v2360
      %v2872 = vsel %vm2848, %v2839, %v2362
      %v2874 = vsel %vm2848, %v2841, %v2364
      %v2876 = vsel %vm2848, %v2843, %v2366
      %v2878 = vsel %vm2848, %v2845, %v2368
      %v2880 = vsel %vm2848, %v2847, %v2370
      %vm2881 = vcmask 719872
      %v2883 = vsel %vm2881, %v2850, %v2372
      %v2885 = vsel %vm2881, %v2852, %v2374
      %v2887 = vsel %vm2881, %v2854, %v2376
      %v2889 = vsel %vm2881, %v2856, %v2378
      %v2891 = vsel %vm2881, %v2858, %v2380
      %v2893 = vsel %vm2881, %v2860, %v2382
      %v2895 = vsel %vm2881, %v2862, %v2384
      %v2897 = vsel %vm2881, %v2864, %v2386
      %v2899 = vsel %vm2881, %v2866, %v2388
      %v2901 = vsel %vm2881, %v2868, %v2390
      %v2903 = vsel %vm2881, %v2870, %v2392
      %v2905 = vsel %vm2881, %v2872, %v2394
      %v2907 = vsel %vm2881, %v2874, %v2396
      %v2909 = vsel %vm2881, %v2876, %v2398
      %v2911 = vsel %vm2881, %v2878, %v2400
      %v2913 = vsel %vm2881, %v2880, %v2402
      %v2914 = vunpack.c.l.b16 %v1712
      %v2915 = vunpack.c.l.b16 %v1720
      %v2916 = vpack.c.b16 %v2915, %v2914
      %2917 = vrot.lane.b32.xlu0 %v1594, 4
      %v2918 = vpop.permute.xlu0 %2917
      %2919 = vrot.lane.b32.xlu0 %v1601, 4
      %v2920 = vpop.permute.xlu0 %2919
      %2921 = vrot.lane.b32.xlu0 %v1608, 4
      %v2922 = vpop.permute.xlu0 %2921
      %2923 = vrot.lane.b32.xlu0 %v1615, 4
      %v2924 = vpop.permute.xlu0 %2923
      %2925 = vrot.lane.b32.xlu0 %v1622, 4
      %v2926 = vpop.permute.xlu0 %2925
      %2927 = vrot.lane.b32.xlu0 %v1629, 4
      %v2928 = vpop.permute.xlu0 %2927
      %2929 = vrot.lane.b32.xlu0 %v1636, 4
      %v2930 = vpop.permute.xlu0 %2929
      %2931 = vrot.lane.b32.xlu0 %v1643, 4
      %v2932 = vpop.permute.xlu0 %2931
      %2933 = vrot.lane.b32.xlu0 %v1650, 4
      %v2934 = vpop.permute.xlu0 %2933
      %2935 = vrot.lane.b32.xlu0 %v1657, 4
      %v2936 = vpop.permute.xlu0 %2935
      %2937 = vrot.lane.b32.xlu0 %v1664, 4
      %v2938 = vpop.permute.xlu0 %2937
      %2939 = vrot.lane.b32.xlu0 %v1671, 4
      %v2940 = vpop.permute.xlu0 %2939
      %2941 = vrot.lane.b32.xlu0 %v1678, 4
      %v2942 = vpop.permute.xlu0 %2941
      %2943 = vrot.lane.b32.xlu0 %v1685, 4
      %v2944 = vpop.permute.xlu0 %2943
      %2945 = vrot.lane.b32.xlu0 %v1706, 4
      %v2946 = vpop.permute.xlu0 %2945
      %2947 = vrot.lane.b32.xlu0 %v1727, 4
      %v2948 = vpop.permute.xlu0 %2947
      %v2951 = vsel %vm2403, %v2258, %v2918
      %v2954 = vsel %vm2403, %v2259, %v2920
      %v2957 = vsel %vm2403, %v2260, %v2922
      %v2960 = vsel %vm2403, %v2261, %v2924
      %v2963 = vsel %vm2403, %v2262, %v2926
      %v2966 = vsel %vm2403, %v2263, %v2928
      %v2969 = vsel %vm2403, %v2264, %v2930
      %v2972 = vsel %vm2403, %v2265, %v2932
      %v2975 = vsel %vm2403, %v2266, %v2934
      %v2978 = vsel %vm2403, %v2267, %v2936
      %v2981 = vsel %vm2403, %v2268, %v2938
      %v2984 = vsel %vm2403, %v2269, %v2940
      %v2987 = vsel %vm2403, %v2270, %v2942
      %v2990 = vsel %vm2403, %v2271, %v2944
      %v2993 = vsel %vm2403, %v2338, %v2946
      %v2996 = vsel %vm2403, %v2916, %v2948
      %3013 = vrot.lane.b32.xlu0 %v2951, 96
      %v3014 = vpop.permute.xlu0 %3013
      %3015 = vrot.lane.b32.xlu0 %v2954, 96
      %v3016 = vpop.permute.xlu0 %3015
      %3017 = vrot.lane.b32.xlu0 %v2957, 96
      %v3018 = vpop.permute.xlu0 %3017
      %3019 = vrot.lane.b32.xlu0 %v2960, 96
      %v3020 = vpop.permute.xlu0 %3019
      %3021 = vrot.lane.b32.xlu0 %v2963, 96
      %v3022 = vpop.permute.xlu0 %3021
      %3023 = vrot.lane.b32.xlu0 %v2966, 96
      %v3024 = vpop.permute.xlu0 %3023
      %3025 = vrot.lane.b32.xlu0 %v2969, 96
      %v3026 = vpop.permute.xlu0 %3025
      %3027 = vrot.lane.b32.xlu0 %v2972, 96
      %v3028 = vpop.permute.xlu0 %3027
      %3029 = vrot.lane.b32.xlu0 %v2975, 96
      %v3030 = vpop.permute.xlu0 %3029
      %3031 = vrot.lane.b32.xlu0 %v2978, 96
      %v3032 = vpop.permute.xlu0 %3031
      %3033 = vrot.lane.b32.xlu0 %v2981, 96
      %v3034 = vpop.permute.xlu0 %3033
      %3035 = vrot.lane.b32.xlu0 %v2984, 96
      %v3036 = vpop.permute.xlu0 %3035
      %3037 = vrot.lane.b32.xlu0 %v2987, 96
      %v3038 = vpop.permute.xlu0 %3037
      %3039 = vrot.lane.b32.xlu0 %v2990, 96
      %v3040 = vpop.permute.xlu0 %3039
      %3041 = vrot.lane.b32.xlu0 %v2993, 96
      %v3042 = vpop.permute.xlu0 %3041
      %3043 = vrot.lane.b32.xlu0 %v2996, 96
      %v3044 = vpop.permute.xlu0 %3043
      %vm3045 = vcmask 785408
      %v3047 = vsel %vm3045, %v2883, %v3014
      %v3049 = vsel %vm3045, %v2885, %v3016
      %v3051 = vsel %vm3045, %v2887, %v3018
      %v3053 = vsel %vm3045, %v2889, %v3020
      %v3055 = vsel %vm3045, %v2891, %v3022
      %v3057 = vsel %vm3045, %v2893, %v3024
      %v3059 = vsel %vm3045, %v2895, %v3026
      %v3061 = vsel %vm3045, %v2897, %v3028
      %v3063 = vsel %vm3045, %v2899, %v3030
      %v3065 = vsel %vm3045, %v2901, %v3032
      %v3067 = vsel %vm3045, %v2903, %v3034
      %v3069 = vsel %vm3045, %v2905, %v3036
      %v3071 = vsel %vm3045, %v2907, %v3038
      %v3073 = vsel %vm3045, %v2909, %v3040
      %v3075 = vsel %vm3045, %v2911, %v3042
      %v3077 = vsel %vm3045, %v2913, %v3044
      %v3078 = vld [vmem:[%s2] sm:$0xf]
      %v3079 = vld [vmem:[%s2 + $0x4] sm:$0xf]
      %v3080 = vld [vmem:[%s2 + $0x8] sm:$0xf]
      %v3081 = vld [vmem:[%s2 + $0xc] sm:$0xf]
      %v3082 = vld [vmem:[%s2 + $0x10] sm:$0xf]
      %v3083 = vld [vmem:[%s2 + $0x14] sm:$0xf]
      %v3084 = vld [vmem:[%s2 + $0x18] sm:$0xf]
      %v3085 = vld [vmem:[%s2 + $0x1c] sm:$0xf]
      %v3086 = vld [vmem:[%s2 + $0x20] sm:$0xf]
      %v3087 = vld [vmem:[%s2 + $0x24] sm:$0xf]
      %v3088 = vld [vmem:[%s2 + $0x28] sm:$0xf]
      %v3089 = vld [vmem:[%s2 + $0x2c] sm:$0xf]
      %v3090 = vld [vmem:[%s2 + $0x30] sm:$0xf]
      %v3091 = vld [vmem:[%s2 + $0x34] sm:$0x3]
      %v3092 = vld [vmem:[%s3] sm:$0x1]
      %v3094 = vlaneseq
      %v3095 = vshrl.u32 %v3094, 7
      %v3096 = vsub.s32 0, %v3095
      %v3097 = vrot.slane %v3092, %v3096
      %v3113 = vunpack.c.l.b16 %v3078
      %v3114 = vunpack.c.l.b16 %v3079
      %v3115 = vunpack.c.l.b16 %v3080
      %v3116 = vunpack.c.l.b16 %v3081
      %v3117 = vunpack.c.l.b16 %v3082
      %v3118 = vunpack.c.l.b16 %v3083
      %v3119 = vunpack.c.l.b16 %v3084
      %v3120 = vunpack.c.l.b16 %v3085
      %v3121 = vunpack.c.l.b16 %v3086
      %v3122 = vunpack.c.l.b16 %v3087
      %v3123 = vunpack.c.l.b16 %v3088
      %v3124 = vunpack.c.l.b16 %v3089
      %v3125 = vunpack.c.l.b16 %v3090
      %v3126 = vunpack.c.l.b16 %v3091
      %v3127 = vpack.c.b16 %v3114, %v3113
      %v3128 = vpack.c.b16 %v3116, %v3115
      %v3129 = vpack.c.b16 %v3118, %v3117
      %v3130 = vpack.c.b16 %v3120, %v3119
      %v3131 = vpack.c.b16 %v3122, %v3121
      %v3132 = vpack.c.b16 %v3124, %v3123
      %v3133 = vpack.c.b16 %v3126, %v3125
      %vm3140 = vcmask 883712
      %v3141 = vsel %vm3140, %v3047, 0
      %v3143 = vsel %vm3140, %v3049, 0
      %v3145 = vsel %vm3140, %v3051, 0
      %v3147 = vsel %vm3140, %v3053, 0
      %v3149 = vsel %vm3140, %v3055, 0
      %v3151 = vsel %vm3140, %v3057, 0
      %v3153 = vsel %vm3140, %v3059, 0
      %v3155 = vsel %vm3140, %v3061, 0
      %v3157 = vsel %vm3140, %v3063, 0
      %v3159 = vsel %vm3140, %v3065, 0
      %v3161 = vsel %vm3140, %v3067, 0
      %v3163 = vsel %vm3140, %v3069, 0
      %v3165 = vsel %vm3140, %v3071, 0
      %v3167 = vsel %vm3140, %v3073, 0
      %v3169 = vsel %vm3140, %v3075, 0
      %v3171 = vsel %vm3140, %v3077, 0
      %vm3173 = vcmask 1045504
      %v3175 = vsel %vm3173, %v3133, 0
      %3177 = vmatprep.subr.bf16.mxu0 0
      %3178 = vmatpush1.bf16.msra.mxu0 %v3127
      %3179 = vmatprep.subr.bf16.mxu0 0
      %3180 = vmatpush1.bf16.msra.mxu0 %v3128
      %3181 = vmatprep.subr.bf16.mxu0 0
      %3182 = vmatpush1.bf16.msra.mxu0 %v3129
      %3183 = vmatprep.subr.bf16.mxu0 0
      %3184 = vmatpush1.bf16.msra.mxu0 %v3130
      %3185 = vmatprep.subr.bf16.mxu0 0
      %3186 = vmatpush1.bf16.msra.mxu0 %v3131
      %3187 = vmatprep.subr.bf16.mxu0 0
      %3188 = vmatpush1.bf16.msra.mxu0 %v3132
      %3189 = vmatprep.subr.bf16.mxu0 0
      %3190 = vmatpush1.bf16.msra.mxu0 %v3175
      %3191 = vmatprep.subr.bf16.mxu0 0
      %3192 = vmatpush1.bf16.msra.mxu0 0
      %3193 = vmatprep.subr.bf16.mxu0 0
      %3194 = vmatpush1.bf16.msra.mxu0 0
      %3195 = vmatprep.subr.bf16.mxu0 0
      %3196 = vmatpush1.bf16.msra.mxu0 0
      %3197 = vmatprep.subr.bf16.mxu0 0
      %3198 = vmatpush1.bf16.msra.mxu0 0
      %3199 = vmatprep.subr.bf16.mxu0 0
      %3200 = vmatpush1.bf16.msra.mxu0 0
      %3201 = vmatprep.subr.bf16.mxu0 0
      %3202 = vmatpush1.bf16.msra.mxu0 0
      %3203 = vmatprep.subr.bf16.mxu0 0
      %3204 = vmatpush1.bf16.msra.mxu0 0
      %3205 = vmatprep.subr.bf16.mxu0 0
      %3206 = vmatpush1.bf16.msra.mxu0 0
      %3207 = vmatprep.subr.bf16.mxu0 0
      %3208 = vmatpush1.bf16.msra.mxu0 0
      %3209 = vmatprep.mubr.bf16.mxu0 0
      %3210 = vmatmul.mubr.bf16.gmra.mrb[0].mxu0 %v3141
      %v3211 = vpop.f32.mrb[0].mxu0
      %v3212 = vadd.f32 %v3097, %v3211
      %v3213 = vpop.f32.mrb[0].mxu0
      %v3214 = vpop.f32.mrb[0].mxu0
      %v3215 = vadd.f32 %v3097, %v3214
      %v3216 = vpop.f32.mrb[0].mxu0
      %3217 = vmatprep.mubr.bf16.mxu0 0
      %3218 = vmatmul.mubr.bf16.gmra.mrb[0].mxu0 %v3143
      %v3219 = vpop.f32.mrb[0].mxu0
      %v3220 = vadd.f32 %v3097, %v3219
      %v3221 = vpop.f32.mrb[0].mxu0
      %v3222 = vpop.f32.mrb[0].mxu0
      %v3223 = vadd.f32 %v3097, %v3222
      %v3224 = vpop.f32.mrb[0].mxu0
      %3225 = vmatprep.mubr.bf16.mxu0 0
      %3226 = vmatmul.mubr.bf16.gmra.mrb[0].mxu0 %v3145
      %v3227 = vpop.f32.mrb[0].mxu0
      %v3228 = vadd.f32 %v3097, %v3227
      %v3229 = vpop.f32.mrb[0].mxu0
      %v3230 = vpop.f32.mrb[0].mxu0
      %v3231 = vadd.f32 %v3097, %v3230
      %v3232 = vpop.f32.mrb[0].mxu0
      %3233 = vmatprep.mubr.bf16.mxu0 0
      %3234 = vmatmul.mubr.bf16.gmra.mrb[0].mxu0 %v3147
      %v3235 = vpop.f32.mrb[0].mxu0
      %v3236 = vadd.f32 %v3097, %v3235
      %v3237 = vpop.f32.mrb[0].mxu0
      %v3238 = vpop.f32.mrb[0].mxu0
      %v3239 = vadd.f32 %v3097, %v3238
      %v3240 = vpop.f32.mrb[0].mxu0
      %3241 = vmatprep.mubr.bf16.mxu0 0
      %3242 = vmatmul.mubr.bf16.gmra.mrb[0].mxu0 %v3149
      %v3243 = vpop.f32.mrb[0].mxu0
      %v3244 = vadd.f32 %v3097, %v3243
      %v3245 = vpop.f32.mrb[0].mxu0
      %v3246 = vpop.f32.mrb[0].mxu0
      %v3247 = vadd.f32 %v3097, %v3246
      %v3248 = vpop.f32.mrb[0].mxu0
      %3249 = vmatprep.mubr.bf16.mxu0 0
      %3250 = vmatmul.mubr.bf16.gmra.mrb[0].mxu0 %v3151
      %v3251 = vpop.f32.mrb[0].mxu0
      %v3252 = vadd.f32 %v3097, %v3251
      %v3253 = vpop.f32.mrb[0].mxu0
      %v3254 = vpop.f32.mrb[0].mxu0
      %v3255 = vadd.f32 %v3097, %v3254
      %v3256 = vpop.f32.mrb[0].mxu0
      %3257 = vmatprep.mubr.bf16.mxu0 0
      %3258 = vmatmul.mubr.bf16.gmra.mrb[0].mxu0 %v3153
      %v3259 = vpop.f32.mrb[0].mxu0
      %v3260 = vadd.f32 %v3097, %v3259
      %v3261 = vpop.f32.mrb[0].mxu0
      %v3262 = vpop.f32.mrb[0].mxu0
      %v3263 = vadd.f32 %v3097, %v3262
      %v3264 = vpop.f32.mrb[0].mxu0
      %3265 = vmatprep.mubr.bf16.mxu0 0
      %3266 = vmatmul.mubr.bf16.gmra.mrb[0].mxu0 %v3155
      %v3267 = vpop.f32.mrb[0].mxu0
      %v3268 = vadd.f32 %v3097, %v3267
      %v3269 = vpop.f32.mrb[0].mxu0
      %v3270 = vpop.f32.mrb[0].mxu0
      %v3271 = vadd.f32 %v3097, %v3270
      %v3272 = vpop.f32.mrb[0].mxu0
      %3273 = vmatprep.mubr.bf16.mxu0 0
      %3274 = vmatmul.mubr.bf16.gmra.mrb[0].mxu0 %v3157
      %v3275 = vpop.f32.mrb[0].mxu0
      %v3276 = vadd.f32 %v3097, %v3275
      %v3277 = vpop.f32.mrb[0].mxu0
      %v3278 = vpop.f32.mrb[0].mxu0
      %v3279 = vadd.f32 %v3097, %v3278
      %v3280 = vpop.f32.mrb[0].mxu0
      %3281 = vmatprep.mubr.bf16.mxu0 0
      %3282 = vmatmul.mubr.bf16.gmra.mrb[0].mxu0 %v3159
      %v3283 = vpop.f32.mrb[0].mxu0
      %v3284 = vadd.f32 %v3097, %v3283
      %v3285 = vpop.f32.mrb[0].mxu0
      %v3286 = vpop.f32.mrb[0].mxu0
      %v3287 = vadd.f32 %v3097, %v3286
      %v3288 = vpop.f32.mrb[0].mxu0
      %3289 = vmatprep.mubr.bf16.mxu0 0
      %3290 = vmatmul.mubr.bf16.gmra.mrb[0].mxu0 %v3161
      %v3291 = vpop.f32.mrb[0].mxu0
      %v3292 = vadd.f32 %v3097, %v3291
      %v3293 = vpop.f32.mrb[0].mxu0
      %v3294 = vpop.f32.mrb[0].mxu0
      %v3295 = vadd.f32 %v3097, %v3294
      %v3296 = vpop.f32.mrb[0].mxu0
      %3297 = vmatprep.mubr.bf16.mxu0 0
      %3298 = vmatmul.mubr.bf16.gmra.mrb[0].mxu0 %v3163
      %v3299 = vpop.f32.mrb[0].mxu0
      %v3300 = vadd.f32 %v3097, %v3299
      %v3301 = vpop.f32.mrb[0].mxu0
      %v3302 = vpop.f32.mrb[0].mxu0
      %v3303 = vadd.f32 %v3097, %v3302
      %v3304 = vpop.f32.mrb[0].mxu0
      %3305 = vmatprep.mubr.bf16.mxu0 0
      %3306 = vmatmul.mubr.bf16.gmra.mrb[0].mxu0 %v3165
      %v3307 = vpop.f32.mrb[0].mxu0
      %v3308 = vadd.f32 %v3097, %v3307
      %v3309 = vpop.f32.mrb[0].mxu0
      %v3310 = vpop.f32.mrb[0].mxu0
      %v3311 = vadd.f32 %v3097, %v3310
      %v3312 = vpop.f32.mrb[0].mxu0
      %3313 = vmatprep.mubr.bf16.mxu0 0
      %3314 = vmatmul.mubr.bf16.gmra.mrb[0].mxu0 %v3167
      %v3315 = vpop.f32.mrb[0].mxu0
      %v3316 = vadd.f32 %v3097, %v3315
      %v3317 = vpop.f32.mrb[0].mxu0
      %v3318 = vpop.f32.mrb[0].mxu0
      %v3319 = vadd.f32 %v3097, %v3318
      %v3320 = vpop.f32.mrb[0].mxu0
      %3321 = vmatprep.mubr.bf16.mxu0 0
      %3322 = vmatmul.mubr.bf16.gmra.mrb[0].mxu0 %v3169
      %v3323 = vpop.f32.mrb[0].mxu0
      %v3324 = vadd.f32 %v3097, %v3323
      %v3325 = vpop.f32.mrb[0].mxu0
      %v3326 = vpop.f32.mrb[0].mxu0
      %v3327 = vadd.f32 %v3097, %v3326
      %v3328 = vpop.f32.mrb[0].mxu0
      %3329 = vmatprep.mubr.bf16.mxu0 0
      %3330 = vmatmul.mubr.bf16.gmra.mrb[0].mxu0 %v3171
      %v3331 = vpop.f32.mrb[0].mxu0
      %v3332 = vadd.f32 %v3097, %v3331
      %v3333 = vpop.f32.mrb[0].mxu0
      %v3334 = vpop.f32.mrb[0].mxu0
      %v3335 = vadd.f32 %v3097, %v3334
      %v3336 = vpop.f32.mrb[0].mxu0
      %3337 = vdwg.mxu0
      %v3338 = vld [vmem:[#allocation3] sm:$0xff]
      %v3339 = vld [vmem:[#allocation3 + $0x8] sm:$0xff]
      %v3340 = vld [vmem:[#allocation3 + $0x10] sm:$0xff]
      %v3341 = vld [vmem:[#allocation3 + $0x18] sm:$0xff]
      %v3342 = vld [vmem:[#allocation3 + $0x20] sm:$0xff]
      %v3343 = vld [vmem:[#allocation3 + $0x28] sm:$0xff]
      %v3344 = vld [vmem:[#allocation3 + $0x30] sm:$0xff]
      %v3345 = vld [vmem:[#allocation3 + $0x38] sm:$0xff]
      %v3346 = vld [vmem:[#allocation3 + $0x40] sm:$0xff]
      %v3347 = vld [vmem:[#allocation3 + $0x48] sm:$0xff]
      %v3348 = vld [vmem:[#allocation3 + $0x50] sm:$0xff]
      %v3349 = vld [vmem:[#allocation3 + $0x58] sm:$0xff]
      %v3350 = vld [vmem:[#allocation3 + $0x60] sm:$0xff]
      %v3351 = vld [vmem:[#allocation3 + $0x68] sm:$0xff]
      %v3352 = vld [vmem:[#allocation3 + $0x70] sm:$0xff]
      %v3353 = vld [vmem:[#allocation3 + $0x78] sm:$0xff]
      %v3354 = vld [vmem:[#allocation3 + $0x80] sm:$0xff]
      %v3355 = vld [vmem:[#allocation3 + $0x88] sm:$0xff]
      %v3356 = vld [vmem:[#allocation3 + $0x90] sm:$0xff]
      %v3357 = vld [vmem:[#allocation3 + $0x98] sm:$0xff]
      %v3358 = vld [vmem:[#allocation3 + $0xa0] sm:$0xff]
      %v3359 = vld [vmem:[#allocation3 + $0xa8] sm:$0xff]
      %v3360 = vld [vmem:[#allocation3 + $0xb0] sm:$0xff]
      %v3361 = vld [vmem:[#allocation3 + $0xb8] sm:$0xff]
      %v3362 = vld [vmem:[#allocation3 + $0xc0] sm:$0xff]
      %v3363 = vld [vmem:[#allocation3 + $0xc8] sm:$0xff]
      %v3364 = vld [vmem:[#allocation3 + $0xd0] sm:$0xff]
      %v3365 = vld [vmem:[#allocation3 + $0xd8] sm:$0xff]
      %v3366 = vld [vmem:[#allocation3 + $0xe0] sm:$0xff]
      %v3367 = vld [vmem:[#allocation3 + $0xe8] sm:$0xff]
      %v3368 = vld [vmem:[#allocation3 + $0xf0] sm:$0xff]
      %v3369 = vld [vmem:[#allocation3 + $0xf8] sm:$0xff]
      %v3370 = vxor.u32 %v3212, 2147483648
      %v3371 = vxor.u32 %v3215, 2147483648
      %v3372 = vxor.u32 %v3220, 2147483648
      %v3373 = vxor.u32 %v3223, 2147483648
      %v3374 = vxor.u32 %v3228, 2147483648
      %v3375 = vxor.u32 %v3231, 2147483648
      %v3376 = vxor.u32 %v3236, 2147483648
      %v3377 = vxor.u32 %v3239, 2147483648
      %v3378 = vxor.u32 %v3244, 2147483648
      %v3379 = vxor.u32 %v3247, 2147483648
      %v3380 = vxor.u32 %v3252, 2147483648
      %v3381 = vxor.u32 %v3255, 2147483648
      %v3382 = vxor.u32 %v3260, 2147483648
      %v3383 = vxor.u32 %v3263, 2147483648
      %v3384 = vxor.u32 %v3268, 2147483648
      %v3385 = vxor.u32 %v3271, 2147483648
      %v3386 = vxor.u32 %v3276, 2147483648
      %v3387 = vxor.u32 %v3279, 2147483648
      %v3388 = vxor.u32 %v3284, 2147483648
      %v3389 = vxor.u32 %v3287, 2147483648
      %v3390 = vxor.u32 %v3292, 2147483648
      %v3391 = vxor.u32 %v3295, 2147483648
      %v3392 = vxor.u32 %v3300, 2147483648
      %v3393 = vxor.u32 %v3303, 2147483648
      %v3394 = vxor.u32 %v3308, 2147483648
      %v3395 = vxor.u32 %v3311, 2147483648
      %v3396 = vxor.u32 %v3316, 2147483648
      %v3397 = vxor.u32 %v3319, 2147483648
      %v3398 = vxor.u32 %v3324, 2147483648
      %v3399 = vxor.u32 %v3327, 2147483648
      %v3400 = vxor.u32 %v3332, 2147483648
      %v3401 = vxor.u32 %v3335, 2147483648
      %v3402 = vmul.f32 %v3370, 1.442695
      %v3403 = vpow.pop %v3402
      %v3404 = vmul.f32 %v3371, 1.442695
      %v3405 = vpow.pop %v3404
      %v3406 = vmul.f32 %v3372, 1.442695
      %v3407 = vpow.pop %v3406
      %v3408 = vmul.f32 %v3373, 1.442695
      %v3409 = vpow.pop %v3408
      %v3410 = vmul.f32 %v3374, 1.442695
      %v3411 = vpow.pop %v3410
      %v3412 = vmul.f32 %v3375, 1.442695
      %v3413 = vpow.pop %v3412
      %v3414 = vmul.f32 %v3376, 1.442695
      %v3415 = vpow.pop %v3414
      %v3416 = vmul.f32 %v3377, 1.442695
      %v3417 = vpow.pop %v3416
      %v3418 = vmul.f32 %v3378, 1.442695
      %v3419 = vpow.pop %v3418
      %v3420 = vmul.f32 %v3379, 1.442695
      %v3421 = vpow.pop %v3420
      %v3422 = vmul.f32 %v3380, 1.442695
      %v3423 = vpow.pop %v3422
      %v3424 = vmul.f32 %v3381, 1.442695
      %v3425 = vpow.pop %v3424
      %v3426 = vmul.f32 %v3382, 1.442695
      %v3427 = vpow.pop %v3426
      %v3428 = vmul.f32 %v3383, 1.442695
      %v3429 = vpow.pop %v3428
      %v3430 = vmul.f32 %v3384, 1.442695
      %v3431 = vpow.pop %v3430
      %v3432 = vmul.f32 %v3385, 1.442695
      %v3433 = vpow.pop %v3432
      %v3434 = vmul.f32 %v3386, 1.442695
      %v3435 = vpow.pop %v3434
      %v3436 = vmul.f32 %v3387, 1.442695
      %v3437 = vpow.pop %v3436
      %v3438 = vmul.f32 %v3388, 1.442695
      %v3439 = vpow.pop %v3438
      %v3440 = vmul.f32 %v3389, 1.442695
      %v3441 = vpow.pop %v3440
      %v3442 = vmul.f32 %v3390, 1.442695
      %v3443 = vpow.pop %v3442
      %v3444 = vmul.f32 %v3391, 1.442695
      %v3445 = vpow.pop %v3444
      %v3446 = vmul.f32 %v3392, 1.442695
      %v3447 = vpow.pop %v3446
      %v3448 = vmul.f32 %v3393, 1.442695
      %v3449 = vpow.pop %v3448
      %v3450 = vmul.f32 %v3394, 1.442695
      %v3451 = vpow.pop %v3450
      %v3452 = vmul.f32 %v3395, 1.442695
      %v3453 = vpow.pop %v3452
      %v3454 = vmul.f32 %v3396, 1.442695
      %v3455 = vpow.pop %v3454
      %v3456 = vmul.f32 %v3397, 1.442695
      %v3457 = vpow.pop %v3456
      %v3458 = vmul.f32 %v3398, 1.442695
      %v3459 = vpow.pop %v3458
      %v3460 = vmul.f32 %v3399, 1.442695
      %v3461 = vpow.pop %v3460
      %v3462 = vmul.f32 %v3400, 1.442695
      %v3463 = vpow.pop %v3462
      %v3464 = vmul.f32 %v3401, 1.442695
      %v3465 = vpow.pop %v3464
      %v3466 = vadd.f32 %v3403, 1.0
      %v3467 = vadd.f32 %v3405, 1.0
      %v3468 = vadd.f32 %v3407, 1.0
      %v3469 = vadd.f32 %v3409, 1.0
      %v3470 = vadd.f32 %v3411, 1.0
      %v3471 = vadd.f32 %v3413, 1.0
      %v3472 = vadd.f32 %v3415, 1.0
      %v3473 = vadd.f32 %v3417, 1.0
      %v3474 = vadd.f32 %v3419, 1.0
      %v3475 = vadd.f32 %v3421, 1.0
      %v3476 = vadd.f32 %v3423, 1.0
      %v3477 = vadd.f32 %v3425, 1.0
      %v3478 = vadd.f32 %v3427, 1.0
      %v3479 = vadd.f32 %v3429, 1.0
      %v3480 = vadd.f32 %v3431, 1.0
      %v3481 = vadd.f32 %v3433, 1.0
      %v3482 = vadd.f32 %v3435, 1.0
      %v3483 = vadd.f32 %v3437, 1.0
      %v3484 = vadd.f32 %v3439, 1.0
      %v3485 = vadd.f32 %v3441, 1.0
      %v3486 = vadd.f32 %v3443, 1.0
      %v3487 = vadd.f32 %v3445, 1.0
      %v3488 = vadd.f32 %v3447, 1.0
      %v3489 = vadd.f32 %v3449, 1.0
      %v3490 = vadd.f32 %v3451, 1.0
      %v3491 = vadd.f32 %v3453, 1.0
      %v3492 = vadd.f32 %v3455, 1.0
      %v3493 = vadd.f32 %v3457, 1.0
      %v3494 = vadd.f32 %v3459, 1.0
      %v3495 = vadd.f32 %v3461, 1.0
      %v3496 = vadd.f32 %v3463, 1.0
      %v3497 = vadd.f32 %v3465, 1.0
      %v3498 = vrcp.pop %v3466
      %v3499 = vmul.f32 1.0, %v3498
      %v3500 = vrcp.pop %v3467
      %v3501 = vmul.f32 1.0, %v3500
      %v3502 = vrcp.pop %v3468
      %v3503 = vmul.f32 1.0, %v3502
      %v3504 = vrcp.pop %v3469
      %v3505 = vmul.f32 1.0, %v3504
      %v3506 = vrcp.pop %v3470
      %v3507 = vmul.f32 1.0, %v3506
      %v3508 = vrcp.pop %v3471
      %v3509 = vmul.f32 1.0, %v3508
      %v3510 = vrcp.pop %v3472
      %v3511 = vmul.f32 1.0, %v3510
      %v3512 = vrcp.pop %v3473
      %v3513 = vmul.f32 1.0, %v3512
      %v3514 = vrcp.pop %v3474
      %v3515 = vmul.f32 1.0, %v3514
      %v3516 = vrcp.pop %v3475
      %v3517 = vmul.f32 1.0, %v3516
      %v3518 = vrcp.pop %v3476
      %v3519 = vmul.f32 1.0, %v3518
      %v3520 = vrcp.pop %v3477
      %v3521 = vmul.f32 1.0, %v3520
      %v3522 = vrcp.pop %v3478
      %v3523 = vmul.f32 1.0, %v3522
      %v3524 = vrcp.pop %v3479
      %v3525 = vmul.f32 1.0, %v3524
      %v3526 = vrcp.pop %v3480
      %v3527 = vmul.f32 1.0, %v3526
      %v3528 = vrcp.pop %v3481
      %v3529 = vmul.f32 1.0, %v3528
      %v3530 = vrcp.pop %v3482
      %v3531 = vmul.f32 1.0, %v3530
      %v3532 = vrcp.pop %v3483
      %v3533 = vmul.f32 1.0, %v3532
      %v3534 = vrcp.pop %v3484
      %v3535 = vmul.f32 1.0, %v3534
      %v3536 = vrcp.pop %v3485
      %v3537 = vmul.f32 1.0, %v3536
      %v3538 = vrcp.pop %v3486
      %v3539 = vmul.f32 1.0, %v3538
      %v3540 = vrcp.pop %v3487
      %v3541 = vmul.f32 1.0, %v3540
      %v3542 = vrcp.pop %v3488
      %v3543 = vmul.f32 1.0, %v3542
      %v3544 = vrcp.pop %v3489
      %v3545 = vmul.f32 1.0, %v3544
      %v3546 = vrcp.pop %v3490
      %v3547 = vmul.f32 1.0, %v3546
      %v3548 = vrcp.pop %v3491
      %v3549 = vmul.f32 1.0, %v3548
      %v3550 = vrcp.pop %v3492
      %v3551 = vmul.f32 1.0, %v3550
      %v3552 = vrcp.pop %v3493
      %v3553 = vmul.f32 1.0, %v3552
      %v3554 = vrcp.pop %v3494
      %v3555 = vmul.f32 1.0, %v3554
      %v3556 = vrcp.pop %v3495
      %v3557 = vmul.f32 1.0, %v3556
      %v3558 = vrcp.pop %v3496
      %v3559 = vmul.f32 1.0, %v3558
      %v3560 = vrcp.pop %v3497
      %v3561 = vmul.f32 1.0, %v3560
      %v3562 = vtanh.pop %v3212
      %v3563 = vtanh.pop %v3215
      %v3564 = vtanh.pop %v3220
      %v3565 = vtanh.pop %v3223
      %v3566 = vtanh.pop %v3228
      %v3567 = vtanh.pop %v3231
      %v3568 = vtanh.pop %v3236
      %v3569 = vtanh.pop %v3239
      %v3570 = vtanh.pop %v3244
      %v3571 = vtanh.pop %v3247
      %v3572 = vtanh.pop %v3252
      %v3573 = vtanh.pop %v3255
      %v3574 = vtanh.pop %v3260
      %v3575 = vtanh.pop %v3263
      %v3576 = vtanh.pop %v3268
      %v3577 = vtanh.pop %v3271
      %v3578 = vtanh.pop %v3276
      %v3579 = vtanh.pop %v3279
      %v3580 = vtanh.pop %v3284
      %v3581 = vtanh.pop %v3287
      %v3582 = vtanh.pop %v3292
      %v3583 = vtanh.pop %v3295
      %v3584 = vtanh.pop %v3300
      %v3585 = vtanh.pop %v3303
      %v3586 = vtanh.pop %v3308
      %v3587 = vtanh.pop %v3311
      %v3588 = vtanh.pop %v3316
      %v3589 = vtanh.pop %v3319
      %v3590 = vtanh.pop %v3324
      %v3591 = vtanh.pop %v3327
      %v3592 = vtanh.pop %v3332
      %v3593 = vtanh.pop %v3335
      %3626 = vrot.lane.b32.xlu0 %v3338, 32
      %v3627 = vpop.permute.xlu0 %3626
      %3628 = vrot.lane.b32.xlu0 %v3339, 32
      %v3629 = vpop.permute.xlu0 %3628
      %3630 = vrot.lane.b32.xlu0 %v3340, 32
      %v3631 = vpop.permute.xlu0 %3630
      %3632 = vrot.lane.b32.xlu0 %v3341, 32
      %v3633 = vpop.permute.xlu0 %3632
      %3634 = vrot.lane.b32.xlu0 %v3342, 32
      %v3635 = vpop.permute.xlu0 %3634
      %3636 = vrot.lane.b32.xlu0 %v3343, 32
      %v3637 = vpop.permute.xlu0 %3636
      %3638 = vrot.lane.b32.xlu0 %v3344, 32
      %v3639 = vpop.permute.xlu0 %3638
      %3640 = vrot.lane.b32.xlu0 %v3345, 32
      %v3641 = vpop.permute.xlu0 %3640
      %3642 = vrot.lane.b32.xlu0 %v3346, 32
      %v3643 = vpop.permute.xlu0 %3642
      %3644 = vrot.lane.b32.xlu0 %v3347, 32
      %v3645 = vpop.permute.xlu0 %3644
      %3646 = vrot.lane.b32.xlu0 %v3348, 32
      %v3647 = vpop.permute.xlu0 %3646
      %3648 = vrot.lane.b32.xlu0 %v3349, 32
      %v3649 = vpop.permute.xlu0 %3648
      %3650 = vrot.lane.b32.xlu0 %v3350, 32
      %v3651 = vpop.permute.xlu0 %3650
      %3652 = vrot.lane.b32.xlu0 %v3351, 32
      %v3653 = vpop.permute.xlu0 %3652
      %3654 = vrot.lane.b32.xlu0 %v3352, 32
      %v3655 = vpop.permute.xlu0 %3654
      %3656 = vrot.lane.b32.xlu0 %v3353, 32
      %v3657 = vpop.permute.xlu0 %3656
      %3658 = vrot.lane.b32.xlu0 %v3354, 32
      %v3659 = vpop.permute.xlu0 %3658
      %3660 = vrot.lane.b32.xlu0 %v3355, 32
      %v3661 = vpop.permute.xlu0 %3660
      %3662 = vrot.lane.b32.xlu0 %v3356, 32
      %v3663 = vpop.permute.xlu0 %3662
      %3664 = vrot.lane.b32.xlu0 %v3357, 32
      %v3665 = vpop.permute.xlu0 %3664
      %3666 = vrot.lane.b32.xlu0 %v3358, 32
      %v3667 = vpop.permute.xlu0 %3666
      %3668 = vrot.lane.b32.xlu0 %v3359, 32
      %v3669 = vpop.permute.xlu0 %3668
      %3670 = vrot.lane.b32.xlu0 %v3360, 32
      %v3671 = vpop.permute.xlu0 %3670
      %3672 = vrot.lane.b32.xlu0 %v3361, 32
      %v3673 = vpop.permute.xlu0 %3672
      %3674 = vrot.lane.b32.xlu0 %v3362, 32
      %v3675 = vpop.permute.xlu0 %3674
      %3676 = vrot.lane.b32.xlu0 %v3363, 32
      %v3677 = vpop.permute.xlu0 %3676
      %3678 = vrot.lane.b32.xlu0 %v3364, 32
      %v3679 = vpop.permute.xlu0 %3678
      %3680 = vrot.lane.b32.xlu0 %v3365, 32
      %v3681 = vpop.permute.xlu0 %3680
      %3682 = vrot.lane.b32.xlu0 %v3366, 32
      %v3683 = vpop.permute.xlu0 %3682
      %3684 = vrot.lane.b32.xlu0 %v3367, 32
      %v3685 = vpop.permute.xlu0 %3684
      %3686 = vrot.lane.b32.xlu0 %v3368, 32
      %v3687 = vpop.permute.xlu0 %3686
      %3688 = vrot.lane.b32.xlu0 %v3369, 32
      %v3689 = vpop.permute.xlu0 %3688
      %v3722 = vmul.f32 %v3499, %v3627
      %v3723 = vmul.f32 %v3501, %v3629
      %v3724 = vmul.f32 %v3503, %v3631
      %v3725 = vmul.f32 %v3505, %v3633
      %v3726 = vmul.f32 %v3507, %v3635
      %v3727 = vmul.f32 %v3509, %v3637
      %v3728 = vmul.f32 %v3511, %v3639
      %v3729 = vmul.f32 %v3513, %v3641
      %v3730 = vmul.f32 %v3515, %v3643
      %v3731 = vmul.f32 %v3517, %v3645
      %v3732 = vmul.f32 %v3519, %v3647
      %v3733 = vmul.f32 %v3521, %v3649
      %v3734 = vmul.f32 %v3523, %v3651
      %v3735 = vmul.f32 %v3525, %v3653
      %v3736 = vmul.f32 %v3527, %v3655
      %v3737 = vmul.f32 %v3529, %v3657
      %v3738 = vmul.f32 %v3531, %v3659
      %v3739 = vmul.f32 %v3533, %v3661
      %v3740 = vmul.f32 %v3535, %v3663
      %v3741 = vmul.f32 %v3537, %v3665
      %v3742 = vmul.f32 %v3539, %v3667
      %v3743 = vmul.f32 %v3541, %v3669
      %v3744 = vmul.f32 %v3543, %v3671
      %v3745 = vmul.f32 %v3545, %v3673
      %v3746 = vmul.f32 %v3547, %v3675
      %v3747 = vmul.f32 %v3549, %v3677
      %v3748 = vmul.f32 %v3551, %v3679
      %v3749 = vmul.f32 %v3553, %v3681
      %v3750 = vmul.f32 %v3555, %v3683
      %v3751 = vmul.f32 %v3557, %v3685
      %v3752 = vmul.f32 %v3559, %v3687
      %v3753 = vmul.f32 %v3561, %v3689
      %3786 = vrot.lane.b32.xlu0 %v3562, 64
      %v3787 = vpop.permute.xlu0 %3786
      %3788 = vrot.lane.b32.xlu0 %v3563, 64
      %v3789 = vpop.permute.xlu0 %3788
      %3790 = vrot.lane.b32.xlu0 %v3564, 64
      %v3791 = vpop.permute.xlu0 %3790
      %3792 = vrot.lane.b32.xlu0 %v3565, 64
      %v3793 = vpop.permute.xlu0 %3792
      %3794 = vrot.lane.b32.xlu0 %v3566, 64
      %v3795 = vpop.permute.xlu0 %3794
      %3796 = vrot.lane.b32.xlu0 %v3567, 64
      %v3797 = vpop.permute.xlu0 %3796
      %3798 = vrot.lane.b32.xlu0 %v3568, 64
      %v3799 = vpop.permute.xlu0 %3798
      %3800 = vrot.lane.b32.xlu0 %v3569, 64
      %v3801 = vpop.permute.xlu0 %3800
      %3802 = vrot.lane.b32.xlu0 %v3570, 64
      %v3803 = vpop.permute.xlu0 %3802
      %3804 = vrot.lane.b32.xlu0 %v3571, 64
      %v3805 = vpop.permute.xlu0 %3804
      %3806 = vrot.lane.b32.xlu0 %v3572, 64
      %v3807 = vpop.permute.xlu0 %3806
      %3808 = vrot.lane.b32.xlu0 %v3573, 64
      %v3809 = vpop.permute.xlu0 %3808
      %3810 = vrot.lane.b32.xlu0 %v3574, 64
      %v3811 = vpop.permute.xlu0 %3810
      %3812 = vrot.lane.b32.xlu0 %v3575, 64
      %v3813 = vpop.permute.xlu0 %3812
      %3814 = vrot.lane.b32.xlu0 %v3576, 64
      %v3815 = vpop.permute.xlu0 %3814
      %3816 = vrot.lane.b32.xlu0 %v3577, 64
      %v3817 = vpop.permute.xlu0 %3816
      %3818 = vrot.lane.b32.xlu0 %v3578, 64
      %v3819 = vpop.permute.xlu0 %3818
      %3820 = vrot.lane.b32.xlu0 %v3579, 64
      %v3821 = vpop.permute.xlu0 %3820
      %3822 = vrot.lane.b32.xlu0 %v3580, 64
      %v3823 = vpop.permute.xlu0 %3822
      %3824 = vrot.lane.b32.xlu0 %v3581, 64
      %v3825 = vpop.permute.xlu0 %3824
      %3826 = vrot.lane.b32.xlu0 %v3582, 64
      %v3827 = vpop.permute.xlu0 %3826
      %3828 = vrot.lane.b32.xlu0 %v3583, 64
      %v3829 = vpop.permute.xlu0 %3828
      %3830 = vrot.lane.b32.xlu0 %v3584, 64
      %v3831 = vpop.permute.xlu0 %3830
      %3832 = vrot.lane.b32.xlu0 %v3585, 64
      %v3833 = vpop.permute.xlu0 %3832
      %3834 = vrot.lane.b32.xlu0 %v3586, 64
      %v3835 = vpop.permute.xlu0 %3834
      %3836 = vrot.lane.b32.xlu0 %v3587, 64
      %v3837 = vpop.permute.xlu0 %3836
      %3838 = vrot.lane.b32.xlu0 %v3588, 64
      %v3839 = vpop.permute.xlu0 %3838
      %3840 = vrot.lane.b32.xlu0 %v3589, 64
      %v3841 = vpop.permute.xlu0 %3840
      %3842 = vrot.lane.b32.xlu0 %v3590, 64
      %v3843 = vpop.permute.xlu0 %3842
      %3844 = vrot.lane.b32.xlu0 %v3591, 64
      %v3845 = vpop.permute.xlu0 %3844
      %3846 = vrot.lane.b32.xlu0 %v3592, 64
      %v3847 = vpop.permute.xlu0 %3846
      %3848 = vrot.lane.b32.xlu0 %v3593, 64
      %v3849 = vpop.permute.xlu0 %3848
      %v3882 = vmul.f32 %v3499, %v3787
      %v3883 = vmul.f32 %v3501, %v3789
      %v3884 = vmul.f32 %v3503, %v3791
      %v3885 = vmul.f32 %v3505, %v3793
      %v3886 = vmul.f32 %v3507, %v3795
      %v3887 = vmul.f32 %v3509, %v3797
      %v3888 = vmul.f32 %v3511, %v3799
      %v3889 = vmul.f32 %v3513, %v3801
      %v3890 = vmul.f32 %v3515, %v3803
      %v3891 = vmul.f32 %v3517, %v3805
      %v3892 = vmul.f32 %v3519, %v3807
      %v3893 = vmul.f32 %v3521, %v3809
      %v3894 = vmul.f32 %v3523, %v3811
      %v3895 = vmul.f32 %v3525, %v3813
      %v3896 = vmul.f32 %v3527, %v3815
      %v3897 = vmul.f32 %v3529, %v3817
      %v3898 = vmul.f32 %v3531, %v3819
      %v3899 = vmul.f32 %v3533, %v3821
      %v3900 = vmul.f32 %v3535, %v3823
      %v3901 = vmul.f32 %v3537, %v3825
      %v3902 = vmul.f32 %v3539, %v3827
      %v3903 = vmul.f32 %v3541, %v3829
      %v3904 = vmul.f32 %v3543, %v3831
      %v3905 = vmul.f32 %v3545, %v3833
      %v3906 = vmul.f32 %v3547, %v3835
      %v3907 = vmul.f32 %v3549, %v3837
      %v3908 = vmul.f32 %v3551, %v3839
      %v3909 = vmul.f32 %v3553, %v3841
      %v3910 = vmul.f32 %v3555, %v3843
      %v3911 = vmul.f32 %v3557, %v3845
      %v3912 = vmul.f32 %v3559, %v3847
      %v3913 = vmul.f32 %v3561, %v3849
      %3946 = vrot.lane.b32.xlu0 %v3882, 32
      %v3947 = vpop.permute.xlu0 %3946
      %3948 = vrot.lane.b32.xlu0 %v3883, 32
      %v3949 = vpop.permute.xlu0 %3948
      %3950 = vrot.lane.b32.xlu0 %v3884, 32
      %v3951 = vpop.permute.xlu0 %3950
      %3952 = vrot.lane.b32.xlu0 %v3885, 32
      %v3953 = vpop.permute.xlu0 %3952
      %3954 = vrot.lane.b32.xlu0 %v3886, 32
      %v3955 = vpop.permute.xlu0 %3954
      %3956 = vrot.lane.b32.xlu0 %v3887, 32
      %v3957 = vpop.permute.xlu0 %3956
      %3958 = vrot.lane.b32.xlu0 %v3888, 32
      %v3959 = vpop.permute.xlu0 %3958
      %3960 = vrot.lane.b32.xlu0 %v3889, 32
      %v3961 = vpop.permute.xlu0 %3960
      %3962 = vrot.lane.b32.xlu0 %v3890, 32
      %v3963 = vpop.permute.xlu0 %3962
      %3964 = vrot.lane.b32.xlu0 %v3891, 32
      %v3965 = vpop.permute.xlu0 %3964
      %3966 = vrot.lane.b32.xlu0 %v3892, 32
      %v3967 = vpop.permute.xlu0 %3966
      %3968 = vrot.lane.b32.xlu0 %v3893, 32
      %v3969 = vpop.permute.xlu0 %3968
      %3970 = vrot.lane.b32.xlu0 %v3894, 32
      %v3971 = vpop.permute.xlu0 %3970
      %3972 = vrot.lane.b32.xlu0 %v3895, 32
      %v3973 = vpop.permute.xlu0 %3972
      %3974 = vrot.lane.b32.xlu0 %v3896, 32
      %v3975 = vpop.permute.xlu0 %3974
      %3976 = vrot.lane.b32.xlu0 %v3897, 32
      %v3977 = vpop.permute.xlu0 %3976
      %3978 = vrot.lane.b32.xlu0 %v3898, 32
      %v3979 = vpop.permute.xlu0 %3978
      %3980 = vrot.lane.b32.xlu0 %v3899, 32
      %v3981 = vpop.permute.xlu0 %3980
      %3982 = vrot.lane.b32.xlu0 %v3900, 32
      %v3983 = vpop.permute.xlu0 %3982
      %3984 = vrot.lane.b32.xlu0 %v3901, 32
      %v3985 = vpop.permute.xlu0 %3984
      %3986 = vrot.lane.b32.xlu0 %v3902, 32
      %v3987 = vpop.permute.xlu0 %3986
      %3988 = vrot.lane.b32.xlu0 %v3903, 32
      %v3989 = vpop.permute.xlu0 %3988
      %3990 = vrot.lane.b32.xlu0 %v3904, 32
      %v3991 = vpop.permute.xlu0 %3990
      %3992 = vrot.lane.b32.xlu0 %v3905, 32
      %v3993 = vpop.permute.xlu0 %3992
      %3994 = vrot.lane.b32.xlu0 %v3906, 32
      %v3995 = vpop.permute.xlu0 %3994
      %3996 = vrot.lane.b32.xlu0 %v3907, 32
      %v3997 = vpop.permute.xlu0 %3996
      %3998 = vrot.lane.b32.xlu0 %v3908, 32
      %v3999 = vpop.permute.xlu0 %3998
      %4000 = vrot.lane.b32.xlu0 %v3909, 32
      %v4001 = vpop.permute.xlu0 %4000
      %4002 = vrot.lane.b32.xlu0 %v3910, 32
      %v4003 = vpop.permute.xlu0 %4002
      %4004 = vrot.lane.b32.xlu0 %v3911, 32
      %v4005 = vpop.permute.xlu0 %4004
      %4006 = vrot.lane.b32.xlu0 %v3912, 32
      %v4007 = vpop.permute.xlu0 %4006
      %4008 = vrot.lane.b32.xlu0 %v3913, 32
      %v4009 = vpop.permute.xlu0 %4008
      %v4042 = vadd.f32 %v3722, %v3947
      %v4043 = vadd.f32 %v3723, %v3949
      %v4044 = vadd.f32 %v3724, %v3951
      %v4045 = vadd.f32 %v3725, %v3953
      %v4046 = vadd.f32 %v3726, %v3955
      %v4047 = vadd.f32 %v3727, %v3957
      %v4048 = vadd.f32 %v3728, %v3959
      %v4049 = vadd.f32 %v3729, %v3961
      %v4050 = vadd.f32 %v3730, %v3963
      %v4051 = vadd.f32 %v3731, %v3965
      %v4052 = vadd.f32 %v3732, %v3967
      %v4053 = vadd.f32 %v3733, %v3969
      %v4054 = vadd.f32 %v3734, %v3971
      %v4055 = vadd.f32 %v3735, %v3973
      %v4056 = vadd.f32 %v3736, %v3975
      %v4057 = vadd.f32 %v3737, %v3977
      %v4058 = vadd.f32 %v3738, %v3979
      %v4059 = vadd.f32 %v3739, %v3981
      %v4060 = vadd.f32 %v3740, %v3983
      %v4061 = vadd.f32 %v3741, %v3985
      %v4062 = vadd.f32 %v3742, %v3987
      %v4063 = vadd.f32 %v3743, %v3989
      %v4064 = vadd.f32 %v3744, %v3991
      %v4065 = vadd.f32 %v3745, %v3993
      %v4066 = vadd.f32 %v3746, %v3995
      %v4067 = vadd.f32 %v3747, %v3997
      %v4068 = vadd.f32 %v3748, %v3999
      %v4069 = vadd.f32 %v3749, %v4001
      %v4070 = vadd.f32 %v3750, %v4003
      %v4071 = vadd.f32 %v3751, %v4005
      %v4072 = vadd.f32 %v3752, %v4007
      %v4073 = vadd.f32 %v3753, %v4009
      %v4074 = vtanh.pop %v4042
      %v4075 = vtanh.pop %v4043
      %v4076 = vtanh.pop %v4044
      %v4077 = vtanh.pop %v4045
      %v4078 = vtanh.pop %v4046
      %v4079 = vtanh.pop %v4047
      %v4080 = vtanh.pop %v4048
      %v4081 = vtanh.pop %v4049
      %v4082 = vtanh.pop %v4050
      %v4083 = vtanh.pop %v4051
      %v4084 = vtanh.pop %v4052
      %v4085 = vtanh.pop %v4053
      %v4086 = vtanh.pop %v4054
      %v4087 = vtanh.pop %v4055
      %v4088 = vtanh.pop %v4056
      %v4089 = vtanh.pop %v4057
      %v4090 = vtanh.pop %v4058
      %v4091 = vtanh.pop %v4059
      %v4092 = vtanh.pop %v4060
      %v4093 = vtanh.pop %v4061
      %v4094 = vtanh.pop %v4062
      %v4095 = vtanh.pop %v4063
      %v4096 = vtanh.pop %v4064
      %v4097 = vtanh.pop %v4065
      %v4098 = vtanh.pop %v4066
      %v4099 = vtanh.pop %v4067
      %v4100 = vtanh.pop %v4068
      %v4101 = vtanh.pop %v4069
      %v4102 = vtanh.pop %v4070
      %v4103 = vtanh.pop %v4071
      %v4104 = vtanh.pop %v4072
      %v4105 = vtanh.pop %v4073
      %4138 = vrot.lane.b32.xlu0 %v4074, 64
      %v4139 = vpop.permute.xlu0 %4138
      %4140 = vrot.lane.b32.xlu0 %v4075, 64
      %v4141 = vpop.permute.xlu0 %4140
      %4142 = vrot.lane.b32.xlu0 %v4076, 64
      %v4143 = vpop.permute.xlu0 %4142
      %4144 = vrot.lane.b32.xlu0 %v4077, 64
      %v4145 = vpop.permute.xlu0 %4144
      %4146 = vrot.lane.b32.xlu0 %v4078, 64
      %v4147 = vpop.permute.xlu0 %4146
      %4148 = vrot.lane.b32.xlu0 %v4079, 64
      %v4149 = vpop.permute.xlu0 %4148
      %4150 = vrot.lane.b32.xlu0 %v4080, 64
      %v4151 = vpop.permute.xlu0 %4150
      %4152 = vrot.lane.b32.xlu0 %v4081, 64
      %v4153 = vpop.permute.xlu0 %4152
      %4154 = vrot.lane.b32.xlu0 %v4082, 64
      %v4155 = vpop.permute.xlu0 %4154
      %4156 = vrot.lane.b32.xlu0 %v4083, 64
      %v4157 = vpop.permute.xlu0 %4156
      %4158 = vrot.lane.b32.xlu0 %v4084, 64
      %v4159 = vpop.permute.xlu0 %4158
      %4160 = vrot.lane.b32.xlu0 %v4085, 64
      %v4161 = vpop.permute.xlu0 %4160
      %4162 = vrot.lane.b32.xlu0 %v4086, 64
      %v4163 = vpop.permute.xlu0 %4162
      %4164 = vrot.lane.b32.xlu0 %v4087, 64
      %v4165 = vpop.permute.xlu0 %4164
      %4166 = vrot.lane.b32.xlu0 %v4088, 64
      %v4167 = vpop.permute.xlu0 %4166
      %4168 = vrot.lane.b32.xlu0 %v4089, 64
      %v4169 = vpop.permute.xlu0 %4168
      %4170 = vrot.lane.b32.xlu0 %v4090, 64
      %v4171 = vpop.permute.xlu0 %4170
      %4172 = vrot.lane.b32.xlu0 %v4091, 64
      %v4173 = vpop.permute.xlu0 %4172
      %4174 = vrot.lane.b32.xlu0 %v4092, 64
      %v4175 = vpop.permute.xlu0 %4174
      %4176 = vrot.lane.b32.xlu0 %v4093, 64
      %v4177 = vpop.permute.xlu0 %4176
      %4178 = vrot.lane.b32.xlu0 %v4094, 64
      %v4179 = vpop.permute.xlu0 %4178
      %4180 = vrot.lane.b32.xlu0 %v4095, 64
      %v4181 = vpop.permute.xlu0 %4180
      %4182 = vrot.lane.b32.xlu0 %v4096, 64
      %v4183 = vpop.permute.xlu0 %4182
      %4184 = vrot.lane.b32.xlu0 %v4097, 64
      %v4185 = vpop.permute.xlu0 %4184
      %4186 = vrot.lane.b32.xlu0 %v4098, 64
      %v4187 = vpop.permute.xlu0 %4186
      %4188 = vrot.lane.b32.xlu0 %v4099, 64
      %v4189 = vpop.permute.xlu0 %4188
      %4190 = vrot.lane.b32.xlu0 %v4100, 64
      %v4191 = vpop.permute.xlu0 %4190
      %4192 = vrot.lane.b32.xlu0 %v4101, 64
      %v4193 = vpop.permute.xlu0 %4192
      %4194 = vrot.lane.b32.xlu0 %v4102, 64
      %v4195 = vpop.permute.xlu0 %4194
      %4196 = vrot.lane.b32.xlu0 %v4103, 64
      %v4197 = vpop.permute.xlu0 %4196
      %4198 = vrot.lane.b32.xlu0 %v4104, 64
      %v4199 = vpop.permute.xlu0 %4198
      %4200 = vrot.lane.b32.xlu0 %v4105, 64
      %v4201 = vpop.permute.xlu0 %4200
      %v4234 = vmul.f32 %v3499, %v4139
      %v4235 = vmul.f32 %v3501, %v4141
      %v4236 = vmul.f32 %v3503, %v4143
      %v4237 = vmul.f32 %v3505, %v4145
      %v4238 = vmul.f32 %v3507, %v4147
      %v4239 = vmul.f32 %v3509, %v4149
      %v4240 = vmul.f32 %v3511, %v4151
      %v4241 = vmul.f32 %v3513, %v4153
      %v4242 = vmul.f32 %v3515, %v4155
      %v4243 = vmul.f32 %v3517, %v4157
      %v4244 = vmul.f32 %v3519, %v4159
      %v4245 = vmul.f32 %v3521, %v4161
      %v4246 = vmul.f32 %v3523, %v4163
      %v4247 = vmul.f32 %v3525, %v4165
      %v4248 = vmul.f32 %v3527, %v4167
      %v4249 = vmul.f32 %v3529, %v4169
      %v4250 = vmul.f32 %v3531, %v4171
      %v4251 = vmul.f32 %v3533, %v4173
      %v4252 = vmul.f32 %v3535, %v4175
      %v4253 = vmul.f32 %v3537, %v4177
      %v4254 = vmul.f32 %v3539, %v4179
      %v4255 = vmul.f32 %v3541, %v4181
      %v4256 = vmul.f32 %v3543, %v4183
      %v4257 = vmul.f32 %v3545, %v4185
      %v4258 = vmul.f32 %v3547, %v4187
      %v4259 = vmul.f32 %v3549, %v4189
      %v4260 = vmul.f32 %v3551, %v4191
      %v4261 = vmul.f32 %v3553, %v4193
      %v4262 = vmul.f32 %v3555, %v4195
      %v4263 = vmul.f32 %v3557, %v4197
      %v4264 = vmul.f32 %v3559, %v4199
      %v4265 = vmul.f32 %v3561, %v4201
      %4298 = vrot.lane.b32.xlu0 %v4042, 96
      %v4299 = vpop.permute.xlu0 %4298
      %4300 = vrot.lane.b32.xlu0 %v4043, 96
      %v4301 = vpop.permute.xlu0 %4300
      %4302 = vrot.lane.b32.xlu0 %v4044, 96
      %v4303 = vpop.permute.xlu0 %4302
      %4304 = vrot.lane.b32.xlu0 %v4045, 96
      %v4305 = vpop.permute.xlu0 %4304
      %4306 = vrot.lane.b32.xlu0 %v4046, 96
      %v4307 = vpop.permute.xlu0 %4306
      %4308 = vrot.lane.b32.xlu0 %v4047, 96
      %v4309 = vpop.permute.xlu0 %4308
      %4310 = vrot.lane.b32.xlu0 %v4048, 96
      %v4311 = vpop.permute.xlu0 %4310
      %4312 = vrot.lane.b32.xlu0 %v4049, 96
      %v4313 = vpop.permute.xlu0 %4312
      %4314 = vrot.lane.b32.xlu0 %v4050, 96
      %v4315 = vpop.permute.xlu0 %4314
      %4316 = vrot.lane.b32.xlu0 %v4051, 96
      %v4317 = vpop.permute.xlu0 %4316
      %4318 = vrot.lane.b32.xlu0 %v4052, 96
      %v4319 = vpop.permute.xlu0 %4318
      %4320 = vrot.lane.b32.xlu0 %v4053, 96
      %v4321 = vpop.permute.xlu0 %4320
      %4322 = vrot.lane.b32.xlu0 %v4054, 96
      %v4323 = vpop.permute.xlu0 %4322
      %4324 = vrot.lane.b32.xlu0 %v4055, 96
      %v4325 = vpop.permute.xlu0 %4324
      %4326 = vrot.lane.b32.xlu0 %v4056, 96
      %v4327 = vpop.permute.xlu0 %4326
      %4328 = vrot.lane.b32.xlu0 %v4057, 96
      %v4329 = vpop.permute.xlu0 %4328
      %4330 = vrot.lane.b32.xlu0 %v4058, 96
      %v4331 = vpop.permute.xlu0 %4330
      %4332 = vrot.lane.b32.xlu0 %v4059, 96
      %v4333 = vpop.permute.xlu0 %4332
      %4334 = vrot.lane.b32.xlu0 %v4060, 96
      %v4335 = vpop.permute.xlu0 %4334
      %4336 = vrot.lane.b32.xlu0 %v4061, 96
      %v4337 = vpop.permute.xlu0 %4336
      %4338 = vrot.lane.b32.xlu0 %v4062, 96
      %v4339 = vpop.permute.xlu0 %4338
      %4340 = vrot.lane.b32.xlu0 %v4063, 96
      %v4341 = vpop.permute.xlu0 %4340
      %4342 = vrot.lane.b32.xlu0 %v4064, 96
      %v4343 = vpop.permute.xlu0 %4342
      %4344 = vrot.lane.b32.xlu0 %v4065, 96
      %v4345 = vpop.permute.xlu0 %4344
      %4346 = vrot.lane.b32.xlu0 %v4066, 96
      %v4347 = vpop.permute.xlu0 %4346
      %4348 = vrot.lane.b32.xlu0 %v4067, 96
      %v4349 = vpop.permute.xlu0 %4348
      %4350 = vrot.lane.b32.xlu0 %v4068, 96
      %v4351 = vpop.permute.xlu0 %4350
      %4352 = vrot.lane.b32.xlu0 %v4069, 96
      %v4353 = vpop.permute.xlu0 %4352
      %4354 = vrot.lane.b32.xlu0 %v4070, 96
      %v4355 = vpop.permute.xlu0 %4354
      %4356 = vrot.lane.b32.xlu0 %v4071, 96
      %v4357 = vpop.permute.xlu0 %4356
      %4358 = vrot.lane.b32.xlu0 %v4072, 96
      %v4359 = vpop.permute.xlu0 %4358
      %4360 = vrot.lane.b32.xlu0 %v4073, 96
      %v4361 = vpop.permute.xlu0 %4360
      %vm4394 = vcmask 261120
      %4395 = vst.msk [vmem:[#allocation3] sm:$0xff] %vm4394, %v4299
      %4396 = vst.msk [vmem:[#allocation3 + $0x8] sm:$0xff] %vm4394, %v4301
      %4397 = vst.msk [vmem:[#allocation3 + $0x10] sm:$0xff] %vm4394, %v4303
      %4398 = vst.msk [vmem:[#allocation3 + $0x18] sm:$0xff] %vm4394, %v4305
      %4399 = vst.msk [vmem:[#allocation3 + $0x20] sm:$0xff] %vm4394, %v4307
      %4400 = vst.msk [vmem:[#allocation3 + $0x28] sm:$0xff] %vm4394, %v4309
      %4401 = vst.msk [vmem:[#allocation3 + $0x30] sm:$0xff] %vm4394, %v4311
      %4402 = vst.msk [vmem:[#allocation3 + $0x38] sm:$0xff] %vm4394, %v4313
      %4403 = vst.msk [vmem:[#allocation3 + $0x40] sm:$0xff] %vm4394, %v4315
      %4404 = vst.msk [vmem:[#allocation3 + $0x48] sm:$0xff] %vm4394, %v4317
      %4405 = vst.msk [vmem:[#allocation3 + $0x50] sm:$0xff] %vm4394, %v4319
      %4406 = vst.msk [vmem:[#allocation3 + $0x58] sm:$0xff] %vm4394, %v4321
      %4407 = vst.msk [vmem:[#allocation3 + $0x60] sm:$0xff] %vm4394, %v4323
      %4408 = vst.msk [vmem:[#allocation3 + $0x68] sm:$0xff] %vm4394, %v4325
      %4409 = vst.msk [vmem:[#allocation3 + $0x70] sm:$0xff] %vm4394, %v4327
      %4410 = vst.msk [vmem:[#allocation3 + $0x78] sm:$0xff] %vm4394, %v4329
      %4411 = vst.msk [vmem:[#allocation3 + $0x80] sm:$0xff] %vm4394, %v4331
      %4412 = vst.msk [vmem:[#allocation3 + $0x88] sm:$0xff] %vm4394, %v4333
      %4413 = vst.msk [vmem:[#allocation3 + $0x90] sm:$0xff] %vm4394, %v4335
      %4414 = vst.msk [vmem:[#allocation3 + $0x98] sm:$0xff] %vm4394, %v4337
      %4415 = vst.msk [vmem:[#allocation3 + $0xa0] sm:$0xff] %vm4394, %v4339
      %4416 = vst.msk [vmem:[#allocation3 + $0xa8] sm:$0xff] %vm4394, %v4341
      %4417 = vst.msk [vmem:[#allocation3 + $0xb0] sm:$0xff] %vm4394, %v4343
      %4418 = vst.msk [vmem:[#allocation3 + $0xb8] sm:$0xff] %vm4394, %v4345
      %4419 = vst.msk [vmem:[#allocation3 + $0xc0] sm:$0xff] %vm4394, %v4347
      %4420 = vst.msk [vmem:[#allocation3 + $0xc8] sm:$0xff] %vm4394, %v4349
      %4421 = vst.msk [vmem:[#allocation3 + $0xd0] sm:$0xff] %vm4394, %v4351
      %4422 = vst.msk [vmem:[#allocation3 + $0xd8] sm:$0xff] %vm4394, %v4353
      %4423 = vst.msk [vmem:[#allocation3 + $0xe0] sm:$0xff] %vm4394, %v4355
      %4424 = vst.msk [vmem:[#allocation3 + $0xe8] sm:$0xff] %vm4394, %v4357
      %4425 = vst.msk [vmem:[#allocation3 + $0xf0] sm:$0xff] %vm4394, %v4359
      %4426 = vst.msk [vmem:[#allocation3 + $0xf8] sm:$0xff] %vm4394, %v4361
      %v4427 = vpack.c.bf16 %v4235, %v4234
      %v4428 = vpack.c.bf16 %v4237, %v4236
      %v4429 = vpack.c.bf16 %v4239, %v4238
      %v4430 = vpack.c.bf16 %v4241, %v4240
      %v4431 = vpack.c.bf16 %v4243, %v4242
      %v4432 = vpack.c.bf16 %v4245, %v4244
      %v4433 = vpack.c.bf16 %v4247, %v4246
      %v4434 = vpack.c.bf16 %v4249, %v4248
      %v4435 = vpack.c.bf16 %v4251, %v4250
      %v4436 = vpack.c.bf16 %v4253, %v4252
      %v4437 = vpack.c.bf16 %v4255, %v4254
      %v4438 = vpack.c.bf16 %v4257, %v4256
      %v4439 = vpack.c.bf16 %v4259, %v4258
      %v4440 = vpack.c.bf16 %v4261, %v4260
      %v4441 = vpack.c.bf16 %v4263, %v4262
      %v4442 = vpack.c.bf16 %v4265, %v4264
      %v4459 = vrot.slane %v4427, 4
      %v4460 = vrot.slane %v4428, 4
      %v4461 = vrot.slane %v4429, 4
      %v4462 = vrot.slane %v4430, 4
      %v4463 = vrot.slane %v4431, 4
      %v4464 = vrot.slane %v4432, 4
      %v4465 = vrot.slane %v4433, 4
      %v4466 = vrot.slane %v4434, 4
      %v4467 = vrot.slane %v4435, 4
      %v4468 = vrot.slane %v4436, 4
      %v4469 = vrot.slane %v4437, 4
      %v4470 = vrot.slane %v4438, 4
      %v4471 = vrot.slane %v4439, 4
      %v4472 = vrot.slane %v4440, 4
      %v4473 = vrot.slane %v4441, 4
      %v4474 = vrot.slane %v4442, 4
      %4475 = vrot.lane.b32.xlu0 %v4459, 32
      %v4476 = vpop.permute.xlu0 %4475
      %4477 = vrot.lane.b32.xlu0 %v4460, 32
      %v4478 = vpop.permute.xlu0 %4477
      %4479 = vrot.lane.b32.xlu0 %v4461, 32
      %v4480 = vpop.permute.xlu0 %4479
      %4481 = vrot.lane.b32.xlu0 %v4462, 32
      %v4482 = vpop.permute.xlu0 %4481
      %4483 = vrot.lane.b32.xlu0 %v4463, 32
      %v4484 = vpop.permute.xlu0 %4483
      %4485 = vrot.lane.b32.xlu0 %v4464, 32
      %v4486 = vpop.permute.xlu0 %4485
      %4487 = vrot.lane.b32.xlu0 %v4465, 32
      %v4488 = vpop.permute.xlu0 %4487
      %4489 = vrot.lane.b32.xlu0 %v4466, 32
      %v4490 = vpop.permute.xlu0 %4489
      %4491 = vrot.lane.b32.xlu0 %v4467, 32
      %v4492 = vpop.permute.xlu0 %4491
      %4493 = vrot.lane.b32.xlu0 %v4468, 32
      %v4494 = vpop.permute.xlu0 %4493
      %4495 = vrot.lane.b32.xlu0 %v4469, 32
      %v4496 = vpop.permute.xlu0 %4495
      %4497 = vrot.lane.b32.xlu0 %v4470, 32
      %v4498 = vpop.permute.xlu0 %4497
      %4499 = vrot.lane.b32.xlu0 %v4471, 32
      %v4500 = vpop.permute.xlu0 %4499
      %4501 = vrot.lane.b32.xlu0 %v4472, 32
      %v4502 = vpop.permute.xlu0 %4501
      %4503 = vrot.lane.b32.xlu0 %v4473, 32
      %v4504 = vpop.permute.xlu0 %4503
      %4505 = vrot.lane.b32.xlu0 %v4474, 32
      %v4506 = vpop.permute.xlu0 %4505
      %s4523 = scalar_lea.vmem [#allocation2], 16
      %vm4524 = vcmask 64516
      %4525 = vst.msk [vmem:[%s4523] sm:$0xf0] %vm4524, %v4476
      %vm4526 = vcmask 60416
      %4527 = vst.msk [vmem:[%s4523 + $0x8] sm:$0xf] %vm4526, %v4476
      %4528 = vst.msk [vmem:[%s4523 + $0x10] sm:$0xf0] %vm4524, %v4478
      %4529 = vst.msk [vmem:[%s4523 + $0x18] sm:$0xf] %vm4526, %v4478
      %4530 = vst.msk [vmem:[%s4523 + $0x20] sm:$0xf0] %vm4524, %v4480
      %4531 = vst.msk [vmem:[%s4523 + $0x28] sm:$0xf] %vm4526, %v4480
      %4532 = vst.msk [vmem:[%s4523 + $0x30] sm:$0xf0] %vm4524, %v4482
      %4533 = vst.msk [vmem:[%s4523 + $0x38] sm:$0xf] %vm4526, %v4482
      %4534 = vst.msk [vmem:[%s4523 + $0x40] sm:$0xf0] %vm4524, %v4484
      %4535 = vst.msk [vmem:[%s4523 + $0x48] sm:$0xf] %vm4526, %v4484
      %4536 = vst.msk [vmem:[%s4523 + $0x50] sm:$0xf0] %vm4524, %v4486
      %4537 = vst.msk [vmem:[%s4523 + $0x58] sm:$0xf] %vm4526, %v4486
      %4538 = vst.msk [vmem:[%s4523 + $0x60] sm:$0xf0] %vm4524, %v4488
      %4539 = vst.msk [vmem:[%s4523 + $0x68] sm:$0xf] %vm4526, %v4488
      %4540 = vst.msk [vmem:[%s4523 + $0x70] sm:$0xf0] %vm4524, %v4490
      %4541 = vst.msk [vmem:[%s4523 + $0x78] sm:$0xf] %vm4526, %v4490
      %4542 = vst.msk [vmem:[%s4523 + $0x80] sm:$0xf0] %vm4524, %v4492
      %4543 = vst.msk [vmem:[%s4523 + $0x88] sm:$0xf] %vm4526, %v4492
      %4544 = vst.msk [vmem:[%s4523 + $0x90] sm:$0xf0] %vm4524, %v4494
      %4545 = vst.msk [vmem:[%s4523 + $0x98] sm:$0xf] %vm4526, %v4494
      %4546 = vst.msk [vmem:[%s4523 + $0xa0] sm:$0xf0] %vm4524, %v4496
      %4547 = vst.msk [vmem:[%s4523 + $0xa8] sm:$0xf] %vm4526, %v4496
      %4548 = vst.msk [vmem:[%s4523 + $0xb0] sm:$0xf0] %vm4524, %v4498
      %4549 = vst.msk [vmem:[%s4523 + $0xb8] sm:$0xf] %vm4526, %v4498
      %4550 = vst.msk [vmem:[%s4523 + $0xc0] sm:$0xf0] %vm4524, %v4500
      %4551 = vst.msk [vmem:[%s4523 + $0xc8] sm:$0xf] %vm4526, %v4500
      %4552 = vst.msk [vmem:[%s4523 + $0xd0] sm:$0xf0] %vm4524, %v4502
      %4553 = vst.msk [vmem:[%s4523 + $0xd8] sm:$0xf] %vm4526, %v4502
      %4554 = vst.msk [vmem:[%s4523 + $0xe0] sm:$0xf0] %vm4524, %v4504
      %4555 = vst.msk [vmem:[%s4523 + $0xe8] sm:$0xf] %vm4526, %v4504
      %4556 = vst.msk [vmem:[%s4523 + $0xf0] sm:$0xf0] %vm4524, %v4506
      %4557 = vst.msk [vmem:[%s4523 + $0xf8] sm:$0xf] %vm4526, %v4506
      %v4558 = vld [vmem:[#allocation2] sm:$0xff]
      %v4559 = vld [vmem:[#allocation2 + $0x8] sm:$0xff]
      %v4560 = vld [vmem:[#allocation2 + $0x10] sm:$0xff]
      %v4561 = vld [vmem:[#allocation2 + $0x18] sm:$0xff]
      %v4562 = vld [vmem:[#allocation2 + $0x20] sm:$0xff]
      %v4563 = vld [vmem:[#allocation2 + $0x28] sm:$0xff]
      %v4564 = vld [vmem:[#allocation2 + $0x30] sm:$0xff]
      %v4565 = vld [vmem:[#allocation2 + $0x38] sm:$0xff]
      %v4566 = vld [vmem:[#allocation2 + $0x40] sm:$0xff]
      %v4567 = vld [vmem:[#allocation2 + $0x48] sm:$0xff]
      %v4568 = vld [vmem:[#allocation2 + $0x50] sm:$0xff]
      %v4569 = vld [vmem:[#allocation2 + $0x58] sm:$0xff]
      %v4570 = vld [vmem:[#allocation2 + $0x60] sm:$0xff]
      %v4571 = vld [vmem:[#allocation2 + $0x68] sm:$0xff]
      %v4572 = vld [vmem:[#allocation2 + $0x70] sm:$0xff]
      %v4573 = vld [vmem:[#allocation2 + $0x78] sm:$0xff]
      %v4574 = vld [vmem:[#allocation2 + $0x80] sm:$0xff]
      %v4575 = vld [vmem:[#allocation2 + $0x88] sm:$0xff]
      %v4576 = vld [vmem:[#allocation2 + $0x90] sm:$0xff]
      %v4577 = vld [vmem:[#allocation2 + $0x98] sm:$0xff]
      %v4578 = vld [vmem:[#allocation2 + $0xa0] sm:$0xff]
      %v4579 = vld [vmem:[#allocation2 + $0xa8] sm:$0xff]
      %v4580 = vld [vmem:[#allocation2 + $0xb0] sm:$0xff]
      %v4581 = vld [vmem:[#allocation2 + $0xb8] sm:$0xff]
      %v4582 = vld [vmem:[#allocation2 + $0xc0] sm:$0xff]
      %v4583 = vld [vmem:[#allocation2 + $0xc8] sm:$0xff]
      %v4584 = vld [vmem:[#allocation2 + $0xd0] sm:$0xff]
      %v4585 = vld [vmem:[#allocation2 + $0xd8] sm:$0xff]
      %v4586 = vld [vmem:[#allocation2 + $0xe0] sm:$0xff]
      %v4587 = vld [vmem:[#allocation2 + $0xe8] sm:$0xff]
      %v4588 = vld [vmem:[#allocation2 + $0xf0] sm:$0xff]
      %v4589 = vld [vmem:[#allocation2 + $0xf8] sm:$0xff]
      %v4590 = vld [vmem:[#allocation2 + $0x100] sm:$0xff]
      %v4591 = vld [vmem:[#allocation2 + $0x108] sm:$0xff]
      %v4592 = vld [vmem:[#allocation2 + $0x110] sm:$0xff]
      %v4593 = vld [vmem:[#allocation2 + $0x118] sm:$0xff]
      %v4594 = vld [vmem:[#allocation4] sm:$0xff]
      %v4595 = vld [vmem:[#allocation4 + $0x8] sm:$0xff]
      %v4596 = vld [vmem:[#allocation4 + $0x10] sm:$0xff]
      %v4597 = vld [vmem:[#allocation4 + $0x18] sm:$0xff]
      %v4598 = vld [vmem:[#allocation4 + $0x20] sm:$0xff]
      %v4599 = vld [vmem:[#allocation4 + $0x28] sm:$0xff]
      %v4600 = vld [vmem:[#allocation4 + $0x30] sm:$0xff]
      %v4601 = vld [vmem:[#allocation4 + $0x38] sm:$0xff]
      %v4602 = vld [vmem:[#allocation4 + $0x40] sm:$0xff]
      %v4603 = vld [vmem:[#allocation4 + $0x48] sm:$0xff]
      %v4604 = vld [vmem:[#allocation4 + $0x50] sm:$0xff]
      %v4605 = vld [vmem:[#allocation4 + $0x58] sm:$0xff]
      %v4606 = vld [vmem:[#allocation4 + $0x60] sm:$0xff]
      %v4607 = vld [vmem:[#allocation4 + $0x68] sm:$0xff]
      %v4608 = vld [vmem:[#allocation4 + $0x70] sm:$0xff]
      %v4609 = vld [vmem:[#allocation4 + $0x78] sm:$0xff]
      %v4610 = vld [vmem:[#allocation4 + $0x80] sm:$0xff]
      %v4611 = vld [vmem:[#allocation4 + $0x88] sm:$0xff]
      %v4612 = vld [vmem:[#allocation4 + $0x90] sm:$0xff]
      %v4613 = vld [vmem:[#allocation4 + $0x98] sm:$0xff]
      %v4614 = vld [vmem:[#allocation4 + $0xa0] sm:$0xff]
      %v4615 = vld [vmem:[#allocation4 + $0xa8] sm:$0xff]
      %v4616 = vld [vmem:[#allocation4 + $0xb0] sm:$0xff]
      %v4617 = vld [vmem:[#allocation4 + $0xb8] sm:$0xff]
      %v4618 = vld [vmem:[#allocation4 + $0xc0] sm:$0xff]
      %v4619 = vld [vmem:[#allocation4 + $0xc8] sm:$0xff]
      %v4620 = vld [vmem:[#allocation4 + $0xd0] sm:$0xff]
      %v4621 = vld [vmem:[#allocation4 + $0xd8] sm:$0xff]
      %v4622 = vld [vmem:[#allocation4 + $0xe0] sm:$0xff]
      %v4623 = vld [vmem:[#allocation4 + $0xe8] sm:$0xff]
      %v4624 = vld [vmem:[#allocation4 + $0xf0] sm:$0xff]
      %v4625 = vld [vmem:[#allocation4 + $0xf8] sm:$0xff]
      %v4626 = vld [vmem:[#allocation4 + $0x100] sm:$0xff]
      %v4627 = vld [vmem:[#allocation4 + $0x108] sm:$0xff]
      %v4628 = vld [vmem:[#allocation4 + $0x110] sm:$0xff]
      %v4629 = vld [vmem:[#allocation4 + $0x118] sm:$0xff]
      %v4631 = vshrl.u32 %v4558, 16
      %v4633 = vrot.slane %v4631, 3
      %v4634 = vshll.u32 %v4558, 16
      %v4636 = vrot.slane %v4634, 4
      %v4637 = vor.u32 %v4633, %v4636
      %v4639 = vshrl.u32 %v4559, 16
      %v4641 = vrot.slane %v4639, 3
      %v4642 = vshll.u32 %v4559, 16
      %v4644 = vrot.slane %v4642, 4
      %v4645 = vor.u32 %v4641, %v4644
      %v4646 = vsel %vm905, %v4637, %v4645
      %v4648 = vshrl.u32 %v4560, 16
      %v4650 = vrot.slane %v4648, 3
      %v4651 = vshll.u32 %v4560, 16
      %v4653 = vrot.slane %v4651, 4
      %v4654 = vor.u32 %v4650, %v4653
      %v4656 = vshrl.u32 %v4561, 16
      %v4658 = vrot.slane %v4656, 3
      %v4659 = vshll.u32 %v4561, 16
      %v4661 = vrot.slane %v4659, 4
      %v4662 = vor.u32 %v4658, %v4661
      %v4663 = vsel %vm905, %v4654, %v4662
      %v4665 = vshrl.u32 %v4562, 16
      %v4667 = vrot.slane %v4665, 3
      %v4668 = vshll.u32 %v4562, 16
      %v4670 = vrot.slane %v4668, 4
      %v4671 = vor.u32 %v4667, %v4670
      %v4673 = vshrl.u32 %v4563, 16
      %v4675 = vrot.slane %v4673, 3
      %v4676 = vshll.u32 %v4563, 16
      %v4678 = vrot.slane %v4676, 4
      %v4679 = vor.u32 %v4675, %v4678
      %v4680 = vsel %vm905, %v4671, %v4679
      %v4682 = vshrl.u32 %v4564, 16
      %v4684 = vrot.slane %v4682, 3
      %v4685 = vshll.u32 %v4564, 16
      %v4687 = vrot.slane %v4685, 4
      %v4688 = vor.u32 %v4684, %v4687
      %v4690 = vshrl.u32 %v4565, 16
      %v4692 = vrot.slane %v4690, 3
      %v4693 = vshll.u32 %v4565, 16
      %v4695 = vrot.slane %v4693, 4
      %v4696 = vor.u32 %v4692, %v4695
      %v4697 = vsel %vm905, %v4688, %v4696
      %v4699 = vshrl.u32 %v4566, 16
      %v4701 = vrot.slane %v4699, 3
      %v4702 = vshll.u32 %v4566, 16
      %v4704 = vrot.slane %v4702, 4
      %v4705 = vor.u32 %v4701, %v4704
      %v4707 = vshrl.u32 %v4567, 16
      %v4709 = vrot.slane %v4707, 3
      %v4710 = vshll.u32 %v4567, 16
      %v4712 = vrot.slane %v4710, 4
      %v4713 = vor.u32 %v4709, %v4712
      %v4714 = vsel %vm905, %v4705, %v4713
      %v4716 = vshrl.u32 %v4568, 16
      %v4718 = vrot.slane %v4716, 3
      %v4719 = vshll.u32 %v4568, 16
      %v4721 = vrot.slane %v4719, 4
      %v4722 = vor.u32 %v4718, %v4721
      %v4724 = vshrl.u32 %v4569, 16
      %v4726 = vrot.slane %v4724, 3
      %v4727 = vshll.u32 %v4569, 16
      %v4729 = vrot.slane %v4727, 4
      %v4730 = vor.u32 %v4726, %v4729
      %v4731 = vsel %vm905, %v4722, %v4730
      %v4733 = vshrl.u32 %v4570, 16
      %v4735 = vrot.slane %v4733, 3
      %v4736 = vshll.u32 %v4570, 16
      %v4738 = vrot.slane %v4736, 4
      %v4739 = vor.u32 %v4735, %v4738
      %v4741 = vshrl.u32 %v4571, 16
      %v4743 = vrot.slane %v4741, 3
      %v4744 = vshll.u32 %v4571, 16
      %v4746 = vrot.slane %v4744, 4
      %v4747 = vor.u32 %v4743, %v4746
      %v4748 = vsel %vm905, %v4739, %v4747
      %v4750 = vshrl.u32 %v4572, 16
      %v4752 = vrot.slane %v4750, 3
      %v4753 = vshll.u32 %v4572, 16
      %v4755 = vrot.slane %v4753, 4
      %v4756 = vor.u32 %v4752, %v4755
      %v4758 = vshrl.u32 %v4573, 16
      %v4760 = vrot.slane %v4758, 3
      %v4761 = vshll.u32 %v4573, 16
      %v4763 = vrot.slane %v4761, 4
      %v4764 = vor.u32 %v4760, %v4763
      %v4765 = vsel %vm905, %v4756, %v4764
      %v4767 = vshrl.u32 %v4574, 16
      %v4769 = vrot.slane %v4767, 3
      %v4770 = vshll.u32 %v4574, 16
      %v4772 = vrot.slane %v4770, 4
      %v4773 = vor.u32 %v4769, %v4772
      %v4775 = vshrl.u32 %v4575, 16
      %v4777 = vrot.slane %v4775, 3
      %v4778 = vshll.u32 %v4575, 16
      %v4780 = vrot.slane %v4778, 4
      %v4781 = vor.u32 %v4777, %v4780
      %v4782 = vsel %vm905, %v4773, %v4781
      %v4784 = vshrl.u32 %v4576, 16
      %v4786 = vrot.slane %v4784, 3
      %v4787 = vshll.u32 %v4576, 16
      %v4789 = vrot.slane %v4787, 4
      %v4790 = vor.u32 %v4786, %v4789
      %v4792 = vshrl.u32 %v4577, 16
      %v4794 = vrot.slane %v4792, 3
      %v4795 = vshll.u32 %v4577, 16
      %v4797 = vrot.slane %v4795, 4
      %v4798 = vor.u32 %v4794, %v4797
      %v4799 = vsel %vm905, %v4790, %v4798
      %v4801 = vshrl.u32 %v4578, 16
      %v4803 = vrot.slane %v4801, 3
      %v4804 = vshll.u32 %v4578, 16
      %v4806 = vrot.slane %v4804, 4
      %v4807 = vor.u32 %v4803, %v4806
      %v4809 = vshrl.u32 %v4579, 16
      %v4811 = vrot.slane %v4809, 3
      %v4812 = vshll.u32 %v4579, 16
      %v4814 = vrot.slane %v4812, 4
      %v4815 = vor.u32 %v4811, %v4814
      %v4816 = vsel %vm905, %v4807, %v4815
      %v4818 = vshrl.u32 %v4580, 16
      %v4820 = vrot.slane %v4818, 3
      %v4821 = vshll.u32 %v4580, 16
      %v4823 = vrot.slane %v4821, 4
      %v4824 = vor.u32 %v4820, %v4823
      %v4826 = vshrl.u32 %v4581, 16
      %v4828 = vrot.slane %v4826, 3
      %v4829 = vshll.u32 %v4581, 16
      %v4831 = vrot.slane %v4829, 4
      %v4832 = vor.u32 %v4828, %v4831
      %v4833 = vsel %vm905, %v4824, %v4832
      %v4835 = vshrl.u32 %v4582, 16
      %v4837 = vrot.slane %v4835, 3
      %v4838 = vshll.u32 %v4582, 16
      %v4840 = vrot.slane %v4838, 4
      %v4841 = vor.u32 %v4837, %v4840
      %v4843 = vshrl.u32 %v4583, 16
      %v4845 = vrot.slane %v4843, 3
      %v4846 = vshll.u32 %v4583, 16
      %v4848 = vrot.slane %v4846, 4
      %v4849 = vor.u32 %v4845, %v4848
      %v4850 = vsel %vm905, %v4841, %v4849
      %v4852 = vshrl.u32 %v4584, 16
      %v4854 = vrot.slane %v4852, 3
      %v4855 = vshll.u32 %v4584, 16
      %v4857 = vrot.slane %v4855, 4
      %v4858 = vor.u32 %v4854, %v4857
      %v4860 = vshrl.u32 %v4585, 16
      %v4862 = vrot.slane %v4860, 3
      %v4863 = vshll.u32 %v4585, 16
      %v4865 = vrot.slane %v4863, 4
      %v4866 = vor.u32 %v4862, %v4865
      %v4867 = vsel %vm905, %v4858, %v4866
      %v4869 = vshrl.u32 %v4586, 16
      %v4871 = vrot.slane %v4869, 3
      %v4872 = vshll.u32 %v4586, 16
      %v4874 = vrot.slane %v4872, 4
      %v4875 = vor.u32 %v4871, %v4874
      %v4877 = vshrl.u32 %v4587, 16
      %v4879 = vrot.slane %v4877, 3
      %v4880 = vshll.u32 %v4587, 16
      %v4882 = vrot.slane %v4880, 4
      %v4883 = vor.u32 %v4879, %v4882
      %v4884 = vsel %vm905, %v4875, %v4883
      %v4886 = vshrl.u32 %v4588, 16
      %v4888 = vrot.slane %v4886, 3
      %v4889 = vshll.u32 %v4588, 16
      %v4891 = vrot.slane %v4889, 4
      %v4892 = vor.u32 %v4888, %v4891
      %v4894 = vshrl.u32 %v4589, 16
      %v4896 = vrot.slane %v4894, 3
      %v4897 = vshll.u32 %v4589, 16
      %v4899 = vrot.slane %v4897, 4
      %v4900 = vor.u32 %v4896, %v4899
      %v4901 = vsel %vm905, %v4892, %v4900
      %v4903 = vshrl.u32 %v4594, 16
      %v4905 = vrot.slane %v4903, 3
      %v4906 = vshll.u32 %v4594, 16
      %v4908 = vrot.slane %v4906, 4
      %v4909 = vor.u32 %v4905, %v4908
      %v4911 = vshrl.u32 %v4595, 16
      %v4913 = vrot.slane %v4911, 3
      %v4914 = vshll.u32 %v4595, 16
      %v4916 = vrot.slane %v4914, 4
      %v4917 = vor.u32 %v4913, %v4916
      %v4918 = vsel %vm905, %v4909, %v4917
      %v4920 = vshrl.u32 %v4596, 16
      %v4922 = vrot.slane %v4920, 3
      %v4923 = vshll.u32 %v4596, 16
      %v4925 = vrot.slane %v4923, 4
      %v4926 = vor.u32 %v4922, %v4925
      %v4928 = vshrl.u32 %v4597, 16
      %v4930 = vrot.slane %v4928, 3
      %v4931 = vshll.u32 %v4597, 16
      %v4933 = vrot.slane %v4931, 4
      %v4934 = vor.u32 %v4930, %v4933
      %v4935 = vsel %vm905, %v4926, %v4934
      %v4937 = vshrl.u32 %v4598, 16
      %v4939 = vrot.slane %v4937, 3
      %v4940 = vshll.u32 %v4598, 16
      %v4942 = vrot.slane %v4940, 4
      %v4943 = vor.u32 %v4939, %v4942
      %v4945 = vshrl.u32 %v4599, 16
      %v4947 = vrot.slane %v4945, 3
      %v4948 = vshll.u32 %v4599, 16
      %v4950 = vrot.slane %v4948, 4
      %v4951 = vor.u32 %v4947, %v4950
      %v4952 = vsel %vm905, %v4943, %v4951
      %v4954 = vshrl.u32 %v4600, 16
      %v4956 = vrot.slane %v4954, 3
      %v4957 = vshll.u32 %v4600, 16
      %v4959 = vrot.slane %v4957, 4
      %v4960 = vor.u32 %v4956, %v4959
      %v4962 = vshrl.u32 %v4601, 16
      %v4964 = vrot.slane %v4962, 3
      %v4965 = vshll.u32 %v4601, 16
      %v4967 = vrot.slane %v4965, 4
      %v4968 = vor.u32 %v4964, %v4967
      %v4969 = vsel %vm905, %v4960, %v4968
      %v4971 = vshrl.u32 %v4602, 16
      %v4973 = vrot.slane %v4971, 3
      %v4974 = vshll.u32 %v4602, 16
      %v4976 = vrot.slane %v4974, 4
      %v4977 = vor.u32 %v4973, %v4976
      %v4979 = vshrl.u32 %v4603, 16
      %v4981 = vrot.slane %v4979, 3
      %v4982 = vshll.u32 %v4603, 16
      %v4984 = vrot.slane %v4982, 4
      %v4985 = vor.u32 %v4981, %v4984
      %v4986 = vsel %vm905, %v4977, %v4985
      %v4988 = vshrl.u32 %v4604, 16
      %v4990 = vrot.slane %v4988, 3
      %v4991 = vshll.u32 %v4604, 16
      %v4993 = vrot.slane %v4991, 4
      %v4994 = vor.u32 %v4990, %v4993
      %v4996 = vshrl.u32 %v4605, 16
      %v4998 = vrot.slane %v4996, 3
      %v4999 = vshll.u32 %v4605, 16
      %v5001 = vrot.slane %v4999, 4
      %v5002 = vor.u32 %v4998, %v5001
      %v5003 = vsel %vm905, %v4994, %v5002
      %v5005 = vshrl.u32 %v4606, 16
      %v5007 = vrot.slane %v5005, 3
      %v5008 = vshll.u32 %v4606, 16
      %v5010 = vrot.slane %v5008, 4
      %v5011 = vor.u32 %v5007, %v5010
      %v5013 = vshrl.u32 %v4607, 16
      %v5015 = vrot.slane %v5013, 3
      %v5016 = vshll.u32 %v4607, 16
      %v5018 = vrot.slane %v5016, 4
      %v5019 = vor.u32 %v5015, %v5018
      %v5020 = vsel %vm905, %v5011, %v5019
      %v5022 = vshrl.u32 %v4608, 16
      %v5024 = vrot.slane %v5022, 3
      %v5025 = vshll.u32 %v4608, 16
      %v5027 = vrot.slane %v5025, 4
      %v5028 = vor.u32 %v5024, %v5027
      %v5030 = vshrl.u32 %v4609, 16
      %v5032 = vrot.slane %v5030, 3
      %v5033 = vshll.u32 %v4609, 16
      %v5035 = vrot.slane %v5033, 4
      %v5036 = vor.u32 %v5032, %v5035
      %v5037 = vsel %vm905, %v5028, %v5036
      %v5039 = vshrl.u32 %v4610, 16
      %v5041 = vrot.slane %v5039, 3
      %v5042 = vshll.u32 %v4610, 16
      %v5044 = vrot.slane %v5042, 4
      %v5045 = vor.u32 %v5041, %v5044
      %v5047 = vshrl.u32 %v4611, 16
      %v5049 = vrot.slane %v5047, 3
      %v5050 = vshll.u32 %v4611, 16
      %v5052 = vrot.slane %v5050, 4
      %v5053 = vor.u32 %v5049, %v5052
      %v5054 = vsel %vm905, %v5045, %v5053
      %v5056 = vshrl.u32 %v4612, 16
      %v5058 = vrot.slane %v5056, 3
      %v5059 = vshll.u32 %v4612, 16
      %v5061 = vrot.slane %v5059, 4
      %v5062 = vor.u32 %v5058, %v5061
      %v5064 = vshrl.u32 %v4613, 16
      %v5066 = vrot.slane %v5064, 3
      %v5067 = vshll.u32 %v4613, 16
      %v5069 = vrot.slane %v5067, 4
      %v5070 = vor.u32 %v5066, %v5069
      %v5071 = vsel %vm905, %v5062, %v5070
      %v5073 = vshrl.u32 %v4614, 16
      %v5075 = vrot.slane %v5073, 3
      %v5076 = vshll.u32 %v4614, 16
      %v5078 = vrot.slane %v5076, 4
      %v5079 = vor.u32 %v5075, %v5078
      %v5081 = vshrl.u32 %v4615, 16
      %v5083 = vrot.slane %v5081, 3
      %v5084 = vshll.u32 %v4615, 16
      %v5086 = vrot.slane %v5084, 4
      %v5087 = vor.u32 %v5083, %v5086
      %v5088 = vsel %vm905, %v5079, %v5087
      %v5090 = vshrl.u32 %v4616, 16
      %v5092 = vrot.slane %v5090, 3
      %v5093 = vshll.u32 %v4616, 16
      %v5095 = vrot.slane %v5093, 4
      %v5096 = vor.u32 %v5092, %v5095
      %v5098 = vshrl.u32 %v4617, 16
      %v5100 = vrot.slane %v5098, 3
      %v5101 = vshll.u32 %v4617, 16
      %v5103 = vrot.slane %v5101, 4
      %v5104 = vor.u32 %v5100, %v5103
      %v5105 = vsel %vm905, %v5096, %v5104
      %v5107 = vshrl.u32 %v4618, 16
      %v5109 = vrot.slane %v5107, 3
      %v5110 = vshll.u32 %v4618, 16
      %v5112 = vrot.slane %v5110, 4
      %v5113 = vor.u32 %v5109, %v5112
      %v5115 = vshrl.u32 %v4619, 16
      %v5117 = vrot.slane %v5115, 3
      %v5118 = vshll.u32 %v4619, 16
      %v5120 = vrot.slane %v5118, 4
      %v5121 = vor.u32 %v5117, %v5120
      %v5122 = vsel %vm905, %v5113, %v5121
      %v5124 = vshrl.u32 %v4620, 16
      %v5126 = vrot.slane %v5124, 3
      %v5127 = vshll.u32 %v4620, 16
      %v5129 = vrot.slane %v5127, 4
      %v5130 = vor.u32 %v5126, %v5129
      %v5132 = vshrl.u32 %v4621, 16
      %v5134 = vrot.slane %v5132, 3
      %v5135 = vshll.u32 %v4621, 16
      %v5137 = vrot.slane %v5135, 4
      %v5138 = vor.u32 %v5134, %v5137
      %v5139 = vsel %vm905, %v5130, %v5138
      %v5141 = vshrl.u32 %v4622, 16
      %v5143 = vrot.slane %v5141, 3
      %v5144 = vshll.u32 %v4622, 16
      %v5146 = vrot.slane %v5144, 4
      %v5147 = vor.u32 %v5143, %v5146
      %v5149 = vshrl.u32 %v4623, 16
      %v5151 = vrot.slane %v5149, 3
      %v5152 = vshll.u32 %v4623, 16
      %v5154 = vrot.slane %v5152, 4
      %v5155 = vor.u32 %v5151, %v5154
      %v5156 = vsel %vm905, %v5147, %v5155
      %v5158 = vshrl.u32 %v4624, 16
      %v5160 = vrot.slane %v5158, 3
      %v5161 = vshll.u32 %v4624, 16
      %v5163 = vrot.slane %v5161, 4
      %v5164 = vor.u32 %v5160, %v5163
      %v5166 = vshrl.u32 %v4625, 16
      %v5168 = vrot.slane %v5166, 3
      %v5169 = vshll.u32 %v4625, 16
      %v5171 = vrot.slane %v5169, 4
      %v5172 = vor.u32 %v5168, %v5171
      %v5173 = vsel %vm905, %v5164, %v5172
      %v5175 = vshrl.u32 %v4590, 16
      %v5177 = vrot.slane %v5175, 3
      %v5178 = vshll.u32 %v4590, 16
      %v5180 = vrot.slane %v5178, 4
      %v5181 = vor.u32 %v5177, %v5180
      %v5183 = vshrl.u32 %v4591, 16
      %v5185 = vrot.slane %v5183, 3
      %v5186 = vshll.u32 %v4591, 16
      %v5188 = vrot.slane %v5186, 4
      %v5189 = vor.u32 %v5185, %v5188
      %v5190 = vsel %vm905, %v5181, %v5189
      %v5192 = vshrl.u32 %v4626, 16
      %v5194 = vrot.slane %v5192, 3
      %v5195 = vshll.u32 %v4626, 16
      %v5197 = vrot.slane %v5195, 4
      %v5198 = vor.u32 %v5194, %v5197
      %v5200 = vshrl.u32 %v4627, 16
      %v5202 = vrot.slane %v5200, 3
      %v5203 = vshll.u32 %v4627, 16
      %v5205 = vrot.slane %v5203, 4
      %v5206 = vor.u32 %v5202, %v5205
      %v5207 = vsel %vm905, %v5198, %v5206
      %v5209 = vshrl.u32 %v4592, 16
      %v5211 = vrot.slane %v5209, 3
      %v5212 = vshll.u32 %v4592, 16
      %v5214 = vrot.slane %v5212, 4
      %v5215 = vor.u32 %v5211, %v5214
      %v5217 = vshrl.u32 %v4593, 16
      %v5219 = vrot.slane %v5217, 3
      %v5220 = vshll.u32 %v4593, 16
      %v5222 = vrot.slane %v5220, 4
      %v5223 = vor.u32 %v5219, %v5222
      %v5224 = vsel %vm905, %v5215, %v5223
      %v5226 = vshrl.u32 %v4628, 16
      %v5228 = vrot.slane %v5226, 3
      %v5229 = vshll.u32 %v4628, 16
      %v5231 = vrot.slane %v5229, 4
      %v5232 = vor.u32 %v5228, %v5231
      %v5234 = vshrl.u32 %v4629, 16
      %v5236 = vrot.slane %v5234, 3
      %v5237 = vshll.u32 %v4629, 16
      %v5239 = vrot.slane %v5237, 4
      %v5240 = vor.u32 %v5236, %v5239
      %v5241 = vsel %vm905, %v5232, %v5240
      %v5274 = vrot.slane %v4558, 4
      %v5275 = vrot.slane %v4559, 4
      %v5276 = vsel %vm1288, %v5274, %v5275
      %v5277 = vrot.slane %v4560, 4
      %v5278 = vrot.slane %v4561, 4
      %v5279 = vsel %vm1288, %v5277, %v5278
      %v5280 = vrot.slane %v4562, 4
      %v5281 = vrot.slane %v4563, 4
      %v5282 = vsel %vm1288, %v5280, %v5281
      %v5283 = vrot.slane %v4564, 4
      %v5284 = vrot.slane %v4565, 4
      %v5285 = vsel %vm1288, %v5283, %v5284
      %v5286 = vrot.slane %v4566, 4
      %v5287 = vrot.slane %v4567, 4
      %v5288 = vsel %vm1288, %v5286, %v5287
      %v5289 = vrot.slane %v4568, 4
      %v5290 = vrot.slane %v4569, 4
      %v5291 = vsel %vm1288, %v5289, %v5290
      %v5292 = vrot.slane %v4570, 4
      %v5293 = vrot.slane %v4571, 4
      %v5294 = vsel %vm1288, %v5292, %v5293
      %v5295 = vrot.slane %v4572, 4
      %v5296 = vrot.slane %v4573, 4
      %v5297 = vsel %vm1288, %v5295, %v5296
      %v5298 = vrot.slane %v4574, 4
      %v5299 = vrot.slane %v4575, 4
      %v5300 = vsel %vm1288, %v5298, %v5299
      %v5301 = vrot.slane %v4576, 4
      %v5302 = vrot.slane %v4577, 4
      %v5303 = vsel %vm1288, %v5301, %v5302
      %v5304 = vrot.slane %v4578, 4
      %v5305 = vrot.slane %v4579, 4
      %v5306 = vsel %vm1288, %v5304, %v5305
      %v5307 = vrot.slane %v4580, 4
      %v5308 = vrot.slane %v4581, 4
      %v5309 = vsel %vm1288, %v5307, %v5308
      %v5310 = vrot.slane %v4582, 4
      %v5311 = vrot.slane %v4583, 4
      %v5312 = vsel %vm1288, %v5310, %v5311
      %v5313 = vrot.slane %v4584, 4
      %v5314 = vrot.slane %v4585, 4
      %v5315 = vsel %vm1288, %v5313, %v5314
      %v5316 = vrot.slane %v4586, 4
      %v5317 = vrot.slane %v4587, 4
      %v5318 = vsel %vm1288, %v5316, %v5317
      %v5319 = vrot.slane %v4588, 4
      %v5320 = vrot.slane %v4589, 4
      %v5321 = vsel %vm1288, %v5319, %v5320
      %v5354 = vrot.slane %v4594, 4
      %v5355 = vrot.slane %v4595, 4
      %v5356 = vsel %vm1288, %v5354, %v5355
      %v5357 = vrot.slane %v4596, 4
      %v5358 = vrot.slane %v4597, 4
      %v5359 = vsel %vm1288, %v5357, %v5358
      %v5360 = vrot.slane %v4598, 4
      %v5361 = vrot.slane %v4599, 4
      %v5362 = vsel %vm1288, %v5360, %v5361
      %v5363 = vrot.slane %v4600, 4
      %v5364 = vrot.slane %v4601, 4
      %v5365 = vsel %vm1288, %v5363, %v5364
      %v5366 = vrot.slane %v4602, 4
      %v5367 = vrot.slane %v4603, 4
      %v5368 = vsel %vm1288, %v5366, %v5367
      %v5369 = vrot.slane %v4604, 4
      %v5370 = vrot.slane %v4605, 4
      %v5371 = vsel %vm1288, %v5369, %v5370
      %v5372 = vrot.slane %v4606, 4
      %v5373 = vrot.slane %v4607, 4
      %v5374 = vsel %vm1288, %v5372, %v5373
      %v5375 = vrot.slane %v4608, 4
      %v5376 = vrot.slane %v4609, 4
      %v5377 = vsel %vm1288, %v5375, %v5376
      %v5378 = vrot.slane %v4610, 4
      %v5379 = vrot.slane %v4611, 4
      %v5380 = vsel %vm1288, %v5378, %v5379
      %v5381 = vrot.slane %v4612, 4
      %v5382 = vrot.slane %v4613, 4
      %v5383 = vsel %vm1288, %v5381, %v5382
      %v5384 = vrot.slane %v4614, 4
      %v5385 = vrot.slane %v4615, 4
      %v5386 = vsel %vm1288, %v5384, %v5385
      %v5387 = vrot.slane %v4616, 4
      %v5388 = vrot.slane %v4617, 4
      %v5389 = vsel %vm1288, %v5387, %v5388
      %v5390 = vrot.slane %v4618, 4
      %v5391 = vrot.slane %v4619, 4
      %v5392 = vsel %vm1288, %v5390, %v5391
      %v5393 = vrot.slane %v4620, 4
      %v5394 = vrot.slane %v4621, 4
      %v5395 = vsel %vm1288, %v5393, %v5394
      %v5396 = vrot.slane %v4622, 4
      %v5397 = vrot.slane %v4623, 4
      %v5398 = vsel %vm1288, %v5396, %v5397
      %v5399 = vrot.slane %v4624, 4
      %v5400 = vrot.slane %v4625, 4
      %v5401 = vsel %vm1288, %v5399, %v5400
      %v5404 = vrot.slane %v4590, 4
      %v5405 = vrot.slane %v4591, 4
      %v5406 = vsel %vm1288, %v5404, %v5405
      %v5409 = vrot.slane %v4626, 4
      %v5410 = vrot.slane %v4627, 4
      %v5411 = vsel %vm1288, %v5409, %v5410
      %v5414 = vrot.slane %v4592, 4
      %v5415 = vrot.slane %v4593, 4
      %v5416 = vsel %vm1288, %v5414, %v5415
      %v5419 = vrot.slane %v4628, 4
      %v5420 = vrot.slane %v4629, 4
      %v5421 = vsel %vm1288, %v5419, %v5420
      %v5422 = vrot.slane %v4631, 4
      %v5423 = vrot.slane %v4634, 5
      %v5424 = vor.u32 %v5422, %v5423
      %v5425 = vrot.slane %v4639, 4
      %v5426 = vrot.slane %v4642, 5
      %v5427 = vor.u32 %v5425, %v5426
      %v5428 = vsel %vm1347, %v5424, %v5427
      %v5429 = vrot.slane %v4648, 4
      %v5430 = vrot.slane %v4651, 5
      %v5431 = vor.u32 %v5429, %v5430
      %v5432 = vrot.slane %v4656, 4
      %v5433 = vrot.slane %v4659, 5
      %v5434 = vor.u32 %v5432, %v5433
      %v5435 = vsel %vm1347, %v5431, %v5434
      %v5436 = vrot.slane %v4665, 4
      %v5437 = vrot.slane %v4668, 5
      %v5438 = vor.u32 %v5436, %v5437
      %v5439 = vrot.slane %v4673, 4
      %v5440 = vrot.slane %v4676, 5
      %v5441 = vor.u32 %v5439, %v5440
      %v5442 = vsel %vm1347, %v5438, %v5441
      %v5443 = vrot.slane %v4682, 4
      %v5444 = vrot.slane %v4685, 5
      %v5445 = vor.u32 %v5443, %v5444
      %v5446 = vrot.slane %v4690, 4
      %v5447 = vrot.slane %v4693, 5
      %v5448 = vor.u32 %v5446, %v5447
      %v5449 = vsel %vm1347, %v5445, %v5448
      %v5450 = vrot.slane %v4699, 4
      %v5451 = vrot.slane %v4702, 5
      %v5452 = vor.u32 %v5450, %v5451
      %v5453 = vrot.slane %v4707, 4
      %v5454 = vrot.slane %v4710, 5
      %v5455 = vor.u32 %v5453, %v5454
      %v5456 = vsel %vm1347, %v5452, %v5455
      %v5457 = vrot.slane %v4716, 4
      %v5458 = vrot.slane %v4719, 5
      %v5459 = vor.u32 %v5457, %v5458
      %v5460 = vrot.slane %v4724, 4
      %v5461 = vrot.slane %v4727, 5
      %v5462 = vor.u32 %v5460, %v5461
      %v5463 = vsel %vm1347, %v5459, %v5462
      %v5464 = vrot.slane %v4733, 4
      %v5465 = vrot.slane %v4736, 5
      %v5466 = vor.u32 %v5464, %v5465
      %v5467 = vrot.slane %v4741, 4
      %v5468 = vrot.slane %v4744, 5
      %v5469 = vor.u32 %v5467, %v5468
      %v5470 = vsel %vm1347, %v5466, %v5469
      %v5471 = vrot.slane %v4750, 4
      %v5472 = vrot.slane %v4753, 5
      %v5473 = vor.u32 %v5471, %v5472
      %v5474 = vrot.slane %v4758, 4
      %v5475 = vrot.slane %v4761, 5
      %v5476 = vor.u32 %v5474, %v5475
      %v5477 = vsel %vm1347, %v5473, %v5476
      %v5478 = vrot.slane %v4767, 4
      %v5479 = vrot.slane %v4770, 5
      %v5480 = vor.u32 %v5478, %v5479
      %v5481 = vrot.slane %v4775, 4
      %v5482 = vrot.slane %v4778, 5
      %v5483 = vor.u32 %v5481, %v5482
      %v5484 = vsel %vm1347, %v5480, %v5483
      %v5485 = vrot.slane %v4784, 4
      %v5486 = vrot.slane %v4787, 5
      %v5487 = vor.u32 %v5485, %v5486
      %v5488 = vrot.slane %v4792, 4
      %v5489 = vrot.slane %v4795, 5
      %v5490 = vor.u32 %v5488, %v5489
      %v5491 = vsel %vm1347, %v5487, %v5490
      %v5492 = vrot.slane %v4801, 4
      %v5493 = vrot.slane %v4804, 5
      %v5494 = vor.u32 %v5492, %v5493
      %v5495 = vrot.slane %v4809, 4
      %v5496 = vrot.slane %v4812, 5
      %v5497 = vor.u32 %v5495, %v5496
      %v5498 = vsel %vm1347, %v5494, %v5497
      %v5499 = vrot.slane %v4818, 4
      %v5500 = vrot.slane %v4821, 5
      %v5501 = vor.u32 %v5499, %v5500
      %v5502 = vrot.slane %v4826, 4
      %v5503 = vrot.slane %v4829, 5
      %v5504 = vor.u32 %v5502, %v5503
      %v5505 = vsel %vm1347, %v5501, %v5504
      %v5506 = vrot.slane %v4835, 4
      %v5507 = vrot.slane %v4838, 5
      %v5508 = vor.u32 %v5506, %v5507
      %v5509 = vrot.slane %v4843, 4
      %v5510 = vrot.slane %v4846, 5
      %v5511 = vor.u32 %v5509, %v5510
      %v5512 = vsel %vm1347, %v5508, %v5511
      %v5513 = vrot.slane %v4852, 4
      %v5514 = vrot.slane %v4855, 5
      %v5515 = vor.u32 %v5513, %v5514
      %v5516 = vrot.slane %v4860, 4
      %v5517 = vrot.slane %v4863, 5
      %v5518 = vor.u32 %v5516, %v5517
      %v5519 = vsel %vm1347, %v5515, %v5518
      %v5520 = vrot.slane %v4869, 4
      %v5521 = vrot.slane %v4872, 5
      %v5522 = vor.u32 %v5520, %v5521
      %v5523 = vrot.slane %v4877, 4
      %v5524 = vrot.slane %v4880, 5
      %v5525 = vor.u32 %v5523, %v5524
      %v5526 = vsel %vm1347, %v5522, %v5525
      %v5527 = vrot.slane %v4886, 4
      %v5528 = vrot.slane %v4889, 5
      %v5529 = vor.u32 %v5527, %v5528
      %v5530 = vrot.slane %v4894, 4
      %v5531 = vrot.slane %v4897, 5
      %v5532 = vor.u32 %v5530, %v5531
      %v5533 = vsel %vm1347, %v5529, %v5532
      %v5534 = vrot.slane %v4903, 4
      %v5535 = vrot.slane %v4906, 5
      %v5536 = vor.u32 %v5534, %v5535
      %v5537 = vrot.slane %v4911, 4
      %v5538 = vrot.slane %v4914, 5
      %v5539 = vor.u32 %v5537, %v5538
      %v5540 = vsel %vm1347, %v5536, %v5539
      %v5541 = vrot.slane %v4920, 4
      %v5542 = vrot.slane %v4923, 5
      %v5543 = vor.u32 %v5541, %v5542
      %v5544 = vrot.slane %v4928, 4
      %v5545 = vrot.slane %v4931, 5
      %v5546 = vor.u32 %v5544, %v5545
      %v5547 = vsel %vm1347, %v5543, %v5546
      %v5548 = vrot.slane %v4937, 4
      %v5549 = vrot.slane %v4940, 5
      %v5550 = vor.u32 %v5548, %v5549
      %v5551 = vrot.slane %v4945, 4
      %v5552 = vrot.slane %v4948, 5
      %v5553 = vor.u32 %v5551, %v5552
      %v5554 = vsel %vm1347, %v5550, %v5553
      %v5555 = vrot.slane %v4954, 4
      %v5556 = vrot.slane %v4957, 5
      %v5557 = vor.u32 %v5555, %v5556
      %v5558 = vrot.slane %v4962, 4
      %v5559 = vrot.slane %v4965, 5
      %v5560 = vor.u32 %v5558, %v5559
      %v5561 = vsel %vm1347, %v5557, %v5560
      %v5562 = vrot.slane %v4971, 4
      %v5563 = vrot.slane %v4974, 5
      %v5564 = vor.u32 %v5562, %v5563
      %v5565 = vrot.slane %v4979, 4
      %v5566 = vrot.slane %v4982, 5
      %v5567 = vor.u32 %v5565, %v5566
      %v5568 = vsel %vm1347, %v5564, %v5567
      %v5569 = vrot.slane %v4988, 4
      %v5570 = vrot.slane %v4991, 5
      %v5571 = vor.u32 %v5569, %v5570
      %v5572 = vrot.slane %v4996, 4
      %v5573 = vrot.slane %v4999, 5
      %v5574 = vor.u32 %v5572, %v5573
      %v5575 = vsel %vm1347, %v5571, %v5574
      %v5576 = vrot.slane %v5005, 4
      %v5577 = vrot.slane %v5008, 5
      %v5578 = vor.u32 %v5576, %v5577
      %v5579 = vrot.slane %v5013, 4
      %v5580 = vrot.slane %v5016, 5
      %v5581 = vor.u32 %v5579, %v5580
      %v5582 = vsel %vm1347, %v5578, %v5581
      %v5583 = vrot.slane %v5022, 4
      %v5584 = vrot.slane %v5025, 5
      %v5585 = vor.u32 %v5583, %v5584
      %v5586 = vrot.slane %v5030, 4
      %v5587 = vrot.slane %v5033, 5
      %v5588 = vor.u32 %v5586, %v5587
      %v5589 = vsel %vm1347, %v5585, %v5588
      %v5590 = vrot.slane %v5039, 4
      %v5591 = vrot.slane %v5042, 5
      %v5592 = vor.u32 %v5590, %v5591
      %v5593 = vrot.slane %v5047, 4
      %v5594 = vrot.slane %v5050, 5
      %v5595 = vor.u32 %v5593, %v5594
      %v5596 = vsel %vm1347, %v5592, %v5595
      %v5597 = vrot.slane %v5056, 4
      %v5598 = vrot.slane %v5059, 5
      %v5599 = vor.u32 %v5597, %v5598
      %v5600 = vrot.slane %v5064, 4
      %v5601 = vrot.slane %v5067, 5
      %v5602 = vor.u32 %v5600, %v5601
      %v5603 = vsel %vm1347, %v5599, %v5602
      %v5604 = vrot.slane %v5073, 4
      %v5605 = vrot.slane %v5076, 5
      %v5606 = vor.u32 %v5604, %v5605
      %v5607 = vrot.slane %v5081, 4
      %v5608 = vrot.slane %v5084, 5
      %v5609 = vor.u32 %v5607, %v5608
      %v5610 = vsel %vm1347, %v5606, %v5609
      %v5611 = vrot.slane %v5090, 4
      %v5612 = vrot.slane %v5093, 5
      %v5613 = vor.u32 %v5611, %v5612
      %v5614 = vrot.slane %v5098, 4
      %v5615 = vrot.slane %v5101, 5
      %v5616 = vor.u32 %v5614, %v5615
      %v5617 = vsel %vm1347, %v5613, %v5616
      %v5618 = vrot.slane %v5107, 4
      %v5619 = vrot.slane %v5110, 5
      %v5620 = vor.u32 %v5618, %v5619
      %v5621 = vrot.slane %v5115, 4
      %v5622 = vrot.slane %v5118, 5
      %v5623 = vor.u32 %v5621, %v5622
      %v5624 = vsel %vm1347, %v5620, %v5623
      %v5625 = vrot.slane %v5124, 4
      %v5626 = vrot.slane %v5127, 5
      %v5627 = vor.u32 %v5625, %v5626
      %v5628 = vrot.slane %v5132, 4
      %v5629 = vrot.slane %v5135, 5
      %v5630 = vor.u32 %v5628, %v5629
      %v5631 = vsel %vm1347, %v5627, %v5630
      %v5632 = vrot.slane %v5141, 4
      %v5633 = vrot.slane %v5144, 5
      %v5634 = vor.u32 %v5632, %v5633
      %v5635 = vrot.slane %v5149, 4
      %v5636 = vrot.slane %v5152, 5
      %v5637 = vor.u32 %v5635, %v5636
      %v5638 = vsel %vm1347, %v5634, %v5637
      %v5639 = vrot.slane %v5158, 4
      %v5640 = vrot.slane %v5161, 5
      %v5641 = vor.u32 %v5639, %v5640
      %v5642 = vrot.slane %v5166, 4
      %v5643 = vrot.slane %v5169, 5
      %v5644 = vor.u32 %v5642, %v5643
      %v5645 = vsel %vm1347, %v5641, %v5644
      %v5646 = vrot.slane %v5175, 4
      %v5647 = vrot.slane %v5178, 5
      %v5648 = vor.u32 %v5646, %v5647
      %v5649 = vrot.slane %v5183, 4
      %v5650 = vrot.slane %v5186, 5
      %v5651 = vor.u32 %v5649, %v5650
      %v5652 = vsel %vm1347, %v5648, %v5651
      %v5653 = vrot.slane %v5192, 4
      %v5654 = vrot.slane %v5195, 5
      %v5655 = vor.u32 %v5653, %v5654
      %v5656 = vrot.slane %v5200, 4
      %v5657 = vrot.slane %v5203, 5
      %v5658 = vor.u32 %v5656, %v5657
      %v5659 = vsel %vm1347, %v5655, %v5658
      %v5660 = vrot.slane %v5209, 4
      %v5661 = vrot.slane %v5212, 5
      %v5662 = vor.u32 %v5660, %v5661
      %v5663 = vrot.slane %v5217, 4
      %v5664 = vrot.slane %v5220, 5
      %v5665 = vor.u32 %v5663, %v5664
      %v5666 = vsel %vm1347, %v5662, %v5665
      %v5667 = vrot.slane %v5226, 4
      %v5668 = vrot.slane %v5229, 5
      %v5669 = vor.u32 %v5667, %v5668
      %v5670 = vrot.slane %v5234, 4
      %v5671 = vrot.slane %v5237, 5
      %v5672 = vor.u32 %v5670, %v5671
      %v5673 = vsel %vm1347, %v5669, %v5672
      %5674 = vrot.lane.b32.xlu0 %v4918, 8
      %v5675 = vpop.permute.xlu0 %5674
      %5676 = vrot.lane.b32.xlu0 %v4935, 8
      %v5677 = vpop.permute.xlu0 %5676
      %5678 = vrot.lane.b32.xlu0 %v4952, 8
      %v5679 = vpop.permute.xlu0 %5678
      %5680 = vrot.lane.b32.xlu0 %v4969, 8
      %v5681 = vpop.permute.xlu0 %5680
      %5682 = vrot.lane.b32.xlu0 %v4986, 8
      %v5683 = vpop.permute.xlu0 %5682
      %5684 = vrot.lane.b32.xlu0 %v5003, 8
      %v5685 = vpop.permute.xlu0 %5684
      %5686 = vrot.lane.b32.xlu0 %v5020, 8
      %v5687 = vpop.permute.xlu0 %5686
      %5688 = vrot.lane.b32.xlu0 %v5037, 8
      %v5689 = vpop.permute.xlu0 %5688
      %5690 = vrot.lane.b32.xlu0 %v5054, 8
      %v5691 = vpop.permute.xlu0 %5690
      %5692 = vrot.lane.b32.xlu0 %v5071, 8
      %v5693 = vpop.permute.xlu0 %5692
      %5694 = vrot.lane.b32.xlu0 %v5088, 8
      %v5695 = vpop.permute.xlu0 %5694
      %5696 = vrot.lane.b32.xlu0 %v5105, 8
      %v5697 = vpop.permute.xlu0 %5696
      %5698 = vrot.lane.b32.xlu0 %v5122, 8
      %v5699 = vpop.permute.xlu0 %5698
      %5700 = vrot.lane.b32.xlu0 %v5139, 8
      %v5701 = vpop.permute.xlu0 %5700
      %5702 = vrot.lane.b32.xlu0 %v5156, 8
      %v5703 = vpop.permute.xlu0 %5702
      %5704 = vrot.lane.b32.xlu0 %v5173, 8
      %v5705 = vpop.permute.xlu0 %5704
      %5706 = vrot.lane.b32.xlu0 %v4663, 16
      %v5707 = vpop.permute.xlu0 %5706
      %5708 = vrot.lane.b32.xlu0 %v4680, 16
      %v5709 = vpop.permute.xlu0 %5708
      %5710 = vrot.lane.b32.xlu0 %v4697, 16
      %v5711 = vpop.permute.xlu0 %5710
      %5712 = vrot.lane.b32.xlu0 %v4714, 16
      %v5713 = vpop.permute.xlu0 %5712
      %5714 = vrot.lane.b32.xlu0 %v4731, 16
      %v5715 = vpop.permute.xlu0 %5714
      %5716 = vrot.lane.b32.xlu0 %v4748, 16
      %v5717 = vpop.permute.xlu0 %5716
      %5718 = vrot.lane.b32.xlu0 %v4765, 16
      %v5719 = vpop.permute.xlu0 %5718
      %5720 = vrot.lane.b32.xlu0 %v4782, 16
      %v5721 = vpop.permute.xlu0 %5720
      %5722 = vrot.lane.b32.xlu0 %v4799, 16
      %v5723 = vpop.permute.xlu0 %5722
      %5724 = vrot.lane.b32.xlu0 %v4816, 16
      %v5725 = vpop.permute.xlu0 %5724
      %5726 = vrot.lane.b32.xlu0 %v4833, 16
      %v5727 = vpop.permute.xlu0 %5726
      %5728 = vrot.lane.b32.xlu0 %v4850, 16
      %v5729 = vpop.permute.xlu0 %5728
      %5730 = vrot.lane.b32.xlu0 %v4867, 16
      %v5731 = vpop.permute.xlu0 %5730
      %5732 = vrot.lane.b32.xlu0 %v4884, 16
      %v5733 = vpop.permute.xlu0 %5732
      %5734 = vrot.lane.b32.xlu0 %v4901, 16
      %v5735 = vpop.permute.xlu0 %5734
      %5736 = vrot.lane.b32.xlu0 %v5190, 16
      %v5737 = vpop.permute.xlu0 %5736
      %5738 = vrot.lane.b32.xlu0 %v4935, 24
      %v5739 = vpop.permute.xlu0 %5738
      %5740 = vrot.lane.b32.xlu0 %v4952, 24
      %v5741 = vpop.permute.xlu0 %5740
      %5742 = vrot.lane.b32.xlu0 %v4969, 24
      %v5743 = vpop.permute.xlu0 %5742
      %5744 = vrot.lane.b32.xlu0 %v4986, 24
      %v5745 = vpop.permute.xlu0 %5744
      %5746 = vrot.lane.b32.xlu0 %v5003, 24
      %v5747 = vpop.permute.xlu0 %5746
      %5748 = vrot.lane.b32.xlu0 %v5020, 24
      %v5749 = vpop.permute.xlu0 %5748
      %5750 = vrot.lane.b32.xlu0 %v5037, 24
      %v5751 = vpop.permute.xlu0 %5750
      %5752 = vrot.lane.b32.xlu0 %v5054, 24
      %v5753 = vpop.permute.xlu0 %5752
      %5754 = vrot.lane.b32.xlu0 %v5071, 24
      %v5755 = vpop.permute.xlu0 %5754
      %5756 = vrot.lane.b32.xlu0 %v5088, 24
      %v5757 = vpop.permute.xlu0 %5756
      %5758 = vrot.lane.b32.xlu0 %v5105, 24
      %v5759 = vpop.permute.xlu0 %5758
      %5760 = vrot.lane.b32.xlu0 %v5122, 24
      %v5761 = vpop.permute.xlu0 %5760
      %5762 = vrot.lane.b32.xlu0 %v5139, 24
      %v5763 = vpop.permute.xlu0 %5762
      %5764 = vrot.lane.b32.xlu0 %v5156, 24
      %v5765 = vpop.permute.xlu0 %5764
      %5766 = vrot.lane.b32.xlu0 %v5173, 24
      %v5767 = vpop.permute.xlu0 %5766
      %5768 = vrot.lane.b32.xlu0 %v5207, 24
      %v5769 = vpop.permute.xlu0 %5768
      %5770 = vrot.lane.b32.xlu0 %v4680, 32
      %v5771 = vpop.permute.xlu0 %5770
      %5772 = vrot.lane.b32.xlu0 %v4697, 32
      %v5773 = vpop.permute.xlu0 %5772
      %5774 = vrot.lane.b32.xlu0 %v4714, 32
      %v5775 = vpop.permute.xlu0 %5774
      %5776 = vrot.lane.b32.xlu0 %v4731, 32
      %v5777 = vpop.permute.xlu0 %5776
      %5778 = vrot.lane.b32.xlu0 %v4748, 32
      %v5779 = vpop.permute.xlu0 %5778
      %5780 = vrot.lane.b32.xlu0 %v4765, 32
      %v5781 = vpop.permute.xlu0 %5780
      %5782 = vrot.lane.b32.xlu0 %v4782, 32
      %v5783 = vpop.permute.xlu0 %5782
      %5784 = vrot.lane.b32.xlu0 %v4799, 32
      %v5785 = vpop.permute.xlu0 %5784
      %5786 = vrot.lane.b32.xlu0 %v4816, 32
      %v5787 = vpop.permute.xlu0 %5786
      %5788 = vrot.lane.b32.xlu0 %v4833, 32
      %v5789 = vpop.permute.xlu0 %5788
      %5790 = vrot.lane.b32.xlu0 %v4850, 32
      %v5791 = vpop.permute.xlu0 %5790
      %5792 = vrot.lane.b32.xlu0 %v4867, 32
      %v5793 = vpop.permute.xlu0 %5792
      %5794 = vrot.lane.b32.xlu0 %v4884, 32
      %v5795 = vpop.permute.xlu0 %5794
      %5796 = vrot.lane.b32.xlu0 %v4901, 32
      %v5797 = vpop.permute.xlu0 %5796
      %5798 = vrot.lane.b32.xlu0 %v5190, 32
      %v5799 = vpop.permute.xlu0 %5798
      %5800 = vrot.lane.b32.xlu0 %v5224, 32
      %v5801 = vpop.permute.xlu0 %5800
      %5802 = vrot.lane.b32.xlu0 %v4952, 40
      %v5803 = vpop.permute.xlu0 %5802
      %5804 = vrot.lane.b32.xlu0 %v4969, 40
      %v5805 = vpop.permute.xlu0 %5804
      %5806 = vrot.lane.b32.xlu0 %v4986, 40
      %v5807 = vpop.permute.xlu0 %5806
      %5808 = vrot.lane.b32.xlu0 %v5003, 40
      %v5809 = vpop.permute.xlu0 %5808
      %5810 = vrot.lane.b32.xlu0 %v5020, 40
      %v5811 = vpop.permute.xlu0 %5810
      %5812 = vrot.lane.b32.xlu0 %v5037, 40
      %v5813 = vpop.permute.xlu0 %5812
      %5814 = vrot.lane.b32.xlu0 %v5054, 40
      %v5815 = vpop.permute.xlu0 %5814
      %5816 = vrot.lane.b32.xlu0 %v5071, 40
      %v5817 = vpop.permute.xlu0 %5816
      %5818 = vrot.lane.b32.xlu0 %v5088, 40
      %v5819 = vpop.permute.xlu0 %5818
      %5820 = vrot.lane.b32.xlu0 %v5105, 40
      %v5821 = vpop.permute.xlu0 %5820
      %5822 = vrot.lane.b32.xlu0 %v5122, 40
      %v5823 = vpop.permute.xlu0 %5822
      %5824 = vrot.lane.b32.xlu0 %v5139, 40
      %v5825 = vpop.permute.xlu0 %5824
      %5826 = vrot.lane.b32.xlu0 %v5156, 40
      %v5827 = vpop.permute.xlu0 %5826
      %5828 = vrot.lane.b32.xlu0 %v5173, 40
      %v5829 = vpop.permute.xlu0 %5828
      %5830 = vrot.lane.b32.xlu0 %v5207, 40
      %v5831 = vpop.permute.xlu0 %5830
      %5832 = vrot.lane.b32.xlu0 %v5241, 40
      %v5833 = vpop.permute.xlu0 %5832
      %5834 = vrot.lane.b32.xlu0 %v5276, 48
      %v5835 = vpop.permute.xlu0 %5834
      %5836 = vrot.lane.b32.xlu0 %v5279, 48
      %v5837 = vpop.permute.xlu0 %5836
      %5838 = vrot.lane.b32.xlu0 %v5282, 48
      %v5839 = vpop.permute.xlu0 %5838
      %5840 = vrot.lane.b32.xlu0 %v5285, 48
      %v5841 = vpop.permute.xlu0 %5840
      %5842 = vrot.lane.b32.xlu0 %v5288, 48
      %v5843 = vpop.permute.xlu0 %5842
      %5844 = vrot.lane.b32.xlu0 %v5291, 48
      %v5845 = vpop.permute.xlu0 %5844
      %5846 = vrot.lane.b32.xlu0 %v5294, 48
      %v5847 = vpop.permute.xlu0 %5846
      %5848 = vrot.lane.b32.xlu0 %v5297, 48
      %v5849 = vpop.permute.xlu0 %5848
      %5850 = vrot.lane.b32.xlu0 %v5300, 48
      %v5851 = vpop.permute.xlu0 %5850
      %5852 = vrot.lane.b32.xlu0 %v5303, 48
      %v5853 = vpop.permute.xlu0 %5852
      %5854 = vrot.lane.b32.xlu0 %v5306, 48
      %v5855 = vpop.permute.xlu0 %5854
      %5856 = vrot.lane.b32.xlu0 %v5309, 48
      %v5857 = vpop.permute.xlu0 %5856
      %5858 = vrot.lane.b32.xlu0 %v5312, 48
      %v5859 = vpop.permute.xlu0 %5858
      %5860 = vrot.lane.b32.xlu0 %v5315, 48
      %v5861 = vpop.permute.xlu0 %5860
      %5862 = vrot.lane.b32.xlu0 %v5318, 48
      %v5863 = vpop.permute.xlu0 %5862
      %5864 = vrot.lane.b32.xlu0 %v5321, 48
      %v5865 = vpop.permute.xlu0 %5864
      %5866 = vrot.lane.b32.xlu0 %v5356, 56
      %v5867 = vpop.permute.xlu0 %5866
      %5868 = vrot.lane.b32.xlu0 %v5359, 56
      %v5869 = vpop.permute.xlu0 %5868
      %5870 = vrot.lane.b32.xlu0 %v5362, 56
      %v5871 = vpop.permute.xlu0 %5870
      %5872 = vrot.lane.b32.xlu0 %v5365, 56
      %v5873 = vpop.permute.xlu0 %5872
      %5874 = vrot.lane.b32.xlu0 %v5368, 56
      %v5875 = vpop.permute.xlu0 %5874
      %5876 = vrot.lane.b32.xlu0 %v5371, 56
      %v5877 = vpop.permute.xlu0 %5876
      %5878 = vrot.lane.b32.xlu0 %v5374, 56
      %v5879 = vpop.permute.xlu0 %5878
      %5880 = vrot.lane.b32.xlu0 %v5377, 56
      %v5881 = vpop.permute.xlu0 %5880
      %5882 = vrot.lane.b32.xlu0 %v5380, 56
      %v5883 = vpop.permute.xlu0 %5882
      %5884 = vrot.lane.b32.xlu0 %v5383, 56
      %v5885 = vpop.permute.xlu0 %5884
      %5886 = vrot.lane.b32.xlu0 %v5386, 56
      %v5887 = vpop.permute.xlu0 %5886
      %5888 = vrot.lane.b32.xlu0 %v5389, 56
      %v5889 = vpop.permute.xlu0 %5888
      %5890 = vrot.lane.b32.xlu0 %v5392, 56
      %v5891 = vpop.permute.xlu0 %5890
      %5892 = vrot.lane.b32.xlu0 %v5395, 56
      %v5893 = vpop.permute.xlu0 %5892
      %5894 = vrot.lane.b32.xlu0 %v5398, 56
      %v5895 = vpop.permute.xlu0 %5894
      %5896 = vrot.lane.b32.xlu0 %v5401, 56
      %v5897 = vpop.permute.xlu0 %5896
      %5898 = vrot.lane.b32.xlu0 %v5279, 64
      %v5899 = vpop.permute.xlu0 %5898
      %5900 = vrot.lane.b32.xlu0 %v5282, 64
      %v5901 = vpop.permute.xlu0 %5900
      %5902 = vrot.lane.b32.xlu0 %v5285, 64
      %v5903 = vpop.permute.xlu0 %5902
      %5904 = vrot.lane.b32.xlu0 %v5288, 64
      %v5905 = vpop.permute.xlu0 %5904
      %5906 = vrot.lane.b32.xlu0 %v5291, 64
      %v5907 = vpop.permute.xlu0 %5906
      %5908 = vrot.lane.b32.xlu0 %v5294, 64
      %v5909 = vpop.permute.xlu0 %5908
      %5910 = vrot.lane.b32.xlu0 %v5297, 64
      %v5911 = vpop.permute.xlu0 %5910
      %5912 = vrot.lane.b32.xlu0 %v5300, 64
      %v5913 = vpop.permute.xlu0 %5912
      %5914 = vrot.lane.b32.xlu0 %v5303, 64
      %v5915 = vpop.permute.xlu0 %5914
      %5916 = vrot.lane.b32.xlu0 %v5306, 64
      %v5917 = vpop.permute.xlu0 %5916
      %5918 = vrot.lane.b32.xlu0 %v5309, 64
      %v5919 = vpop.permute.xlu0 %5918
      %5920 = vrot.lane.b32.xlu0 %v5312, 64
      %v5921 = vpop.permute.xlu0 %5920
      %5922 = vrot.lane.b32.xlu0 %v5315, 64
      %v5923 = vpop.permute.xlu0 %5922
      %5924 = vrot.lane.b32.xlu0 %v5318, 64
      %v5925 = vpop.permute.xlu0 %5924
      %5926 = vrot.lane.b32.xlu0 %v5321, 64
      %v5927 = vpop.permute.xlu0 %5926
      %5928 = vrot.lane.b32.xlu0 %v5406, 64
      %v5929 = vpop.permute.xlu0 %5928
      %5930 = vrot.lane.b32.xlu0 %v5359, 72
      %v5931 = vpop.permute.xlu0 %5930
      %5932 = vrot.lane.b32.xlu0 %v5362, 72
      %v5933 = vpop.permute.xlu0 %5932
      %5934 = vrot.lane.b32.xlu0 %v5365, 72
      %v5935 = vpop.permute.xlu0 %5934
      %5936 = vrot.lane.b32.xlu0 %v5368, 72
      %v5937 = vpop.permute.xlu0 %5936
      %5938 = vrot.lane.b32.xlu0 %v5371, 72
      %v5939 = vpop.permute.xlu0 %5938
      %5940 = vrot.lane.b32.xlu0 %v5374, 72
      %v5941 = vpop.permute.xlu0 %5940
      %5942 = vrot.lane.b32.xlu0 %v5377, 72
      %v5943 = vpop.permute.xlu0 %5942
      %5944 = vrot.lane.b32.xlu0 %v5380, 72
      %v5945 = vpop.permute.xlu0 %5944
      %5946 = vrot.lane.b32.xlu0 %v5383, 72
      %v5947 = vpop.permute.xlu0 %5946
      %5948 = vrot.lane.b32.xlu0 %v5386, 72
      %v5949 = vpop.permute.xlu0 %5948
      %5950 = vrot.lane.b32.xlu0 %v5389, 72
      %v5951 = vpop.permute.xlu0 %5950
      %5952 = vrot.lane.b32.xlu0 %v5392, 72
      %v5953 = vpop.permute.xlu0 %5952
      %5954 = vrot.lane.b32.xlu0 %v5395, 72
      %v5955 = vpop.permute.xlu0 %5954
      %5956 = vrot.lane.b32.xlu0 %v5398, 72
      %v5957 = vpop.permute.xlu0 %5956
      %5958 = vrot.lane.b32.xlu0 %v5401, 72
      %v5959 = vpop.permute.xlu0 %5958
      %5960 = vrot.lane.b32.xlu0 %v5411, 72
      %v5961 = vpop.permute.xlu0 %5960
      %5962 = vrot.lane.b32.xlu0 %v5282, 80
      %v5963 = vpop.permute.xlu0 %5962
      %5964 = vrot.lane.b32.xlu0 %v5285, 80
      %v5965 = vpop.permute.xlu0 %5964
      %5966 = vrot.lane.b32.xlu0 %v5288, 80
      %v5967 = vpop.permute.xlu0 %5966
      %5968 = vrot.lane.b32.xlu0 %v5291, 80
      %v5969 = vpop.permute.xlu0 %5968
      %5970 = vrot.lane.b32.xlu0 %v5294, 80
      %v5971 = vpop.permute.xlu0 %5970
      %5972 = vrot.lane.b32.xlu0 %v5297, 80
      %v5973 = vpop.permute.xlu0 %5972
      %5974 = vrot.lane.b32.xlu0 %v5300, 80
      %v5975 = vpop.permute.xlu0 %5974
      %5976 = vrot.lane.b32.xlu0 %v5303, 80
      %v5977 = vpop.permute.xlu0 %5976
      %5978 = vrot.lane.b32.xlu0 %v5306, 80
      %v5979 = vpop.permute.xlu0 %5978
      %5980 = vrot.lane.b32.xlu0 %v5309, 80
      %v5981 = vpop.permute.xlu0 %5980
      %5982 = vrot.lane.b32.xlu0 %v5312, 80
      %v5983 = vpop.permute.xlu0 %5982
      %5984 = vrot.lane.b32.xlu0 %v5315, 80
      %v5985 = vpop.permute.xlu0 %5984
      %5986 = vrot.lane.b32.xlu0 %v5318, 80
      %v5987 = vpop.permute.xlu0 %5986
      %5988 = vrot.lane.b32.xlu0 %v5321, 80
      %v5989 = vpop.permute.xlu0 %5988
      %5990 = vrot.lane.b32.xlu0 %v5406, 80
      %v5991 = vpop.permute.xlu0 %5990
      %5992 = vrot.lane.b32.xlu0 %v5416, 80
      %v5993 = vpop.permute.xlu0 %5992
      %5994 = vrot.lane.b32.xlu0 %v5362, 88
      %v5995 = vpop.permute.xlu0 %5994
      %5996 = vrot.lane.b32.xlu0 %v5365, 88
      %v5997 = vpop.permute.xlu0 %5996
      %5998 = vrot.lane.b32.xlu0 %v5368, 88
      %v5999 = vpop.permute.xlu0 %5998
      %6000 = vrot.lane.b32.xlu0 %v5371, 88
      %v6001 = vpop.permute.xlu0 %6000
      %6002 = vrot.lane.b32.xlu0 %v5374, 88
      %v6003 = vpop.permute.xlu0 %6002
      %6004 = vrot.lane.b32.xlu0 %v5377, 88
      %v6005 = vpop.permute.xlu0 %6004
      %6006 = vrot.lane.b32.xlu0 %v5380, 88
      %v6007 = vpop.permute.xlu0 %6006
      %6008 = vrot.lane.b32.xlu0 %v5383, 88
      %v6009 = vpop.permute.xlu0 %6008
      %6010 = vrot.lane.b32.xlu0 %v5386, 88
      %v6011 = vpop.permute.xlu0 %6010
      %6012 = vrot.lane.b32.xlu0 %v5389, 88
      %v6013 = vpop.permute.xlu0 %6012
      %6014 = vrot.lane.b32.xlu0 %v5392, 88
      %v6015 = vpop.permute.xlu0 %6014
      %6016 = vrot.lane.b32.xlu0 %v5395, 88
      %v6017 = vpop.permute.xlu0 %6016
      %6018 = vrot.lane.b32.xlu0 %v5398, 88
      %v6019 = vpop.permute.xlu0 %6018
      %6020 = vrot.lane.b32.xlu0 %v5401, 88
      %v6021 = vpop.permute.xlu0 %6020
      %6022 = vrot.lane.b32.xlu0 %v5411, 88
      %v6023 = vpop.permute.xlu0 %6022
      %6024 = vrot.lane.b32.xlu0 %v5421, 88
      %v6025 = vpop.permute.xlu0 %6024
      %6026 = vrot.lane.b32.xlu0 %v5428, 96
      %v6027 = vpop.permute.xlu0 %6026
      %6028 = vrot.lane.b32.xlu0 %v5435, 96
      %v6029 = vpop.permute.xlu0 %6028
      %6030 = vrot.lane.b32.xlu0 %v5442, 96
      %v6031 = vpop.permute.xlu0 %6030
      %6032 = vrot.lane.b32.xlu0 %v5449, 96
      %v6033 = vpop.permute.xlu0 %6032
      %6034 = vrot.lane.b32.xlu0 %v5456, 96
      %v6035 = vpop.permute.xlu0 %6034
      %6036 = vrot.lane.b32.xlu0 %v5463, 96
      %v6037 = vpop.permute.xlu0 %6036
      %6038 = vrot.lane.b32.xlu0 %v5470, 96
      %v6039 = vpop.permute.xlu0 %6038
      %6040 = vrot.lane.b32.xlu0 %v5477, 96
      %v6041 = vpop.permute.xlu0 %6040
      %6042 = vrot.lane.b32.xlu0 %v5484, 96
      %v6043 = vpop.permute.xlu0 %6042
      %6044 = vrot.lane.b32.xlu0 %v5491, 96
      %v6045 = vpop.permute.xlu0 %6044
      %6046 = vrot.lane.b32.xlu0 %v5498, 96
      %v6047 = vpop.permute.xlu0 %6046
      %6048 = vrot.lane.b32.xlu0 %v5505, 96
      %v6049 = vpop.permute.xlu0 %6048
      %6050 = vrot.lane.b32.xlu0 %v5512, 96
      %v6051 = vpop.permute.xlu0 %6050
      %6052 = vrot.lane.b32.xlu0 %v5519, 96
      %v6053 = vpop.permute.xlu0 %6052
      %6054 = vrot.lane.b32.xlu0 %v5526, 96
      %v6055 = vpop.permute.xlu0 %6054
      %6056 = vrot.lane.b32.xlu0 %v5533, 96
      %v6057 = vpop.permute.xlu0 %6056
      %6058 = vrot.lane.b32.xlu0 %v5540, 104
      %v6059 = vpop.permute.xlu0 %6058
      %6060 = vrot.lane.b32.xlu0 %v5547, 104
      %v6061 = vpop.permute.xlu0 %6060
      %6062 = vrot.lane.b32.xlu0 %v5554, 104
      %v6063 = vpop.permute.xlu0 %6062
      %6064 = vrot.lane.b32.xlu0 %v5561, 104
      %v6065 = vpop.permute.xlu0 %6064
      %6066 = vrot.lane.b32.xlu0 %v5568, 104
      %v6067 = vpop.permute.xlu0 %6066
      %6068 = vrot.lane.b32.xlu0 %v5575, 104
      %v6069 = vpop.permute.xlu0 %6068
      %6070 = vrot.lane.b32.xlu0 %v5582, 104
      %v6071 = vpop.permute.xlu0 %6070
      %6072 = vrot.lane.b32.xlu0 %v5589, 104
      %v6073 = vpop.permute.xlu0 %6072
      %6074 = vrot.lane.b32.xlu0 %v5596, 104
      %v6075 = vpop.permute.xlu0 %6074
      %6076 = vrot.lane.b32.xlu0 %v5603, 104
      %v6077 = vpop.permute.xlu0 %6076
      %6078 = vrot.lane.b32.xlu0 %v5610, 104
      %v6079 = vpop.permute.xlu0 %6078
      %6080 = vrot.lane.b32.xlu0 %v5617, 104
      %v6081 = vpop.permute.xlu0 %6080
      %6082 = vrot.lane.b32.xlu0 %v5624, 104
      %v6083 = vpop.permute.xlu0 %6082
      %6084 = vrot.lane.b32.xlu0 %v5631, 104
      %v6085 = vpop.permute.xlu0 %6084
      %6086 = vrot.lane.b32.xlu0 %v5638, 104
      %v6087 = vpop.permute.xlu0 %6086
      %6088 = vrot.lane.b32.xlu0 %v5645, 104
      %v6089 = vpop.permute.xlu0 %6088
      %6090 = vrot.lane.b32.xlu0 %v5435, 112
      %v6091 = vpop.permute.xlu0 %6090
      %6092 = vrot.lane.b32.xlu0 %v5442, 112
      %v6093 = vpop.permute.xlu0 %6092
      %6094 = vrot.lane.b32.xlu0 %v5449, 112
      %v6095 = vpop.permute.xlu0 %6094
      %6096 = vrot.lane.b32.xlu0 %v5456, 112
      %v6097 = vpop.permute.xlu0 %6096
      %6098 = vrot.lane.b32.xlu0 %v5463, 112
      %v6099 = vpop.permute.xlu0 %6098
      %6100 = vrot.lane.b32.xlu0 %v5470, 112
      %v6101 = vpop.permute.xlu0 %6100
      %6102 = vrot.lane.b32.xlu0 %v5477, 112
      %v6103 = vpop.permute.xlu0 %6102
      %6104 = vrot.lane.b32.xlu0 %v5484, 112
      %v6105 = vpop.permute.xlu0 %6104
      %6106 = vrot.lane.b32.xlu0 %v5491, 112
      %v6107 = vpop.permute.xlu0 %6106
      %6108 = vrot.lane.b32.xlu0 %v5498, 112
      %v6109 = vpop.permute.xlu0 %6108
      %6110 = vrot.lane.b32.xlu0 %v5505, 112
      %v6111 = vpop.permute.xlu0 %6110
      %6112 = vrot.lane.b32.xlu0 %v5512, 112
      %v6113 = vpop.permute.xlu0 %6112
      %6114 = vrot.lane.b32.xlu0 %v5519, 112
      %v6115 = vpop.permute.xlu0 %6114
      %6116 = vrot.lane.b32.xlu0 %v5526, 112
      %v6117 = vpop.permute.xlu0 %6116
      %6118 = vrot.lane.b32.xlu0 %v5533, 112
      %v6119 = vpop.permute.xlu0 %6118
      %6120 = vrot.lane.b32.xlu0 %v5652, 112
      %v6121 = vpop.permute.xlu0 %6120
      %6122 = vrot.lane.b32.xlu0 %v5547, 120
      %v6123 = vpop.permute.xlu0 %6122
      %6124 = vrot.lane.b32.xlu0 %v5554, 120
      %v6125 = vpop.permute.xlu0 %6124
      %6126 = vrot.lane.b32.xlu0 %v5561, 120
      %v6127 = vpop.permute.xlu0 %6126
      %6128 = vrot.lane.b32.xlu0 %v5568, 120
      %v6129 = vpop.permute.xlu0 %6128
      %6130 = vrot.lane.b32.xlu0 %v5575, 120
      %v6131 = vpop.permute.xlu0 %6130
      %6132 = vrot.lane.b32.xlu0 %v5582, 120
      %v6133 = vpop.permute.xlu0 %6132
      %6134 = vrot.lane.b32.xlu0 %v5589, 120
      %v6135 = vpop.permute.xlu0 %6134
      %6136 = vrot.lane.b32.xlu0 %v5596, 120
      %v6137 = vpop.permute.xlu0 %6136
      %6138 = vrot.lane.b32.xlu0 %v5603, 120
      %v6139 = vpop.permute.xlu0 %6138
      %6140 = vrot.lane.b32.xlu0 %v5610, 120
      %v6141 = vpop.permute.xlu0 %6140
      %6142 = vrot.lane.b32.xlu0 %v5617, 120
      %v6143 = vpop.permute.xlu0 %6142
      %6144 = vrot.lane.b32.xlu0 %v5624, 120
      %v6145 = vpop.permute.xlu0 %6144
      %6146 = vrot.lane.b32.xlu0 %v5631, 120
      %v6147 = vpop.permute.xlu0 %6146
      %6148 = vrot.lane.b32.xlu0 %v5638, 120
      %v6149 = vpop.permute.xlu0 %6148
      %6150 = vrot.lane.b32.xlu0 %v5645, 120
      %v6151 = vpop.permute.xlu0 %6150
      %6152 = vrot.lane.b32.xlu0 %v5659, 120
      %v6153 = vpop.permute.xlu0 %6152
      %vm6154 = vcmask 64512
      %v6157 = vsel %vm6154, %v4646, %v5675
      %v6160 = vsel %vm6154, %v4663, %v5677
      %v6163 = vsel %vm6154, %v4680, %v5679
      %v6166 = vsel %vm6154, %v4697, %v5681
      %v6169 = vsel %vm6154, %v4714, %v5683
      %v6172 = vsel %vm6154, %v4731, %v5685
      %v6175 = vsel %vm6154, %v4748, %v5687
      %v6178 = vsel %vm6154, %v4765, %v5689
      %v6181 = vsel %vm6154, %v4782, %v5691
      %v6184 = vsel %vm6154, %v4799, %v5693
      %v6187 = vsel %vm6154, %v4816, %v5695
      %v6190 = vsel %vm6154, %v4833, %v5697
      %v6193 = vsel %vm6154, %v4850, %v5699
      %v6196 = vsel %vm6154, %v4867, %v5701
      %v6199 = vsel %vm6154, %v4884, %v5703
      %v6202 = vsel %vm6154, %v4901, %v5705
      %v6204 = vsel %vm2485, %v6157, %v5707
      %v6206 = vsel %vm2485, %v6160, %v5709
      %v6208 = vsel %vm2485, %v6163, %v5711
      %v6210 = vsel %vm2485, %v6166, %v5713
      %v6212 = vsel %vm2485, %v6169, %v5715
      %v6214 = vsel %vm2485, %v6172, %v5717
      %v6216 = vsel %vm2485, %v6175, %v5719
      %v6218 = vsel %vm2485, %v6178, %v5721
      %v6220 = vsel %vm2485, %v6181, %v5723
      %v6222 = vsel %vm2485, %v6184, %v5725
      %v6224 = vsel %vm2485, %v6187, %v5727
      %v6226 = vsel %vm2485, %v6190, %v5729
      %v6228 = vsel %vm2485, %v6193, %v5731
      %v6230 = vsel %vm2485, %v6196, %v5733
      %v6232 = vsel %vm2485, %v6199, %v5735
      %v6234 = vsel %vm2485, %v6202, %v5737
      %v6236 = vsel %vm2518, %v6204, %v5739
      %v6238 = vsel %vm2518, %v6206, %v5741
      %v6240 = vsel %vm2518, %v6208, %v5743
      %v6242 = vsel %vm2518, %v6210, %v5745
      %v6244 = vsel %vm2518, %v6212, %v5747
      %v6246 = vsel %vm2518, %v6214, %v5749
      %v6248 = vsel %vm2518, %v6216, %v5751
      %v6250 = vsel %vm2518, %v6218, %v5753
      %v6252 = vsel %vm2518, %v6220, %v5755
      %v6254 = vsel %vm2518, %v6222, %v5757
      %v6256 = vsel %vm2518, %v6224, %v5759
      %v6258 = vsel %vm2518, %v6226, %v5761
      %v6260 = vsel %vm2518, %v6228, %v5763
      %v6262 = vsel %vm2518, %v6230, %v5765
      %v6264 = vsel %vm2518, %v6232, %v5767
      %v6266 = vsel %vm2518, %v6234, %v5769
      %v6268 = vsel %vm4394, %v6236, %v5771
      %v6270 = vsel %vm4394, %v6238, %v5773
      %v6272 = vsel %vm4394, %v6240, %v5775
      %v6274 = vsel %vm4394, %v6242, %v5777
      %v6276 = vsel %vm4394, %v6244, %v5779
      %v6278 = vsel %vm4394, %v6246, %v5781
      %v6280 = vsel %vm4394, %v6248, %v5783
      %v6282 = vsel %vm4394, %v6250, %v5785
      %v6284 = vsel %vm4394, %v6252, %v5787
      %v6286 = vsel %vm4394, %v6254, %v5789
      %v6288 = vsel %vm4394, %v6256, %v5791
      %v6290 = vsel %vm4394, %v6258, %v5793
      %v6292 = vsel %vm4394, %v6260, %v5795
      %v6294 = vsel %vm4394, %v6262, %v5797
      %v6296 = vsel %vm4394, %v6264, %v5799
      %v6298 = vsel %vm4394, %v6266, %v5801
      %v6300 = vsel %vm2617, %v6268, %v5803
      %v6302 = vsel %vm2617, %v6270, %v5805
      %v6304 = vsel %vm2617, %v6272, %v5807
      %v6306 = vsel %vm2617, %v6274, %v5809
      %v6308 = vsel %vm2617, %v6276, %v5811
      %v6310 = vsel %vm2617, %v6278, %v5813
      %v6312 = vsel %vm2617, %v6280, %v5815
      %v6314 = vsel %vm2617, %v6282, %v5817
      %v6316 = vsel %vm2617, %v6284, %v5819
      %v6318 = vsel %vm2617, %v6286, %v5821
      %v6320 = vsel %vm2617, %v6288, %v5823
      %v6322 = vsel %vm2617, %v6290, %v5825
      %v6324 = vsel %vm2617, %v6292, %v5827
      %v6326 = vsel %vm2617, %v6294, %v5829
      %v6328 = vsel %vm2617, %v6296, %v5831
      %v6330 = vsel %vm2617, %v6298, %v5833
      %v6332 = vsel %vm2650, %v6300, %v5835
      %v6334 = vsel %vm2650, %v6302, %v5837
      %v6336 = vsel %vm2650, %v6304, %v5839
      %v6338 = vsel %vm2650, %v6306, %v5841
      %v6340 = vsel %vm2650, %v6308, %v5843
      %v6342 = vsel %vm2650, %v6310, %v5845
      %v6344 = vsel %vm2650, %v6312, %v5847
      %v6346 = vsel %vm2650, %v6314, %v5849
      %v6348 = vsel %vm2650, %v6316, %v5851
      %v6350 = vsel %vm2650, %v6318, %v5853
      %v6352 = vsel %vm2650, %v6320, %v5855
      %v6354 = vsel %vm2650, %v6322, %v5857
      %v6356 = vsel %vm2650, %v6324, %v5859
      %v6358 = vsel %vm2650, %v6326, %v5861
      %v6360 = vsel %vm2650, %v6328, %v5863
      %v6362 = vsel %vm2650, %v6330, %v5865
      %vm6363 = vcmask 457728
      %v6365 = vsel %vm6363, %v6332, %v5867
      %v6367 = vsel %vm6363, %v6334, %v5869
      %v6369 = vsel %vm6363, %v6336, %v5871
      %v6371 = vsel %vm6363, %v6338, %v5873
      %v6373 = vsel %vm6363, %v6340, %v5875
      %v6375 = vsel %vm6363, %v6342, %v5877
      %v6377 = vsel %vm6363, %v6344, %v5879
      %v6379 = vsel %vm6363, %v6346, %v5881
      %v6381 = vsel %vm6363, %v6348, %v5883
      %v6383 = vsel %vm6363, %v6350, %v5885
      %v6385 = vsel %vm6363, %v6352, %v5887
      %v6387 = vsel %vm6363, %v6354, %v5889
      %v6389 = vsel %vm6363, %v6356, %v5891
      %v6391 = vsel %vm6363, %v6358, %v5893
      %v6393 = vsel %vm6363, %v6360, %v5895
      %v6395 = vsel %vm6363, %v6362, %v5897
      %v6397 = vsel %vm2749, %v6365, %v5899
      %v6399 = vsel %vm2749, %v6367, %v5901
      %v6401 = vsel %vm2749, %v6369, %v5903
      %v6403 = vsel %vm2749, %v6371, %v5905
      %v6405 = vsel %vm2749, %v6373, %v5907
      %v6407 = vsel %vm2749, %v6375, %v5909
      %v6409 = vsel %vm2749, %v6377, %v5911
      %v6411 = vsel %vm2749, %v6379, %v5913
      %v6413 = vsel %vm2749, %v6381, %v5915
      %v6415 = vsel %vm2749, %v6383, %v5917
      %v6417 = vsel %vm2749, %v6385, %v5919
      %v6419 = vsel %vm2749, %v6387, %v5921
      %v6421 = vsel %vm2749, %v6389, %v5923
      %v6423 = vsel %vm2749, %v6391, %v5925
      %v6425 = vsel %vm2749, %v6393, %v5927
      %v6427 = vsel %vm2749, %v6395, %v5929
      %v6429 = vsel %vm2782, %v6397, %v5931
      %v6431 = vsel %vm2782, %v6399, %v5933
      %v6433 = vsel %vm2782, %v6401, %v5935
      %v6435 = vsel %vm2782, %v6403, %v5937
      %v6437 = vsel %vm2782, %v6405, %v5939
      %v6439 = vsel %vm2782, %v6407, %v5941
      %v6441 = vsel %vm2782, %v6409, %v5943
      %v6443 = vsel %vm2782, %v6411, %v5945
      %v6445 = vsel %vm2782, %v6413, %v5947
      %v6447 = vsel %vm2782, %v6415, %v5949
      %v6449 = vsel %vm2782, %v6417, %v5951
      %v6451 = vsel %vm2782, %v6419, %v5953
      %v6453 = vsel %vm2782, %v6421, %v5955
      %v6455 = vsel %vm2782, %v6423, %v5957
      %v6457 = vsel %vm2782, %v6425, %v5959
      %v6459 = vsel %vm2782, %v6427, %v5961
      %vm6460 = vcmask 654336
      %v6462 = vsel %vm6460, %v6429, %v5963
      %v6464 = vsel %vm6460, %v6431, %v5965
      %v6466 = vsel %vm6460, %v6433, %v5967
      %v6468 = vsel %vm6460, %v6435, %v5969
      %v6470 = vsel %vm6460, %v6437, %v5971
      %v6472 = vsel %vm6460, %v6439, %v5973
      %v6474 = vsel %vm6460, %v6441, %v5975
      %v6476 = vsel %vm6460, %v6443, %v5977
      %v6478 = vsel %vm6460, %v6445, %v5979
      %v6480 = vsel %vm6460, %v6447, %v5981
      %v6482 = vsel %vm6460, %v6449, %v5983
      %v6484 = vsel %vm6460, %v6451, %v5985
      %v6486 = vsel %vm6460, %v6453, %v5987
      %v6488 = vsel %vm6460, %v6455, %v5989
      %v6490 = vsel %vm6460, %v6457, %v5991
      %v6492 = vsel %vm6460, %v6459, %v5993
      %v6494 = vsel %vm2881, %v6462, %v5995
      %v6496 = vsel %vm2881, %v6464, %v5997
      %v6498 = vsel %vm2881, %v6466, %v5999
      %v6500 = vsel %vm2881, %v6468, %v6001
      %v6502 = vsel %vm2881, %v6470, %v6003
      %v6504 = vsel %vm2881, %v6472, %v6005
      %v6506 = vsel %vm2881, %v6474, %v6007
      %v6508 = vsel %vm2881, %v6476, %v6009
      %v6510 = vsel %vm2881, %v6478, %v6011
      %v6512 = vsel %vm2881, %v6480, %v6013
      %v6514 = vsel %vm2881, %v6482, %v6015
      %v6516 = vsel %vm2881, %v6484, %v6017
      %v6518 = vsel %vm2881, %v6486, %v6019
      %v6520 = vsel %vm2881, %v6488, %v6021
      %v6522 = vsel %vm2881, %v6490, %v6023
      %v6524 = vsel %vm2881, %v6492, %v6025
      %v6526 = vsel %vm3045, %v6494, %v6027
      %v6528 = vsel %vm3045, %v6496, %v6029
      %v6530 = vsel %vm3045, %v6498, %v6031
      %v6532 = vsel %vm3045, %v6500, %v6033
      %v6534 = vsel %vm3045, %v6502, %v6035
      %v6536 = vsel %vm3045, %v6504, %v6037
      %v6538 = vsel %vm3045, %v6506, %v6039
      %v6540 = vsel %vm3045, %v6508, %v6041
      %v6542 = vsel %vm3045, %v6510, %v6043
      %v6544 = vsel %vm3045, %v6512, %v6045
      %v6546 = vsel %vm3045, %v6514, %v6047
      %v6548 = vsel %vm3045, %v6516, %v6049
      %v6550 = vsel %vm3045, %v6518, %v6051
      %v6552 = vsel %vm3045, %v6520, %v6053
      %v6554 = vsel %vm3045, %v6522, %v6055
      %v6556 = vsel %vm3045, %v6524, %v6057
      %vm6557 = vcmask 850944
      %v6559 = vsel %vm6557, %v6526, %v6059
      %v6561 = vsel %vm6557, %v6528, %v6061
      %v6563 = vsel %vm6557, %v6530, %v6063
      %v6565 = vsel %vm6557, %v6532, %v6065
      %v6567 = vsel %vm6557, %v6534, %v6067
      %v6569 = vsel %vm6557, %v6536, %v6069
      %v6571 = vsel %vm6557, %v6538, %v6071
      %v6573 = vsel %vm6557, %v6540, %v6073
      %v6575 = vsel %vm6557, %v6542, %v6075
      %v6577 = vsel %vm6557, %v6544, %v6077
      %v6579 = vsel %vm6557, %v6546, %v6079
      %v6581 = vsel %vm6557, %v6548, %v6081
      %v6583 = vsel %vm6557, %v6550, %v6083
      %v6585 = vsel %vm6557, %v6552, %v6085
      %v6587 = vsel %vm6557, %v6554, %v6087
      %v6589 = vsel %vm6557, %v6556, %v6089
      %vm6590 = vcmask 916480
      %v6592 = vsel %vm6590, %v6559, %v6091
      %v6594 = vsel %vm6590, %v6561, %v6093
      %v6596 = vsel %vm6590, %v6563, %v6095
      %v6598 = vsel %vm6590, %v6565, %v6097
      %v6600 = vsel %vm6590, %v6567, %v6099
      %v6602 = vsel %vm6590, %v6569, %v6101
      %v6604 = vsel %vm6590, %v6571, %v6103
      %v6606 = vsel %vm6590, %v6573, %v6105
      %v6608 = vsel %vm6590, %v6575, %v6107
      %v6610 = vsel %vm6590, %v6577, %v6109
      %v6612 = vsel %vm6590, %v6579, %v6111
      %v6614 = vsel %vm6590, %v6581, %v6113
      %v6616 = vsel %vm6590, %v6583, %v6115
      %v6618 = vsel %vm6590, %v6585, %v6117
      %v6620 = vsel %vm6590, %v6587, %v6119
      %v6622 = vsel %vm6590, %v6589, %v6121
      %vm6623 = vcmask 982016
      %v6625 = vsel %vm6623, %v6592, %v6123
      %v6628 = vsel %vm6623, %v6594, %v6125
      %v6631 = vsel %vm6623, %v6596, %v6127
      %v6634 = vsel %vm6623, %v6598, %v6129
      %v6637 = vsel %vm6623, %v6600, %v6131
      %v6640 = vsel %vm6623, %v6602, %v6133
      %v6643 = vsel %vm6623, %v6604, %v6135
      %v6646 = vsel %vm6623, %v6606, %v6137
      %v6649 = vsel %vm6623, %v6608, %v6139
      %v6652 = vsel %vm6623, %v6610, %v6141
      %v6655 = vsel %vm6623, %v6612, %v6143
      %v6658 = vsel %vm6623, %v6614, %v6145
      %v6661 = vsel %vm6623, %v6616, %v6147
      %v6664 = vsel %vm6623, %v6618, %v6149
      %v6667 = vsel %vm6623, %v6620, %v6151
      %v6670 = vsel %vm6623, %v6622, %v6153
      %6672 = vrot.lane.b32.xlu0 %v5554, 8
      %v6673 = vpop.permute.xlu0 %6672
      %6674 = vrot.lane.b32.xlu0 %v5561, 8
      %v6675 = vpop.permute.xlu0 %6674
      %6676 = vrot.lane.b32.xlu0 %v5568, 8
      %v6677 = vpop.permute.xlu0 %6676
      %6678 = vrot.lane.b32.xlu0 %v5575, 8
      %v6679 = vpop.permute.xlu0 %6678
      %6680 = vrot.lane.b32.xlu0 %v5582, 8
      %v6681 = vpop.permute.xlu0 %6680
      %6682 = vrot.lane.b32.xlu0 %v5589, 8
      %v6683 = vpop.permute.xlu0 %6682
      %6684 = vrot.lane.b32.xlu0 %v5596, 8
      %v6685 = vpop.permute.xlu0 %6684
      %6686 = vrot.lane.b32.xlu0 %v5603, 8
      %v6687 = vpop.permute.xlu0 %6686
      %6688 = vrot.lane.b32.xlu0 %v5610, 8
      %v6689 = vpop.permute.xlu0 %6688
      %6690 = vrot.lane.b32.xlu0 %v5617, 8
      %v6691 = vpop.permute.xlu0 %6690
      %6692 = vrot.lane.b32.xlu0 %v5624, 8
      %v6693 = vpop.permute.xlu0 %6692
      %6694 = vrot.lane.b32.xlu0 %v5631, 8
      %v6695 = vpop.permute.xlu0 %6694
      %6696 = vrot.lane.b32.xlu0 %v5638, 8
      %v6697 = vpop.permute.xlu0 %6696
      %6698 = vrot.lane.b32.xlu0 %v5645, 8
      %v6699 = vpop.permute.xlu0 %6698
      %6700 = vrot.lane.b32.xlu0 %v5659, 8
      %v6701 = vpop.permute.xlu0 %6700
      %6702 = vrot.lane.b32.xlu0 %v5673, 8
      %v6703 = vpop.permute.xlu0 %6702
      %v6706 = vsel %vm6154, %v5442, %v6673
      %v6709 = vsel %vm6154, %v5449, %v6675
      %v6712 = vsel %vm6154, %v5456, %v6677
      %v6715 = vsel %vm6154, %v5463, %v6679
      %v6718 = vsel %vm6154, %v5470, %v6681
      %v6721 = vsel %vm6154, %v5477, %v6683
      %v6724 = vsel %vm6154, %v5484, %v6685
      %v6727 = vsel %vm6154, %v5491, %v6687
      %v6730 = vsel %vm6154, %v5498, %v6689
      %v6733 = vsel %vm6154, %v5505, %v6691
      %v6736 = vsel %vm6154, %v5512, %v6693
      %v6739 = vsel %vm6154, %v5519, %v6695
      %v6742 = vsel %vm6154, %v5526, %v6697
      %v6745 = vsel %vm6154, %v5533, %v6699
      %v6748 = vsel %vm6154, %v5652, %v6701
      %v6751 = vsel %vm6154, %v5666, %v6703
      %v6752 = vld [vmem:[%s4] sm:$0xf]
      %v6753 = vld [vmem:[%s4 + $0x4] sm:$0xf]
      %v6754 = vld [vmem:[%s4 + $0x8] sm:$0xf]
      %v6755 = vld [vmem:[%s4 + $0xc] sm:$0xf]
      %v6756 = vld [vmem:[%s4 + $0x10] sm:$0xf]
      %v6757 = vld [vmem:[%s4 + $0x14] sm:$0xf]
      %v6758 = vld [vmem:[%s4 + $0x18] sm:$0xf]
      %v6759 = vld [vmem:[%s4 + $0x1c] sm:$0xf]
      %v6760 = vld [vmem:[%s4 + $0x20] sm:$0xf]
      %v6761 = vld [vmem:[%s4 + $0x24] sm:$0xf]
      %v6762 = vld [vmem:[%s4 + $0x28] sm:$0xf]
      %v6763 = vld [vmem:[%s4 + $0x2c] sm:$0xf]
      %v6764 = vld [vmem:[%s4 + $0x30] sm:$0xf]
      %v6765 = vld [vmem:[%s4 + $0x34] sm:$0xf]
      %v6766 = vld [vmem:[%s4 + $0x38] sm:$0xf]
      %v6767 = vld [vmem:[%s4 + $0x3c] sm:$0xf]
      %v6768 = vld [vmem:[%s4 + $0x40] sm:$0xf]
      %v6769 = vld [vmem:[%s4 + $0x44] sm:$0xf]
      %v6770 = vld [vmem:[%s5] sm:$0x1]
      %v6772 = vlaneseq
      %v6773 = vshrl.u32 %v6772, 7
      %v6774 = vsub.s32 0, %v6773
      %v6775 = vrot.slane %v6770, %v6774
      %v6795 = vunpack.c.l.b16 %v6752
      %v6796 = vunpack.c.l.b16 %v6753
      %v6797 = vunpack.c.l.b16 %v6754
      %v6798 = vunpack.c.l.b16 %v6755
      %v6799 = vunpack.c.l.b16 %v6756
      %v6800 = vunpack.c.l.b16 %v6757
      %v6801 = vunpack.c.l.b16 %v6758
      %v6802 = vunpack.c.l.b16 %v6759
      %v6803 = vunpack.c.l.b16 %v6760
      %v6804 = vunpack.c.l.b16 %v6761
      %v6805 = vunpack.c.l.b16 %v6762
      %v6806 = vunpack.c.l.b16 %v6763
      %v6807 = vunpack.c.l.b16 %v6764
      %v6808 = vunpack.c.l.b16 %v6765
      %v6809 = vunpack.c.l.b16 %v6766
      %v6810 = vunpack.c.l.b16 %v6767
      %v6811 = vunpack.c.l.b16 %v6768
      %v6812 = vunpack.c.l.b16 %v6769
      %v6813 = vpack.c.b16 %v6796, %v6795
      %v6814 = vpack.c.b16 %v6798, %v6797
      %v6815 = vpack.c.b16 %v6800, %v6799
      %v6816 = vpack.c.b16 %v6802, %v6801
      %v6817 = vpack.c.b16 %v6804, %v6803
      %v6818 = vpack.c.b16 %v6806, %v6805
      %v6819 = vpack.c.b16 %v6808, %v6807
      %v6820 = vpack.c.b16 %v6810, %v6809
      %v6821 = vpack.c.b16 %v6812, %v6811
      %v6831 = vsel %vm2485, %v6706, 0
      %v6833 = vsel %vm2485, %v6709, 0
      %v6835 = vsel %vm2485, %v6712, 0
      %v6837 = vsel %vm2485, %v6715, 0
      %v6839 = vsel %vm2485, %v6718, 0
      %v6841 = vsel %vm2485, %v6721, 0
      %v6843 = vsel %vm2485, %v6724, 0
      %v6845 = vsel %vm2485, %v6727, 0
      %v6847 = vsel %vm2485, %v6730, 0
      %v6849 = vsel %vm2485, %v6733, 0
      %v6851 = vsel %vm2485, %v6736, 0
      %v6853 = vsel %vm2485, %v6739, 0
      %v6855 = vsel %vm2485, %v6742, 0
      %v6857 = vsel %vm2485, %v6745, 0
      %v6859 = vsel %vm2485, %v6748, 0
      %v6861 = vsel %vm2485, %v6751, 0
      %6863 = vmatprep.subr.bf16.mxu0 0
      %6864 = vmatpush1.bf16.msra.mxu0 %v6813
      %6865 = vmatprep.subr.bf16.mxu0 0
      %6866 = vmatpush1.bf16.msra.mxu0 %v6814
      %6867 = vmatprep.subr.bf16.mxu0 0
      %6868 = vmatpush1.bf16.msra.mxu0 %v6815
      %6869 = vmatprep.subr.bf16.mxu0 0
      %6870 = vmatpush1.bf16.msra.mxu0 %v6816
      %6871 = vmatprep.subr.bf16.mxu0 0
      %6872 = vmatpush1.bf16.msra.mxu0 %v6817
      %6873 = vmatprep.subr.bf16.mxu0 0
      %6874 = vmatpush1.bf16.msra.mxu0 %v6818
      %6875 = vmatprep.subr.bf16.mxu0 0
      %6876 = vmatpush1.bf16.msra.mxu0 %v6819
      %6877 = vmatprep.subr.bf16.mxu0 0
      %6878 = vmatpush1.bf16.msra.mxu0 %v6820
      %6879 = vmatprep.subr.bf16.mxu0 0
      %6880 = vmatpush1.bf16.msra.mxu0 %v6821
      %6881 = vmatprep.subr.bf16.mxu0 0
      %6882 = vmatpush1.bf16.msra.mxu0 0
      %6883 = vmatprep.subr.bf16.mxu0 0
      %6884 = vmatpush1.bf16.msra.mxu0 0
      %6885 = vmatprep.subr.bf16.mxu0 0
      %6886 = vmatpush1.bf16.msra.mxu0 0
      %6887 = vmatprep.subr.bf16.mxu0 0
      %6888 = vmatpush1.bf16.msra.mxu0 0
      %6889 = vmatprep.subr.bf16.mxu0 0
      %6890 = vmatpush1.bf16.msra.mxu0 0
      %6891 = vmatprep.subr.bf16.mxu0 0
      %6892 = vmatpush1.bf16.msra.mxu0 0
      %6893 = vmatprep.subr.bf16.mxu0 0
      %6894 = vmatpush1.bf16.msra.mxu0 0
      %6895 = vmatprep.mubr.bf16.mxu0 %v6831
      %6896 = vmatmul.mubr.bf16.gmra.mrb[0].mxu0 %v6625
      %v6897 = vpop.f32.mrb[0].mxu0
      %v6898 = vadd.f32 %v6775, %v6897
      %v6899 = vpop.f32.mrb[0].mxu0
      %v6900 = vpop.f32.mrb[0].mxu0
      %v6901 = vadd.f32 %v6775, %v6900
      %v6902 = vpop.f32.mrb[0].mxu0
      %6903 = vmatprep.mubr.bf16.mxu0 %v6833
      %6904 = vmatmul.mubr.bf16.gmra.mrb[0].mxu0 %v6628
      %v6905 = vpop.f32.mrb[0].mxu0
      %v6906 = vadd.f32 %v6775, %v6905
      %v6907 = vpop.f32.mrb[0].mxu0
      %v6908 = vpop.f32.mrb[0].mxu0
      %v6909 = vadd.f32 %v6775, %v6908
      %v6910 = vpop.f32.mrb[0].mxu0
      %6911 = vmatprep.mubr.bf16.mxu0 %v6835
      %6912 = vmatmul.mubr.bf16.gmra.mrb[0].mxu0 %v6631
      %v6913 = vpop.f32.mrb[0].mxu0
      %v6914 = vadd.f32 %v6775, %v6913
      %v6915 = vpop.f32.mrb[0].mxu0
      %v6916 = vpop.f32.mrb[0].mxu0
      %v6917 = vadd.f32 %v6775, %v6916
      %v6918 = vpop.f32.mrb[0].mxu0
      %6919 = vmatprep.mubr.bf16.mxu0 %v6837
      %6920 = vmatmul.mubr.bf16.gmra.mrb[0].mxu0 %v6634
      %v6921 = vpop.f32.mrb[0].mxu0
      %v6922 = vadd.f32 %v6775, %v6921
      %v6923 = vpop.f32.mrb[0].mxu0
      %v6924 = vpop.f32.mrb[0].mxu0
      %v6925 = vadd.f32 %v6775, %v6924
      %v6926 = vpop.f32.mrb[0].mxu0
      %6927 = vmatprep.mubr.bf16.mxu0 %v6839
      %6928 = vmatmul.mubr.bf16.gmra.mrb[0].mxu0 %v6637
      %v6929 = vpop.f32.mrb[0].mxu0
      %v6930 = vadd.f32 %v6775, %v6929
      %v6931 = vpop.f32.mrb[0].mxu0
      %v6932 = vpop.f32.mrb[0].mxu0
      %v6933 = vadd.f32 %v6775, %v6932
      %v6934 = vpop.f32.mrb[0].mxu0
      %6935 = vmatprep.mubr.bf16.mxu0 %v6841
      %6936 = vmatmul.mubr.bf16.gmra.mrb[0].mxu0 %v6640
      %v6937 = vpop.f32.mrb[0].mxu0
      %v6938 = vadd.f32 %v6775, %v6937
      %v6939 = vpop.f32.mrb[0].mxu0
      %v6940 = vpop.f32.mrb[0].mxu0
      %v6941 = vadd.f32 %v6775, %v6940
      %v6942 = vpop.f32.mrb[0].mxu0
      %6943 = vmatprep.mubr.bf16.mxu0 %v6843
      %6944 = vmatmul.mubr.bf16.gmra.mrb[0].mxu0 %v6643
      %v6945 = vpop.f32.mrb[0].mxu0
      %v6946 = vadd.f32 %v6775, %v6945
      %v6947 = vpop.f32.mrb[0].mxu0
      %v6948 = vpop.f32.mrb[0].mxu0
      %v6949 = vadd.f32 %v6775, %v6948
      %v6950 = vpop.f32.mrb[0].mxu0
      %6951 = vmatprep.mubr.bf16.mxu0 %v6845
      %6952 = vmatmul.mubr.bf16.gmra.mrb[0].mxu0 %v6646
      %v6953 = vpop.f32.mrb[0].mxu0
      %v6954 = vadd.f32 %v6775, %v6953
      %v6955 = vpop.f32.mrb[0].mxu0
      %v6956 = vpop.f32.mrb[0].mxu0
      %v6957 = vadd.f32 %v6775, %v6956
      %v6958 = vpop.f32.mrb[0].mxu0
      %6959 = vmatprep.mubr.bf16.mxu0 %v6847
      %6960 = vmatmul.mubr.bf16.gmra.mrb[0].mxu0 %v6649
      %v6961 = vpop.f32.mrb[0].mxu0
      %v6962 = vadd.f32 %v6775, %v6961
      %v6963 = vpop.f32.mrb[0].mxu0
      %v6964 = vpop.f32.mrb[0].mxu0
      %v6965 = vadd.f32 %v6775, %v6964
      %v6966 = vpop.f32.mrb[0].mxu0
      %6967 = vmatprep.mubr.bf16.mxu0 %v6849
      %6968 = vmatmul.mubr.bf16.gmra.mrb[0].mxu0 %v6652
      %v6969 = vpop.f32.mrb[0].mxu0
      %v6970 = vadd.f32 %v6775, %v6969
      %v6971 = vpop.f32.mrb[0].mxu0
      %v6972 = vpop.f32.mrb[0].mxu0
      %v6973 = vadd.f32 %v6775, %v6972
      %v6974 = vpop.f32.mrb[0].mxu0
      %6975 = vmatprep.mubr.bf16.mxu0 %v6851
      %6976 = vmatmul.mubr.bf16.gmra.mrb[0].mxu0 %v6655
      %v6977 = vpop.f32.mrb[0].mxu0
      %v6978 = vadd.f32 %v6775, %v6977
      %v6979 = vpop.f32.mrb[0].mxu0
      %v6980 = vpop.f32.mrb[0].mxu0
      %v6981 = vadd.f32 %v6775, %v6980
      %v6982 = vpop.f32.mrb[0].mxu0
      %6983 = vmatprep.mubr.bf16.mxu0 %v6853
      %6984 = vmatmul.mubr.bf16.gmra.mrb[0].mxu0 %v6658
      %v6985 = vpop.f32.mrb[0].mxu0
      %v6986 = vadd.f32 %v6775, %v6985
      %v6987 = vpop.f32.mrb[0].mxu0
      %v6988 = vpop.f32.mrb[0].mxu0
      %v6989 = vadd.f32 %v6775, %v6988
      %v6990 = vpop.f32.mrb[0].mxu0
      %6991 = vmatprep.mubr.bf16.mxu0 %v6855
      %6992 = vmatmul.mubr.bf16.gmra.mrb[0].mxu0 %v6661
      %v6993 = vpop.f32.mrb[0].mxu0
      %v6994 = vadd.f32 %v6775, %v6993
      %v6995 = vpop.f32.mrb[0].mxu0
      %v6996 = vpop.f32.mrb[0].mxu0
      %v6997 = vadd.f32 %v6775, %v6996
      %v6998 = vpop.f32.mrb[0].mxu0
      %6999 = vmatprep.mubr.bf16.mxu0 %v6857
      %7000 = vmatmul.mubr.bf16.gmra.mrb[0].mxu0 %v6664
      %v7001 = vpop.f32.mrb[0].mxu0
      %v7002 = vadd.f32 %v6775, %v7001
      %v7003 = vpop.f32.mrb[0].mxu0
      %v7004 = vpop.f32.mrb[0].mxu0
      %v7005 = vadd.f32 %v6775, %v7004
      %v7006 = vpop.f32.mrb[0].mxu0
      %7007 = vmatprep.mubr.bf16.mxu0 %v6859
      %7008 = vmatmul.mubr.bf16.gmra.mrb[0].mxu0 %v6667
      %v7009 = vpop.f32.mrb[0].mxu0
      %v7010 = vadd.f32 %v6775, %v7009
      %v7011 = vpop.f32.mrb[0].mxu0
      %v7012 = vpop.f32.mrb[0].mxu0
      %v7013 = vadd.f32 %v6775, %v7012
      %v7014 = vpop.f32.mrb[0].mxu0
      %7015 = vmatprep.mubr.bf16.mxu0 %v6861
      %7016 = vmatmul.mubr.bf16.gmra.mrb[0].mxu0 %v6670
      %v7017 = vpop.f32.mrb[0].mxu0
      %v7018 = vadd.f32 %v6775, %v7017
      %v7019 = vpop.f32.mrb[0].mxu0
      %v7020 = vpop.f32.mrb[0].mxu0
      %v7021 = vadd.f32 %v6775, %v7020
      %v7022 = vpop.f32.mrb[0].mxu0
      %7023 = vdwg.mxu0
      %v7024 = vld [vmem:[#allocation5] sm:$0xff]
      %v7025 = vld [vmem:[#allocation5 + $0x8] sm:$0xff]
      %v7026 = vld [vmem:[#allocation5 + $0x10] sm:$0xff]
      %v7027 = vld [vmem:[#allocation5 + $0x18] sm:$0xff]
      %v7028 = vld [vmem:[#allocation5 + $0x20] sm:$0xff]
      %v7029 = vld [vmem:[#allocation5 + $0x28] sm:$0xff]
      %v7030 = vld [vmem:[#allocation5 + $0x30] sm:$0xff]
      %v7031 = vld [vmem:[#allocation5 + $0x38] sm:$0xff]
      %v7032 = vld [vmem:[#allocation5 + $0x40] sm:$0xff]
      %v7033 = vld [vmem:[#allocation5 + $0x48] sm:$0xff]
      %v7034 = vld [vmem:[#allocation5 + $0x50] sm:$0xff]
      %v7035 = vld [vmem:[#allocation5 + $0x58] sm:$0xff]
      %v7036 = vld [vmem:[#allocation5 + $0x60] sm:$0xff]
      %v7037 = vld [vmem:[#allocation5 + $0x68] sm:$0xff]
      %v7038 = vld [vmem:[#allocation5 + $0x70] sm:$0xff]
      %v7039 = vld [vmem:[#allocation5 + $0x78] sm:$0xff]
      %v7040 = vld [vmem:[#allocation5 + $0x80] sm:$0xff]
      %v7041 = vld [vmem:[#allocation5 + $0x88] sm:$0xff]
      %v7042 = vld [vmem:[#allocation5 + $0x90] sm:$0xff]
      %v7043 = vld [vmem:[#allocation5 + $0x98] sm:$0xff]
      %v7044 = vld [vmem:[#allocation5 + $0xa0] sm:$0xff]
      %v7045 = vld [vmem:[#allocation5 + $0xa8] sm:$0xff]
      %v7046 = vld [vmem:[#allocation5 + $0xb0] sm:$0xff]
      %v7047 = vld [vmem:[#allocation5 + $0xb8] sm:$0xff]
      %v7048 = vld [vmem:[#allocation5 + $0xc0] sm:$0xff]
      %v7049 = vld [vmem:[#allocation5 + $0xc8] sm:$0xff]
      %v7050 = vld [vmem:[#allocation5 + $0xd0] sm:$0xff]
      %v7051 = vld [vmem:[#allocation5 + $0xd8] sm:$0xff]
      %v7052 = vld [vmem:[#allocation5 + $0xe0] sm:$0xff]
      %v7053 = vld [vmem:[#allocation5 + $0xe8] sm:$0xff]
      %v7054 = vld [vmem:[#allocation5 + $0xf0] sm:$0xff]
      %v7055 = vld [vmem:[#allocation5 + $0xf8] sm:$0xff]
      %v7056 = vxor.u32 %v6898, 2147483648
      %v7057 = vxor.u32 %v6901, 2147483648
      %v7058 = vxor.u32 %v6906, 2147483648
      %v7059 = vxor.u32 %v6909, 2147483648
      %v7060 = vxor.u32 %v6914, 2147483648
      %v7061 = vxor.u32 %v6917, 2147483648
      %v7062 = vxor.u32 %v6922, 2147483648
      %v7063 = vxor.u32 %v6925, 2147483648
      %v7064 = vxor.u32 %v6930, 2147483648
      %v7065 = vxor.u32 %v6933, 2147483648
      %v7066 = vxor.u32 %v6938, 2147483648
      %v7067 = vxor.u32 %v6941, 2147483648
      %v7068 = vxor.u32 %v6946, 2147483648
      %v7069 = vxor.u32 %v6949, 2147483648
      %v7070 = vxor.u32 %v6954, 2147483648
      %v7071 = vxor.u32 %v6957, 2147483648
      %v7072 = vxor.u32 %v6962, 2147483648
      %v7073 = vxor.u32 %v6965, 2147483648
      %v7074 = vxor.u32 %v6970, 2147483648
      %v7075 = vxor.u32 %v6973, 2147483648
      %v7076 = vxor.u32 %v6978, 2147483648
      %v7077 = vxor.u32 %v6981, 2147483648
      %v7078 = vxor.u32 %v6986, 2147483648
      %v7079 = vxor.u32 %v6989, 2147483648
      %v7080 = vxor.u32 %v6994, 2147483648
      %v7081 = vxor.u32 %v6997, 2147483648
      %v7082 = vxor.u32 %v7002, 2147483648
      %v7083 = vxor.u32 %v7005, 2147483648
      %v7084 = vxor.u32 %v7010, 2147483648
      %v7085 = vxor.u32 %v7013, 2147483648
      %v7086 = vxor.u32 %v7018, 2147483648
      %v7087 = vxor.u32 %v7021, 2147483648
      %v7088 = vmul.f32 %v7056, 1.442695
      %v7089 = vpow.pop %v7088
      %v7090 = vmul.f32 %v7057, 1.442695
      %v7091 = vpow.pop %v7090
      %v7092 = vmul.f32 %v7058, 1.442695
      %v7093 = vpow.pop %v7092
      %v7094 = vmul.f32 %v7059, 1.442695
      %v7095 = vpow.pop %v7094
      %v7096 = vmul.f32 %v7060, 1.442695
      %v7097 = vpow.pop %v7096
      %v7098 = vmul.f32 %v7061, 1.442695
      %v7099 = vpow.pop %v7098
      %v7100 = vmul.f32 %v7062, 1.442695
      %v7101 = vpow.pop %v7100
      %v7102 = vmul.f32 %v7063, 1.442695
      %v7103 = vpow.pop %v7102
      %v7104 = vmul.f32 %v7064, 1.442695
      %v7105 = vpow.pop %v7104
      %v7106 = vmul.f32 %v7065, 1.442695
      %v7107 = vpow.pop %v7106
      %v7108 = vmul.f32 %v7066, 1.442695
      %v7109 = vpow.pop %v7108
      %v7110 = vmul.f32 %v7067, 1.442695
      %v7111 = vpow.pop %v7110
      %v7112 = vmul.f32 %v7068, 1.442695
      %v7113 = vpow.pop %v7112
      %v7114 = vmul.f32 %v7069, 1.442695
      %v7115 = vpow.pop %v7114
      %v7116 = vmul.f32 %v7070, 1.442695
      %v7117 = vpow.pop %v7116
      %v7118 = vmul.f32 %v7071, 1.442695
      %v7119 = vpow.pop %v7118
      %v7120 = vmul.f32 %v7072, 1.442695
      %v7121 = vpow.pop %v7120
      %v7122 = vmul.f32 %v7073, 1.442695
      %v7123 = vpow.pop %v7122
      %v7124 = vmul.f32 %v7074, 1.442695
      %v7125 = vpow.pop %v7124
      %v7126 = vmul.f32 %v7075, 1.442695
      %v7127 = vpow.pop %v7126
      %v7128 = vmul.f32 %v7076, 1.442695
      %v7129 = vpow.pop %v7128
      %v7130 = vmul.f32 %v7077, 1.442695
      %v7131 = vpow.pop %v7130
      %v7132 = vmul.f32 %v7078, 1.442695
      %v7133 = vpow.pop %v7132
      %v7134 = vmul.f32 %v7079, 1.442695
      %v7135 = vpow.pop %v7134
      %v7136 = vmul.f32 %v7080, 1.442695
      %v7137 = vpow.pop %v7136
      %v7138 = vmul.f32 %v7081, 1.442695
      %v7139 = vpow.pop %v7138
      %v7140 = vmul.f32 %v7082, 1.442695
      %v7141 = vpow.pop %v7140
      %v7142 = vmul.f32 %v7083, 1.442695
      %v7143 = vpow.pop %v7142
      %v7144 = vmul.f32 %v7084, 1.442695
      %v7145 = vpow.pop %v7144
      %v7146 = vmul.f32 %v7085, 1.442695
      %v7147 = vpow.pop %v7146
      %v7148 = vmul.f32 %v7086, 1.442695
      %v7149 = vpow.pop %v7148
      %v7150 = vmul.f32 %v7087, 1.442695
      %v7151 = vpow.pop %v7150
      %v7152 = vadd.f32 %v7089, 1.0
      %v7153 = vadd.f32 %v7091, 1.0
      %v7154 = vadd.f32 %v7093, 1.0
      %v7155 = vadd.f32 %v7095, 1.0
      %v7156 = vadd.f32 %v7097, 1.0
      %v7157 = vadd.f32 %v7099, 1.0
      %v7158 = vadd.f32 %v7101, 1.0
      %v7159 = vadd.f32 %v7103, 1.0
      %v7160 = vadd.f32 %v7105, 1.0
      %v7161 = vadd.f32 %v7107, 1.0
      %v7162 = vadd.f32 %v7109, 1.0
      %v7163 = vadd.f32 %v7111, 1.0
      %v7164 = vadd.f32 %v7113, 1.0
      %v7165 = vadd.f32 %v7115, 1.0
      %v7166 = vadd.f32 %v7117, 1.0
      %v7167 = vadd.f32 %v7119, 1.0
      %v7168 = vadd.f32 %v7121, 1.0
      %v7169 = vadd.f32 %v7123, 1.0
      %v7170 = vadd.f32 %v7125, 1.0
      %v7171 = vadd.f32 %v7127, 1.0
      %v7172 = vadd.f32 %v7129, 1.0
      %v7173 = vadd.f32 %v7131, 1.0
      %v7174 = vadd.f32 %v7133, 1.0
      %v7175 = vadd.f32 %v7135, 1.0
      %v7176 = vadd.f32 %v7137, 1.0
      %v7177 = vadd.f32 %v7139, 1.0
      %v7178 = vadd.f32 %v7141, 1.0
      %v7179 = vadd.f32 %v7143, 1.0
      %v7180 = vadd.f32 %v7145, 1.0
      %v7181 = vadd.f32 %v7147, 1.0
      %v7182 = vadd.f32 %v7149, 1.0
      %v7183 = vadd.f32 %v7151, 1.0
      %v7184 = vrcp.pop %v7152
      %v7185 = vmul.f32 1.0, %v7184
      %v7186 = vrcp.pop %v7153
      %v7187 = vmul.f32 1.0, %v7186
      %v7188 = vrcp.pop %v7154
      %v7189 = vmul.f32 1.0, %v7188
      %v7190 = vrcp.pop %v7155
      %v7191 = vmul.f32 1.0, %v7190
      %v7192 = vrcp.pop %v7156
      %v7193 = vmul.f32 1.0, %v7192
      %v7194 = vrcp.pop %v7157
      %v7195 = vmul.f32 1.0, %v7194
      %v7196 = vrcp.pop %v7158
      %v7197 = vmul.f32 1.0, %v7196
      %v7198 = vrcp.pop %v7159
      %v7199 = vmul.f32 1.0, %v7198
      %v7200 = vrcp.pop %v7160
      %v7201 = vmul.f32 1.0, %v7200
      %v7202 = vrcp.pop %v7161
      %v7203 = vmul.f32 1.0, %v7202
      %v7204 = vrcp.pop %v7162
      %v7205 = vmul.f32 1.0, %v7204
      %v7206 = vrcp.pop %v7163
      %v7207 = vmul.f32 1.0, %v7206
      %v7208 = vrcp.pop %v7164
      %v7209 = vmul.f32 1.0, %v7208
      %v7210 = vrcp.pop %v7165
      %v7211 = vmul.f32 1.0, %v7210
      %v7212 = vrcp.pop %v7166
      %v7213 = vmul.f32 1.0, %v7212
      %v7214 = vrcp.pop %v7167
      %v7215 = vmul.f32 1.0, %v7214
      %v7216 = vrcp.pop %v7168
      %v7217 = vmul.f32 1.0, %v7216
      %v7218 = vrcp.pop %v7169
      %v7219 = vmul.f32 1.0, %v7218
      %v7220 = vrcp.pop %v7170
      %v7221 = vmul.f32 1.0, %v7220
      %v7222 = vrcp.pop %v7171
      %v7223 = vmul.f32 1.0, %v7222
      %v7224 = vrcp.pop %v7172
      %v7225 = vmul.f32 1.0, %v7224
      %v7226 = vrcp.pop %v7173
      %v7227 = vmul.f32 1.0, %v7226
      %v7228 = vrcp.pop %v7174
      %v7229 = vmul.f32 1.0, %v7228
      %v7230 = vrcp.pop %v7175
      %v7231 = vmul.f32 1.0, %v7230
      %v7232 = vrcp.pop %v7176
      %v7233 = vmul.f32 1.0, %v7232
      %v7234 = vrcp.pop %v7177
      %v7235 = vmul.f32 1.0, %v7234
      %v7236 = vrcp.pop %v7178
      %v7237 = vmul.f32 1.0, %v7236
      %v7238 = vrcp.pop %v7179
      %v7239 = vmul.f32 1.0, %v7238
      %v7240 = vrcp.pop %v7180
      %v7241 = vmul.f32 1.0, %v7240
      %v7242 = vrcp.pop %v7181
      %v7243 = vmul.f32 1.0, %v7242
      %v7244 = vrcp.pop %v7182
      %v7245 = vmul.f32 1.0, %v7244
      %v7246 = vrcp.pop %v7183
      %v7247 = vmul.f32 1.0, %v7246
      %v7248 = vtanh.pop %v6898
      %v7249 = vtanh.pop %v6901
      %v7250 = vtanh.pop %v6906
      %v7251 = vtanh.pop %v6909
      %v7252 = vtanh.pop %v6914
      %v7253 = vtanh.pop %v6917
      %v7254 = vtanh.pop %v6922
      %v7255 = vtanh.pop %v6925
      %v7256 = vtanh.pop %v6930
      %v7257 = vtanh.pop %v6933
      %v7258 = vtanh.pop %v6938
      %v7259 = vtanh.pop %v6941
      %v7260 = vtanh.pop %v6946
      %v7261 = vtanh.pop %v6949
      %v7262 = vtanh.pop %v6954
      %v7263 = vtanh.pop %v6957
      %v7264 = vtanh.pop %v6962
      %v7265 = vtanh.pop %v6965
      %v7266 = vtanh.pop %v6970
      %v7267 = vtanh.pop %v6973
      %v7268 = vtanh.pop %v6978
      %v7269 = vtanh.pop %v6981
      %v7270 = vtanh.pop %v6986
      %v7271 = vtanh.pop %v6989
      %v7272 = vtanh.pop %v6994
      %v7273 = vtanh.pop %v6997
      %v7274 = vtanh.pop %v7002
      %v7275 = vtanh.pop %v7005
      %v7276 = vtanh.pop %v7010
      %v7277 = vtanh.pop %v7013
      %v7278 = vtanh.pop %v7018
      %v7279 = vtanh.pop %v7021
      %7312 = vrot.lane.b32.xlu0 %v7024, 32
      %v7313 = vpop.permute.xlu0 %7312
      %7314 = vrot.lane.b32.xlu0 %v7025, 32
      %v7315 = vpop.permute.xlu0 %7314
      %7316 = vrot.lane.b32.xlu0 %v7026, 32
      %v7317 = vpop.permute.xlu0 %7316
      %7318 = vrot.lane.b32.xlu0 %v7027, 32
      %v7319 = vpop.permute.xlu0 %7318
      %7320 = vrot.lane.b32.xlu0 %v7028, 32
      %v7321 = vpop.permute.xlu0 %7320
      %7322 = vrot.lane.b32.xlu0 %v7029, 32
      %v7323 = vpop.permute.xlu0 %7322
      %7324 = vrot.lane.b32.xlu0 %v7030, 32
      %v7325 = vpop.permute.xlu0 %7324
      %7326 = vrot.lane.b32.xlu0 %v7031, 32
      %v7327 = vpop.permute.xlu0 %7326
      %7328 = vrot.lane.b32.xlu0 %v7032, 32
      %v7329 = vpop.permute.xlu0 %7328
      %7330 = vrot.lane.b32.xlu0 %v7033, 32
      %v7331 = vpop.permute.xlu0 %7330
      %7332 = vrot.lane.b32.xlu0 %v7034, 32
      %v7333 = vpop.permute.xlu0 %7332
      %7334 = vrot.lane.b32.xlu0 %v7035, 32
      %v7335 = vpop.permute.xlu0 %7334
      %7336 = vrot.lane.b32.xlu0 %v7036, 32
      %v7337 = vpop.permute.xlu0 %7336
      %7338 = vrot.lane.b32.xlu0 %v7037, 32
      %v7339 = vpop.permute.xlu0 %7338
      %7340 = vrot.lane.b32.xlu0 %v7038, 32
      %v7341 = vpop.permute.xlu0 %7340
      %7342 = vrot.lane.b32.xlu0 %v7039, 32
      %v7343 = vpop.permute.xlu0 %7342
      %7344 = vrot.lane.b32.xlu0 %v7040, 32
      %v7345 = vpop.permute.xlu0 %7344
      %7346 = vrot.lane.b32.xlu0 %v7041, 32
      %v7347 = vpop.permute.xlu0 %7346
      %7348 = vrot.lane.b32.xlu0 %v7042, 32
      %v7349 = vpop.permute.xlu0 %7348
      %7350 = vrot.lane.b32.xlu0 %v7043, 32
      %v7351 = vpop.permute.xlu0 %7350
      %7352 = vrot.lane.b32.xlu0 %v7044, 32
      %v7353 = vpop.permute.xlu0 %7352
      %7354 = vrot.lane.b32.xlu0 %v7045, 32
      %v7355 = vpop.permute.xlu0 %7354
      %7356 = vrot.lane.b32.xlu0 %v7046, 32
      %v7357 = vpop.permute.xlu0 %7356
      %7358 = vrot.lane.b32.xlu0 %v7047, 32
      %v7359 = vpop.permute.xlu0 %7358
      %7360 = vrot.lane.b32.xlu0 %v7048, 32
      %v7361 = vpop.permute.xlu0 %7360
      %7362 = vrot.lane.b32.xlu0 %v7049, 32
      %v7363 = vpop.permute.xlu0 %7362
      %7364 = vrot.lane.b32.xlu0 %v7050, 32
      %v7365 = vpop.permute.xlu0 %7364
      %7366 = vrot.lane.b32.xlu0 %v7051, 32
      %v7367 = vpop.permute.xlu0 %7366
      %7368 = vrot.lane.b32.xlu0 %v7052, 32
      %v7369 = vpop.permute.xlu0 %7368
      %7370 = vrot.lane.b32.xlu0 %v7053, 32
      %v7371 = vpop.permute.xlu0 %7370
      %7372 = vrot.lane.b32.xlu0 %v7054, 32
      %v7373 = vpop.permute.xlu0 %7372
      %7374 = vrot.lane.b32.xlu0 %v7055, 32
      %v7375 = vpop.permute.xlu0 %7374
      %v7408 = vmul.f32 %v7185, %v7313
      %v7409 = vmul.f32 %v7187, %v7315
      %v7410 = vmul.f32 %v7189, %v7317
      %v7411 = vmul.f32 %v7191, %v7319
      %v7412 = vmul.f32 %v7193, %v7321
      %v7413 = vmul.f32 %v7195, %v7323
      %v7414 = vmul.f32 %v7197, %v7325
      %v7415 = vmul.f32 %v7199, %v7327
      %v7416 = vmul.f32 %v7201, %v7329
      %v7417 = vmul.f32 %v7203, %v7331
      %v7418 = vmul.f32 %v7205, %v7333
      %v7419 = vmul.f32 %v7207, %v7335
      %v7420 = vmul.f32 %v7209, %v7337
      %v7421 = vmul.f32 %v7211, %v7339
      %v7422 = vmul.f32 %v7213, %v7341
      %v7423 = vmul.f32 %v7215, %v7343
      %v7424 = vmul.f32 %v7217, %v7345
      %v7425 = vmul.f32 %v7219, %v7347
      %v7426 = vmul.f32 %v7221, %v7349
      %v7427 = vmul.f32 %v7223, %v7351
      %v7428 = vmul.f32 %v7225, %v7353
      %v7429 = vmul.f32 %v7227, %v7355
      %v7430 = vmul.f32 %v7229, %v7357
      %v7431 = vmul.f32 %v7231, %v7359
      %v7432 = vmul.f32 %v7233, %v7361
      %v7433 = vmul.f32 %v7235, %v7363
      %v7434 = vmul.f32 %v7237, %v7365
      %v7435 = vmul.f32 %v7239, %v7367
      %v7436 = vmul.f32 %v7241, %v7369
      %v7437 = vmul.f32 %v7243, %v7371
      %v7438 = vmul.f32 %v7245, %v7373
      %v7439 = vmul.f32 %v7247, %v7375
      %7472 = vrot.lane.b32.xlu0 %v7248, 64
      %v7473 = vpop.permute.xlu0 %7472
      %7474 = vrot.lane.b32.xlu0 %v7249, 64
      %v7475 = vpop.permute.xlu0 %7474
      %7476 = vrot.lane.b32.xlu0 %v7250, 64
      %v7477 = vpop.permute.xlu0 %7476
      %7478 = vrot.lane.b32.xlu0 %v7251, 64
      %v7479 = vpop.permute.xlu0 %7478
      %7480 = vrot.lane.b32.xlu0 %v7252, 64
      %v7481 = vpop.permute.xlu0 %7480
      %7482 = vrot.lane.b32.xlu0 %v7253, 64
      %v7483 = vpop.permute.xlu0 %7482
      %7484 = vrot.lane.b32.xlu0 %v7254, 64
      %v7485 = vpop.permute.xlu0 %7484
      %7486 = vrot.lane.b32.xlu0 %v7255, 64
      %v7487 = vpop.permute.xlu0 %7486
      %7488 = vrot.lane.b32.xlu0 %v7256, 64
      %v7489 = vpop.permute.xlu0 %7488
      %7490 = vrot.lane.b32.xlu0 %v7257, 64
      %v7491 = vpop.permute.xlu0 %7490
      %7492 = vrot.lane.b32.xlu0 %v7258, 64
      %v7493 = vpop.permute.xlu0 %7492
      %7494 = vrot.lane.b32.xlu0 %v7259, 64
      %v7495 = vpop.permute.xlu0 %7494
      %7496 = vrot.lane.b32.xlu0 %v7260, 64
      %v7497 = vpop.permute.xlu0 %7496
      %7498 = vrot.lane.b32.xlu0 %v7261, 64
      %v7499 = vpop.permute.xlu0 %7498
      %7500 = vrot.lane.b32.xlu0 %v7262, 64
      %v7501 = vpop.permute.xlu0 %7500
      %7502 = vrot.lane.b32.xlu0 %v7263, 64
      %v7503 = vpop.permute.xlu0 %7502
      %7504 = vrot.lane.b32.xlu0 %v7264, 64
      %v7505 = vpop.permute.xlu0 %7504
      %7506 = vrot.lane.b32.xlu0 %v7265, 64
      %v7507 = vpop.permute.xlu0 %7506
      %7508 = vrot.lane.b32.xlu0 %v7266, 64
      %v7509 = vpop.permute.xlu0 %7508
      %7510 = vrot.lane.b32.xlu0 %v7267, 64
      %v7511 = vpop.permute.xlu0 %7510
      %7512 = vrot.lane.b32.xlu0 %v7268, 64
      %v7513 = vpop.permute.xlu0 %7512
      %7514 = vrot.lane.b32.xlu0 %v7269, 64
      %v7515 = vpop.permute.xlu0 %7514
      %7516 = vrot.lane.b32.xlu0 %v7270, 64
      %v7517 = vpop.permute.xlu0 %7516
      %7518 = vrot.lane.b32.xlu0 %v7271, 64
      %v7519 = vpop.permute.xlu0 %7518
      %7520 = vrot.lane.b32.xlu0 %v7272, 64
      %v7521 = vpop.permute.xlu0 %7520
      %7522 = vrot.lane.b32.xlu0 %v7273, 64
      %v7523 = vpop.permute.xlu0 %7522
      %7524 = vrot.lane.b32.xlu0 %v7274, 64
      %v7525 = vpop.permute.xlu0 %7524
      %7526 = vrot.lane.b32.xlu0 %v7275, 64
      %v7527 = vpop.permute.xlu0 %7526
      %7528 = vrot.lane.b32.xlu0 %v7276, 64
      %v7529 = vpop.permute.xlu0 %7528
      %7530 = vrot.lane.b32.xlu0 %v7277, 64
      %v7531 = vpop.permute.xlu0 %7530
      %7532 = vrot.lane.b32.xlu0 %v7278, 64
      %v7533 = vpop.permute.xlu0 %7532
      %7534 = vrot.lane.b32.xlu0 %v7279, 64
      %v7535 = vpop.permute.xlu0 %7534
      %v7568 = vmul.f32 %v7185, %v7473
      %v7569 = vmul.f32 %v7187, %v7475
      %v7570 = vmul.f32 %v7189, %v7477
      %v7571 = vmul.f32 %v7191, %v7479
      %v7572 = vmul.f32 %v7193, %v7481
      %v7573 = vmul.f32 %v7195, %v7483
      %v7574 = vmul.f32 %v7197, %v7485
      %v7575 = vmul.f32 %v7199, %v7487
      %v7576 = vmul.f32 %v7201, %v7489
      %v7577 = vmul.f32 %v7203, %v7491
      %v7578 = vmul.f32 %v7205, %v7493
      %v7579 = vmul.f32 %v7207, %v7495
      %v7580 = vmul.f32 %v7209, %v7497
      %v7581 = vmul.f32 %v7211, %v7499
      %v7582 = vmul.f32 %v7213, %v7501
      %v7583 = vmul.f32 %v7215, %v7503
      %v7584 = vmul.f32 %v7217, %v7505
      %v7585 = vmul.f32 %v7219, %v7507
      %v7586 = vmul.f32 %v7221, %v7509
      %v7587 = vmul.f32 %v7223, %v7511
      %v7588 = vmul.f32 %v7225, %v7513
      %v7589 = vmul.f32 %v7227, %v7515
      %v7590 = vmul.f32 %v7229, %v7517
      %v7591 = vmul.f32 %v7231, %v7519
      %v7592 = vmul.f32 %v7233, %v7521
      %v7593 = vmul.f32 %v7235, %v7523
      %v7594 = vmul.f32 %v7237, %v7525
      %v7595 = vmul.f32 %v7239, %v7527
      %v7596 = vmul.f32 %v7241, %v7529
      %v7597 = vmul.f32 %v7243, %v7531
      %v7598 = vmul.f32 %v7245, %v7533
      %v7599 = vmul.f32 %v7247, %v7535
      %7632 = vrot.lane.b32.xlu0 %v7568, 32
      %v7633 = vpop.permute.xlu0 %7632
      %7634 = vrot.lane.b32.xlu0 %v7569, 32
      %v7635 = vpop.permute.xlu0 %7634
      %7636 = vrot.lane.b32.xlu0 %v7570, 32
      %v7637 = vpop.permute.xlu0 %7636
      %7638 = vrot.lane.b32.xlu0 %v7571, 32
      %v7639 = vpop.permute.xlu0 %7638
      %7640 = vrot.lane.b32.xlu0 %v7572, 32
      %v7641 = vpop.permute.xlu0 %7640
      %7642 = vrot.lane.b32.xlu0 %v7573, 32
      %v7643 = vpop.permute.xlu0 %7642
      %7644 = vrot.lane.b32.xlu0 %v7574, 32
      %v7645 = vpop.permute.xlu0 %7644
      %7646 = vrot.lane.b32.xlu0 %v7575, 32
      %v7647 = vpop.permute.xlu0 %7646
      %7648 = vrot.lane.b32.xlu0 %v7576, 32
      %v7649 = vpop.permute.xlu0 %7648
      %7650 = vrot.lane.b32.xlu0 %v7577, 32
      %v7651 = vpop.permute.xlu0 %7650
      %7652 = vrot.lane.b32.xlu0 %v7578, 32
      %v7653 = vpop.permute.xlu0 %7652
      %7654 = vrot.lane.b32.xlu0 %v7579, 32
      %v7655 = vpop.permute.xlu0 %7654
      %7656 = vrot.lane.b32.xlu0 %v7580, 32
      %v7657 = vpop.permute.xlu0 %7656
      %7658 = vrot.lane.b32.xlu0 %v7581, 32
      %v7659 = vpop.permute.xlu0 %7658
      %7660 = vrot.lane.b32.xlu0 %v7582, 32
      %v7661 = vpop.permute.xlu0 %7660
      %7662 = vrot.lane.b32.xlu0 %v7583, 32
      %v7663 = vpop.permute.xlu0 %7662
      %7664 = vrot.lane.b32.xlu0 %v7584, 32
      %v7665 = vpop.permute.xlu0 %7664
      %7666 = vrot.lane.b32.xlu0 %v7585, 32
      %v7667 = vpop.permute.xlu0 %7666
      %7668 = vrot.lane.b32.xlu0 %v7586, 32
      %v7669 = vpop.permute.xlu0 %7668
      %7670 = vrot.lane.b32.xlu0 %v7587, 32
      %v7671 = vpop.permute.xlu0 %7670
      %7672 = vrot.lane.b32.xlu0 %v7588, 32
      %v7673 = vpop.permute.xlu0 %7672
      %7674 = vrot.lane.b32.xlu0 %v7589, 32
      %v7675 = vpop.permute.xlu0 %7674
      %7676 = vrot.lane.b32.xlu0 %v7590, 32
      %v7677 = vpop.permute.xlu0 %7676
      %7678 = vrot.lane.b32.xlu0 %v7591, 32
      %v7679 = vpop.permute.xlu0 %7678
      %7680 = vrot.lane.b32.xlu0 %v7592, 32
      %v7681 = vpop.permute.xlu0 %7680
      %7682 = vrot.lane.b32.xlu0 %v7593, 32
      %v7683 = vpop.permute.xlu0 %7682
      %7684 = vrot.lane.b32.xlu0 %v7594, 32
      %v7685 = vpop.permute.xlu0 %7684
      %7686 = vrot.lane.b32.xlu0 %v7595, 32
      %v7687 = vpop.permute.xlu0 %7686
      %7688 = vrot.lane.b32.xlu0 %v7596, 32
      %v7689 = vpop.permute.xlu0 %7688
      %7690 = vrot.lane.b32.xlu0 %v7597, 32
      %v7691 = vpop.permute.xlu0 %7690
      %7692 = vrot.lane.b32.xlu0 %v7598, 32
      %v7693 = vpop.permute.xlu0 %7692
      %7694 = vrot.lane.b32.xlu0 %v7599, 32
      %v7695 = vpop.permute.xlu0 %7694
      %v7728 = vadd.f32 %v7408, %v7633
      %v7729 = vadd.f32 %v7409, %v7635
      %v7730 = vadd.f32 %v7410, %v7637
      %v7731 = vadd.f32 %v7411, %v7639
      %v7732 = vadd.f32 %v7412, %v7641
      %v7733 = vadd.f32 %v7413, %v7643
      %v7734 = vadd.f32 %v7414, %v7645
      %v7735 = vadd.f32 %v7415, %v7647
      %v7736 = vadd.f32 %v7416, %v7649
      %v7737 = vadd.f32 %v7417, %v7651
      %v7738 = vadd.f32 %v7418, %v7653
      %v7739 = vadd.f32 %v7419, %v7655
      %v7740 = vadd.f32 %v7420, %v7657
      %v7741 = vadd.f32 %v7421, %v7659
      %v7742 = vadd.f32 %v7422, %v7661
      %v7743 = vadd.f32 %v7423, %v7663
      %v7744 = vadd.f32 %v7424, %v7665
      %v7745 = vadd.f32 %v7425, %v7667
      %v7746 = vadd.f32 %v7426, %v7669
      %v7747 = vadd.f32 %v7427, %v7671
      %v7748 = vadd.f32 %v7428, %v7673
      %v7749 = vadd.f32 %v7429, %v7675
      %v7750 = vadd.f32 %v7430, %v7677
      %v7751 = vadd.f32 %v7431, %v7679
      %v7752 = vadd.f32 %v7432, %v7681
      %v7753 = vadd.f32 %v7433, %v7683
      %v7754 = vadd.f32 %v7434, %v7685
      %v7755 = vadd.f32 %v7435, %v7687
      %v7756 = vadd.f32 %v7436, %v7689
      %v7757 = vadd.f32 %v7437, %v7691
      %v7758 = vadd.f32 %v7438, %v7693
      %v7759 = vadd.f32 %v7439, %v7695
      %v7760 = vtanh.pop %v7728
      %v7761 = vtanh.pop %v7729
      %v7762 = vtanh.pop %v7730
      %v7763 = vtanh.pop %v7731
      %v7764 = vtanh.pop %v7732
      %v7765 = vtanh.pop %v7733
      %v7766 = vtanh.pop %v7734
      %v7767 = vtanh.pop %v7735
      %v7768 = vtanh.pop %v7736
      %v7769 = vtanh.pop %v7737
      %v7770 = vtanh.pop %v7738
      %v7771 = vtanh.pop %v7739
      %v7772 = vtanh.pop %v7740
      %v7773 = vtanh.pop %v7741
      %v7774 = vtanh.pop %v7742
      %v7775 = vtanh.pop %v7743
      %v7776 = vtanh.pop %v7744
      %v7777 = vtanh.pop %v7745
      %v7778 = vtanh.pop %v7746
      %v7779 = vtanh.pop %v7747
      %v7780 = vtanh.pop %v7748
      %v7781 = vtanh.pop %v7749
      %v7782 = vtanh.pop %v7750
      %v7783 = vtanh.pop %v7751
      %v7784 = vtanh.pop %v7752
      %v7785 = vtanh.pop %v7753
      %v7786 = vtanh.pop %v7754
      %v7787 = vtanh.pop %v7755
      %v7788 = vtanh.pop %v7756
      %v7789 = vtanh.pop %v7757
      %v7790 = vtanh.pop %v7758
      %v7791 = vtanh.pop %v7759
      %7824 = vrot.lane.b32.xlu0 %v7760, 64
      %v7825 = vpop.permute.xlu0 %7824
      %7826 = vrot.lane.b32.xlu0 %v7761, 64
      %v7827 = vpop.permute.xlu0 %7826
      %7828 = vrot.lane.b32.xlu0 %v7762, 64
      %v7829 = vpop.permute.xlu0 %7828
      %7830 = vrot.lane.b32.xlu0 %v7763, 64
      %v7831 = vpop.permute.xlu0 %7830
      %7832 = vrot.lane.b32.xlu0 %v7764, 64
      %v7833 = vpop.permute.xlu0 %7832
      %7834 = vrot.lane.b32.xlu0 %v7765, 64
      %v7835 = vpop.permute.xlu0 %7834
      %7836 = vrot.lane.b32.xlu0 %v7766, 64
      %v7837 = vpop.permute.xlu0 %7836
      %7838 = vrot.lane.b32.xlu0 %v7767, 64
      %v7839 = vpop.permute.xlu0 %7838
      %7840 = vrot.lane.b32.xlu0 %v7768, 64
      %v7841 = vpop.permute.xlu0 %7840
      %7842 = vrot.lane.b32.xlu0 %v7769, 64
      %v7843 = vpop.permute.xlu0 %7842
      %7844 = vrot.lane.b32.xlu0 %v7770, 64
      %v7845 = vpop.permute.xlu0 %7844
      %7846 = vrot.lane.b32.xlu0 %v7771, 64
      %v7847 = vpop.permute.xlu0 %7846
      %7848 = vrot.lane.b32.xlu0 %v7772, 64
      %v7849 = vpop.permute.xlu0 %7848
      %7850 = vrot.lane.b32.xlu0 %v7773, 64
      %v7851 = vpop.permute.xlu0 %7850
      %7852 = vrot.lane.b32.xlu0 %v7774, 64
      %v7853 = vpop.permute.xlu0 %7852
      %7854 = vrot.lane.b32.xlu0 %v7775, 64
      %v7855 = vpop.permute.xlu0 %7854
      %7856 = vrot.lane.b32.xlu0 %v7776, 64
      %v7857 = vpop.permute.xlu0 %7856
      %7858 = vrot.lane.b32.xlu0 %v7777, 64
      %v7859 = vpop.permute.xlu0 %7858
      %7860 = vrot.lane.b32.xlu0 %v7778, 64
      %v7861 = vpop.permute.xlu0 %7860
      %7862 = vrot.lane.b32.xlu0 %v7779, 64
      %v7863 = vpop.permute.xlu0 %7862
      %7864 = vrot.lane.b32.xlu0 %v7780, 64
      %v7865 = vpop.permute.xlu0 %7864
      %7866 = vrot.lane.b32.xlu0 %v7781, 64
      %v7867 = vpop.permute.xlu0 %7866
      %7868 = vrot.lane.b32.xlu0 %v7782, 64
      %v7869 = vpop.permute.xlu0 %7868
      %7870 = vrot.lane.b32.xlu0 %v7783, 64
      %v7871 = vpop.permute.xlu0 %7870
      %7872 = vrot.lane.b32.xlu0 %v7784, 64
      %v7873 = vpop.permute.xlu0 %7872
      %7874 = vrot.lane.b32.xlu0 %v7785, 64
      %v7875 = vpop.permute.xlu0 %7874
      %7876 = vrot.lane.b32.xlu0 %v7786, 64
      %v7877 = vpop.permute.xlu0 %7876
      %7878 = vrot.lane.b32.xlu0 %v7787, 64
      %v7879 = vpop.permute.xlu0 %7878
      %7880 = vrot.lane.b32.xlu0 %v7788, 64
      %v7881 = vpop.permute.xlu0 %7880
      %7882 = vrot.lane.b32.xlu0 %v7789, 64
      %v7883 = vpop.permute.xlu0 %7882
      %7884 = vrot.lane.b32.xlu0 %v7790, 64
      %v7885 = vpop.permute.xlu0 %7884
      %7886 = vrot.lane.b32.xlu0 %v7791, 64
      %v7887 = vpop.permute.xlu0 %7886
      %v7920 = vmul.f32 %v7185, %v7825
      %v7921 = vmul.f32 %v7187, %v7827
      %v7922 = vmul.f32 %v7189, %v7829
      %v7923 = vmul.f32 %v7191, %v7831
      %v7924 = vmul.f32 %v7193, %v7833
      %v7925 = vmul.f32 %v7195, %v7835
      %v7926 = vmul.f32 %v7197, %v7837
      %v7927 = vmul.f32 %v7199, %v7839
      %v7928 = vmul.f32 %v7201, %v7841
      %v7929 = vmul.f32 %v7203, %v7843
      %v7930 = vmul.f32 %v7205, %v7845
      %v7931 = vmul.f32 %v7207, %v7847
      %v7932 = vmul.f32 %v7209, %v7849
      %v7933 = vmul.f32 %v7211, %v7851
      %v7934 = vmul.f32 %v7213, %v7853
      %v7935 = vmul.f32 %v7215, %v7855
      %v7936 = vmul.f32 %v7217, %v7857
      %v7937 = vmul.f32 %v7219, %v7859
      %v7938 = vmul.f32 %v7221, %v7861
      %v7939 = vmul.f32 %v7223, %v7863
      %v7940 = vmul.f32 %v7225, %v7865
      %v7941 = vmul.f32 %v7227, %v7867
      %v7942 = vmul.f32 %v7229, %v7869
      %v7943 = vmul.f32 %v7231, %v7871
      %v7944 = vmul.f32 %v7233, %v7873
      %v7945 = vmul.f32 %v7235, %v7875
      %v7946 = vmul.f32 %v7237, %v7877
      %v7947 = vmul.f32 %v7239, %v7879
      %v7948 = vmul.f32 %v7241, %v7881
      %v7949 = vmul.f32 %v7243, %v7883
      %v7950 = vmul.f32 %v7245, %v7885
      %v7951 = vmul.f32 %v7247, %v7887
      %7984 = vrot.lane.b32.xlu0 %v7728, 96
      %v7985 = vpop.permute.xlu0 %7984
      %7986 = vrot.lane.b32.xlu0 %v7729, 96
      %v7987 = vpop.permute.xlu0 %7986
      %7988 = vrot.lane.b32.xlu0 %v7730, 96
      %v7989 = vpop.permute.xlu0 %7988
      %7990 = vrot.lane.b32.xlu0 %v7731, 96
      %v7991 = vpop.permute.xlu0 %7990
      %7992 = vrot.lane.b32.xlu0 %v7732, 96
      %v7993 = vpop.permute.xlu0 %7992
      %7994 = vrot.lane.b32.xlu0 %v7733, 96
      %v7995 = vpop.permute.xlu0 %7994
      %7996 = vrot.lane.b32.xlu0 %v7734, 96
      %v7997 = vpop.permute.xlu0 %7996
      %7998 = vrot.lane.b32.xlu0 %v7735, 96
      %v7999 = vpop.permute.xlu0 %7998
      %8000 = vrot.lane.b32.xlu0 %v7736, 96
      %v8001 = vpop.permute.xlu0 %8000
      %8002 = vrot.lane.b32.xlu0 %v7737, 96
      %v8003 = vpop.permute.xlu0 %8002
      %8004 = vrot.lane.b32.xlu0 %v7738, 96
      %v8005 = vpop.permute.xlu0 %8004
      %8006 = vrot.lane.b32.xlu0 %v7739, 96
      %v8007 = vpop.permute.xlu0 %8006
      %8008 = vrot.lane.b32.xlu0 %v7740, 96
      %v8009 = vpop.permute.xlu0 %8008
      %8010 = vrot.lane.b32.xlu0 %v7741, 96
      %v8011 = vpop.permute.xlu0 %8010
      %8012 = vrot.lane.b32.xlu0 %v7742, 96
      %v8013 = vpop.permute.xlu0 %8012
      %8014 = vrot.lane.b32.xlu0 %v7743, 96
      %v8015 = vpop.permute.xlu0 %8014
      %8016 = vrot.lane.b32.xlu0 %v7744, 96
      %v8017 = vpop.permute.xlu0 %8016
      %8018 = vrot.lane.b32.xlu0 %v7745, 96
      %v8019 = vpop.permute.xlu0 %8018
      %8020 = vrot.lane.b32.xlu0 %v7746, 96
      %v8021 = vpop.permute.xlu0 %8020
      %8022 = vrot.lane.b32.xlu0 %v7747, 96
      %v8023 = vpop.permute.xlu0 %8022
      %8024 = vrot.lane.b32.xlu0 %v7748, 96
      %v8025 = vpop.permute.xlu0 %8024
      %8026 = vrot.lane.b32.xlu0 %v7749, 96
      %v8027 = vpop.permute.xlu0 %8026
      %8028 = vrot.lane.b32.xlu0 %v7750, 96
      %v8029 = vpop.permute.xlu0 %8028
      %8030 = vrot.lane.b32.xlu0 %v7751, 96
      %v8031 = vpop.permute.xlu0 %8030
      %8032 = vrot.lane.b32.xlu0 %v7752, 96
      %v8033 = vpop.permute.xlu0 %8032
      %8034 = vrot.lane.b32.xlu0 %v7753, 96
      %v8035 = vpop.permute.xlu0 %8034
      %8036 = vrot.lane.b32.xlu0 %v7754, 96
      %v8037 = vpop.permute.xlu0 %8036
      %8038 = vrot.lane.b32.xlu0 %v7755, 96
      %v8039 = vpop.permute.xlu0 %8038
      %8040 = vrot.lane.b32.xlu0 %v7756, 96
      %v8041 = vpop.permute.xlu0 %8040
      %8042 = vrot.lane.b32.xlu0 %v7757, 96
      %v8043 = vpop.permute.xlu0 %8042
      %8044 = vrot.lane.b32.xlu0 %v7758, 96
      %v8045 = vpop.permute.xlu0 %8044
      %8046 = vrot.lane.b32.xlu0 %v7759, 96
      %v8047 = vpop.permute.xlu0 %8046
      %8080 = vst.msk [vmem:[#allocation5] sm:$0xff] %vm4394, %v7985
      %8081 = vst.msk [vmem:[#allocation5 + $0x8] sm:$0xff] %vm4394, %v7987
      %8082 = vst.msk [vmem:[#allocation5 + $0x10] sm:$0xff] %vm4394, %v7989
      %8083 = vst.msk [vmem:[#allocation5 + $0x18] sm:$0xff] %vm4394, %v7991
      %8084 = vst.msk [vmem:[#allocation5 + $0x20] sm:$0xff] %vm4394, %v7993
      %8085 = vst.msk [vmem:[#allocation5 + $0x28] sm:$0xff] %vm4394, %v7995
      %8086 = vst.msk [vmem:[#allocation5 + $0x30] sm:$0xff] %vm4394, %v7997
      %8087 = vst.msk [vmem:[#allocation5 + $0x38] sm:$0xff] %vm4394, %v7999
      %8088 = vst.msk [vmem:[#allocation5 + $0x40] sm:$0xff] %vm4394, %v8001
      %8089 = vst.msk [vmem:[#allocation5 + $0x48] sm:$0xff] %vm4394, %v8003
      %8090 = vst.msk [vmem:[#allocation5 + $0x50] sm:$0xff] %vm4394, %v8005
      %8091 = vst.msk [vmem:[#allocation5 + $0x58] sm:$0xff] %vm4394, %v8007
      %8092 = vst.msk [vmem:[#allocation5 + $0x60] sm:$0xff] %vm4394, %v8009
      %8093 = vst.msk [vmem:[#allocation5 + $0x68] sm:$0xff] %vm4394, %v8011
      %8094 = vst.msk [vmem:[#allocation5 + $0x70] sm:$0xff] %vm4394, %v8013
      %8095 = vst.msk [vmem:[#allocation5 + $0x78] sm:$0xff] %vm4394, %v8015
      %8096 = vst.msk [vmem:[#allocation5 + $0x80] sm:$0xff] %vm4394, %v8017
      %8097 = vst.msk [vmem:[#allocation5 + $0x88] sm:$0xff] %vm4394, %v8019
      %8098 = vst.msk [vmem:[#allocation5 + $0x90] sm:$0xff] %vm4394, %v8021
      %8099 = vst.msk [vmem:[#allocation5 + $0x98] sm:$0xff] %vm4394, %v8023
      %8100 = vst.msk [vmem:[#allocation5 + $0xa0] sm:$0xff] %vm4394, %v8025
      %8101 = vst.msk [vmem:[#allocation5 + $0xa8] sm:$0xff] %vm4394, %v8027
      %8102 = vst.msk [vmem:[#allocation5 + $0xb0] sm:$0xff] %vm4394, %v8029
      %8103 = vst.msk [vmem:[#allocation5 + $0xb8] sm:$0xff] %vm4394, %v8031
      %8104 = vst.msk [vmem:[#allocation5 + $0xc0] sm:$0xff] %vm4394, %v8033
      %8105 = vst.msk [vmem:[#allocation5 + $0xc8] sm:$0xff] %vm4394, %v8035
      %8106 = vst.msk [vmem:[#allocation5 + $0xd0] sm:$0xff] %vm4394, %v8037
      %8107 = vst.msk [vmem:[#allocation5 + $0xd8] sm:$0xff] %vm4394, %v8039
      %8108 = vst.msk [vmem:[#allocation5 + $0xe0] sm:$0xff] %vm4394, %v8041
      %8109 = vst.msk [vmem:[#allocation5 + $0xe8] sm:$0xff] %vm4394, %v8043
      %8110 = vst.msk [vmem:[#allocation5 + $0xf0] sm:$0xff] %vm4394, %v8045
      %8111 = vst.msk [vmem:[#allocation5 + $0xf8] sm:$0xff] %vm4394, %v8047
      %v8112 = vpack.c.bf16 %v7921, %v7920
      %v8113 = vpack.c.bf16 %v7923, %v7922
      %v8114 = vpack.c.bf16 %v7925, %v7924
      %v8115 = vpack.c.bf16 %v7927, %v7926
      %v8116 = vpack.c.bf16 %v7929, %v7928
      %v8117 = vpack.c.bf16 %v7931, %v7930
      %v8118 = vpack.c.bf16 %v7933, %v7932
      %v8119 = vpack.c.bf16 %v7935, %v7934
      %v8120 = vpack.c.bf16 %v7937, %v7936
      %v8121 = vpack.c.bf16 %v7939, %v7938
      %v8122 = vpack.c.bf16 %v7941, %v7940
      %v8123 = vpack.c.bf16 %v7943, %v7942
      %v8124 = vpack.c.bf16 %v7945, %v7944
      %v8125 = vpack.c.bf16 %v7947, %v7946
      %v8126 = vpack.c.bf16 %v7949, %v7948
      %v8127 = vpack.c.bf16 %v7951, %v7950
      %v8144 = vrot.slane %v8112, 4
      %v8145 = vrot.slane %v8113, 4
      %v8146 = vrot.slane %v8114, 4
      %v8147 = vrot.slane %v8115, 4
      %v8148 = vrot.slane %v8116, 4
      %v8149 = vrot.slane %v8117, 4
      %v8150 = vrot.slane %v8118, 4
      %v8151 = vrot.slane %v8119, 4
      %v8152 = vrot.slane %v8120, 4
      %v8153 = vrot.slane %v8121, 4
      %v8154 = vrot.slane %v8122, 4
      %v8155 = vrot.slane %v8123, 4
      %v8156 = vrot.slane %v8124, 4
      %v8157 = vrot.slane %v8125, 4
      %v8158 = vrot.slane %v8126, 4
      %v8159 = vrot.slane %v8127, 4
      %8160 = vrot.lane.b32.xlu0 %v8144, 32
      %v8161 = vpop.permute.xlu0 %8160
      %8162 = vrot.lane.b32.xlu0 %v8145, 32
      %v8163 = vpop.permute.xlu0 %8162
      %8164 = vrot.lane.b32.xlu0 %v8146, 32
      %v8165 = vpop.permute.xlu0 %8164
      %8166 = vrot.lane.b32.xlu0 %v8147, 32
      %v8167 = vpop.permute.xlu0 %8166
      %8168 = vrot.lane.b32.xlu0 %v8148, 32
      %v8169 = vpop.permute.xlu0 %8168
      %8170 = vrot.lane.b32.xlu0 %v8149, 32
      %v8171 = vpop.permute.xlu0 %8170
      %8172 = vrot.lane.b32.xlu0 %v8150, 32
      %v8173 = vpop.permute.xlu0 %8172
      %8174 = vrot.lane.b32.xlu0 %v8151, 32
      %v8175 = vpop.permute.xlu0 %8174
      %8176 = vrot.lane.b32.xlu0 %v8152, 32
      %v8177 = vpop.permute.xlu0 %8176
      %8178 = vrot.lane.b32.xlu0 %v8153, 32
      %v8179 = vpop.permute.xlu0 %8178
      %8180 = vrot.lane.b32.xlu0 %v8154, 32
      %v8181 = vpop.permute.xlu0 %8180
      %8182 = vrot.lane.b32.xlu0 %v8155, 32
      %v8183 = vpop.permute.xlu0 %8182
      %8184 = vrot.lane.b32.xlu0 %v8156, 32
      %v8185 = vpop.permute.xlu0 %8184
      %8186 = vrot.lane.b32.xlu0 %v8157, 32
      %v8187 = vpop.permute.xlu0 %8186
      %8188 = vrot.lane.b32.xlu0 %v8158, 32
      %v8189 = vpop.permute.xlu0 %8188
      %8190 = vrot.lane.b32.xlu0 %v8159, 32
      %v8191 = vpop.permute.xlu0 %8190
      %s8208 = scalar_lea.vmem [#allocation4], 16
      %8209 = vst.msk [vmem:[%s8208] sm:$0xf0] %vm4524, %v8161
      %8210 = vst.msk [vmem:[%s8208 + $0x8] sm:$0xf] %vm4526, %v8161
      %8211 = vst.msk [vmem:[%s8208 + $0x10] sm:$0xf0] %vm4524, %v8163
      %8212 = vst.msk [vmem:[%s8208 + $0x18] sm:$0xf] %vm4526, %v8163
      %8213 = vst.msk [vmem:[%s8208 + $0x20] sm:$0xf0] %vm4524, %v8165
      %8214 = vst.msk [vmem:[%s8208 + $0x28] sm:$0xf] %vm4526, %v8165
      %8215 = vst.msk [vmem:[%s8208 + $0x30] sm:$0xf0] %vm4524, %v8167
      %8216 = vst.msk [vmem:[%s8208 + $0x38] sm:$0xf] %vm4526, %v8167
      %8217 = vst.msk [vmem:[%s8208 + $0x40] sm:$0xf0] %vm4524, %v8169
      %8218 = vst.msk [vmem:[%s8208 + $0x48] sm:$0xf] %vm4526, %v8169
      %8219 = vst.msk [vmem:[%s8208 + $0x50] sm:$0xf0] %vm4524, %v8171
      %8220 = vst.msk [vmem:[%s8208 + $0x58] sm:$0xf] %vm4526, %v8171
      %8221 = vst.msk [vmem:[%s8208 + $0x60] sm:$0xf0] %vm4524, %v8173
      %8222 = vst.msk [vmem:[%s8208 + $0x68] sm:$0xf] %vm4526, %v8173
      %8223 = vst.msk [vmem:[%s8208 + $0x70] sm:$0xf0] %vm4524, %v8175
      %8224 = vst.msk [vmem:[%s8208 + $0x78] sm:$0xf] %vm4526, %v8175
      %8225 = vst.msk [vmem:[%s8208 + $0x80] sm:$0xf0] %vm4524, %v8177
      %8226 = vst.msk [vmem:[%s8208 + $0x88] sm:$0xf] %vm4526, %v8177
      %8227 = vst.msk [vmem:[%s8208 + $0x90] sm:$0xf0] %vm4524, %v8179
      %8228 = vst.msk [vmem:[%s8208 + $0x98] sm:$0xf] %vm4526, %v8179
      %8229 = vst.msk [vmem:[%s8208 + $0xa0] sm:$0xf0] %vm4524, %v8181
      %8230 = vst.msk [vmem:[%s8208 + $0xa8] sm:$0xf] %vm4526, %v8181
      %8231 = vst.msk [vmem:[%s8208 + $0xb0] sm:$0xf0] %vm4524, %v8183
      %8232 = vst.msk [vmem:[%s8208 + $0xb8] sm:$0xf] %vm4526, %v8183
      %8233 = vst.msk [vmem:[%s8208 + $0xc0] sm:$0xf0] %vm4524, %v8185
      %8234 = vst.msk [vmem:[%s8208 + $0xc8] sm:$0xf] %vm4526, %v8185
      %8235 = vst.msk [vmem:[%s8208 + $0xd0] sm:$0xf0] %vm4524, %v8187
      %8236 = vst.msk [vmem:[%s8208 + $0xd8] sm:$0xf] %vm4526, %v8187
      %8237 = vst.msk [vmem:[%s8208 + $0xe0] sm:$0xf0] %vm4524, %v8189
      %8238 = vst.msk [vmem:[%s8208 + $0xe8] sm:$0xf] %vm4526, %v8189
      %8239 = vst.msk [vmem:[%s8208 + $0xf0] sm:$0xf0] %vm4524, %v8191
      %8240 = vst.msk [vmem:[%s8208 + $0xf8] sm:$0xf] %vm4526, %v8191
      %8273 = vrot.lane.b32.xlu0 %v7920, 32
      %v8274 = vpop.permute.xlu0 %8273
      %8275 = vrot.lane.b32.xlu0 %v7921, 32
      %v8276 = vpop.permute.xlu0 %8275
      %8277 = vrot.lane.b32.xlu0 %v7922, 32
      %v8278 = vpop.permute.xlu0 %8277
      %8279 = vrot.lane.b32.xlu0 %v7923, 32
      %v8280 = vpop.permute.xlu0 %8279
      %8281 = vrot.lane.b32.xlu0 %v7924, 32
      %v8282 = vpop.permute.xlu0 %8281
      %8283 = vrot.lane.b32.xlu0 %v7925, 32
      %v8284 = vpop.permute.xlu0 %8283
      %8285 = vrot.lane.b32.xlu0 %v7926, 32
      %v8286 = vpop.permute.xlu0 %8285
      %8287 = vrot.lane.b32.xlu0 %v7927, 32
      %v8288 = vpop.permute.xlu0 %8287
      %8289 = vrot.lane.b32.xlu0 %v7928, 32
      %v8290 = vpop.permute.xlu0 %8289
      %8291 = vrot.lane.b32.xlu0 %v7929, 32
      %v8292 = vpop.permute.xlu0 %8291
      %8293 = vrot.lane.b32.xlu0 %v7930, 32
      %v8294 = vpop.permute.xlu0 %8293
      %8295 = vrot.lane.b32.xlu0 %v7931, 32
      %v8296 = vpop.permute.xlu0 %8295
      %8297 = vrot.lane.b32.xlu0 %v7932, 32
      %v8298 = vpop.permute.xlu0 %8297
      %8299 = vrot.lane.b32.xlu0 %v7933, 32
      %v8300 = vpop.permute.xlu0 %8299
      %8301 = vrot.lane.b32.xlu0 %v7934, 32
      %v8302 = vpop.permute.xlu0 %8301
      %8303 = vrot.lane.b32.xlu0 %v7935, 32
      %v8304 = vpop.permute.xlu0 %8303
      %8305 = vrot.lane.b32.xlu0 %v7936, 32
      %v8306 = vpop.permute.xlu0 %8305
      %8307 = vrot.lane.b32.xlu0 %v7937, 32
      %v8308 = vpop.permute.xlu0 %8307
      %8309 = vrot.lane.b32.xlu0 %v7938, 32
      %v8310 = vpop.permute.xlu0 %8309
      %8311 = vrot.lane.b32.xlu0 %v7939, 32
      %v8312 = vpop.permute.xlu0 %8311
      %8313 = vrot.lane.b32.xlu0 %v7940, 32
      %v8314 = vpop.permute.xlu0 %8313
      %8315 = vrot.lane.b32.xlu0 %v7941, 32
      %v8316 = vpop.permute.xlu0 %8315
      %8317 = vrot.lane.b32.xlu0 %v7942, 32
      %v8318 = vpop.permute.xlu0 %8317
      %8319 = vrot.lane.b32.xlu0 %v7943, 32
      %v8320 = vpop.permute.xlu0 %8319
      %8321 = vrot.lane.b32.xlu0 %v7944, 32
      %v8322 = vpop.permute.xlu0 %8321
      %8323 = vrot.lane.b32.xlu0 %v7945, 32
      %v8324 = vpop.permute.xlu0 %8323
      %8325 = vrot.lane.b32.xlu0 %v7946, 32
      %v8326 = vpop.permute.xlu0 %8325
      %8327 = vrot.lane.b32.xlu0 %v7947, 32
      %v8328 = vpop.permute.xlu0 %8327
      %8329 = vrot.lane.b32.xlu0 %v7948, 32
      %v8330 = vpop.permute.xlu0 %8329
      %8331 = vrot.lane.b32.xlu0 %v7949, 32
      %v8332 = vpop.permute.xlu0 %8331
      %8333 = vrot.lane.b32.xlu0 %v7950, 32
      %v8334 = vpop.permute.xlu0 %8333
      %8335 = vrot.lane.b32.xlu0 %v7951, 32
      %v8336 = vpop.permute.xlu0 %8335
      %8369 = vst.msk [vmem:[%s292] sm:$0xff] %vm4394, %v8274
      %8370 = vst.msk [vmem:[%s292 + $0x8] sm:$0xff] %vm4394, %v8276
      %8371 = vst.msk [vmem:[%s292 + $0x10] sm:$0xff] %vm4394, %v8278
      %8372 = vst.msk [vmem:[%s292 + $0x18] sm:$0xff] %vm4394, %v8280
      %8373 = vst.msk [vmem:[%s292 + $0x20] sm:$0xff] %vm4394, %v8282
      %8374 = vst.msk [vmem:[%s292 + $0x28] sm:$0xff] %vm4394, %v8284
      %8375 = vst.msk [vmem:[%s292 + $0x30] sm:$0xff] %vm4394, %v8286
      %8376 = vst.msk [vmem:[%s292 + $0x38] sm:$0xff] %vm4394, %v8288
      %8377 = vst.msk [vmem:[%s292 + $0x40] sm:$0xff] %vm4394, %v8290
      %8378 = vst.msk [vmem:[%s292 + $0x48] sm:$0xff] %vm4394, %v8292
      %8379 = vst.msk [vmem:[%s292 + $0x50] sm:$0xff] %vm4394, %v8294
      %8380 = vst.msk [vmem:[%s292 + $0x58] sm:$0xff] %vm4394, %v8296
      %8381 = vst.msk [vmem:[%s292 + $0x60] sm:$0xff] %vm4394, %v8298
      %8382 = vst.msk [vmem:[%s292 + $0x68] sm:$0xff] %vm4394, %v8300
      %8383 = vst.msk [vmem:[%s292 + $0x70] sm:$0xff] %vm4394, %v8302
      %8384 = vst.msk [vmem:[%s292 + $0x78] sm:$0xff] %vm4394, %v8304
      %8385 = vst.msk [vmem:[%s292 + $0x80] sm:$0xff] %vm4394, %v8306
      %8386 = vst.msk [vmem:[%s292 + $0x88] sm:$0xff] %vm4394, %v8308
      %8387 = vst.msk [vmem:[%s292 + $0x90] sm:$0xff] %vm4394, %v8310
      %8388 = vst.msk [vmem:[%s292 + $0x98] sm:$0xff] %vm4394, %v8312
      %8389 = vst.msk [vmem:[%s292 + $0xa0] sm:$0xff] %vm4394, %v8314
      %8390 = vst.msk [vmem:[%s292 + $0xa8] sm:$0xff] %vm4394, %v8316
      %8391 = vst.msk [vmem:[%s292 + $0xb0] sm:$0xff] %vm4394, %v8318
      %8392 = vst.msk [vmem:[%s292 + $0xb8] sm:$0xff] %vm4394, %v8320
      %8393 = vst.msk [vmem:[%s292 + $0xc0] sm:$0xff] %vm4394, %v8322
      %8394 = vst.msk [vmem:[%s292 + $0xc8] sm:$0xff] %vm4394, %v8324
      %8395 = vst.msk [vmem:[%s292 + $0xd0] sm:$0xff] %vm4394, %v8326
      %8396 = vst.msk [vmem:[%s292 + $0xd8] sm:$0xff] %vm4394, %v8328
      %8397 = vst.msk [vmem:[%s292 + $0xe0] sm:$0xff] %vm4394, %v8330
      %8398 = vst.msk [vmem:[%s292 + $0xe8] sm:$0xff] %vm4394, %v8332
      %8399 = vst.msk [vmem:[%s292 + $0xf0] sm:$0xff] %vm4394, %v8334
      %8400 = vst.msk [vmem:[%s292 + $0xf8] sm:$0xff] %vm4394, %v8336
      %8401 = vst.msk [vmem:[%s298] sm:$0xff] %vm4394, %v7985
      %8402 = vst.msk [vmem:[%s298 + $0x8] sm:$0xff] %vm4394, %v7987
      %8403 = vst.msk [vmem:[%s298 + $0x10] sm:$0xff] %vm4394, %v7989
      %8404 = vst.msk [vmem:[%s298 + $0x18] sm:$0xff] %vm4394, %v7991
      %8405 = vst.msk [vmem:[%s298 + $0x20] sm:$0xff] %vm4394, %v7993
      %8406 = vst.msk [vmem:[%s298 + $0x28] sm:$0xff] %vm4394, %v7995
      %8407 = vst.msk [vmem:[%s298 + $0x30] sm:$0xff] %vm4394, %v7997
      %8408 = vst.msk [vmem:[%s298 + $0x38] sm:$0xff] %vm4394, %v7999
      %8409 = vst.msk [vmem:[%s298 + $0x40] sm:$0xff] %vm4394, %v8001
      %8410 = vst.msk [vmem:[%s298 + $0x48] sm:$0xff] %vm4394, %v8003
      %8411 = vst.msk [vmem:[%s298 + $0x50] sm:$0xff] %vm4394, %v8005
      %8412 = vst.msk [vmem:[%s298 + $0x58] sm:$0xff] %vm4394, %v8007
      %8413 = vst.msk [vmem:[%s298 + $0x60] sm:$0xff] %vm4394, %v8009
      %8414 = vst.msk [vmem:[%s298 + $0x68] sm:$0xff] %vm4394, %v8011
      %8415 = vst.msk [vmem:[%s298 + $0x70] sm:$0xff] %vm4394, %v8013
      %8416 = vst.msk [vmem:[%s298 + $0x78] sm:$0xff] %vm4394, %v8015
      %8417 = vst.msk [vmem:[%s298 + $0x80] sm:$0xff] %vm4394, %v8017
      %8418 = vst.msk [vmem:[%s298 + $0x88] sm:$0xff] %vm4394, %v8019
      %8419 = vst.msk [vmem:[%s298 + $0x90] sm:$0xff] %vm4394, %v8021
      %8420 = vst.msk [vmem:[%s298 + $0x98] sm:$0xff] %vm4394, %v8023
      %8421 = vst.msk [vmem:[%s298 + $0xa0] sm:$0xff] %vm4394, %v8025
      %8422 = vst.msk [vmem:[%s298 + $0xa8] sm:$0xff] %vm4394, %v8027
      %8423 = vst.msk [vmem:[%s298 + $0xb0] sm:$0xff] %vm4394, %v8029
      %8424 = vst.msk [vmem:[%s298 + $0xb8] sm:$0xff] %vm4394, %v8031
      %8425 = vst.msk [vmem:[%s298 + $0xc0] sm:$0xff] %vm4394, %v8033
      %8426 = vst.msk [vmem:[%s298 + $0xc8] sm:$0xff] %vm4394, %v8035
      %8427 = vst.msk [vmem:[%s298 + $0xd0] sm:$0xff] %vm4394, %v8037
      %8428 = vst.msk [vmem:[%s298 + $0xd8] sm:$0xff] %vm4394, %v8039
      %8429 = vst.msk [vmem:[%s298 + $0xe0] sm:$0xff] %vm4394, %v8041
      %8430 = vst.msk [vmem:[%s298 + $0xe8] sm:$0xff] %vm4394, %v8043
      %8431 = vst.msk [vmem:[%s298 + $0xf0] sm:$0xff] %vm4394, %v8045
      %8432 = vst.msk [vmem:[%s298 + $0xf8] sm:$0xff] %vm4394, %v8047
      %s8433 = sld [smem:[#allocation7 + %s30]]
      %p8434 = scmp.lt.s32.totalorder %s8433, 1
      %s8435 = scalar_select %p8434, %s8433, 1
      %p8436 = scmp.lt.s32.totalorder %s29, 1
      %s8437 = scalar_select %p8436, %s29, 1
      %s8438 = smul.addr %s8437, 32
      %s8439 = smul.addr %s8435, 64
      %s8440 = sadd.s32 %s8438, %s8439
      %s8441 = smul.addr %s8440, 8
      %s8442 = scalar_lea.vmem %s6, %s8441
      %p8443 = scmp.lt.s32.totalorder %s29, 1
      %s8444 = scalar_select %p8443, %s29, 1
      %s8445 = smul.addr %s8444, 32
      %s8446 = smul.addr %s8445, 8
      %s8447 = scalar_lea.vmem %s7, %s8446
      // Predicated region
      $region45: #{tpu_custom_call.1} parent=39 // pred_check
        %p8448 = pneg %p169
      $region46: #{tpu_custom_call.1} parent=39 // pred_check_branch
        %8450 = sbr.rel (%p8448) target = $region48
      $region47: #{tpu_custom_call.1} parent=39 // pred_region
        %s8451 = sld [smem:[#allocation7 + %s30]]
      $region48: #{tpu_custom_call.1} parent=39 // pred_fallthru
        _
      // Predicated region
      $region49: #{tpu_custom_call.1} parent=39 // pred_check
        %p8452 = pneg %p195
      $region50: #{tpu_custom_call.1} parent=39 // pred_check_branch
        %8454 = sbr.rel (%p8452) target = $region52
      $region51: #{tpu_custom_call.1} parent=39 // pred_region
        _
      $region52: #{tpu_custom_call.1} parent=39 // pred_fallthru
        _
    $region40: #{tpu_custom_call.1} parent=5 // pred_fallthru
      _
    %p8455 = scmp.le.s32.totalorder 2, %s20
    // Predicated region
    $region53: #{tpu_custom_call.1} parent=5 // pred_check
      %p8456 = pneg %p8455
    $region54: #{tpu_custom_call.1} parent=5 // pred_check_branch
      %8458 = sbr.rel (%p8456) target = $region56
    $region55: #{tpu_custom_call.1} parent=5 // pred_region
      %s8459 = ssub.s32 %s20, 2
      // Predicated region
      $region57: #{tpu_custom_call.1} parent=55 // pred_check
        %p8460 = pneg %p175
      $region58: #{tpu_custom_call.1} parent=55 // pred_check_branch
        %8462 = sbr.rel (%p8460) target = $region60
      $region59: #{tpu_custom_call.1} parent=55 // pred_region
        %s8463 = sld [smem:[#allocation7 + %s32]]
        %p8464 = scmp.lt.s32.totalorder %s8463, 1
        %s8465 = scalar_select %p8464, %s8463, 1
        %p8466 = scmp.lt.s32.totalorder %s31, 1
        %s8467 = scalar_select %p8466, %s31, 1
        %s8468 = smul.addr %s8467, 32
        %s8469 = smul.addr %s8465, 64
        %s8470 = sadd.s32 %s8468, %s8469
        %s8471 = smul.addr %s8470, 8
        %s8472 = scalar_lea.vmem %s6, %s8471
      $region60: #{tpu_custom_call.1} parent=55 // pred_fallthru
        _
      // Predicated region
      $region61: #{tpu_custom_call.1} parent=55 // pred_check
        %p8473 = pneg %p201
      $region62: #{tpu_custom_call.1} parent=55 // pred_check_branch
        %8475 = sbr.rel (%p8473) target = $region64
      $region63: #{tpu_custom_call.1} parent=55 // pred_region
        %p8476 = scmp.lt.s32.totalorder %s31, 1
        %s8477 = scalar_select %p8476, %s31, 1
        %s8478 = smul.addr %s8477, 32
        %s8479 = smul.addr %s8478, 8
        %s8480 = scalar_lea.vmem %s7, %s8479
      $region64: #{tpu_custom_call.1} parent=55 // pred_fallthru
        _
    $region56: #{tpu_custom_call.1} parent=5 // pred_fallthru
      _
  $region6: #{tpu_custom_call.1} parent=0 // loop_footer
    %s24 = sadd.s32 1, %s20
  $region7: #{tpu_custom_call.1} parent=0 // loop_footer_branch
    %19 = sbr.rel target = $region3
  $region8: #{tpu_custom_call.1} parent=0 // loop_exit
    _

</llo_original>
